<compile_context>
chip_gen: v7x
topology: tpu7x:2x2x1
jax: 0.10.0
libtpu: 0.0.40
codegen_flags: <defaults>
</compile_context>

<pallas_src>
import functools

import jax
import jax.numpy as jnp
from jax.experimental import pallas as pl
from jax.experimental.pallas import tpu as pltpu


def _round_up(x, m):
    return ((x + m - 1) // m) * m


def _choose_tn(out_pad, tn_max=512):
    """Largest 128-multiple divisor of out_pad that is <= tn_max and (when
    possible) <= out_pad // 2, so the parallel axis has >= 2 tiles (v7x)."""
    if out_pad <= 128:
        return out_pad                       # 128: single lane-dense tile
    cap = min(tn_max, out_pad // 2)
    for t in range(cap - cap % 128, 127, -128):
        if out_pad % t == 0:
            return t
    return 128


def _choose_tk(h2_pad, tn, weight_itemsize=2, tile_budget_bytes=8 << 20):
    """Largest 512-multiple divisor of h2_pad whose single-buffered w3 tile
    (tk * tn * itemsize) stays under the budget (double-buffered <= 2x)."""
    best = 512
    t = 512
    while t <= h2_pad:
        if h2_pad % t == 0 and t * tn * weight_itemsize <= tile_budget_bytes:
            best = t
        t += 512
    return best


def _mlp_kernel(x_ref, w1_ref, b1_ref, w2_ref, b2_ref, w3_ref, b3_ref, o_ref,
                h1_ref, *, mm_dtype):
    k = pl.program_id(1)            # reduction step over the 10240-wide hidden dim

    # Start of each reduction sweep: (re)compute the tiny first layer from fully
    # resident operands (no HBM traffic) and initialise the f32 output block
    # with the broadcast layer-3 bias -- it doubles as the accumulator because
    # its block index (0, n) is constant across the k axis.
    @pl.when(k == 0)
    def _():
        h1 = jnp.dot(x_ref[...], w1_ref[...], preferred_element_type=jnp.float32)
        h1_ref[...] = jnp.maximum(h1 + b1_ref[...], 0.0).astype(mm_dtype)
        o_ref[...] = jnp.broadcast_to(b3_ref[...], o_ref.shape)

    # Layer 2 tile from the VMEM-resident blocked w2 (DMA'd from HBM only once):
    # (B, 128) @ (128, tk) + b2 -> ReLU.  Recomputing this per output-column
    # tile costs only MXU flops on resident data, never extra HBM bytes.
    h2 = jnp.dot(h1_ref[...], w2_ref[k], preferred_element_type=jnp.float32)
    h2 = jnp.maximum(h2 + b2_ref[k], 0.0)

    # Layer 3 partial product: (B, tk) @ (tk, tn), accumulated into the output.
    o_ref[...] += jnp.dot(h2.astype(mm_dtype), w3_ref[...],
                          preferred_element_type=jnp.float32)


def linear_decoder_pallas(z, params, *, output_size=None, tn=None):
    """z: (B, nz) float32. params: dict from init_params (see layouts there)."""
    w1, b1 = params["w1"], params["b1"]          # (nz, 128) f32, (1, 128) f32
    w2, b2 = params["w2"], params["b2"]          # (num_k, 128, tk) bf16, (num_k, 1, tk) f32
    w3, b3 = params["w3"], params["b3"]          # (h2_pad, out_pad) bf16, (1, out_pad) f32
    B, nz = z.shape
    num_k, h1_dim, tk = w2.shape
    h2_pad, out_pad = w3.shape
    if num_k * tk != h2_pad:
        raise ValueError("blocked w2 layout inconsistent with w3")
    if out_pad % 128 != 0:
        raise ValueError("padded output width must be a multiple of 128")
    if tn is None:
        tn = _choose_tn(out_pad)

    grid = (out_pad // tn, num_k)                # (parallel out-cols, reduction last)
    mm_dtype = w3.dtype
    mm_bytes = jnp.dtype(mm_dtype).itemsize

    # Explicit VMEM budget (v5e default scoped limit is only 16 MiB); stays well
    # below v7x's 64 MiB physical VMEM by construction of tk/tn.
    est = 2 * (int(z.size) * 4 + int(w1.size) * 4 + int(b1.size) * 4
               + int(w2.size) * mm_bytes + int(b2.size) * 4
               + tk * tn * mm_bytes + tn * 4 + B * tn * 4) + B * h1_dim * 2
    vmem_limit = min(max(int(est * 1.25) + (4 << 20), 32 << 20), 56 << 20)

    kernel = functools.partial(_mlp_kernel, mm_dtype=mm_dtype)

    out = pl.pallas_call(
        kernel,
        out_shape=jax.ShapeDtypeStruct((B, out_pad), jnp.float32),
        grid_spec=pltpu.PrefetchScalarGridSpec(
            num_scalar_prefetch=0,
            grid=grid,
            in_specs=[
                pl.BlockSpec((B, nz), lambda n, k: (0, 0)),                 # z   (resident)
                pl.BlockSpec((nz, h1_dim), lambda n, k: (0, 0)),            # w1  (resident)
                pl.BlockSpec((1, h1_dim), lambda n, k: (0, 0)),             # b1  (resident)
                pl.BlockSpec((num_k, h1_dim, tk), lambda n, k: (0, 0, 0)),  # w2  (resident, DMA'd once)
                pl.BlockSpec((num_k, 1, tk), lambda n, k: (0, 0, 0)),       # b2  (resident)
                pl.BlockSpec((tk, tn), lambda n, k: (k, n)),                # w3  (streamed)
                pl.BlockSpec((1, tn), lambda n, k: (0, n)),                 # b3  tile
            ],
            out_specs=pl.BlockSpec((B, tn), lambda n, k: (0, n)),
            scratch_shapes=[
                pltpu.VMEM((B, h1_dim), mm_dtype),   # resident h1 activations (bf16)
            ],
        ),
        compiler_params=pltpu.CompilerParams(
            dimension_semantics=("parallel", "arbitrary"),
            vmem_limit_bytes=vmem_limit),
    )(z, w1, b1, w2, b2, w3, b3)

    if output_size is not None and output_size != out_pad:
        out = out[:, :output_size]
    return out


def init_params(key, nz, output_size, *, weight_dtype=jnp.bfloat16):
    """nn.Linear-style init (U[-1/sqrt(fan_in), +1/sqrt(fan_in)]) at the module's
    true sizes (100 / 10000 / output_size), then zero-padded to TPU-friendly
    shapes (100->128, 10000->10240, output_size->mult of 128). Zero padding does
    not change the forward output. w2 is stored in a blocked (num_k, 128, tk)
    layout so the kernel keeps it fully resident in VMEM; w2/w3 are bf16 to
    halve the streamed HBM weight bytes."""
    h1_true, h2_true = 100, 10000
    h1_pad = 128
    h2_pad = _round_up(h2_true, 512)             # 10240
    out_pad = _round_up(output_size, 128)
    tn = _choose_tn(out_pad)
    tk = _choose_tk(h2_pad, tn, jnp.dtype(weight_dtype).itemsize)
    num_k = h2_pad // tk

    dims = [(nz, h1_true), (h1_true, h2_true), (h2_true, output_size)]
    raw = {}
    for i, (fan_in, fan_out) in enumerate(dims, start=1):
        key, kw, kb = jax.random.split(key, 3)
        bound = 1.0 / (fan_in ** 0.5)
        raw[f"w{i}"] = jax.random.uniform(kw, (fan_in, fan_out), jnp.float32,
                                          -bound, bound)
        raw[f"b{i}"] = jax.random.uniform(kb, (1, fan_out), jnp.float32,
                                          -bound, bound)

    w1 = jnp.pad(raw["w1"], ((0, 0), (0, h1_pad - h1_true)))
    b1 = jnp.pad(raw["b1"], ((0, 0), (0, h1_pad - h1_true)))
    w2 = jnp.pad(raw["w2"], ((0, h1_pad - h1_true), (0, h2_pad - h2_true)))
    b2 = jnp.pad(raw["b2"], ((0, 0), (0, h2_pad - h2_true)))
    w3 = jnp.pad(raw["w3"], ((0, h2_pad - h2_true), (0, out_pad - output_size)))
    b3 = jnp.pad(raw["b3"], ((0, 0), (0, out_pad - output_size)))

    # Blocked layouts: tile j of w2 is w2[:, j*tk:(j+1)*tk].
    w2b = jnp.transpose(w2.reshape(h1_pad, num_k, tk), (1, 0, 2))   # (num_k, 128, tk)
    b2b = jnp.transpose(b2.reshape(1, num_k, tk), (1, 0, 2))        # (num_k, 1, tk)

    # TODO(synk): quantize streamed w2/w3 to int8 (v5e/v6e) or fp8 (v7x) with
    # per-output-channel scales for another ~2x on the bandwidth-bound path.
    return {
        "w1": w1, "b1": b1,
        "w2": w2b.astype(weight_dtype), "b2": b2b,
        "w3": w3.astype(weight_dtype), "b3": b3,
    }


def linear_decoder_ref(z, params, *, output_size=None):
    """Pure-JAX reference using the exact same stored (padded, bf16) weights."""
    w2b = params["w2"].astype(jnp.float32)
    num_k, h1_pad, tk = w2b.shape
    w2 = jnp.transpose(w2b, (1, 0, 2)).reshape(h1_pad, num_k * tk)
    b2 = params["b2"].reshape(1, num_k * tk)
    h = jnp.maximum(z @ params["w1"] + params["b1"], 0.0)
    h = jnp.maximum(h @ w2 + b2, 0.0)
    y = h @ params["w3"].astype(jnp.float32) + params["b3"]
    if output_size is not None:
        y = y[:, :output_size]
    return y


if __name__ == "__main__":
    nz = 32
    output_size = 128
    batch = 8   # weight traffic is amortized over batch; larger B is ~free while mem-bound

    key = jax.random.PRNGKey(0)
    key, kz = jax.random.split(key)
    z = jax.random.normal(kz, (batch, nz), jnp.float32)
    params = init_params(key, nz, output_size)

    out = jax.block_until_ready(
        linear_decoder_pallas(z, params, output_size=output_size))
    ref = linear_decoder_ref(z, params, output_size=output_size)

    assert out.shape == (batch, output_size), out.shape
    max_err = float(jnp.max(jnp.abs(out - ref)))
    assert jnp.allclose(out, ref, atol=1e-2, rtol=1e-2), max_err

    print("KERNEL_OK")
</pallas_src>

<mosaic_0001>
module attributes {stable_mosaic.version = 11 : i64} {
  func.func @_mlp_kernel(%arg0: i32, %arg1: i32, %arg2: memref<8x32xf32, #tpu.memory_space<vmem>>, %arg3: memref<32x128xf32, #tpu.memory_space<vmem>>, %arg4: memref<1x128xf32, #tpu.memory_space<vmem>>, %arg5: memref<1x128x10240xbf16, #tpu.memory_space<vmem>>, %arg6: memref<1x1x10240xf32, #tpu.memory_space<vmem>>, %arg7: memref<10240x128xbf16, #tpu.memory_space<vmem>>, %arg8: memref<1x128xf32, #tpu.memory_space<vmem>>, %arg9: memref<8x128xf32, #tpu.memory_space<vmem>>, %arg10: memref<8x128xbf16, #tpu.memory_space<vmem>>) attributes {dimension_semantics = [#tpu.dimension_semantics<parallel>, #tpu.dimension_semantics<arbitrary>], iteration_bounds = array<i64: 1, 1>, scalar_prefetch = 0 : i64, scratch_operands = 1 : i64, tpu.core_type = #tpu.core_type<tc>, window_params = [{pipeline_mode = #tpu.pipeline_mode<synchronous>, transform_indices = @transform_0, window_bounds = array<i64: 8, 32>}, {pipeline_mode = #tpu.pipeline_mode<synchronous>, transform_indices = @transform_1, window_bounds = array<i64: 32, 128>}, {pipeline_mode = #tpu.pipeline_mode<synchronous>, transform_indices = @transform_2, window_bounds = array<i64: 1, 128>}, {pipeline_mode = #tpu.pipeline_mode<synchronous>, transform_indices = @transform_3, window_bounds = array<i64: 1, 128, 10240>}, {pipeline_mode = #tpu.pipeline_mode<synchronous>, transform_indices = @transform_4, window_bounds = array<i64: 1, 1, 10240>}, {transform_indices = @transform_5, window_bounds = array<i64: 10240, 128>}, {transform_indices = @transform_6, window_bounds = array<i64: 1, 128>}, {transform_indices = @transform_7, window_bounds = array<i64: 8, 128>}]} {
    %c0_i32 = arith.constant 0 : i32
    %0 = arith.cmpi eq, %arg1, %c0_i32 : i32
    %1 = arith.extui %0 : i1 to i32
    %c0_i32_0 = arith.constant 0 : i32
    %2 = arith.cmpi ne, %1, %c0_i32_0 : i32
    scf.if %2 {
      %c0_14 = arith.constant 0 : index
      %c0_15 = arith.constant 0 : index
      %21 = vector.load %arg2[%c0_14, %c0_15] : memref<8x32xf32, #tpu.memory_space<vmem>>, vector<8x32xf32>
      %c0_16 = arith.constant 0 : index
      %c0_17 = arith.constant 0 : index
      %22 = vector.load %arg3[%c0_16, %c0_17] : memref<32x128xf32, #tpu.memory_space<vmem>>, vector<32x128xf32>
      %cst_18 = arith.constant dense<0.000000e+00> : vector<8x128xf32>
      %23 = tpu.matmul %21, %22, %cst_18 {dimension_numbers = #tpu.dot_dimension_numbers<[1], [0], [0], [1], [0, 0, 1, 1], [], []>} : vector<8x32xf32>, vector<32x128xf32>, vector<8x128xf32> -> vector<8x128xf32>
      %c0_19 = arith.constant 0 : index
      %c0_20 = arith.constant 0 : index
      %24 = vector.load %arg4[%c0_19, %c0_20] : memref<1x128xf32, #tpu.memory_space<vmem>>, vector<1x128xf32>
      %25 = vector.broadcast %24 : vector<1x128xf32> to vector<8x128xf32>
      %26 = arith.addf %23, %25 : vector<8x128xf32>
      %cst_21 = arith.constant 0.000000e+00 : f32
      %27 = vector.broadcast %cst_21 : f32 to vector<8x128xf32>
      %28 = arith.maximumf %26, %27 : vector<8x128xf32>
      %29 = arith.truncf %28 : vector<8x128xf32> to vector<8x128xbf16>
      %c0_22 = arith.constant 0 : index
      %c0_23 = arith.constant 0 : index
      %30 = vector.load %arg10[%c0_22, %c0_23] : memref<8x128xbf16, #tpu.memory_space<vmem>>, vector<8x128xbf16>
      tpu.vector_store %arg10[%c0_22, %c0_23], %29 {strides = array<i32>} : memref<8x128xbf16, #tpu.memory_space<vmem>>, vector<8x128xbf16>,
      %c0_24 = arith.constant 0 : index
      %c0_25 = arith.constant 0 : index
      %31 = vector.load %arg8[%c0_24, %c0_25] : memref<1x128xf32, #tpu.memory_space<vmem>>, vector<1x128xf32>
      %32 = vector.shape_cast %31 : vector<1x128xf32> to vector<1x128xf32>
      %33 = vector.broadcast %32 : vector<1x128xf32> to vector<8x128xf32>
      %c0_26 = arith.constant 0 : index
      %c0_27 = arith.constant 0 : index
      %34 = vector.load %arg9[%c0_26, %c0_27] : memref<8x128xf32, #tpu.memory_space<vmem>>, vector<8x128xf32>
      tpu.vector_store %arg9[%c0_26, %c0_27], %33 {strides = array<i32>} : memref<8x128xf32, #tpu.memory_space<vmem>>, vector<8x128xf32>,
    } else {
    }
    %c0 = arith.constant 0 : index
    %c0_1 = arith.constant 0 : index
    %3 = vector.load %arg10[%c0, %c0_1] : memref<8x128xbf16, #tpu.memory_space<vmem>>, vector<8x128xbf16>
    %4 = arith.index_cast %arg1 : i32 to index
    %c0_2 = arith.constant 0 : index
    %c0_3 = arith.constant 0 : index
    %5 = vector.load %arg5[%4, %c0_2, %c0_3] : memref<1x128x10240xbf16, #tpu.memory_space<vmem>>, vector<1x128x10240xbf16>
    %6 = vector.shape_cast %5 : vector<1x128x10240xbf16> to vector<128x10240xbf16>
    %cst = arith.constant dense<0.000000e+00> : vector<8x10240xf32>
    %7 = tpu.matmul %3, %6, %cst {dimension_numbers = #tpu.dot_dimension_numbers<[1], [0], [0], [1], [0, 0, 1, 1], [], []>} : vector<8x128xbf16>, vector<128x10240xbf16>, vector<8x10240xf32> -> vector<8x10240xf32>
    %8 = arith.index_cast %arg1 : i32 to index
    %c0_4 = arith.constant 0 : index
    %c0_5 = arith.constant 0 : index
    %9 = vector.load %arg6[%8, %c0_4, %c0_5] : memref<1x1x10240xf32, #tpu.memory_space<vmem>>, vector<1x1x10240xf32>
    %10 = vector.shape_cast %9 : vector<1x1x10240xf32> to vector<1x10240xf32>
    %11 = vector.broadcast %10 : vector<1x10240xf32> to vector<8x10240xf32>
    %12 = arith.addf %7, %11 : vector<8x10240xf32>
    %cst_6 = arith.constant 0.000000e+00 : f32
    %13 = vector.broadcast %cst_6 : f32 to vector<8x10240xf32>
    %14 = arith.maximumf %12, %13 : vector<8x10240xf32>
    %c0_7 = arith.constant 0 : index
    %c0_8 = arith.constant 0 : index
    %15 = vector.load %arg9[%c0_7, %c0_8] : memref<8x128xf32, #tpu.memory_space<vmem>>, vector<8x128xf32>
    %16 = arith.truncf %14 : vector<8x10240xf32> to vector<8x10240xbf16>
    %c0_9 = arith.constant 0 : index
    %c0_10 = arith.constant 0 : index
    %17 = vector.load %arg7[%c0_9, %c0_10] : memref<10240x128xbf16, #tpu.memory_space<vmem>>, vector<10240x128xbf16>
    %cst_11 = arith.constant dense<0.000000e+00> : vector<8x128xf32>
    %18 = tpu.matmul %16, %17, %cst_11 {dimension_numbers = #tpu.dot_dimension_numbers<[1], [0], [0], [1], [0, 0, 1, 1], [], []>} : vector<8x10240xbf16>, vector<10240x128xbf16>, vector<8x128xf32> -> vector<8x128xf32>
    %19 = arith.addf %15, %18 : vector<8x128xf32>
    %c0_12 = arith.constant 0 : index
    %c0_13 = arith.constant 0 : index
    %20 = vector.load %arg9[%c0_12, %c0_13] : memref<8x128xf32, #tpu.memory_space<vmem>>, vector<8x128xf32>
    tpu.vector_store %arg9[%c0_12, %c0_13], %19 {strides = array<i32>} : memref<8x128xf32, #tpu.memory_space<vmem>>, vector<8x128xf32>,
    return
  }
  func.func @transform_0(%arg0: i32, %arg1: i32) -> (i32, i32) {
    %c0_i32 = arith.constant 0 : i32
    %c0_i32_0 = arith.constant 0 : i32
    %c0_i32_1 = arith.constant 0 : i32
    return %c0_i32, %c0_i32_0 : i32, i32
  }
  func.func @transform_1(%arg0: i32, %arg1: i32) -> (i32, i32) {
    %c0_i32 = arith.constant 0 : i32
    %c0_i32_0 = arith.constant 0 : i32
    %c0_i32_1 = arith.constant 0 : i32
    return %c0_i32, %c0_i32_0 : i32, i32
  }
  func.func @transform_2(%arg0: i32, %arg1: i32) -> (i32, i32) {
    %c0_i32 = arith.constant 0 : i32
    %c0_i32_0 = arith.constant 0 : i32
    %c0_i32_1 = arith.constant 0 : i32
    return %c0_i32, %c0_i32_0 : i32, i32
  }
  func.func @transform_3(%arg0: i32, %arg1: i32) -> (i32, i32, i32) {
    %c0_i32 = arith.constant 0 : i32
    %c0_i32_0 = arith.constant 0 : i32
    %c0_i32_1 = arith.constant 0 : i32
    %c0_i32_2 = arith.constant 0 : i32
    return %c0_i32, %c0_i32_0, %c0_i32_1 : i32, i32, i32
  }
  func.func @transform_4(%arg0: i32, %arg1: i32) -> (i32, i32, i32) {
    %c0_i32 = arith.constant 0 : i32
    %c0_i32_0 = arith.constant 0 : i32
    %c0_i32_1 = arith.constant 0 : i32
    %c0_i32_2 = arith.constant 0 : i32
    return %c0_i32, %c0_i32_0, %c0_i32_1 : i32, i32, i32
  }
  func.func @transform_5(%arg0: i32, %arg1: i32) -> (i32, i32) {
    %c0_i32 = arith.constant 0 : i32
    return %arg1, %arg0 : i32, i32
  }
  func.func @transform_6(%arg0: i32, %arg1: i32) -> (i32, i32) {
    %c0_i32 = arith.constant 0 : i32
    %c0_i32_0 = arith.constant 0 : i32
    return %c0_i32, %arg0 : i32, i32
  }
  func.func @transform_7(%arg0: i32, %arg1: i32) -> (i32, i32) {
    %c0_i32 = arith.constant 0 : i32
    %c0_i32_0 = arith.constant 0 : i32
    return %c0_i32, %arg0 : i32, i32
  }
}

</mosaic_0001>

<llo_original>
// kernel: tpu_custom_call.1
$region0: #{tpu_custom_call.1}
  #allocation0 [shape = 'u32[]', space=smem, size = 0x4, offset = 0x4, fixed_abs, tag = 'smem constant byte address 0x4 - core index']
  #allocation1 [shape = 'u32[144,128]{1,0:T(1,128)}', space=vmem, size = 0x12000, scoped, tag = 'internal scratch']
  #allocation2 [shape = 'bf16[8,128]{1,0:T(8,128)(2,1)}', space=vmem, size = 0x800, scoped, tag = 'scratch operand']
  %s0 = inlined_call_operand.hbm [shape: f32[8,32], index: 0, kind: input, shape index: {}]
  %s1 = inlined_call_operand.hbm [shape: f32[32,128], index: 1, kind: input, shape index: {}]
  %s2 = inlined_call_operand.hbm [shape: f32[1,128], index: 2, kind: input, shape index: {}]
  %s3 = inlined_call_operand.hbm [shape: bf16[1,128,10240], index: 3, kind: input, shape index: {}]
  %s4 = inlined_call_operand.hbm [shape: f32[1,1,10240], index: 4, kind: input, shape index: {}]
  %s5 = inlined_call_operand.hbm [shape: bf16[10240,128], index: 5, kind: input, shape index: {}]
  %s6 = inlined_call_operand.hbm [shape: f32[1,128], index: 6, kind: input, shape index: {}]
  %s7 = inlined_call_operand.hbm [shape: f32[8,128], index: 7, kind: output, shape index: {}]
  %s8 = sld [smem:[#allocation0]]
  $region70: #{tpu_custom_call.1} parent=0
    _
  %s10 = ssub.s32 1, %s8
  %s11 = scalar_select 0, %s10, %s8
  $region1: #{tpu_custom_call.1} parent=0
    #allocation3 [shape = 'u8[4096]{0}', space=vmem, size = 0x1000, scoped, tag = 'input window, operand 0, single buffered']
    #allocation4 [shape = 's32[1]{0}', space=sflag, size = 0x4, scoped, tag = 'scoped memory for tpu_custom_call.1']
    #allocation5 [shape = 's32[1]{0}', space=sflag, size = 0x4, scoped, tag = 'scoped memory for tpu_custom_call.1']
    #allocation6 [shape = 'u8[16384]{0}', space=vmem, size = 0x4000, scoped, tag = 'input window, operand 1, single buffered']
    #allocation7 [shape = 's32[1]{0}', space=sflag, size = 0x4, scoped, tag = 'scoped memory for tpu_custom_call.1']
    #allocation8 [shape = 'u8[512]{0}', space=vmem, size = 0x400, scoped, tag = 'input window, operand 2, single buffered']
    #allocation9 [shape = 'u8[2621440]{0}', space=vmem, size = 0x280000, scoped, tag = 'input window, operand 3, single buffered']
    #allocation10 [shape = 's32[1]{0}', space=sflag, size = 0x4, scoped, tag = 'scoped memory for tpu_custom_call.1']
    #allocation11 [shape = 'u8[40960]{0}', space=vmem, size = 0xa000, scoped, tag = 'input window, operand 4, single buffered']
    #allocation12 [shape = 'u8[2621440]{0}', space=vmem, size = 0x280000, scoped, tag = 'input window, operand 5, single buffered']
    #allocation13 [shape = 's32[1]{0}', space=sflag, size = 0x4, scoped, tag = 'scoped memory for tpu_custom_call.1']
    #allocation14 [shape = 'u8[512]{0}', space=vmem, size = 0x400, scoped, tag = 'input window, operand 6, single buffered']
    #allocation15 [shape = 'u8[4096]{0}', space=vmem, size = 0x1000, scoped, tag = 'output window, operand 0, single buffered']
    %12 = vsyncpa [#allocation4], 0
    %13 = vsyncpa [#allocation7], 0
    %14 = vsyncpa [#allocation10], 0
    %15 = vsyncpa [#allocation13], 0
    %16 = vsyncpa [#allocation5], 0
    // Predicated region
    $region2: #{tpu_custom_call.1} parent=1 // pred_check
      _
    $region3: #{tpu_custom_call.1} parent=1 // pred_check_branch
      %18 = sbr.rel (0) target = $region5
    $region4: #{tpu_custom_call.1} parent=1 // pred_region
      %s20 = ssub.s32 128, 128
      %21 = vsyncadd [#allocation4], %s20
      %s23 = sshll.u32 [#allocation3], 4
      %s24 = int_to_ptr.vmem [resolvable:$true] %s23
      %26 = dma.hbm_to_vmem [thread:$0]  %s0, 128, %s24, [#allocation4]
    $region5: #{tpu_custom_call.1} parent=1 // pred_fallthru
      _
    // Predicated region
    $region6: #{tpu_custom_call.1} parent=1 // pred_check
      _
    $region7: #{tpu_custom_call.1} parent=1 // pred_check_branch
      %28 = sbr.rel (0) target = $region9
    $region8: #{tpu_custom_call.1} parent=1 // pred_region
      %s30 = ssub.s32 512, 512
      %31 = vsyncadd [#allocation7], %s30
      %s32 = sshll.u32 [#allocation6], 4
      %s33 = int_to_ptr.vmem [resolvable:$true] %s32
      %38 = dma.hbm_to_vmem [thread:$0]  %s1, 512, %s33, [#allocation7], 128, 128, 8
    $region9: #{tpu_custom_call.1} parent=1 // pred_fallthru
      _
    // Predicated region
    $region10: #{tpu_custom_call.1} parent=1 // pred_check
      _
    $region11: #{tpu_custom_call.1} parent=1 // pred_check_branch
      %40 = sbr.rel (0) target = $region13
    $region12: #{tpu_custom_call.1} parent=1 // pred_region
      %s42 = ssub.s32 16, 16
      %43 = vsyncadd [#allocation7], %s42
      %s45 = sshll.u32 [#allocation8], 4
      %s46 = int_to_ptr.vmem [resolvable:$true] %s45
      %48 = dma.hbm_to_vmem [thread:$0]  %s2, 16, %s46, [#allocation7]
    $region13: #{tpu_custom_call.1} parent=1 // pred_fallthru
      _
    // Predicated region
    $region14: #{tpu_custom_call.1} parent=1 // pred_check
      _
    $region15: #{tpu_custom_call.1} parent=1 // pred_check_branch
      %50 = sbr.rel (0) target = $region17
    $region16: #{tpu_custom_call.1} parent=1 // pred_region
      %s52 = ssub.s32 81920, 81920
      %53 = vsyncadd [#allocation10], %s52
      %s54 = sshll.u32 [#allocation9], 4
      %s55 = int_to_ptr.vmem [resolvable:$true] %s54
      %60 = dma.hbm_to_vmem [thread:$0]  %s3, 81920, %s55, [#allocation10], 5120, 5120, 320
    $region17: #{tpu_custom_call.1} parent=1 // pred_fallthru
      _
    // Predicated region
    $region18: #{tpu_custom_call.1} parent=1 // pred_check
      _
    $region19: #{tpu_custom_call.1} parent=1 // pred_check_branch
      %62 = sbr.rel (0) target = $region21
    $region20: #{tpu_custom_call.1} parent=1 // pred_region
      %s64 = ssub.s32 1280, 1280
      %65 = vsyncadd [#allocation10], %s64
      %s67 = sshll.u32 [#allocation11], 4
      %s68 = int_to_ptr.vmem [resolvable:$true] %s67
      %70 = dma.hbm_to_vmem [thread:$0]  %s4, 1280, %s68, [#allocation10]
    $region21: #{tpu_custom_call.1} parent=1 // pred_fallthru
      _
    // Predicated region
    $region22: #{tpu_custom_call.1} parent=1 // pred_check
      _
    $region23: #{tpu_custom_call.1} parent=1 // pred_check_branch
      %72 = sbr.rel (0) target = $region25
    $region24: #{tpu_custom_call.1} parent=1 // pred_region
      %s74 = ssub.s32 81920, 81920
      %75 = vsyncadd [#allocation13], %s74
      %s76 = sshll.u32 [#allocation12], 4
      %s77 = int_to_ptr.vmem [resolvable:$true] %s76
      %82 = dma.hbm_to_vmem [thread:$0]  %s5, 81920, %s77, [#allocation13], 64, 64, 4
    $region25: #{tpu_custom_call.1} parent=1 // pred_fallthru
      _
    // Predicated region
    $region26: #{tpu_custom_call.1} parent=1 // pred_check
      _
    $region27: #{tpu_custom_call.1} parent=1 // pred_check_branch
      %84 = sbr.rel (0) target = $region29
    $region28: #{tpu_custom_call.1} parent=1 // pred_region
      %s86 = ssub.s32 16, 16
      %87 = vsyncadd [#allocation13], %s86
      %s89 = sshll.u32 [#allocation14], 4
      %s90 = int_to_ptr.vmem [resolvable:$true] %s89
      %92 = dma.hbm_to_vmem [thread:$0]  %s6, 16, %s90, [#allocation13]
    $region29: #{tpu_custom_call.1} parent=1 // pred_fallthru
      _
    // Predicated region
    $region30: #{tpu_custom_call.1} parent=1 // pred_check
      _
    $region31: #{tpu_custom_call.1} parent=1 // pred_check_branch
      %94 = sbr.rel (0) target = $region33
    $region32: #{tpu_custom_call.1} parent=1 // pred_region
      %95 = dma.done [#allocation4], 128
    $region33: #{tpu_custom_call.1} parent=1 // pred_fallthru
      _
    // Predicated region
    $region34: #{tpu_custom_call.1} parent=1 // pred_check
      _
    $region35: #{tpu_custom_call.1} parent=1 // pred_check_branch
      %97 = sbr.rel (0) target = $region37
    $region36: #{tpu_custom_call.1} parent=1 // pred_region
      %98 = dma.done [#allocation7], 512
    $region37: #{tpu_custom_call.1} parent=1 // pred_fallthru
      _
    // Predicated region
    $region38: #{tpu_custom_call.1} parent=1 // pred_check
      _
    $region39: #{tpu_custom_call.1} parent=1 // pred_check_branch
      %100 = sbr.rel (0) target = $region41
    $region40: #{tpu_custom_call.1} parent=1 // pred_region
      %101 = dma.done [#allocation7], 16
    $region41: #{tpu_custom_call.1} parent=1 // pred_fallthru
      _
    // Predicated region
    $region42: #{tpu_custom_call.1} parent=1 // pred_check
      _
    $region43: #{tpu_custom_call.1} parent=1 // pred_check_branch
      %103 = sbr.rel (0) target = $region45
    $region44: #{tpu_custom_call.1} parent=1 // pred_region
      %104 = dma.done [#allocation10], 81920
    $region45: #{tpu_custom_call.1} parent=1 // pred_fallthru
      _
    // Predicated region
    $region46: #{tpu_custom_call.1} parent=1 // pred_check
      _
    $region47: #{tpu_custom_call.1} parent=1 // pred_check_branch
      %106 = sbr.rel (0) target = $region49
    $region48: #{tpu_custom_call.1} parent=1 // pred_region
      %107 = dma.done [#allocation10], 1280
    $region49: #{tpu_custom_call.1} parent=1 // pred_fallthru
      _
    // Predicated region
    $region50: #{tpu_custom_call.1} parent=1 // pred_check
      _
    $region51: #{tpu_custom_call.1} parent=1 // pred_check_branch
      %109 = sbr.rel (0) target = $region53
    $region52: #{tpu_custom_call.1} parent=1 // pred_region
      %110 = dma.done [#allocation13], 81920
    $region53: #{tpu_custom_call.1} parent=1 // pred_fallthru
      _
    // Predicated region
    $region54: #{tpu_custom_call.1} parent=1 // pred_check
      _
    $region55: #{tpu_custom_call.1} parent=1 // pred_check_branch
      %112 = sbr.rel (0) target = $region57
    $region56: #{tpu_custom_call.1} parent=1 // pred_region
      %113 = dma.done [#allocation13], 16
    $region57: #{tpu_custom_call.1} parent=1 // pred_fallthru
      _
    %p115 = scmp.eq.s32.totalorder 0, 0
    // Predicated region
    $region58: #{tpu_custom_call.1} parent=1 // pred_check
      %p116 = pneg %p115
    $region59: #{tpu_custom_call.1} parent=1 // pred_check_branch
      %118 = sbr.rel (%p116) target = $region61
    $region60: #{tpu_custom_call.1} parent=1 // pred_region
      %v119 = vld [vmem:[#allocation3] sm:$0xff]
      %v120 = vld [vmem:[#allocation6] sm:$0xff]
      %v121 = vld [vmem:[#allocation6 + $0x8] sm:$0xff]
      %v122 = vld [vmem:[#allocation6 + $0x10] sm:$0xff]
      %v123 = vld [vmem:[#allocation6 + $0x18] sm:$0xff]
      %v124 = vld [vmem:[#allocation8] sm:$0x1]
      %v126 = vlaneseq
      %v127 = vshrl.u32 %v126, 7
      %v128 = vsub.s32 0, %v127
      %v129 = vrot.slane %v124, %v128
      %vm131 = vcmask 261120
      %v133 = vsel %vm131, %v119, 0
      %135 = vmatprep.subr.mxu0 0.0
      %136 = vmatpush1.msra.mxu0 %v120
      %137 = vmatprep.subr.mxu0 0.0
      %138 = vmatpush1.msra.mxu0 %v121
      %139 = vmatprep.subr.mxu0 0.0
      %140 = vmatpush1.msra.mxu0 %v122
      %141 = vmatprep.subr.mxu0 0.0
      %142 = vmatpush1.msra.mxu0 %v123
      %143 = vmatprep.subr.mxu0 0.0
      %144 = vmatpush1.msra.mxu0 0.0
      %145 = vmatprep.subr.mxu0 0.0
      %146 = vmatpush1.msra.mxu0 0.0
      %147 = vmatprep.subr.mxu0 0.0
      %148 = vmatpush1.msra.mxu0 0.0
      %149 = vmatprep.subr.mxu0 0.0
      %150 = vmatpush1.msra.mxu0 0.0
      %151 = vmatprep.subr.mxu0 0.0
      %152 = vmatpush1.msra.mxu0 0.0
      %153 = vmatprep.subr.mxu0 0.0
      %154 = vmatpush1.msra.mxu0 0.0
      %155 = vmatprep.subr.mxu0 0.0
      %156 = vmatpush1.msra.mxu0 0.0
      %157 = vmatprep.subr.mxu0 0.0
      %158 = vmatpush1.msra.mxu0 0.0
      %159 = vmatprep.subr.mxu0 0.0
      %160 = vmatpush1.msra.mxu0 0.0
      %161 = vmatprep.subr.mxu0 0.0
      %162 = vmatpush1.msra.mxu0 0.0
      %163 = vmatprep.subr.mxu0 0.0
      %164 = vmatpush1.msra.mxu0 0.0
      %165 = vmatprep.subr.mxu0 0.0
      %166 = vmatpush1.msra.mxu0 0.0
      %167 = vmatprep.subr.mxu0 0.0
      %168 = vmatpush1.msra.mxu0 0.0
      %169 = vmatprep.subr.mxu0 0.0
      %170 = vmatpush1.msra.mxu0 0.0
      %171 = vmatprep.subr.mxu0 0.0
      %172 = vmatpush1.msra.mxu0 0.0
      %173 = vmatprep.subr.mxu0 0.0
      %174 = vmatpush1.msra.mxu0 0.0
      %175 = vmatprep.subr.mxu0 0.0
      %176 = vmatpush1.msra.mxu0 0.0
      %177 = vmatprep.subr.mxu0 0.0
      %178 = vmatpush1.msra.mxu0 0.0
      %179 = vmatprep.subr.mxu0 0.0
      %180 = vmatpush1.msra.mxu0 0.0
      %181 = vmatprep.subr.mxu0 0.0
      %182 = vmatpush1.msra.mxu0 0.0
      %183 = vmatprep.subr.mxu0 0.0
      %184 = vmatpush1.msra.mxu0 0.0
      %185 = vmatprep.subr.mxu0 0.0
      %186 = vmatpush1.msra.mxu0 0.0
      %187 = vmatprep.subr.mxu0 0.0
      %188 = vmatpush1.msra.mxu0 0.0
      %189 = vmatprep.subr.mxu0 0.0
      %190 = vmatpush1.msra.mxu0 0.0
      %191 = vmatprep.subr.mxu0 0.0
      %192 = vmatpush1.msra.mxu0 0.0
      %193 = vmatprep.subr.mxu0 0.0
      %194 = vmatpush1.msra.mxu0 0.0
      %195 = vmatprep.subr.mxu0 0.0
      %196 = vmatpush1.msra.mxu0 0.0
      %197 = vmatprep.subr.mxu0 0.0
      %198 = vmatpush1.msra.mxu0 0.0
      %199 = vmatprep.mubr.f32.mxu0 0.0
      %200 = vmatmul.mubr.f32.gmra.mrb[0].mxu0 %v133
      %v201 = vpop.f32.mrb[0].mxu0
      %v202 = vadd.f32 %v129, %v201
      %v203 = vpop.f32.mrb[0].mxu0
      %204 = vdwg.mxu0
      %v205 = vmax.f32 %v202, 0.0
      %v206 = vpack.c.bf16 %v205, %v205
      %207 = vst [vmem:[#allocation2] sm:$0xf] %v206
      %v208 = vld [vmem:[#allocation14] sm:$0x1]
      %v210 = vlaneseq
      %v211 = vshrl.u32 %v210, 7
      %v212 = vsub.s32 0, %v211
      %v213 = vrot.slane %v208, %v212
      %215 = vst [vmem:[#allocation15] sm:$0xff] %v213
    $region61: #{tpu_custom_call.1} parent=1 // pred_fallthru
      _
    %v216 = vld [vmem:[#allocation2] sm:$0xf]
    %s217 = smul.u32 0, 1280
    %s218 = smul.addr %s217, 4
    %s219 = scalar_lea.vmem [#allocation9], %s218
    %v220 = vld [vmem:[%s219] sm:$0xff]
    %v221 = vld [vmem:[%s219 + $0x8] sm:$0xff]
    %v222 = vld [vmem:[%s219 + $0x10] sm:$0xff]
    %v223 = vld [vmem:[%s219 + $0x18] sm:$0xff]
    %v224 = vld [vmem:[%s219 + $0x20] sm:$0xff]
    %v225 = vld [vmem:[%s219 + $0x28] sm:$0xff]
    %v226 = vld [vmem:[%s219 + $0x30] sm:$0xff]
    %v227 = vld [vmem:[%s219 + $0x38] sm:$0xff]
    %v228 = vld [vmem:[%s219 + $0x40] sm:$0xff]
    %v229 = vld [vmem:[%s219 + $0x48] sm:$0xff]
    %v230 = vld [vmem:[%s219 + $0x50] sm:$0xff]
    %v231 = vld [vmem:[%s219 + $0x58] sm:$0xff]
    %v232 = vld [vmem:[%s219 + $0x60] sm:$0xff]
    %v233 = vld [vmem:[%s219 + $0x68] sm:$0xff]
    %v234 = vld [vmem:[%s219 + $0x70] sm:$0xff]
    %v235 = vld [vmem:[%s219 + $0x78] sm:$0xff]
    %v236 = vld [vmem:[%s219 + $0x80] sm:$0xff]
    %v237 = vld [vmem:[%s219 + $0x88] sm:$0xff]
    %v238 = vld [vmem:[%s219 + $0x90] sm:$0xff]
    %v239 = vld [vmem:[%s219 + $0x98] sm:$0xff]
    %v240 = vld [vmem:[%s219 + $0xa0] sm:$0xff]
    %v241 = vld [vmem:[%s219 + $0xa8] sm:$0xff]
    %v242 = vld [vmem:[%s219 + $0xb0] sm:$0xff]
    %v243 = vld [vmem:[%s219 + $0xb8] sm:$0xff]
    %v244 = vld [vmem:[%s219 + $0xc0] sm:$0xff]
    %v245 = vld [vmem:[%s219 + $0xc8] sm:$0xff]
    %v246 = vld [vmem:[%s219 + $0xd0] sm:$0xff]
    %v247 = vld [vmem:[%s219 + $0xd8] sm:$0xff]
    %v248 = vld [vmem:[%s219 + $0xe0] sm:$0xff]
    %v249 = vld [vmem:[%s219 + $0xe8] sm:$0xff]
    %v250 = vld [vmem:[%s219 + $0xf0] sm:$0xff]
    %v251 = vld [vmem:[%s219 + $0xf8] sm:$0xff]
    %v252 = vld [vmem:[%s219 + $0x100] sm:$0xff]
    %v253 = vld [vmem:[%s219 + $0x108] sm:$0xff]
    %v254 = vld [vmem:[%s219 + $0x110] sm:$0xff]
    %v255 = vld [vmem:[%s219 + $0x118] sm:$0xff]
    %v256 = vld [vmem:[%s219 + $0x120] sm:$0xff]
    %v257 = vld [vmem:[%s219 + $0x128] sm:$0xff]
    %v258 = vld [vmem:[%s219 + $0x130] sm:$0xff]
    %v259 = vld [vmem:[%s219 + $0x138] sm:$0xff]
    %v260 = vld [vmem:[%s219 + $0x140] sm:$0xff]
    %v261 = vld [vmem:[%s219 + $0x148] sm:$0xff]
    %v262 = vld [vmem:[%s219 + $0x150] sm:$0xff]
    %v263 = vld [vmem:[%s219 + $0x158] sm:$0xff]
    %v264 = vld [vmem:[%s219 + $0x160] sm:$0xff]
    %v265 = vld [vmem:[%s219 + $0x168] sm:$0xff]
    %v266 = vld [vmem:[%s219 + $0x170] sm:$0xff]
    %v267 = vld [vmem:[%s219 + $0x178] sm:$0xff]
    %v268 = vld [vmem:[%s219 + $0x180] sm:$0xff]
    %v269 = vld [vmem:[%s219 + $0x188] sm:$0xff]
    %v270 = vld [vmem:[%s219 + $0x190] sm:$0xff]
    %v271 = vld [vmem:[%s219 + $0x198] sm:$0xff]
    %v272 = vld [vmem:[%s219 + $0x1a0] sm:$0xff]
    %v273 = vld [vmem:[%s219 + $0x1a8] sm:$0xff]
    %v274 = vld [vmem:[%s219 + $0x1b0] sm:$0xff]
    %v275 = vld [vmem:[%s219 + $0x1b8] sm:$0xff]
    %v276 = vld [vmem:[%s219 + $0x1c0] sm:$0xff]
    %v277 = vld [vmem:[%s219 + $0x1c8] sm:$0xff]
    %v278 = vld [vmem:[%s219 + $0x1d0] sm:$0xff]
    %v279 = vld [vmem:[%s219 + $0x1d8] sm:$0xff]
    %v280 = vld [vmem:[%s219 + $0x1e0] sm:$0xff]
    %v281 = vld [vmem:[%s219 + $0x1e8] sm:$0xff]
    %v282 = vld [vmem:[%s219 + $0x1f0] sm:$0xff]
    %v283 = vld [vmem:[%s219 + $0x1f8] sm:$0xff]
    %v284 = vld [vmem:[%s219 + $0x200] sm:$0xff]
    %v285 = vld [vmem:[%s219 + $0x208] sm:$0xff]
    %v286 = vld [vmem:[%s219 + $0x210] sm:$0xff]
    %v287 = vld [vmem:[%s219 + $0x218] sm:$0xff]
    %v288 = vld [vmem:[%s219 + $0x220] sm:$0xff]
    %v289 = vld [vmem:[%s219 + $0x228] sm:$0xff]
    %v290 = vld [vmem:[%s219 + $0x230] sm:$0xff]
    %v291 = vld [vmem:[%s219 + $0x238] sm:$0xff]
    %v292 = vld [vmem:[%s219 + $0x240] sm:$0xff]
    %v293 = vld [vmem:[%s219 + $0x248] sm:$0xff]
    %v294 = vld [vmem:[%s219 + $0x250] sm:$0xff]
    %v295 = vld [vmem:[%s219 + $0x258] sm:$0xff]
    %v296 = vld [vmem:[%s219 + $0x260] sm:$0xff]
    %v297 = vld [vmem:[%s219 + $0x268] sm:$0xff]
    %v298 = vld [vmem:[%s219 + $0x270] sm:$0xff]
    %v299 = vld [vmem:[%s219 + $0x278] sm:$0xff]
    %v300 = vld [vmem:[%s219 + $0x280] sm:$0xff]
    %v301 = vld [vmem:[%s219 + $0x288] sm:$0xff]
    %v302 = vld [vmem:[%s219 + $0x290] sm:$0xff]
    %v303 = vld [vmem:[%s219 + $0x298] sm:$0xff]
    %v304 = vld [vmem:[%s219 + $0x2a0] sm:$0xff]
    %v305 = vld [vmem:[%s219 + $0x2a8] sm:$0xff]
    %v306 = vld [vmem:[%s219 + $0x2b0] sm:$0xff]
    %v307 = vld [vmem:[%s219 + $0x2b8] sm:$0xff]
    %v308 = vld [vmem:[%s219 + $0x2c0] sm:$0xff]
    %v309 = vld [vmem:[%s219 + $0x2c8] sm:$0xff]
    %v310 = vld [vmem:[%s219 + $0x2d0] sm:$0xff]
    %v311 = vld [vmem:[%s219 + $0x2d8] sm:$0xff]
    %v312 = vld [vmem:[%s219 + $0x2e0] sm:$0xff]
    %v313 = vld [vmem:[%s219 + $0x2e8] sm:$0xff]
    %v314 = vld [vmem:[%s219 + $0x2f0] sm:$0xff]
    %v315 = vld [vmem:[%s219 + $0x2f8] sm:$0xff]
    %v316 = vld [vmem:[%s219 + $0x300] sm:$0xff]
    %v317 = vld [vmem:[%s219 + $0x308] sm:$0xff]
    %v318 = vld [vmem:[%s219 + $0x310] sm:$0xff]
    %v319 = vld [vmem:[%s219 + $0x318] sm:$0xff]
    %v320 = vld [vmem:[%s219 + $0x320] sm:$0xff]
    %v321 = vld [vmem:[%s219 + $0x328] sm:$0xff]
    %v322 = vld [vmem:[%s219 + $0x330] sm:$0xff]
    %v323 = vld [vmem:[%s219 + $0x338] sm:$0xff]
    %v324 = vld [vmem:[%s219 + $0x340] sm:$0xff]
    %v325 = vld [vmem:[%s219 + $0x348] sm:$0xff]
    %v326 = vld [vmem:[%s219 + $0x350] sm:$0xff]
    %v327 = vld [vmem:[%s219 + $0x358] sm:$0xff]
    %v328 = vld [vmem:[%s219 + $0x360] sm:$0xff]
    %v329 = vld [vmem:[%s219 + $0x368] sm:$0xff]
    %v330 = vld [vmem:[%s219 + $0x370] sm:$0xff]
    %v331 = vld [vmem:[%s219 + $0x378] sm:$0xff]
    %v332 = vld [vmem:[%s219 + $0x380] sm:$0xff]
    %v333 = vld [vmem:[%s219 + $0x388] sm:$0xff]
    %v334 = vld [vmem:[%s219 + $0x390] sm:$0xff]
    %v335 = vld [vmem:[%s219 + $0x398] sm:$0xff]
    %v336 = vld [vmem:[%s219 + $0x3a0] sm:$0xff]
    %v337 = vld [vmem:[%s219 + $0x3a8] sm:$0xff]
    %v338 = vld [vmem:[%s219 + $0x3b0] sm:$0xff]
    %v339 = vld [vmem:[%s219 + $0x3b8] sm:$0xff]
    %v340 = vld [vmem:[%s219 + $0x3c0] sm:$0xff]
    %v341 = vld [vmem:[%s219 + $0x3c8] sm:$0xff]
    %v342 = vld [vmem:[%s219 + $0x3d0] sm:$0xff]
    %v343 = vld [vmem:[%s219 + $0x3d8] sm:$0xff]
    %v344 = vld [vmem:[%s219 + $0x3e0] sm:$0xff]
    %v345 = vld [vmem:[%s219 + $0x3e8] sm:$0xff]
    %v346 = vld [vmem:[%s219 + $0x3f0] sm:$0xff]
    %v347 = vld [vmem:[%s219 + $0x3f8] sm:$0xff]
    %v348 = vld [vmem:[%s219 + $0x400] sm:$0xff]
    %v349 = vld [vmem:[%s219 + $0x408] sm:$0xff]
    %v350 = vld [vmem:[%s219 + $0x410] sm:$0xff]
    %v351 = vld [vmem:[%s219 + $0x418] sm:$0xff]
    %v352 = vld [vmem:[%s219 + $0x420] sm:$0xff]
    %v353 = vld [vmem:[%s219 + $0x428] sm:$0xff]
    %v354 = vld [vmem:[%s219 + $0x430] sm:$0xff]
    %v355 = vld [vmem:[%s219 + $0x438] sm:$0xff]
    %v356 = vld [vmem:[%s219 + $0x440] sm:$0xff]
    %v357 = vld [vmem:[%s219 + $0x448] sm:$0xff]
    %v358 = vld [vmem:[%s219 + $0x450] sm:$0xff]
    %v359 = vld [vmem:[%s219 + $0x458] sm:$0xff]
    %v360 = vld [vmem:[%s219 + $0x460] sm:$0xff]
    %v361 = vld [vmem:[%s219 + $0x468] sm:$0xff]
    %v362 = vld [vmem:[%s219 + $0x470] sm:$0xff]
    %v363 = vld [vmem:[%s219 + $0x478] sm:$0xff]
    %v364 = vld [vmem:[%s219 + $0x480] sm:$0xff]
    %v365 = vld [vmem:[%s219 + $0x488] sm:$0xff]
    %v366 = vld [vmem:[%s219 + $0x490] sm:$0xff]
    %v367 = vld [vmem:[%s219 + $0x498] sm:$0xff]
    %v368 = vld [vmem:[%s219 + $0x4a0] sm:$0xff]
    %v369 = vld [vmem:[%s219 + $0x4a8] sm:$0xff]
    %v370 = vld [vmem:[%s219 + $0x4b0] sm:$0xff]
    %v371 = vld [vmem:[%s219 + $0x4b8] sm:$0xff]
    %v372 = vld [vmem:[%s219 + $0x4c0] sm:$0xff]
    %v373 = vld [vmem:[%s219 + $0x4c8] sm:$0xff]
    %v374 = vld [vmem:[%s219 + $0x4d0] sm:$0xff]
    %v375 = vld [vmem:[%s219 + $0x4d8] sm:$0xff]
    %v376 = vld [vmem:[%s219 + $0x4e0] sm:$0xff]
    %v377 = vld [vmem:[%s219 + $0x4e8] sm:$0xff]
    %v378 = vld [vmem:[%s219 + $0x4f0] sm:$0xff]
    %v379 = vld [vmem:[%s219 + $0x4f8] sm:$0xff]
    %v380 = vld [vmem:[%s219 + $0x500] sm:$0xff]
    %v381 = vld [vmem:[%s219 + $0x508] sm:$0xff]
    %v382 = vld [vmem:[%s219 + $0x510] sm:$0xff]
    %v383 = vld [vmem:[%s219 + $0x518] sm:$0xff]
    %v384 = vld [vmem:[%s219 + $0x520] sm:$0xff]
    %v385 = vld [vmem:[%s219 + $0x528] sm:$0xff]
    %v386 = vld [vmem:[%s219 + $0x530] sm:$0xff]
    %v387 = vld [vmem:[%s219 + $0x538] sm:$0xff]
    %v388 = vld [vmem:[%s219 + $0x540] sm:$0xff]
    %v389 = vld [vmem:[%s219 + $0x548] sm:$0xff]
    %v390 = vld [vmem:[%s219 + $0x550] sm:$0xff]
    %v391 = vld [vmem:[%s219 + $0x558] sm:$0xff]
    %v392 = vld [vmem:[%s219 + $0x560] sm:$0xff]
    %v393 = vld [vmem:[%s219 + $0x568] sm:$0xff]
    %v394 = vld [vmem:[%s219 + $0x570] sm:$0xff]
    %v395 = vld [vmem:[%s219 + $0x578] sm:$0xff]
    %v396 = vld [vmem:[%s219 + $0x580] sm:$0xff]
    %v397 = vld [vmem:[%s219 + $0x588] sm:$0xff]
    %v398 = vld [vmem:[%s219 + $0x590] sm:$0xff]
    %v399 = vld [vmem:[%s219 + $0x598] sm:$0xff]
    %v400 = vld [vmem:[%s219 + $0x5a0] sm:$0xff]
    %v401 = vld [vmem:[%s219 + $0x5a8] sm:$0xff]
    %v402 = vld [vmem:[%s219 + $0x5b0] sm:$0xff]
    %v403 = vld [vmem:[%s219 + $0x5b8] sm:$0xff]
    %v404 = vld [vmem:[%s219 + $0x5c0] sm:$0xff]
    %v405 = vld [vmem:[%s219 + $0x5c8] sm:$0xff]
    %v406 = vld [vmem:[%s219 + $0x5d0] sm:$0xff]
    %v407 = vld [vmem:[%s219 + $0x5d8] sm:$0xff]
    %v408 = vld [vmem:[%s219 + $0x5e0] sm:$0xff]
    %v409 = vld [vmem:[%s219 + $0x5e8] sm:$0xff]
    %v410 = vld [vmem:[%s219 + $0x5f0] sm:$0xff]
    %v411 = vld [vmem:[%s219 + $0x5f8] sm:$0xff]
    %v412 = vld [vmem:[%s219 + $0x600] sm:$0xff]
    %v413 = vld [vmem:[%s219 + $0x608] sm:$0xff]
    %v414 = vld [vmem:[%s219 + $0x610] sm:$0xff]
    %v415 = vld [vmem:[%s219 + $0x618] sm:$0xff]
    %v416 = vld [vmem:[%s219 + $0x620] sm:$0xff]
    %v417 = vld [vmem:[%s219 + $0x628] sm:$0xff]
    %v418 = vld [vmem:[%s219 + $0x630] sm:$0xff]
    %v419 = vld [vmem:[%s219 + $0x638] sm:$0xff]
    %v420 = vld [vmem:[%s219 + $0x640] sm:$0xff]
    %v421 = vld [vmem:[%s219 + $0x648] sm:$0xff]
    %v422 = vld [vmem:[%s219 + $0x650] sm:$0xff]
    %v423 = vld [vmem:[%s219 + $0x658] sm:$0xff]
    %v424 = vld [vmem:[%s219 + $0x660] sm:$0xff]
    %v425 = vld [vmem:[%s219 + $0x668] sm:$0xff]
    %v426 = vld [vmem:[%s219 + $0x670] sm:$0xff]
    %v427 = vld [vmem:[%s219 + $0x678] sm:$0xff]
    %v428 = vld [vmem:[%s219 + $0x680] sm:$0xff]
    %v429 = vld [vmem:[%s219 + $0x688] sm:$0xff]
    %v430 = vld [vmem:[%s219 + $0x690] sm:$0xff]
    %v431 = vld [vmem:[%s219 + $0x698] sm:$0xff]
    %v432 = vld [vmem:[%s219 + $0x6a0] sm:$0xff]
    %v433 = vld [vmem:[%s219 + $0x6a8] sm:$0xff]
    %v434 = vld [vmem:[%s219 + $0x6b0] sm:$0xff]
    %v435 = vld [vmem:[%s219 + $0x6b8] sm:$0xff]
    %v436 = vld [vmem:[%s219 + $0x6c0] sm:$0xff]
    %v437 = vld [vmem:[%s219 + $0x6c8] sm:$0xff]
    %v438 = vld [vmem:[%s219 + $0x6d0] sm:$0xff]
    %v439 = vld [vmem:[%s219 + $0x6d8] sm:$0xff]
    %v440 = vld [vmem:[%s219 + $0x6e0] sm:$0xff]
    %v441 = vld [vmem:[%s219 + $0x6e8] sm:$0xff]
    %v442 = vld [vmem:[%s219 + $0x6f0] sm:$0xff]
    %v443 = vld [vmem:[%s219 + $0x6f8] sm:$0xff]
    %v444 = vld [vmem:[%s219 + $0x700] sm:$0xff]
    %v445 = vld [vmem:[%s219 + $0x708] sm:$0xff]
    %v446 = vld [vmem:[%s219 + $0x710] sm:$0xff]
    %v447 = vld [vmem:[%s219 + $0x718] sm:$0xff]
    %v448 = vld [vmem:[%s219 + $0x720] sm:$0xff]
    %v449 = vld [vmem:[%s219 + $0x728] sm:$0xff]
    %v450 = vld [vmem:[%s219 + $0x730] sm:$0xff]
    %v451 = vld [vmem:[%s219 + $0x738] sm:$0xff]
    %v452 = vld [vmem:[%s219 + $0x740] sm:$0xff]
    %v453 = vld [vmem:[%s219 + $0x748] sm:$0xff]
    %v454 = vld [vmem:[%s219 + $0x750] sm:$0xff]
    %v455 = vld [vmem:[%s219 + $0x758] sm:$0xff]
    %v456 = vld [vmem:[%s219 + $0x760] sm:$0xff]
    %v457 = vld [vmem:[%s219 + $0x768] sm:$0xff]
    %v458 = vld [vmem:[%s219 + $0x770] sm:$0xff]
    %v459 = vld [vmem:[%s219 + $0x778] sm:$0xff]
    %v460 = vld [vmem:[%s219 + $0x780] sm:$0xff]
    %v461 = vld [vmem:[%s219 + $0x788] sm:$0xff]
    %v462 = vld [vmem:[%s219 + $0x790] sm:$0xff]
    %v463 = vld [vmem:[%s219 + $0x798] sm:$0xff]
    %v464 = vld [vmem:[%s219 + $0x7a0] sm:$0xff]
    %v465 = vld [vmem:[%s219 + $0x7a8] sm:$0xff]
    %v466 = vld [vmem:[%s219 + $0x7b0] sm:$0xff]
    %v467 = vld [vmem:[%s219 + $0x7b8] sm:$0xff]
    %v468 = vld [vmem:[%s219 + $0x7c0] sm:$0xff]
    %v469 = vld [vmem:[%s219 + $0x7c8] sm:$0xff]
    %v470 = vld [vmem:[%s219 + $0x7d0] sm:$0xff]
    %v471 = vld [vmem:[%s219 + $0x7d8] sm:$0xff]
    %v472 = vld [vmem:[%s219 + $0x7e0] sm:$0xff]
    %v473 = vld [vmem:[%s219 + $0x7e8] sm:$0xff]
    %v474 = vld [vmem:[%s219 + $0x7f0] sm:$0xff]
    %v475 = vld [vmem:[%s219 + $0x7f8] sm:$0xff]
    %v476 = vld [vmem:[%s219 + $0x800] sm:$0xff]
    %v477 = vld [vmem:[%s219 + $0x808] sm:$0xff]
    %v478 = vld [vmem:[%s219 + $0x810] sm:$0xff]
    %v479 = vld [vmem:[%s219 + $0x818] sm:$0xff]
    %v480 = vld [vmem:[%s219 + $0x820] sm:$0xff]
    %v481 = vld [vmem:[%s219 + $0x828] sm:$0xff]
    %v482 = vld [vmem:[%s219 + $0x830] sm:$0xff]
    %v483 = vld [vmem:[%s219 + $0x838] sm:$0xff]
    %v484 = vld [vmem:[%s219 + $0x840] sm:$0xff]
    %v485 = vld [vmem:[%s219 + $0x848] sm:$0xff]
    %v486 = vld [vmem:[%s219 + $0x850] sm:$0xff]
    %v487 = vld [vmem:[%s219 + $0x858] sm:$0xff]
    %v488 = vld [vmem:[%s219 + $0x860] sm:$0xff]
    %v489 = vld [vmem:[%s219 + $0x868] sm:$0xff]
    %v490 = vld [vmem:[%s219 + $0x870] sm:$0xff]
    %v491 = vld [vmem:[%s219 + $0x878] sm:$0xff]
    %v492 = vld [vmem:[%s219 + $0x880] sm:$0xff]
    %v493 = vld [vmem:[%s219 + $0x888] sm:$0xff]
    %v494 = vld [vmem:[%s219 + $0x890] sm:$0xff]
    %v495 = vld [vmem:[%s219 + $0x898] sm:$0xff]
    %v496 = vld [vmem:[%s219 + $0x8a0] sm:$0xff]
    %v497 = vld [vmem:[%s219 + $0x8a8] sm:$0xff]
    %v498 = vld [vmem:[%s219 + $0x8b0] sm:$0xff]
    %v499 = vld [vmem:[%s219 + $0x8b8] sm:$0xff]
    %v500 = vld [vmem:[%s219 + $0x8c0] sm:$0xff]
    %v501 = vld [vmem:[%s219 + $0x8c8] sm:$0xff]
    %v502 = vld [vmem:[%s219 + $0x8d0] sm:$0xff]
    %v503 = vld [vmem:[%s219 + $0x8d8] sm:$0xff]
    %v504 = vld [vmem:[%s219 + $0x8e0] sm:$0xff]
    %v505 = vld [vmem:[%s219 + $0x8e8] sm:$0xff]
    %v506 = vld [vmem:[%s219 + $0x8f0] sm:$0xff]
    %v507 = vld [vmem:[%s219 + $0x8f8] sm:$0xff]
    %v508 = vld [vmem:[%s219 + $0x900] sm:$0xff]
    %v509 = vld [vmem:[%s219 + $0x908] sm:$0xff]
    %v510 = vld [vmem:[%s219 + $0x910] sm:$0xff]
    %v511 = vld [vmem:[%s219 + $0x918] sm:$0xff]
    %v512 = vld [vmem:[%s219 + $0x920] sm:$0xff]
    %v513 = vld [vmem:[%s219 + $0x928] sm:$0xff]
    %v514 = vld [vmem:[%s219 + $0x930] sm:$0xff]
    %v515 = vld [vmem:[%s219 + $0x938] sm:$0xff]
    %v516 = vld [vmem:[%s219 + $0x940] sm:$0xff]
    %v517 = vld [vmem:[%s219 + $0x948] sm:$0xff]
    %v518 = vld [vmem:[%s219 + $0x950] sm:$0xff]
    %v519 = vld [vmem:[%s219 + $0x958] sm:$0xff]
    %v520 = vld [vmem:[%s219 + $0x960] sm:$0xff]
    %v521 = vld [vmem:[%s219 + $0x968] sm:$0xff]
    %v522 = vld [vmem:[%s219 + $0x970] sm:$0xff]
    %v523 = vld [vmem:[%s219 + $0x978] sm:$0xff]
    %v524 = vld [vmem:[%s219 + $0x980] sm:$0xff]
    %v525 = vld [vmem:[%s219 + $0x988] sm:$0xff]
    %v526 = vld [vmem:[%s219 + $0x990] sm:$0xff]
    %v527 = vld [vmem:[%s219 + $0x998] sm:$0xff]
    %v528 = vld [vmem:[%s219 + $0x9a0] sm:$0xff]
    %v529 = vld [vmem:[%s219 + $0x9a8] sm:$0xff]
    %v530 = vld [vmem:[%s219 + $0x9b0] sm:$0xff]
    %v531 = vld [vmem:[%s219 + $0x9b8] sm:$0xff]
    %v532 = vld [vmem:[%s219 + $0x9c0] sm:$0xff]
    %v533 = vld [vmem:[%s219 + $0x9c8] sm:$0xff]
    %v534 = vld [vmem:[%s219 + $0x9d0] sm:$0xff]
    %v535 = vld [vmem:[%s219 + $0x9d8] sm:$0xff]
    %v536 = vld [vmem:[%s219 + $0x9e0] sm:$0xff]
    %v537 = vld [vmem:[%s219 + $0x9e8] sm:$0xff]
    %v538 = vld [vmem:[%s219 + $0x9f0] sm:$0xff]
    %v539 = vld [vmem:[%s219 + $0x9f8] sm:$0xff]
    %v540 = vld [vmem:[%s219 + $0xa00] sm:$0xff]
    %v541 = vld [vmem:[%s219 + $0xa08] sm:$0xff]
    %v542 = vld [vmem:[%s219 + $0xa10] sm:$0xff]
    %v543 = vld [vmem:[%s219 + $0xa18] sm:$0xff]
    %v544 = vld [vmem:[%s219 + $0xa20] sm:$0xff]
    %v545 = vld [vmem:[%s219 + $0xa28] sm:$0xff]
    %v546 = vld [vmem:[%s219 + $0xa30] sm:$0xff]
    %v547 = vld [vmem:[%s219 + $0xa38] sm:$0xff]
    %v548 = vld [vmem:[%s219 + $0xa40] sm:$0xff]
    %v549 = vld [vmem:[%s219 + $0xa48] sm:$0xff]
    %v550 = vld [vmem:[%s219 + $0xa50] sm:$0xff]
    %v551 = vld [vmem:[%s219 + $0xa58] sm:$0xff]
    %v552 = vld [vmem:[%s219 + $0xa60] sm:$0xff]
    %v553 = vld [vmem:[%s219 + $0xa68] sm:$0xff]
    %v554 = vld [vmem:[%s219 + $0xa70] sm:$0xff]
    %v555 = vld [vmem:[%s219 + $0xa78] sm:$0xff]
    %v556 = vld [vmem:[%s219 + $0xa80] sm:$0xff]
    %v557 = vld [vmem:[%s219 + $0xa88] sm:$0xff]
    %v558 = vld [vmem:[%s219 + $0xa90] sm:$0xff]
    %v559 = vld [vmem:[%s219 + $0xa98] sm:$0xff]
    %v560 = vld [vmem:[%s219 + $0xaa0] sm:$0xff]
    %v561 = vld [vmem:[%s219 + $0xaa8] sm:$0xff]
    %v562 = vld [vmem:[%s219 + $0xab0] sm:$0xff]
    %v563 = vld [vmem:[%s219 + $0xab8] sm:$0xff]
    %v564 = vld [vmem:[%s219 + $0xac0] sm:$0xff]
    %v565 = vld [vmem:[%s219 + $0xac8] sm:$0xff]
    %v566 = vld [vmem:[%s219 + $0xad0] sm:$0xff]
    %v567 = vld [vmem:[%s219 + $0xad8] sm:$0xff]
    %v568 = vld [vmem:[%s219 + $0xae0] sm:$0xff]
    %v569 = vld [vmem:[%s219 + $0xae8] sm:$0xff]
    %v570 = vld [vmem:[%s219 + $0xaf0] sm:$0xff]
    %v571 = vld [vmem:[%s219 + $0xaf8] sm:$0xff]
    %v572 = vld [vmem:[%s219 + $0xb00] sm:$0xff]
    %v573 = vld [vmem:[%s219 + $0xb08] sm:$0xff]
    %v574 = vld [vmem:[%s219 + $0xb10] sm:$0xff]
    %v575 = vld [vmem:[%s219 + $0xb18] sm:$0xff]
    %v576 = vld [vmem:[%s219 + $0xb20] sm:$0xff]
    %v577 = vld [vmem:[%s219 + $0xb28] sm:$0xff]
    %v578 = vld [vmem:[%s219 + $0xb30] sm:$0xff]
    %v579 = vld [vmem:[%s219 + $0xb38] sm:$0xff]
    %v580 = vld [vmem:[%s219 + $0xb40] sm:$0xff]
    %v581 = vld [vmem:[%s219 + $0xb48] sm:$0xff]
    %v582 = vld [vmem:[%s219 + $0xb50] sm:$0xff]
    %v583 = vld [vmem:[%s219 + $0xb58] sm:$0xff]
    %v584 = vld [vmem:[%s219 + $0xb60] sm:$0xff]
    %v585 = vld [vmem:[%s219 + $0xb68] sm:$0xff]
    %v586 = vld [vmem:[%s219 + $0xb70] sm:$0xff]
    %v587 = vld [vmem:[%s219 + $0xb78] sm:$0xff]
    %v588 = vld [vmem:[%s219 + $0xb80] sm:$0xff]
    %v589 = vld [vmem:[%s219 + $0xb88] sm:$0xff]
    %v590 = vld [vmem:[%s219 + $0xb90] sm:$0xff]
    %v591 = vld [vmem:[%s219 + $0xb98] sm:$0xff]
    %v592 = vld [vmem:[%s219 + $0xba0] sm:$0xff]
    %v593 = vld [vmem:[%s219 + $0xba8] sm:$0xff]
    %v594 = vld [vmem:[%s219 + $0xbb0] sm:$0xff]
    %v595 = vld [vmem:[%s219 + $0xbb8] sm:$0xff]
    %v596 = vld [vmem:[%s219 + $0xbc0] sm:$0xff]
    %v597 = vld [vmem:[%s219 + $0xbc8] sm:$0xff]
    %v598 = vld [vmem:[%s219 + $0xbd0] sm:$0xff]
    %v599 = vld [vmem:[%s219 + $0xbd8] sm:$0xff]
    %v600 = vld [vmem:[%s219 + $0xbe0] sm:$0xff]
    %v601 = vld [vmem:[%s219 + $0xbe8] sm:$0xff]
    %v602 = vld [vmem:[%s219 + $0xbf0] sm:$0xff]
    %v603 = vld [vmem:[%s219 + $0xbf8] sm:$0xff]
    %v604 = vld [vmem:[%s219 + $0xc00] sm:$0xff]
    %v605 = vld [vmem:[%s219 + $0xc08] sm:$0xff]
    %v606 = vld [vmem:[%s219 + $0xc10] sm:$0xff]
    %v607 = vld [vmem:[%s219 + $0xc18] sm:$0xff]
    %v608 = vld [vmem:[%s219 + $0xc20] sm:$0xff]
    %v609 = vld [vmem:[%s219 + $0xc28] sm:$0xff]
    %v610 = vld [vmem:[%s219 + $0xc30] sm:$0xff]
    %v611 = vld [vmem:[%s219 + $0xc38] sm:$0xff]
    %v612 = vld [vmem:[%s219 + $0xc40] sm:$0xff]
    %v613 = vld [vmem:[%s219 + $0xc48] sm:$0xff]
    %v614 = vld [vmem:[%s219 + $0xc50] sm:$0xff]
    %v615 = vld [vmem:[%s219 + $0xc58] sm:$0xff]
    %v616 = vld [vmem:[%s219 + $0xc60] sm:$0xff]
    %v617 = vld [vmem:[%s219 + $0xc68] sm:$0xff]
    %v618 = vld [vmem:[%s219 + $0xc70] sm:$0xff]
    %v619 = vld [vmem:[%s219 + $0xc78] sm:$0xff]
    %v620 = vld [vmem:[%s219 + $0xc80] sm:$0xff]
    %v621 = vld [vmem:[%s219 + $0xc88] sm:$0xff]
    %v622 = vld [vmem:[%s219 + $0xc90] sm:$0xff]
    %v623 = vld [vmem:[%s219 + $0xc98] sm:$0xff]
    %v624 = vld [vmem:[%s219 + $0xca0] sm:$0xff]
    %v625 = vld [vmem:[%s219 + $0xca8] sm:$0xff]
    %v626 = vld [vmem:[%s219 + $0xcb0] sm:$0xff]
    %v627 = vld [vmem:[%s219 + $0xcb8] sm:$0xff]
    %v628 = vld [vmem:[%s219 + $0xcc0] sm:$0xff]
    %v629 = vld [vmem:[%s219 + $0xcc8] sm:$0xff]
    %v630 = vld [vmem:[%s219 + $0xcd0] sm:$0xff]
    %v631 = vld [vmem:[%s219 + $0xcd8] sm:$0xff]
    %v632 = vld [vmem:[%s219 + $0xce0] sm:$0xff]
    %v633 = vld [vmem:[%s219 + $0xce8] sm:$0xff]
    %v634 = vld [vmem:[%s219 + $0xcf0] sm:$0xff]
    %v635 = vld [vmem:[%s219 + $0xcf8] sm:$0xff]
    %v636 = vld [vmem:[%s219 + $0xd00] sm:$0xff]
    %v637 = vld [vmem:[%s219 + $0xd08] sm:$0xff]
    %v638 = vld [vmem:[%s219 + $0xd10] sm:$0xff]
    %v639 = vld [vmem:[%s219 + $0xd18] sm:$0xff]
    %v640 = vld [vmem:[%s219 + $0xd20] sm:$0xff]
    %v641 = vld [vmem:[%s219 + $0xd28] sm:$0xff]
    %v642 = vld [vmem:[%s219 + $0xd30] sm:$0xff]
    %v643 = vld [vmem:[%s219 + $0xd38] sm:$0xff]
    %v644 = vld [vmem:[%s219 + $0xd40] sm:$0xff]
    %v645 = vld [vmem:[%s219 + $0xd48] sm:$0xff]
    %v646 = vld [vmem:[%s219 + $0xd50] sm:$0xff]
    %v647 = vld [vmem:[%s219 + $0xd58] sm:$0xff]
    %v648 = vld [vmem:[%s219 + $0xd60] sm:$0xff]
    %v649 = vld [vmem:[%s219 + $0xd68] sm:$0xff]
    %v650 = vld [vmem:[%s219 + $0xd70] sm:$0xff]
    %v651 = vld [vmem:[%s219 + $0xd78] sm:$0xff]
    %v652 = vld [vmem:[%s219 + $0xd80] sm:$0xff]
    %v653 = vld [vmem:[%s219 + $0xd88] sm:$0xff]
    %v654 = vld [vmem:[%s219 + $0xd90] sm:$0xff]
    %v655 = vld [vmem:[%s219 + $0xd98] sm:$0xff]
    %v656 = vld [vmem:[%s219 + $0xda0] sm:$0xff]
    %v657 = vld [vmem:[%s219 + $0xda8] sm:$0xff]
    %v658 = vld [vmem:[%s219 + $0xdb0] sm:$0xff]
    %v659 = vld [vmem:[%s219 + $0xdb8] sm:$0xff]
    %v660 = vld [vmem:[%s219 + $0xdc0] sm:$0xff]
    %v661 = vld [vmem:[%s219 + $0xdc8] sm:$0xff]
    %v662 = vld [vmem:[%s219 + $0xdd0] sm:$0xff]
    %v663 = vld [vmem:[%s219 + $0xdd8] sm:$0xff]
    %v664 = vld [vmem:[%s219 + $0xde0] sm:$0xff]
    %v665 = vld [vmem:[%s219 + $0xde8] sm:$0xff]
    %v666 = vld [vmem:[%s219 + $0xdf0] sm:$0xff]
    %v667 = vld [vmem:[%s219 + $0xdf8] sm:$0xff]
    %v668 = vld [vmem:[%s219 + $0xe00] sm:$0xff]
    %v669 = vld [vmem:[%s219 + $0xe08] sm:$0xff]
    %v670 = vld [vmem:[%s219 + $0xe10] sm:$0xff]
    %v671 = vld [vmem:[%s219 + $0xe18] sm:$0xff]
    %v672 = vld [vmem:[%s219 + $0xe20] sm:$0xff]
    %v673 = vld [vmem:[%s219 + $0xe28] sm:$0xff]
    %v674 = vld [vmem:[%s219 + $0xe30] sm:$0xff]
    %v675 = vld [vmem:[%s219 + $0xe38] sm:$0xff]
    %v676 = vld [vmem:[%s219 + $0xe40] sm:$0xff]
    %v677 = vld [vmem:[%s219 + $0xe48] sm:$0xff]
    %v678 = vld [vmem:[%s219 + $0xe50] sm:$0xff]
    %v679 = vld [vmem:[%s219 + $0xe58] sm:$0xff]
    %v680 = vld [vmem:[%s219 + $0xe60] sm:$0xff]
    %v681 = vld [vmem:[%s219 + $0xe68] sm:$0xff]
    %v682 = vld [vmem:[%s219 + $0xe70] sm:$0xff]
    %v683 = vld [vmem:[%s219 + $0xe78] sm:$0xff]
    %v684 = vld [vmem:[%s219 + $0xe80] sm:$0xff]
    %v685 = vld [vmem:[%s219 + $0xe88] sm:$0xff]
    %v686 = vld [vmem:[%s219 + $0xe90] sm:$0xff]
    %v687 = vld [vmem:[%s219 + $0xe98] sm:$0xff]
    %v688 = vld [vmem:[%s219 + $0xea0] sm:$0xff]
    %v689 = vld [vmem:[%s219 + $0xea8] sm:$0xff]
    %v690 = vld [vmem:[%s219 + $0xeb0] sm:$0xff]
    %v691 = vld [vmem:[%s219 + $0xeb8] sm:$0xff]
    %v692 = vld [vmem:[%s219 + $0xec0] sm:$0xff]
    %v693 = vld [vmem:[%s219 + $0xec8] sm:$0xff]
    %v694 = vld [vmem:[%s219 + $0xed0] sm:$0xff]
    %v695 = vld [vmem:[%s219 + $0xed8] sm:$0xff]
    %v696 = vld [vmem:[%s219 + $0xee0] sm:$0xff]
    %v697 = vld [vmem:[%s219 + $0xee8] sm:$0xff]
    %v698 = vld [vmem:[%s219 + $0xef0] sm:$0xff]
    %v699 = vld [vmem:[%s219 + $0xef8] sm:$0xff]
    %v700 = vld [vmem:[%s219 + $0xf00] sm:$0xff]
    %v701 = vld [vmem:[%s219 + $0xf08] sm:$0xff]
    %v702 = vld [vmem:[%s219 + $0xf10] sm:$0xff]
    %v703 = vld [vmem:[%s219 + $0xf18] sm:$0xff]
    %v704 = vld [vmem:[%s219 + $0xf20] sm:$0xff]
    %v705 = vld [vmem:[%s219 + $0xf28] sm:$0xff]
    %v706 = vld [vmem:[%s219 + $0xf30] sm:$0xff]
    %v707 = vld [vmem:[%s219 + $0xf38] sm:$0xff]
    %v708 = vld [vmem:[%s219 + $0xf40] sm:$0xff]
    %v709 = vld [vmem:[%s219 + $0xf48] sm:$0xff]
    %v710 = vld [vmem:[%s219 + $0xf50] sm:$0xff]
    %v711 = vld [vmem:[%s219 + $0xf58] sm:$0xff]
    %v712 = vld [vmem:[%s219 + $0xf60] sm:$0xff]
    %v713 = vld [vmem:[%s219 + $0xf68] sm:$0xff]
    %v714 = vld [vmem:[%s219 + $0xf70] sm:$0xff]
    %v715 = vld [vmem:[%s219 + $0xf78] sm:$0xff]
    %v716 = vld [vmem:[%s219 + $0xf80] sm:$0xff]
    %v717 = vld [vmem:[%s219 + $0xf88] sm:$0xff]
    %v718 = vld [vmem:[%s219 + $0xf90] sm:$0xff]
    %v719 = vld [vmem:[%s219 + $0xf98] sm:$0xff]
    %v720 = vld [vmem:[%s219 + $0xfa0] sm:$0xff]
    %v721 = vld [vmem:[%s219 + $0xfa8] sm:$0xff]
    %v722 = vld [vmem:[%s219 + $0xfb0] sm:$0xff]
    %v723 = vld [vmem:[%s219 + $0xfb8] sm:$0xff]
    %v724 = vld [vmem:[%s219 + $0xfc0] sm:$0xff]
    %v725 = vld [vmem:[%s219 + $0xfc8] sm:$0xff]
    %v726 = vld [vmem:[%s219 + $0xfd0] sm:$0xff]
    %v727 = vld [vmem:[%s219 + $0xfd8] sm:$0xff]
    %v728 = vld [vmem:[%s219 + $0xfe0] sm:$0xff]
    %v729 = vld [vmem:[%s219 + $0xfe8] sm:$0xff]
    %v730 = vld [vmem:[%s219 + $0xff0] sm:$0xff]
    %v731 = vld [vmem:[%s219 + $0xff8] sm:$0xff]
    %v732 = vld [vmem:[%s219 + $0x1000] sm:$0xff]
    %v733 = vld [vmem:[%s219 + $0x1008] sm:$0xff]
    %v734 = vld [vmem:[%s219 + $0x1010] sm:$0xff]
    %v735 = vld [vmem:[%s219 + $0x1018] sm:$0xff]
    %v736 = vld [vmem:[%s219 + $0x1020] sm:$0xff]
    %v737 = vld [vmem:[%s219 + $0x1028] sm:$0xff]
    %v738 = vld [vmem:[%s219 + $0x1030] sm:$0xff]
    %v739 = vld [vmem:[%s219 + $0x1038] sm:$0xff]
    %v740 = vld [vmem:[%s219 + $0x1040] sm:$0xff]
    %v741 = vld [vmem:[%s219 + $0x1048] sm:$0xff]
    %v742 = vld [vmem:[%s219 + $0x1050] sm:$0xff]
    %v743 = vld [vmem:[%s219 + $0x1058] sm:$0xff]
    %v744 = vld [vmem:[%s219 + $0x1060] sm:$0xff]
    %v745 = vld [vmem:[%s219 + $0x1068] sm:$0xff]
    %v746 = vld [vmem:[%s219 + $0x1070] sm:$0xff]
    %v747 = vld [vmem:[%s219 + $0x1078] sm:$0xff]
    %v748 = vld [vmem:[%s219 + $0x1080] sm:$0xff]
    %v749 = vld [vmem:[%s219 + $0x1088] sm:$0xff]
    %v750 = vld [vmem:[%s219 + $0x1090] sm:$0xff]
    %v751 = vld [vmem:[%s219 + $0x1098] sm:$0xff]
    %v752 = vld [vmem:[%s219 + $0x10a0] sm:$0xff]
    %v753 = vld [vmem:[%s219 + $0x10a8] sm:$0xff]
    %v754 = vld [vmem:[%s219 + $0x10b0] sm:$0xff]
    %v755 = vld [vmem:[%s219 + $0x10b8] sm:$0xff]
    %v756 = vld [vmem:[%s219 + $0x10c0] sm:$0xff]
    %v757 = vld [vmem:[%s219 + $0x10c8] sm:$0xff]
    %v758 = vld [vmem:[%s219 + $0x10d0] sm:$0xff]
    %v759 = vld [vmem:[%s219 + $0x10d8] sm:$0xff]
    %v760 = vld [vmem:[%s219 + $0x10e0] sm:$0xff]
    %v761 = vld [vmem:[%s219 + $0x10e8] sm:$0xff]
    %v762 = vld [vmem:[%s219 + $0x10f0] sm:$0xff]
    %v763 = vld [vmem:[%s219 + $0x10f8] sm:$0xff]
    %v764 = vld [vmem:[%s219 + $0x1100] sm:$0xff]
    %v765 = vld [vmem:[%s219 + $0x1108] sm:$0xff]
    %v766 = vld [vmem:[%s219 + $0x1110] sm:$0xff]
    %v767 = vld [vmem:[%s219 + $0x1118] sm:$0xff]
    %v768 = vld [vmem:[%s219 + $0x1120] sm:$0xff]
    %v769 = vld [vmem:[%s219 + $0x1128] sm:$0xff]
    %v770 = vld [vmem:[%s219 + $0x1130] sm:$0xff]
    %v771 = vld [vmem:[%s219 + $0x1138] sm:$0xff]
    %v772 = vld [vmem:[%s219 + $0x1140] sm:$0xff]
    %v773 = vld [vmem:[%s219 + $0x1148] sm:$0xff]
    %v774 = vld [vmem:[%s219 + $0x1150] sm:$0xff]
    %v775 = vld [vmem:[%s219 + $0x1158] sm:$0xff]
    %v776 = vld [vmem:[%s219 + $0x1160] sm:$0xff]
    %v777 = vld [vmem:[%s219 + $0x1168] sm:$0xff]
    %v778 = vld [vmem:[%s219 + $0x1170] sm:$0xff]
    %v779 = vld [vmem:[%s219 + $0x1178] sm:$0xff]
    %v780 = vld [vmem:[%s219 + $0x1180] sm:$0xff]
    %v781 = vld [vmem:[%s219 + $0x1188] sm:$0xff]
    %v782 = vld [vmem:[%s219 + $0x1190] sm:$0xff]
    %v783 = vld [vmem:[%s219 + $0x1198] sm:$0xff]
    %v784 = vld [vmem:[%s219 + $0x11a0] sm:$0xff]
    %v785 = vld [vmem:[%s219 + $0x11a8] sm:$0xff]
    %v786 = vld [vmem:[%s219 + $0x11b0] sm:$0xff]
    %v787 = vld [vmem:[%s219 + $0x11b8] sm:$0xff]
    %v788 = vld [vmem:[%s219 + $0x11c0] sm:$0xff]
    %v789 = vld [vmem:[%s219 + $0x11c8] sm:$0xff]
    %v790 = vld [vmem:[%s219 + $0x11d0] sm:$0xff]
    %v791 = vld [vmem:[%s219 + $0x11d8] sm:$0xff]
    %v792 = vld [vmem:[%s219 + $0x11e0] sm:$0xff]
    %v793 = vld [vmem:[%s219 + $0x11e8] sm:$0xff]
    %v794 = vld [vmem:[%s219 + $0x11f0] sm:$0xff]
    %v795 = vld [vmem:[%s219 + $0x11f8] sm:$0xff]
    %v796 = vld [vmem:[%s219 + $0x1200] sm:$0xff]
    %v797 = vld [vmem:[%s219 + $0x1208] sm:$0xff]
    %v798 = vld [vmem:[%s219 + $0x1210] sm:$0xff]
    %v799 = vld [vmem:[%s219 + $0x1218] sm:$0xff]
    %v800 = vld [vmem:[%s219 + $0x1220] sm:$0xff]
    %v801 = vld [vmem:[%s219 + $0x1228] sm:$0xff]
    %v802 = vld [vmem:[%s219 + $0x1230] sm:$0xff]
    %v803 = vld [vmem:[%s219 + $0x1238] sm:$0xff]
    %v804 = vld [vmem:[%s219 + $0x1240] sm:$0xff]
    %v805 = vld [vmem:[%s219 + $0x1248] sm:$0xff]
    %v806 = vld [vmem:[%s219 + $0x1250] sm:$0xff]
    %v807 = vld [vmem:[%s219 + $0x1258] sm:$0xff]
    %v808 = vld [vmem:[%s219 + $0x1260] sm:$0xff]
    %v809 = vld [vmem:[%s219 + $0x1268] sm:$0xff]
    %v810 = vld [vmem:[%s219 + $0x1270] sm:$0xff]
    %v811 = vld [vmem:[%s219 + $0x1278] sm:$0xff]
    %v812 = vld [vmem:[%s219 + $0x1280] sm:$0xff]
    %v813 = vld [vmem:[%s219 + $0x1288] sm:$0xff]
    %v814 = vld [vmem:[%s219 + $0x1290] sm:$0xff]
    %v815 = vld [vmem:[%s219 + $0x1298] sm:$0xff]
    %v816 = vld [vmem:[%s219 + $0x12a0] sm:$0xff]
    %v817 = vld [vmem:[%s219 + $0x12a8] sm:$0xff]
    %v818 = vld [vmem:[%s219 + $0x12b0] sm:$0xff]
    %v819 = vld [vmem:[%s219 + $0x12b8] sm:$0xff]
    %v820 = vld [vmem:[%s219 + $0x12c0] sm:$0xff]
    %v821 = vld [vmem:[%s219 + $0x12c8] sm:$0xff]
    %v822 = vld [vmem:[%s219 + $0x12d0] sm:$0xff]
    %v823 = vld [vmem:[%s219 + $0x12d8] sm:$0xff]
    %v824 = vld [vmem:[%s219 + $0x12e0] sm:$0xff]
    %v825 = vld [vmem:[%s219 + $0x12e8] sm:$0xff]
    %v826 = vld [vmem:[%s219 + $0x12f0] sm:$0xff]
    %v827 = vld [vmem:[%s219 + $0x12f8] sm:$0xff]
    %v828 = vld [vmem:[%s219 + $0x1300] sm:$0xff]
    %v829 = vld [vmem:[%s219 + $0x1308] sm:$0xff]
    %v830 = vld [vmem:[%s219 + $0x1310] sm:$0xff]
    %v831 = vld [vmem:[%s219 + $0x1318] sm:$0xff]
    %v832 = vld [vmem:[%s219 + $0x1320] sm:$0xff]
    %v833 = vld [vmem:[%s219 + $0x1328] sm:$0xff]
    %v834 = vld [vmem:[%s219 + $0x1330] sm:$0xff]
    %v835 = vld [vmem:[%s219 + $0x1338] sm:$0xff]
    %v836 = vld [vmem:[%s219 + $0x1340] sm:$0xff]
    %v837 = vld [vmem:[%s219 + $0x1348] sm:$0xff]
    %v838 = vld [vmem:[%s219 + $0x1350] sm:$0xff]
    %v839 = vld [vmem:[%s219 + $0x1358] sm:$0xff]
    %v840 = vld [vmem:[%s219 + $0x1360] sm:$0xff]
    %v841 = vld [vmem:[%s219 + $0x1368] sm:$0xff]
    %v842 = vld [vmem:[%s219 + $0x1370] sm:$0xff]
    %v843 = vld [vmem:[%s219 + $0x1378] sm:$0xff]
    %v844 = vld [vmem:[%s219 + $0x1380] sm:$0xff]
    %v845 = vld [vmem:[%s219 + $0x1388] sm:$0xff]
    %v846 = vld [vmem:[%s219 + $0x1390] sm:$0xff]
    %v847 = vld [vmem:[%s219 + $0x1398] sm:$0xff]
    %v848 = vld [vmem:[%s219 + $0x13a0] sm:$0xff]
    %v849 = vld [vmem:[%s219 + $0x13a8] sm:$0xff]
    %v850 = vld [vmem:[%s219 + $0x13b0] sm:$0xff]
    %v851 = vld [vmem:[%s219 + $0x13b8] sm:$0xff]
    %v852 = vld [vmem:[%s219 + $0x13c0] sm:$0xff]
    %v853 = vld [vmem:[%s219 + $0x13c8] sm:$0xff]
    %v854 = vld [vmem:[%s219 + $0x13d0] sm:$0xff]
    %v855 = vld [vmem:[%s219 + $0x13d8] sm:$0xff]
    %v856 = vld [vmem:[%s219 + $0x13e0] sm:$0xff]
    %v857 = vld [vmem:[%s219 + $0x13e8] sm:$0xff]
    %v858 = vld [vmem:[%s219 + $0x13f0] sm:$0xff]
    %v859 = vld [vmem:[%s219 + $0x13f8] sm:$0xff]
    %s860 = smul.u32 0, 80
    %s861 = scalar_lea.vmem [#allocation11], %s860
    %v862 = vld [vmem:[%s861] sm:$0xff]
    %v863 = vld [vmem:[%s861 + $0x8] sm:$0xff]
    %v864 = vld [vmem:[%s861 + $0x10] sm:$0xff]
    %v865 = vld [vmem:[%s861 + $0x18] sm:$0xff]
    %v866 = vld [vmem:[%s861 + $0x20] sm:$0xff]
    %v867 = vld [vmem:[%s861 + $0x28] sm:$0xff]
    %v868 = vld [vmem:[%s861 + $0x30] sm:$0xff]
    %v869 = vld [vmem:[%s861 + $0x38] sm:$0xff]
    %v870 = vld [vmem:[%s861 + $0x40] sm:$0xff]
    %v871 = vld [vmem:[%s861 + $0x48] sm:$0xff]
    %v882 = vlaneseq
    %v883 = vshrl.u32 %v882, 7
    %v884 = vsub.s32 0, %v883
    %v885 = vrot.slane %v862, %v884
    %v886 = vlaneseq
    %v887 = vshrl.u32 %v886, 7
    %v888 = vsub.s32 1, %v887
    %v889 = vrot.slane %v862, %v888
    %v890 = vlaneseq
    %v891 = vshrl.u32 %v890, 7
    %v892 = vsub.s32 2, %v891
    %v893 = vrot.slane %v862, %v892
    %v894 = vlaneseq
    %v895 = vshrl.u32 %v894, 7
    %v896 = vsub.s32 3, %v895
    %v897 = vrot.slane %v862, %v896
    %v898 = vlaneseq
    %v899 = vshrl.u32 %v898, 7
    %v900 = vsub.s32 4, %v899
    %v901 = vrot.slane %v862, %v900
    %v902 = vlaneseq
    %v903 = vshrl.u32 %v902, 7
    %v904 = vsub.s32 5, %v903
    %v905 = vrot.slane %v862, %v904
    %v906 = vlaneseq
    %v907 = vshrl.u32 %v906, 7
    %v908 = vsub.s32 6, %v907
    %v909 = vrot.slane %v862, %v908
    %v910 = vlaneseq
    %v911 = vshrl.u32 %v910, 7
    %v912 = vsub.s32 7, %v911
    %v913 = vrot.slane %v862, %v912
    %v914 = vlaneseq
    %v915 = vshrl.u32 %v914, 7
    %v916 = vsub.s32 0, %v915
    %v917 = vrot.slane %v863, %v916
    %v918 = vlaneseq
    %v919 = vshrl.u32 %v918, 7
    %v920 = vsub.s32 1, %v919
    %v921 = vrot.slane %v863, %v920
    %v922 = vlaneseq
    %v923 = vshrl.u32 %v922, 7
    %v924 = vsub.s32 2, %v923
    %v925 = vrot.slane %v863, %v924
    %v926 = vlaneseq
    %v927 = vshrl.u32 %v926, 7
    %v928 = vsub.s32 3, %v927
    %v929 = vrot.slane %v863, %v928
    %v930 = vlaneseq
    %v931 = vshrl.u32 %v930, 7
    %v932 = vsub.s32 4, %v931
    %v933 = vrot.slane %v863, %v932
    %v934 = vlaneseq
    %v935 = vshrl.u32 %v934, 7
    %v936 = vsub.s32 5, %v935
    %v937 = vrot.slane %v863, %v936
    %v938 = vlaneseq
    %v939 = vshrl.u32 %v938, 7
    %v940 = vsub.s32 6, %v939
    %v941 = vrot.slane %v863, %v940
    %v942 = vlaneseq
    %v943 = vshrl.u32 %v942, 7
    %v944 = vsub.s32 7, %v943
    %v945 = vrot.slane %v863, %v944
    %v946 = vlaneseq
    %v947 = vshrl.u32 %v946, 7
    %v948 = vsub.s32 0, %v947
    %v949 = vrot.slane %v864, %v948
    %v950 = vlaneseq
    %v951 = vshrl.u32 %v950, 7
    %v952 = vsub.s32 1, %v951
    %v953 = vrot.slane %v864, %v952
    %v954 = vlaneseq
    %v955 = vshrl.u32 %v954, 7
    %v956 = vsub.s32 2, %v955
    %v957 = vrot.slane %v864, %v956
    %v958 = vlaneseq
    %v959 = vshrl.u32 %v958, 7
    %v960 = vsub.s32 3, %v959
    %v961 = vrot.slane %v864, %v960
    %v962 = vlaneseq
    %v963 = vshrl.u32 %v962, 7
    %v964 = vsub.s32 4, %v963
    %v965 = vrot.slane %v864, %v964
    %v966 = vlaneseq
    %v967 = vshrl.u32 %v966, 7
    %v968 = vsub.s32 5, %v967
    %v969 = vrot.slane %v864, %v968
    %v970 = vlaneseq
    %v971 = vshrl.u32 %v970, 7
    %v972 = vsub.s32 6, %v971
    %v973 = vrot.slane %v864, %v972
    %v974 = vlaneseq
    %v975 = vshrl.u32 %v974, 7
    %v976 = vsub.s32 7, %v975
    %v977 = vrot.slane %v864, %v976
    %v978 = vlaneseq
    %v979 = vshrl.u32 %v978, 7
    %v980 = vsub.s32 0, %v979
    %v981 = vrot.slane %v865, %v980
    %v982 = vlaneseq
    %v983 = vshrl.u32 %v982, 7
    %v984 = vsub.s32 1, %v983
    %v985 = vrot.slane %v865, %v984
    %v986 = vlaneseq
    %v987 = vshrl.u32 %v986, 7
    %v988 = vsub.s32 2, %v987
    %v989 = vrot.slane %v865, %v988
    %v990 = vlaneseq
    %v991 = vshrl.u32 %v990, 7
    %v992 = vsub.s32 3, %v991
    %v993 = vrot.slane %v865, %v992
    %v994 = vlaneseq
    %v995 = vshrl.u32 %v994, 7
    %v996 = vsub.s32 4, %v995
    %v997 = vrot.slane %v865, %v996
    %v998 = vlaneseq
    %v999 = vshrl.u32 %v998, 7
    %v1000 = vsub.s32 5, %v999
    %v1001 = vrot.slane %v865, %v1000
    %v1002 = vlaneseq
    %v1003 = vshrl.u32 %v1002, 7
    %v1004 = vsub.s32 6, %v1003
    %v1005 = vrot.slane %v865, %v1004
    %v1006 = vlaneseq
    %v1007 = vshrl.u32 %v1006, 7
    %v1008 = vsub.s32 7, %v1007
    %v1009 = vrot.slane %v865, %v1008
    %v1010 = vlaneseq
    %v1011 = vshrl.u32 %v1010, 7
    %v1012 = vsub.s32 0, %v1011
    %v1013 = vrot.slane %v866, %v1012
    %v1014 = vlaneseq
    %v1015 = vshrl.u32 %v1014, 7
    %v1016 = vsub.s32 1, %v1015
    %v1017 = vrot.slane %v866, %v1016
    %v1018 = vlaneseq
    %v1019 = vshrl.u32 %v1018, 7
    %v1020 = vsub.s32 2, %v1019
    %v1021 = vrot.slane %v866, %v1020
    %v1022 = vlaneseq
    %v1023 = vshrl.u32 %v1022, 7
    %v1024 = vsub.s32 3, %v1023
    %v1025 = vrot.slane %v866, %v1024
    %v1026 = vlaneseq
    %v1027 = vshrl.u32 %v1026, 7
    %v1028 = vsub.s32 4, %v1027
    %v1029 = vrot.slane %v866, %v1028
    %v1030 = vlaneseq
    %v1031 = vshrl.u32 %v1030, 7
    %v1032 = vsub.s32 5, %v1031
    %v1033 = vrot.slane %v866, %v1032
    %v1034 = vlaneseq
    %v1035 = vshrl.u32 %v1034, 7
    %v1036 = vsub.s32 6, %v1035
    %v1037 = vrot.slane %v866, %v1036
    %v1038 = vlaneseq
    %v1039 = vshrl.u32 %v1038, 7
    %v1040 = vsub.s32 7, %v1039
    %v1041 = vrot.slane %v866, %v1040
    %v1042 = vlaneseq
    %v1043 = vshrl.u32 %v1042, 7
    %v1044 = vsub.s32 0, %v1043
    %v1045 = vrot.slane %v867, %v1044
    %v1046 = vlaneseq
    %v1047 = vshrl.u32 %v1046, 7
    %v1048 = vsub.s32 1, %v1047
    %v1049 = vrot.slane %v867, %v1048
    %v1050 = vlaneseq
    %v1051 = vshrl.u32 %v1050, 7
    %v1052 = vsub.s32 2, %v1051
    %v1053 = vrot.slane %v867, %v1052
    %v1054 = vlaneseq
    %v1055 = vshrl.u32 %v1054, 7
    %v1056 = vsub.s32 3, %v1055
    %v1057 = vrot.slane %v867, %v1056
    %v1058 = vlaneseq
    %v1059 = vshrl.u32 %v1058, 7
    %v1060 = vsub.s32 4, %v1059
    %v1061 = vrot.slane %v867, %v1060
    %v1062 = vlaneseq
    %v1063 = vshrl.u32 %v1062, 7
    %v1064 = vsub.s32 5, %v1063
    %v1065 = vrot.slane %v867, %v1064
    %v1066 = vlaneseq
    %v1067 = vshrl.u32 %v1066, 7
    %v1068 = vsub.s32 6, %v1067
    %v1069 = vrot.slane %v867, %v1068
    %v1070 = vlaneseq
    %v1071 = vshrl.u32 %v1070, 7
    %v1072 = vsub.s32 7, %v1071
    %v1073 = vrot.slane %v867, %v1072
    %v1074 = vlaneseq
    %v1075 = vshrl.u32 %v1074, 7
    %v1076 = vsub.s32 0, %v1075
    %v1077 = vrot.slane %v868, %v1076
    %v1078 = vlaneseq
    %v1079 = vshrl.u32 %v1078, 7
    %v1080 = vsub.s32 1, %v1079
    %v1081 = vrot.slane %v868, %v1080
    %v1082 = vlaneseq
    %v1083 = vshrl.u32 %v1082, 7
    %v1084 = vsub.s32 2, %v1083
    %v1085 = vrot.slane %v868, %v1084
    %v1086 = vlaneseq
    %v1087 = vshrl.u32 %v1086, 7
    %v1088 = vsub.s32 3, %v1087
    %v1089 = vrot.slane %v868, %v1088
    %v1090 = vlaneseq
    %v1091 = vshrl.u32 %v1090, 7
    %v1092 = vsub.s32 4, %v1091
    %v1093 = vrot.slane %v868, %v1092
    %v1094 = vlaneseq
    %v1095 = vshrl.u32 %v1094, 7
    %v1096 = vsub.s32 5, %v1095
    %v1097 = vrot.slane %v868, %v1096
    %v1098 = vlaneseq
    %v1099 = vshrl.u32 %v1098, 7
    %v1100 = vsub.s32 6, %v1099
    %v1101 = vrot.slane %v868, %v1100
    %v1102 = vlaneseq
    %v1103 = vshrl.u32 %v1102, 7
    %v1104 = vsub.s32 7, %v1103
    %v1105 = vrot.slane %v868, %v1104
    %v1106 = vlaneseq
    %v1107 = vshrl.u32 %v1106, 7
    %v1108 = vsub.s32 0, %v1107
    %v1109 = vrot.slane %v869, %v1108
    %v1110 = vlaneseq
    %v1111 = vshrl.u32 %v1110, 7
    %v1112 = vsub.s32 1, %v1111
    %v1113 = vrot.slane %v869, %v1112
    %v1114 = vlaneseq
    %v1115 = vshrl.u32 %v1114, 7
    %v1116 = vsub.s32 2, %v1115
    %v1117 = vrot.slane %v869, %v1116
    %v1118 = vlaneseq
    %v1119 = vshrl.u32 %v1118, 7
    %v1120 = vsub.s32 3, %v1119
    %v1121 = vrot.slane %v869, %v1120
    %v1122 = vlaneseq
    %v1123 = vshrl.u32 %v1122, 7
    %v1124 = vsub.s32 4, %v1123
    %v1125 = vrot.slane %v869, %v1124
    %v1126 = vlaneseq
    %v1127 = vshrl.u32 %v1126, 7
    %v1128 = vsub.s32 5, %v1127
    %v1129 = vrot.slane %v869, %v1128
    %v1130 = vlaneseq
    %v1131 = vshrl.u32 %v1130, 7
    %v1132 = vsub.s32 6, %v1131
    %v1133 = vrot.slane %v869, %v1132
    %v1134 = vlaneseq
    %v1135 = vshrl.u32 %v1134, 7
    %v1136 = vsub.s32 7, %v1135
    %v1137 = vrot.slane %v869, %v1136
    %v1138 = vlaneseq
    %v1139 = vshrl.u32 %v1138, 7
    %v1140 = vsub.s32 0, %v1139
    %v1141 = vrot.slane %v870, %v1140
    %v1142 = vlaneseq
    %v1143 = vshrl.u32 %v1142, 7
    %v1144 = vsub.s32 1, %v1143
    %v1145 = vrot.slane %v870, %v1144
    %v1146 = vlaneseq
    %v1147 = vshrl.u32 %v1146, 7
    %v1148 = vsub.s32 2, %v1147
    %v1149 = vrot.slane %v870, %v1148
    %v1150 = vlaneseq
    %v1151 = vshrl.u32 %v1150, 7
    %v1152 = vsub.s32 3, %v1151
    %v1153 = vrot.slane %v870, %v1152
    %v1154 = vlaneseq
    %v1155 = vshrl.u32 %v1154, 7
    %v1156 = vsub.s32 4, %v1155
    %v1157 = vrot.slane %v870, %v1156
    %v1158 = vlaneseq
    %v1159 = vshrl.u32 %v1158, 7
    %v1160 = vsub.s32 5, %v1159
    %v1161 = vrot.slane %v870, %v1160
    %v1162 = vlaneseq
    %v1163 = vshrl.u32 %v1162, 7
    %v1164 = vsub.s32 6, %v1163
    %v1165 = vrot.slane %v870, %v1164
    %v1166 = vlaneseq
    %v1167 = vshrl.u32 %v1166, 7
    %v1168 = vsub.s32 7, %v1167
    %v1169 = vrot.slane %v870, %v1168
    %v1170 = vlaneseq
    %v1171 = vshrl.u32 %v1170, 7
    %v1172 = vsub.s32 0, %v1171
    %v1173 = vrot.slane %v871, %v1172
    %v1174 = vlaneseq
    %v1175 = vshrl.u32 %v1174, 7
    %v1176 = vsub.s32 1, %v1175
    %v1177 = vrot.slane %v871, %v1176
    %v1178 = vlaneseq
    %v1179 = vshrl.u32 %v1178, 7
    %v1180 = vsub.s32 2, %v1179
    %v1181 = vrot.slane %v871, %v1180
    %v1182 = vlaneseq
    %v1183 = vshrl.u32 %v1182, 7
    %v1184 = vsub.s32 3, %v1183
    %v1185 = vrot.slane %v871, %v1184
    %v1186 = vlaneseq
    %v1187 = vshrl.u32 %v1186, 7
    %v1188 = vsub.s32 4, %v1187
    %v1189 = vrot.slane %v871, %v1188
    %v1190 = vlaneseq
    %v1191 = vshrl.u32 %v1190, 7
    %v1192 = vsub.s32 5, %v1191
    %v1193 = vrot.slane %v871, %v1192
    %v1194 = vlaneseq
    %v1195 = vshrl.u32 %v1194, 7
    %v1196 = vsub.s32 6, %v1195
    %v1197 = vrot.slane %v871, %v1196
    %v1198 = vlaneseq
    %v1199 = vshrl.u32 %v1198, 7
    %v1200 = vsub.s32 7, %v1199
    %v1201 = vrot.slane %v871, %v1200
    %v1922 = vunpack.c.l.b16 %v220
    %v1923 = vunpack.c.h.b16 %v220
    %v1924 = vunpack.c.l.b16 %v221
    %v1925 = vunpack.c.h.b16 %v221
    %v1926 = vunpack.c.l.b16 %v222
    %v1927 = vunpack.c.h.b16 %v222
    %v1928 = vunpack.c.l.b16 %v223
    %v1929 = vunpack.c.h.b16 %v223
    %v1930 = vunpack.c.l.b16 %v224
    %v1931 = vunpack.c.h.b16 %v224
    %v1932 = vunpack.c.l.b16 %v225
    %v1933 = vunpack.c.h.b16 %v225
    %v1934 = vunpack.c.l.b16 %v226
    %v1935 = vunpack.c.h.b16 %v226
    %v1936 = vunpack.c.l.b16 %v227
    %v1937 = vunpack.c.h.b16 %v227
    %v1938 = vunpack.c.l.b16 %v228
    %v1939 = vunpack.c.h.b16 %v228
    %v1940 = vunpack.c.l.b16 %v229
    %v1941 = vunpack.c.h.b16 %v229
    %v1942 = vunpack.c.l.b16 %v230
    %v1943 = vunpack.c.h.b16 %v230
    %v1944 = vunpack.c.l.b16 %v231
    %v1945 = vunpack.c.h.b16 %v231
    %v1946 = vunpack.c.l.b16 %v232
    %v1947 = vunpack.c.h.b16 %v232
    %v1948 = vunpack.c.l.b16 %v233
    %v1949 = vunpack.c.h.b16 %v233
    %v1950 = vunpack.c.l.b16 %v234
    %v1951 = vunpack.c.h.b16 %v234
    %v1952 = vunpack.c.l.b16 %v235
    %v1953 = vunpack.c.h.b16 %v235
    %v1954 = vunpack.c.l.b16 %v236
    %v1955 = vunpack.c.h.b16 %v236
    %v1956 = vunpack.c.l.b16 %v237
    %v1957 = vunpack.c.h.b16 %v237
    %v1958 = vunpack.c.l.b16 %v238
    %v1959 = vunpack.c.h.b16 %v238
    %v1960 = vunpack.c.l.b16 %v239
    %v1961 = vunpack.c.h.b16 %v239
    %v1962 = vunpack.c.l.b16 %v240
    %v1963 = vunpack.c.h.b16 %v240
    %v1964 = vunpack.c.l.b16 %v241
    %v1965 = vunpack.c.h.b16 %v241
    %v1966 = vunpack.c.l.b16 %v242
    %v1967 = vunpack.c.h.b16 %v242
    %v1968 = vunpack.c.l.b16 %v243
    %v1969 = vunpack.c.h.b16 %v243
    %v1970 = vunpack.c.l.b16 %v244
    %v1971 = vunpack.c.h.b16 %v244
    %v1972 = vunpack.c.l.b16 %v245
    %v1973 = vunpack.c.h.b16 %v245
    %v1974 = vunpack.c.l.b16 %v246
    %v1975 = vunpack.c.h.b16 %v246
    %v1976 = vunpack.c.l.b16 %v247
    %v1977 = vunpack.c.h.b16 %v247
    %v1978 = vunpack.c.l.b16 %v248
    %v1979 = vunpack.c.h.b16 %v248
    %v1980 = vunpack.c.l.b16 %v249
    %v1981 = vunpack.c.h.b16 %v249
    %v1982 = vunpack.c.l.b16 %v250
    %v1983 = vunpack.c.h.b16 %v250
    %v1984 = vunpack.c.l.b16 %v251
    %v1985 = vunpack.c.h.b16 %v251
    %v1986 = vunpack.c.l.b16 %v252
    %v1987 = vunpack.c.h.b16 %v252
    %v1988 = vunpack.c.l.b16 %v253
    %v1989 = vunpack.c.h.b16 %v253
    %v1990 = vunpack.c.l.b16 %v254
    %v1991 = vunpack.c.h.b16 %v254
    %v1992 = vunpack.c.l.b16 %v255
    %v1993 = vunpack.c.h.b16 %v255
    %v1994 = vunpack.c.l.b16 %v256
    %v1995 = vunpack.c.h.b16 %v256
    %v1996 = vunpack.c.l.b16 %v257
    %v1997 = vunpack.c.h.b16 %v257
    %v1998 = vunpack.c.l.b16 %v258
    %v1999 = vunpack.c.h.b16 %v258
    %v2000 = vunpack.c.l.b16 %v259
    %v2001 = vunpack.c.h.b16 %v259
    %v2002 = vunpack.c.l.b16 %v260
    %v2003 = vunpack.c.h.b16 %v260
    %v2004 = vunpack.c.l.b16 %v261
    %v2005 = vunpack.c.h.b16 %v261
    %v2006 = vunpack.c.l.b16 %v262
    %v2007 = vunpack.c.h.b16 %v262
    %v2008 = vunpack.c.l.b16 %v263
    %v2009 = vunpack.c.h.b16 %v263
    %v2010 = vunpack.c.l.b16 %v264
    %v2011 = vunpack.c.h.b16 %v264
    %v2012 = vunpack.c.l.b16 %v265
    %v2013 = vunpack.c.h.b16 %v265
    %v2014 = vunpack.c.l.b16 %v266
    %v2015 = vunpack.c.h.b16 %v266
    %v2016 = vunpack.c.l.b16 %v267
    %v2017 = vunpack.c.h.b16 %v267
    %v2018 = vunpack.c.l.b16 %v268
    %v2019 = vunpack.c.h.b16 %v268
    %v2020 = vunpack.c.l.b16 %v269
    %v2021 = vunpack.c.h.b16 %v269
    %v2022 = vunpack.c.l.b16 %v270
    %v2023 = vunpack.c.h.b16 %v270
    %v2024 = vunpack.c.l.b16 %v271
    %v2025 = vunpack.c.h.b16 %v271
    %v2026 = vunpack.c.l.b16 %v272
    %v2027 = vunpack.c.h.b16 %v272
    %v2028 = vunpack.c.l.b16 %v273
    %v2029 = vunpack.c.h.b16 %v273
    %v2030 = vunpack.c.l.b16 %v274
    %v2031 = vunpack.c.h.b16 %v274
    %v2032 = vunpack.c.l.b16 %v275
    %v2033 = vunpack.c.h.b16 %v275
    %v2034 = vunpack.c.l.b16 %v276
    %v2035 = vunpack.c.h.b16 %v276
    %v2036 = vunpack.c.l.b16 %v277
    %v2037 = vunpack.c.h.b16 %v277
    %v2038 = vunpack.c.l.b16 %v278
    %v2039 = vunpack.c.h.b16 %v278
    %v2040 = vunpack.c.l.b16 %v279
    %v2041 = vunpack.c.h.b16 %v279
    %v2042 = vunpack.c.l.b16 %v280
    %v2043 = vunpack.c.h.b16 %v280
    %v2044 = vunpack.c.l.b16 %v281
    %v2045 = vunpack.c.h.b16 %v281
    %v2046 = vunpack.c.l.b16 %v282
    %v2047 = vunpack.c.h.b16 %v282
    %v2048 = vunpack.c.l.b16 %v283
    %v2049 = vunpack.c.h.b16 %v283
    %v2050 = vunpack.c.l.b16 %v284
    %v2051 = vunpack.c.h.b16 %v284
    %v2052 = vunpack.c.l.b16 %v285
    %v2053 = vunpack.c.h.b16 %v285
    %v2054 = vunpack.c.l.b16 %v286
    %v2055 = vunpack.c.h.b16 %v286
    %v2056 = vunpack.c.l.b16 %v287
    %v2057 = vunpack.c.h.b16 %v287
    %v2058 = vunpack.c.l.b16 %v288
    %v2059 = vunpack.c.h.b16 %v288
    %v2060 = vunpack.c.l.b16 %v289
    %v2061 = vunpack.c.h.b16 %v289
    %v2062 = vunpack.c.l.b16 %v290
    %v2063 = vunpack.c.h.b16 %v290
    %v2064 = vunpack.c.l.b16 %v291
    %v2065 = vunpack.c.h.b16 %v291
    %v2066 = vunpack.c.l.b16 %v292
    %v2067 = vunpack.c.h.b16 %v292
    %v2068 = vunpack.c.l.b16 %v293
    %v2069 = vunpack.c.h.b16 %v293
    %v2070 = vunpack.c.l.b16 %v294
    %v2071 = vunpack.c.h.b16 %v294
    %v2072 = vunpack.c.l.b16 %v295
    %v2073 = vunpack.c.h.b16 %v295
    %v2074 = vunpack.c.l.b16 %v296
    %v2075 = vunpack.c.h.b16 %v296
    %v2076 = vunpack.c.l.b16 %v297
    %v2077 = vunpack.c.h.b16 %v297
    %v2078 = vunpack.c.l.b16 %v298
    %v2079 = vunpack.c.h.b16 %v298
    %v2080 = vunpack.c.l.b16 %v299
    %v2081 = vunpack.c.h.b16 %v299
    %v2082 = vunpack.c.l.b16 %v300
    %v2083 = vunpack.c.h.b16 %v300
    %v2084 = vunpack.c.l.b16 %v301
    %v2085 = vunpack.c.h.b16 %v301
    %v2086 = vunpack.c.l.b16 %v302
    %v2087 = vunpack.c.h.b16 %v302
    %v2088 = vunpack.c.l.b16 %v303
    %v2089 = vunpack.c.h.b16 %v303
    %v2090 = vunpack.c.l.b16 %v304
    %v2091 = vunpack.c.h.b16 %v304
    %v2092 = vunpack.c.l.b16 %v305
    %v2093 = vunpack.c.h.b16 %v305
    %v2094 = vunpack.c.l.b16 %v306
    %v2095 = vunpack.c.h.b16 %v306
    %v2096 = vunpack.c.l.b16 %v307
    %v2097 = vunpack.c.h.b16 %v307
    %v2098 = vunpack.c.l.b16 %v308
    %v2099 = vunpack.c.h.b16 %v308
    %v2100 = vunpack.c.l.b16 %v309
    %v2101 = vunpack.c.h.b16 %v309
    %v2102 = vunpack.c.l.b16 %v310
    %v2103 = vunpack.c.h.b16 %v310
    %v2104 = vunpack.c.l.b16 %v311
    %v2105 = vunpack.c.h.b16 %v311
    %v2106 = vunpack.c.l.b16 %v312
    %v2107 = vunpack.c.h.b16 %v312
    %v2108 = vunpack.c.l.b16 %v313
    %v2109 = vunpack.c.h.b16 %v313
    %v2110 = vunpack.c.l.b16 %v314
    %v2111 = vunpack.c.h.b16 %v314
    %v2112 = vunpack.c.l.b16 %v315
    %v2113 = vunpack.c.h.b16 %v315
    %v2114 = vunpack.c.l.b16 %v316
    %v2115 = vunpack.c.h.b16 %v316
    %v2116 = vunpack.c.l.b16 %v317
    %v2117 = vunpack.c.h.b16 %v317
    %v2118 = vunpack.c.l.b16 %v318
    %v2119 = vunpack.c.h.b16 %v318
    %v2120 = vunpack.c.l.b16 %v319
    %v2121 = vunpack.c.h.b16 %v319
    %v2122 = vunpack.c.l.b16 %v320
    %v2123 = vunpack.c.h.b16 %v320
    %v2124 = vunpack.c.l.b16 %v321
    %v2125 = vunpack.c.h.b16 %v321
    %v2126 = vunpack.c.l.b16 %v322
    %v2127 = vunpack.c.h.b16 %v322
    %v2128 = vunpack.c.l.b16 %v323
    %v2129 = vunpack.c.h.b16 %v323
    %v2130 = vunpack.c.l.b16 %v324
    %v2131 = vunpack.c.h.b16 %v324
    %v2132 = vunpack.c.l.b16 %v325
    %v2133 = vunpack.c.h.b16 %v325
    %v2134 = vunpack.c.l.b16 %v326
    %v2135 = vunpack.c.h.b16 %v326
    %v2136 = vunpack.c.l.b16 %v327
    %v2137 = vunpack.c.h.b16 %v327
    %v2138 = vunpack.c.l.b16 %v328
    %v2139 = vunpack.c.h.b16 %v328
    %v2140 = vunpack.c.l.b16 %v329
    %v2141 = vunpack.c.h.b16 %v329
    %v2142 = vunpack.c.l.b16 %v330
    %v2143 = vunpack.c.h.b16 %v330
    %v2144 = vunpack.c.l.b16 %v331
    %v2145 = vunpack.c.h.b16 %v331
    %v2146 = vunpack.c.l.b16 %v332
    %v2147 = vunpack.c.h.b16 %v332
    %v2148 = vunpack.c.l.b16 %v333
    %v2149 = vunpack.c.h.b16 %v333
    %v2150 = vunpack.c.l.b16 %v334
    %v2151 = vunpack.c.h.b16 %v334
    %v2152 = vunpack.c.l.b16 %v335
    %v2153 = vunpack.c.h.b16 %v335
    %v2154 = vunpack.c.l.b16 %v336
    %v2155 = vunpack.c.h.b16 %v336
    %v2156 = vunpack.c.l.b16 %v337
    %v2157 = vunpack.c.h.b16 %v337
    %v2158 = vunpack.c.l.b16 %v338
    %v2159 = vunpack.c.h.b16 %v338
    %v2160 = vunpack.c.l.b16 %v339
    %v2161 = vunpack.c.h.b16 %v339
    %v2162 = vunpack.c.l.b16 %v340
    %v2163 = vunpack.c.h.b16 %v340
    %v2164 = vunpack.c.l.b16 %v341
    %v2165 = vunpack.c.h.b16 %v341
    %v2166 = vunpack.c.l.b16 %v342
    %v2167 = vunpack.c.h.b16 %v342
    %v2168 = vunpack.c.l.b16 %v343
    %v2169 = vunpack.c.h.b16 %v343
    %v2170 = vunpack.c.l.b16 %v344
    %v2171 = vunpack.c.h.b16 %v344
    %v2172 = vunpack.c.l.b16 %v345
    %v2173 = vunpack.c.h.b16 %v345
    %v2174 = vunpack.c.l.b16 %v346
    %v2175 = vunpack.c.h.b16 %v346
    %v2176 = vunpack.c.l.b16 %v347
    %v2177 = vunpack.c.h.b16 %v347
    %v2178 = vunpack.c.l.b16 %v348
    %v2179 = vunpack.c.h.b16 %v348
    %v2180 = vunpack.c.l.b16 %v349
    %v2181 = vunpack.c.h.b16 %v349
    %v2182 = vunpack.c.l.b16 %v350
    %v2183 = vunpack.c.h.b16 %v350
    %v2184 = vunpack.c.l.b16 %v351
    %v2185 = vunpack.c.h.b16 %v351
    %v2186 = vunpack.c.l.b16 %v352
    %v2187 = vunpack.c.h.b16 %v352
    %v2188 = vunpack.c.l.b16 %v353
    %v2189 = vunpack.c.h.b16 %v353
    %v2190 = vunpack.c.l.b16 %v354
    %v2191 = vunpack.c.h.b16 %v354
    %v2192 = vunpack.c.l.b16 %v355
    %v2193 = vunpack.c.h.b16 %v355
    %v2194 = vunpack.c.l.b16 %v356
    %v2195 = vunpack.c.h.b16 %v356
    %v2196 = vunpack.c.l.b16 %v357
    %v2197 = vunpack.c.h.b16 %v357
    %v2198 = vunpack.c.l.b16 %v358
    %v2199 = vunpack.c.h.b16 %v358
    %v2200 = vunpack.c.l.b16 %v359
    %v2201 = vunpack.c.h.b16 %v359
    %v2202 = vunpack.c.l.b16 %v360
    %v2203 = vunpack.c.h.b16 %v360
    %v2204 = vunpack.c.l.b16 %v361
    %v2205 = vunpack.c.h.b16 %v361
    %v2206 = vunpack.c.l.b16 %v362
    %v2207 = vunpack.c.h.b16 %v362
    %v2208 = vunpack.c.l.b16 %v363
    %v2209 = vunpack.c.h.b16 %v363
    %v2210 = vunpack.c.l.b16 %v364
    %v2211 = vunpack.c.h.b16 %v364
    %v2212 = vunpack.c.l.b16 %v365
    %v2213 = vunpack.c.h.b16 %v365
    %v2214 = vunpack.c.l.b16 %v366
    %v2215 = vunpack.c.h.b16 %v366
    %v2216 = vunpack.c.l.b16 %v367
    %v2217 = vunpack.c.h.b16 %v367
    %v2218 = vunpack.c.l.b16 %v368
    %v2219 = vunpack.c.h.b16 %v368
    %v2220 = vunpack.c.l.b16 %v369
    %v2221 = vunpack.c.h.b16 %v369
    %v2222 = vunpack.c.l.b16 %v370
    %v2223 = vunpack.c.h.b16 %v370
    %v2224 = vunpack.c.l.b16 %v371
    %v2225 = vunpack.c.h.b16 %v371
    %v2226 = vunpack.c.l.b16 %v372
    %v2227 = vunpack.c.h.b16 %v372
    %v2228 = vunpack.c.l.b16 %v373
    %v2229 = vunpack.c.h.b16 %v373
    %v2230 = vunpack.c.l.b16 %v374
    %v2231 = vunpack.c.h.b16 %v374
    %v2232 = vunpack.c.l.b16 %v375
    %v2233 = vunpack.c.h.b16 %v375
    %v2234 = vunpack.c.l.b16 %v376
    %v2235 = vunpack.c.h.b16 %v376
    %v2236 = vunpack.c.l.b16 %v377
    %v2237 = vunpack.c.h.b16 %v377
    %v2238 = vunpack.c.l.b16 %v378
    %v2239 = vunpack.c.h.b16 %v378
    %v2240 = vunpack.c.l.b16 %v379
    %v2241 = vunpack.c.h.b16 %v379
    %v2242 = vunpack.c.l.b16 %v380
    %v2243 = vunpack.c.h.b16 %v380
    %v2244 = vunpack.c.l.b16 %v381
    %v2245 = vunpack.c.h.b16 %v381
    %v2246 = vunpack.c.l.b16 %v382
    %v2247 = vunpack.c.h.b16 %v382
    %v2248 = vunpack.c.l.b16 %v383
    %v2249 = vunpack.c.h.b16 %v383
    %v2250 = vunpack.c.l.b16 %v384
    %v2251 = vunpack.c.h.b16 %v384
    %v2252 = vunpack.c.l.b16 %v385
    %v2253 = vunpack.c.h.b16 %v385
    %v2254 = vunpack.c.l.b16 %v386
    %v2255 = vunpack.c.h.b16 %v386
    %v2256 = vunpack.c.l.b16 %v387
    %v2257 = vunpack.c.h.b16 %v387
    %v2258 = vunpack.c.l.b16 %v388
    %v2259 = vunpack.c.h.b16 %v388
    %v2260 = vunpack.c.l.b16 %v389
    %v2261 = vunpack.c.h.b16 %v389
    %v2262 = vunpack.c.l.b16 %v390
    %v2263 = vunpack.c.h.b16 %v390
    %v2264 = vunpack.c.l.b16 %v391
    %v2265 = vunpack.c.h.b16 %v391
    %v2266 = vunpack.c.l.b16 %v392
    %v2267 = vunpack.c.h.b16 %v392
    %v2268 = vunpack.c.l.b16 %v393
    %v2269 = vunpack.c.h.b16 %v393
    %v2270 = vunpack.c.l.b16 %v394
    %v2271 = vunpack.c.h.b16 %v394
    %v2272 = vunpack.c.l.b16 %v395
    %v2273 = vunpack.c.h.b16 %v395
    %v2274 = vunpack.c.l.b16 %v396
    %v2275 = vunpack.c.h.b16 %v396
    %v2276 = vunpack.c.l.b16 %v397
    %v2277 = vunpack.c.h.b16 %v397
    %v2278 = vunpack.c.l.b16 %v398
    %v2279 = vunpack.c.h.b16 %v398
    %v2280 = vunpack.c.l.b16 %v399
    %v2281 = vunpack.c.h.b16 %v399
    %v2282 = vunpack.c.l.b16 %v400
    %v2283 = vunpack.c.h.b16 %v400
    %v2284 = vunpack.c.l.b16 %v401
    %v2285 = vunpack.c.h.b16 %v401
    %v2286 = vunpack.c.l.b16 %v402
    %v2287 = vunpack.c.h.b16 %v402
    %v2288 = vunpack.c.l.b16 %v403
    %v2289 = vunpack.c.h.b16 %v403
    %v2290 = vunpack.c.l.b16 %v404
    %v2291 = vunpack.c.h.b16 %v404
    %v2292 = vunpack.c.l.b16 %v405
    %v2293 = vunpack.c.h.b16 %v405
    %v2294 = vunpack.c.l.b16 %v406
    %v2295 = vunpack.c.h.b16 %v406
    %v2296 = vunpack.c.l.b16 %v407
    %v2297 = vunpack.c.h.b16 %v407
    %v2298 = vunpack.c.l.b16 %v408
    %v2299 = vunpack.c.h.b16 %v408
    %v2300 = vunpack.c.l.b16 %v409
    %v2301 = vunpack.c.h.b16 %v409
    %v2302 = vunpack.c.l.b16 %v410
    %v2303 = vunpack.c.h.b16 %v410
    %v2304 = vunpack.c.l.b16 %v411
    %v2305 = vunpack.c.h.b16 %v411
    %v2306 = vunpack.c.l.b16 %v412
    %v2307 = vunpack.c.h.b16 %v412
    %v2308 = vunpack.c.l.b16 %v413
    %v2309 = vunpack.c.h.b16 %v413
    %v2310 = vunpack.c.l.b16 %v414
    %v2311 = vunpack.c.h.b16 %v414
    %v2312 = vunpack.c.l.b16 %v415
    %v2313 = vunpack.c.h.b16 %v415
    %v2314 = vunpack.c.l.b16 %v416
    %v2315 = vunpack.c.h.b16 %v416
    %v2316 = vunpack.c.l.b16 %v417
    %v2317 = vunpack.c.h.b16 %v417
    %v2318 = vunpack.c.l.b16 %v418
    %v2319 = vunpack.c.h.b16 %v418
    %v2320 = vunpack.c.l.b16 %v419
    %v2321 = vunpack.c.h.b16 %v419
    %v2322 = vunpack.c.l.b16 %v420
    %v2323 = vunpack.c.h.b16 %v420
    %v2324 = vunpack.c.l.b16 %v421
    %v2325 = vunpack.c.h.b16 %v421
    %v2326 = vunpack.c.l.b16 %v422
    %v2327 = vunpack.c.h.b16 %v422
    %v2328 = vunpack.c.l.b16 %v423
    %v2329 = vunpack.c.h.b16 %v423
    %v2330 = vunpack.c.l.b16 %v424
    %v2331 = vunpack.c.h.b16 %v424
    %v2332 = vunpack.c.l.b16 %v425
    %v2333 = vunpack.c.h.b16 %v425
    %v2334 = vunpack.c.l.b16 %v426
    %v2335 = vunpack.c.h.b16 %v426
    %v2336 = vunpack.c.l.b16 %v427
    %v2337 = vunpack.c.h.b16 %v427
    %v2338 = vunpack.c.l.b16 %v428
    %v2339 = vunpack.c.h.b16 %v428
    %v2340 = vunpack.c.l.b16 %v429
    %v2341 = vunpack.c.h.b16 %v429
    %v2342 = vunpack.c.l.b16 %v430
    %v2343 = vunpack.c.h.b16 %v430
    %v2344 = vunpack.c.l.b16 %v431
    %v2345 = vunpack.c.h.b16 %v431
    %v2346 = vunpack.c.l.b16 %v432
    %v2347 = vunpack.c.h.b16 %v432
    %v2348 = vunpack.c.l.b16 %v433
    %v2349 = vunpack.c.h.b16 %v433
    %v2350 = vunpack.c.l.b16 %v434
    %v2351 = vunpack.c.h.b16 %v434
    %v2352 = vunpack.c.l.b16 %v435
    %v2353 = vunpack.c.h.b16 %v435
    %v2354 = vunpack.c.l.b16 %v436
    %v2355 = vunpack.c.h.b16 %v436
    %v2356 = vunpack.c.l.b16 %v437
    %v2357 = vunpack.c.h.b16 %v437
    %v2358 = vunpack.c.l.b16 %v438
    %v2359 = vunpack.c.h.b16 %v438
    %v2360 = vunpack.c.l.b16 %v439
    %v2361 = vunpack.c.h.b16 %v439
    %v2362 = vunpack.c.l.b16 %v440
    %v2363 = vunpack.c.h.b16 %v440
    %v2364 = vunpack.c.l.b16 %v441
    %v2365 = vunpack.c.h.b16 %v441
    %v2366 = vunpack.c.l.b16 %v442
    %v2367 = vunpack.c.h.b16 %v442
    %v2368 = vunpack.c.l.b16 %v443
    %v2369 = vunpack.c.h.b16 %v443
    %v2370 = vunpack.c.l.b16 %v444
    %v2371 = vunpack.c.h.b16 %v444
    %v2372 = vunpack.c.l.b16 %v445
    %v2373 = vunpack.c.h.b16 %v445
    %v2374 = vunpack.c.l.b16 %v446
    %v2375 = vunpack.c.h.b16 %v446
    %v2376 = vunpack.c.l.b16 %v447
    %v2377 = vunpack.c.h.b16 %v447
    %v2378 = vunpack.c.l.b16 %v448
    %v2379 = vunpack.c.h.b16 %v448
    %v2380 = vunpack.c.l.b16 %v449
    %v2381 = vunpack.c.h.b16 %v449
    %v2382 = vunpack.c.l.b16 %v450
    %v2383 = vunpack.c.h.b16 %v450
    %v2384 = vunpack.c.l.b16 %v451
    %v2385 = vunpack.c.h.b16 %v451
    %v2386 = vunpack.c.l.b16 %v452
    %v2387 = vunpack.c.h.b16 %v452
    %v2388 = vunpack.c.l.b16 %v453
    %v2389 = vunpack.c.h.b16 %v453
    %v2390 = vunpack.c.l.b16 %v454
    %v2391 = vunpack.c.h.b16 %v454
    %v2392 = vunpack.c.l.b16 %v455
    %v2393 = vunpack.c.h.b16 %v455
    %v2394 = vunpack.c.l.b16 %v456
    %v2395 = vunpack.c.h.b16 %v456
    %v2396 = vunpack.c.l.b16 %v457
    %v2397 = vunpack.c.h.b16 %v457
    %v2398 = vunpack.c.l.b16 %v458
    %v2399 = vunpack.c.h.b16 %v458
    %v2400 = vunpack.c.l.b16 %v459
    %v2401 = vunpack.c.h.b16 %v459
    %v2402 = vunpack.c.l.b16 %v460
    %v2403 = vunpack.c.h.b16 %v460
    %v2404 = vunpack.c.l.b16 %v461
    %v2405 = vunpack.c.h.b16 %v461
    %v2406 = vunpack.c.l.b16 %v462
    %v2407 = vunpack.c.h.b16 %v462
    %v2408 = vunpack.c.l.b16 %v463
    %v2409 = vunpack.c.h.b16 %v463
    %v2410 = vunpack.c.l.b16 %v464
    %v2411 = vunpack.c.h.b16 %v464
    %v2412 = vunpack.c.l.b16 %v465
    %v2413 = vunpack.c.h.b16 %v465
    %v2414 = vunpack.c.l.b16 %v466
    %v2415 = vunpack.c.h.b16 %v466
    %v2416 = vunpack.c.l.b16 %v467
    %v2417 = vunpack.c.h.b16 %v467
    %v2418 = vunpack.c.l.b16 %v468
    %v2419 = vunpack.c.h.b16 %v468
    %v2420 = vunpack.c.l.b16 %v469
    %v2421 = vunpack.c.h.b16 %v469
    %v2422 = vunpack.c.l.b16 %v470
    %v2423 = vunpack.c.h.b16 %v470
    %v2424 = vunpack.c.l.b16 %v471
    %v2425 = vunpack.c.h.b16 %v471
    %v2426 = vunpack.c.l.b16 %v472
    %v2427 = vunpack.c.h.b16 %v472
    %v2428 = vunpack.c.l.b16 %v473
    %v2429 = vunpack.c.h.b16 %v473
    %v2430 = vunpack.c.l.b16 %v474
    %v2431 = vunpack.c.h.b16 %v474
    %v2432 = vunpack.c.l.b16 %v475
    %v2433 = vunpack.c.h.b16 %v475
    %v2434 = vunpack.c.l.b16 %v476
    %v2435 = vunpack.c.h.b16 %v476
    %v2436 = vunpack.c.l.b16 %v477
    %v2437 = vunpack.c.h.b16 %v477
    %v2438 = vunpack.c.l.b16 %v478
    %v2439 = vunpack.c.h.b16 %v478
    %v2440 = vunpack.c.l.b16 %v479
    %v2441 = vunpack.c.h.b16 %v479
    %v2442 = vunpack.c.l.b16 %v480
    %v2443 = vunpack.c.h.b16 %v480
    %v2444 = vunpack.c.l.b16 %v481
    %v2445 = vunpack.c.h.b16 %v481
    %v2446 = vunpack.c.l.b16 %v482
    %v2447 = vunpack.c.h.b16 %v482
    %v2448 = vunpack.c.l.b16 %v483
    %v2449 = vunpack.c.h.b16 %v483
    %v2450 = vunpack.c.l.b16 %v484
    %v2451 = vunpack.c.h.b16 %v484
    %v2452 = vunpack.c.l.b16 %v485
    %v2453 = vunpack.c.h.b16 %v485
    %v2454 = vunpack.c.l.b16 %v486
    %v2455 = vunpack.c.h.b16 %v486
    %v2456 = vunpack.c.l.b16 %v487
    %v2457 = vunpack.c.h.b16 %v487
    %v2458 = vunpack.c.l.b16 %v488
    %v2459 = vunpack.c.h.b16 %v488
    %v2460 = vunpack.c.l.b16 %v489
    %v2461 = vunpack.c.h.b16 %v489
    %v2462 = vunpack.c.l.b16 %v490
    %v2463 = vunpack.c.h.b16 %v490
    %v2464 = vunpack.c.l.b16 %v491
    %v2465 = vunpack.c.h.b16 %v491
    %v2466 = vunpack.c.l.b16 %v492
    %v2467 = vunpack.c.h.b16 %v492
    %v2468 = vunpack.c.l.b16 %v493
    %v2469 = vunpack.c.h.b16 %v493
    %v2470 = vunpack.c.l.b16 %v494
    %v2471 = vunpack.c.h.b16 %v494
    %v2472 = vunpack.c.l.b16 %v495
    %v2473 = vunpack.c.h.b16 %v495
    %v2474 = vunpack.c.l.b16 %v496
    %v2475 = vunpack.c.h.b16 %v496
    %v2476 = vunpack.c.l.b16 %v497
    %v2477 = vunpack.c.h.b16 %v497
    %v2478 = vunpack.c.l.b16 %v498
    %v2479 = vunpack.c.h.b16 %v498
    %v2480 = vunpack.c.l.b16 %v499
    %v2481 = vunpack.c.h.b16 %v499
    %v2482 = vunpack.c.l.b16 %v500
    %v2483 = vunpack.c.h.b16 %v500
    %v2484 = vunpack.c.l.b16 %v501
    %v2485 = vunpack.c.h.b16 %v501
    %v2486 = vunpack.c.l.b16 %v502
    %v2487 = vunpack.c.h.b16 %v502
    %v2488 = vunpack.c.l.b16 %v503
    %v2489 = vunpack.c.h.b16 %v503
    %v2490 = vunpack.c.l.b16 %v504
    %v2491 = vunpack.c.h.b16 %v504
    %v2492 = vunpack.c.l.b16 %v505
    %v2493 = vunpack.c.h.b16 %v505
    %v2494 = vunpack.c.l.b16 %v506
    %v2495 = vunpack.c.h.b16 %v506
    %v2496 = vunpack.c.l.b16 %v507
    %v2497 = vunpack.c.h.b16 %v507
    %v2498 = vunpack.c.l.b16 %v508
    %v2499 = vunpack.c.h.b16 %v508
    %v2500 = vunpack.c.l.b16 %v509
    %v2501 = vunpack.c.h.b16 %v509
    %v2502 = vunpack.c.l.b16 %v510
    %v2503 = vunpack.c.h.b16 %v510
    %v2504 = vunpack.c.l.b16 %v511
    %v2505 = vunpack.c.h.b16 %v511
    %v2506 = vunpack.c.l.b16 %v512
    %v2507 = vunpack.c.h.b16 %v512
    %v2508 = vunpack.c.l.b16 %v513
    %v2509 = vunpack.c.h.b16 %v513
    %v2510 = vunpack.c.l.b16 %v514
    %v2511 = vunpack.c.h.b16 %v514
    %v2512 = vunpack.c.l.b16 %v515
    %v2513 = vunpack.c.h.b16 %v515
    %v2514 = vunpack.c.l.b16 %v516
    %v2515 = vunpack.c.h.b16 %v516
    %v2516 = vunpack.c.l.b16 %v517
    %v2517 = vunpack.c.h.b16 %v517
    %v2518 = vunpack.c.l.b16 %v518
    %v2519 = vunpack.c.h.b16 %v518
    %v2520 = vunpack.c.l.b16 %v519
    %v2521 = vunpack.c.h.b16 %v519
    %v2522 = vunpack.c.l.b16 %v520
    %v2523 = vunpack.c.h.b16 %v520
    %v2524 = vunpack.c.l.b16 %v521
    %v2525 = vunpack.c.h.b16 %v521
    %v2526 = vunpack.c.l.b16 %v522
    %v2527 = vunpack.c.h.b16 %v522
    %v2528 = vunpack.c.l.b16 %v523
    %v2529 = vunpack.c.h.b16 %v523
    %v2530 = vunpack.c.l.b16 %v524
    %v2531 = vunpack.c.h.b16 %v524
    %v2532 = vunpack.c.l.b16 %v525
    %v2533 = vunpack.c.h.b16 %v525
    %v2534 = vunpack.c.l.b16 %v526
    %v2535 = vunpack.c.h.b16 %v526
    %v2536 = vunpack.c.l.b16 %v527
    %v2537 = vunpack.c.h.b16 %v527
    %v2538 = vunpack.c.l.b16 %v528
    %v2539 = vunpack.c.h.b16 %v528
    %v2540 = vunpack.c.l.b16 %v529
    %v2541 = vunpack.c.h.b16 %v529
    %v2542 = vunpack.c.l.b16 %v530
    %v2543 = vunpack.c.h.b16 %v530
    %v2544 = vunpack.c.l.b16 %v531
    %v2545 = vunpack.c.h.b16 %v531
    %v2546 = vunpack.c.l.b16 %v532
    %v2547 = vunpack.c.h.b16 %v532
    %v2548 = vunpack.c.l.b16 %v533
    %v2549 = vunpack.c.h.b16 %v533
    %v2550 = vunpack.c.l.b16 %v534
    %v2551 = vunpack.c.h.b16 %v534
    %v2552 = vunpack.c.l.b16 %v535
    %v2553 = vunpack.c.h.b16 %v535
    %v2554 = vunpack.c.l.b16 %v536
    %v2555 = vunpack.c.h.b16 %v536
    %v2556 = vunpack.c.l.b16 %v537
    %v2557 = vunpack.c.h.b16 %v537
    %v2558 = vunpack.c.l.b16 %v538
    %v2559 = vunpack.c.h.b16 %v538
    %v2560 = vunpack.c.l.b16 %v539
    %v2561 = vunpack.c.h.b16 %v539
    %v2562 = vunpack.c.l.b16 %v540
    %v2563 = vunpack.c.h.b16 %v540
    %v2564 = vunpack.c.l.b16 %v541
    %v2565 = vunpack.c.h.b16 %v541
    %v2566 = vunpack.c.l.b16 %v542
    %v2567 = vunpack.c.h.b16 %v542
    %v2568 = vunpack.c.l.b16 %v543
    %v2569 = vunpack.c.h.b16 %v543
    %v2570 = vunpack.c.l.b16 %v544
    %v2571 = vunpack.c.h.b16 %v544
    %v2572 = vunpack.c.l.b16 %v545
    %v2573 = vunpack.c.h.b16 %v545
    %v2574 = vunpack.c.l.b16 %v546
    %v2575 = vunpack.c.h.b16 %v546
    %v2576 = vunpack.c.l.b16 %v547
    %v2577 = vunpack.c.h.b16 %v547
    %v2578 = vunpack.c.l.b16 %v548
    %v2579 = vunpack.c.h.b16 %v548
    %v2580 = vunpack.c.l.b16 %v549
    %v2581 = vunpack.c.h.b16 %v549
    %v2582 = vunpack.c.l.b16 %v550
    %v2583 = vunpack.c.h.b16 %v550
    %v2584 = vunpack.c.l.b16 %v551
    %v2585 = vunpack.c.h.b16 %v551
    %v2586 = vunpack.c.l.b16 %v552
    %v2587 = vunpack.c.h.b16 %v552
    %v2588 = vunpack.c.l.b16 %v553
    %v2589 = vunpack.c.h.b16 %v553
    %v2590 = vunpack.c.l.b16 %v554
    %v2591 = vunpack.c.h.b16 %v554
    %v2592 = vunpack.c.l.b16 %v555
    %v2593 = vunpack.c.h.b16 %v555
    %v2594 = vunpack.c.l.b16 %v556
    %v2595 = vunpack.c.h.b16 %v556
    %v2596 = vunpack.c.l.b16 %v557
    %v2597 = vunpack.c.h.b16 %v557
    %v2598 = vunpack.c.l.b16 %v558
    %v2599 = vunpack.c.h.b16 %v558
    %v2600 = vunpack.c.l.b16 %v559
    %v2601 = vunpack.c.h.b16 %v559
    %v2602 = vunpack.c.l.b16 %v560
    %v2603 = vunpack.c.h.b16 %v560
    %v2604 = vunpack.c.l.b16 %v561
    %v2605 = vunpack.c.h.b16 %v561
    %v2606 = vunpack.c.l.b16 %v562
    %v2607 = vunpack.c.h.b16 %v562
    %v2608 = vunpack.c.l.b16 %v563
    %v2609 = vunpack.c.h.b16 %v563
    %v2610 = vunpack.c.l.b16 %v564
    %v2611 = vunpack.c.h.b16 %v564
    %v2612 = vunpack.c.l.b16 %v565
    %v2613 = vunpack.c.h.b16 %v565
    %v2614 = vunpack.c.l.b16 %v566
    %v2615 = vunpack.c.h.b16 %v566
    %v2616 = vunpack.c.l.b16 %v567
    %v2617 = vunpack.c.h.b16 %v567
    %v2618 = vunpack.c.l.b16 %v568
    %v2619 = vunpack.c.h.b16 %v568
    %v2620 = vunpack.c.l.b16 %v569
    %v2621 = vunpack.c.h.b16 %v569
    %v2622 = vunpack.c.l.b16 %v570
    %v2623 = vunpack.c.h.b16 %v570
    %v2624 = vunpack.c.l.b16 %v571
    %v2625 = vunpack.c.h.b16 %v571
    %v2626 = vunpack.c.l.b16 %v572
    %v2627 = vunpack.c.h.b16 %v572
    %v2628 = vunpack.c.l.b16 %v573
    %v2629 = vunpack.c.h.b16 %v573
    %v2630 = vunpack.c.l.b16 %v574
    %v2631 = vunpack.c.h.b16 %v574
    %v2632 = vunpack.c.l.b16 %v575
    %v2633 = vunpack.c.h.b16 %v575
    %v2634 = vunpack.c.l.b16 %v576
    %v2635 = vunpack.c.h.b16 %v576
    %v2636 = vunpack.c.l.b16 %v577
    %v2637 = vunpack.c.h.b16 %v577
    %v2638 = vunpack.c.l.b16 %v578
    %v2639 = vunpack.c.h.b16 %v578
    %v2640 = vunpack.c.l.b16 %v579
    %v2641 = vunpack.c.h.b16 %v579
    %v2642 = vunpack.c.l.b16 %v580
    %v2643 = vunpack.c.h.b16 %v580
    %v2644 = vunpack.c.l.b16 %v581
    %v2645 = vunpack.c.h.b16 %v581
    %v2646 = vunpack.c.l.b16 %v582
    %v2647 = vunpack.c.h.b16 %v582
    %v2648 = vunpack.c.l.b16 %v583
    %v2649 = vunpack.c.h.b16 %v583
    %v2650 = vunpack.c.l.b16 %v584
    %v2651 = vunpack.c.h.b16 %v584
    %v2652 = vunpack.c.l.b16 %v585
    %v2653 = vunpack.c.h.b16 %v585
    %v2654 = vunpack.c.l.b16 %v586
    %v2655 = vunpack.c.h.b16 %v586
    %v2656 = vunpack.c.l.b16 %v587
    %v2657 = vunpack.c.h.b16 %v587
    %v2658 = vunpack.c.l.b16 %v588
    %v2659 = vunpack.c.h.b16 %v588
    %v2660 = vunpack.c.l.b16 %v589
    %v2661 = vunpack.c.h.b16 %v589
    %v2662 = vunpack.c.l.b16 %v590
    %v2663 = vunpack.c.h.b16 %v590
    %v2664 = vunpack.c.l.b16 %v591
    %v2665 = vunpack.c.h.b16 %v591
    %v2666 = vunpack.c.l.b16 %v592
    %v2667 = vunpack.c.h.b16 %v592
    %v2668 = vunpack.c.l.b16 %v593
    %v2669 = vunpack.c.h.b16 %v593
    %v2670 = vunpack.c.l.b16 %v594
    %v2671 = vunpack.c.h.b16 %v594
    %v2672 = vunpack.c.l.b16 %v595
    %v2673 = vunpack.c.h.b16 %v595
    %v2674 = vunpack.c.l.b16 %v596
    %v2675 = vunpack.c.h.b16 %v596
    %v2676 = vunpack.c.l.b16 %v597
    %v2677 = vunpack.c.h.b16 %v597
    %v2678 = vunpack.c.l.b16 %v598
    %v2679 = vunpack.c.h.b16 %v598
    %v2680 = vunpack.c.l.b16 %v599
    %v2681 = vunpack.c.h.b16 %v599
    %v2682 = vunpack.c.l.b16 %v600
    %v2683 = vunpack.c.h.b16 %v600
    %v2684 = vunpack.c.l.b16 %v601
    %v2685 = vunpack.c.h.b16 %v601
    %v2686 = vunpack.c.l.b16 %v602
    %v2687 = vunpack.c.h.b16 %v602
    %v2688 = vunpack.c.l.b16 %v603
    %v2689 = vunpack.c.h.b16 %v603
    %v2690 = vunpack.c.l.b16 %v604
    %v2691 = vunpack.c.h.b16 %v604
    %v2692 = vunpack.c.l.b16 %v605
    %v2693 = vunpack.c.h.b16 %v605
    %v2694 = vunpack.c.l.b16 %v606
    %v2695 = vunpack.c.h.b16 %v606
    %v2696 = vunpack.c.l.b16 %v607
    %v2697 = vunpack.c.h.b16 %v607
    %v2698 = vunpack.c.l.b16 %v608
    %v2699 = vunpack.c.h.b16 %v608
    %v2700 = vunpack.c.l.b16 %v609
    %v2701 = vunpack.c.h.b16 %v609
    %v2702 = vunpack.c.l.b16 %v610
    %v2703 = vunpack.c.h.b16 %v610
    %v2704 = vunpack.c.l.b16 %v611
    %v2705 = vunpack.c.h.b16 %v611
    %v2706 = vunpack.c.l.b16 %v612
    %v2707 = vunpack.c.h.b16 %v612
    %v2708 = vunpack.c.l.b16 %v613
    %v2709 = vunpack.c.h.b16 %v613
    %v2710 = vunpack.c.l.b16 %v614
    %v2711 = vunpack.c.h.b16 %v614
    %v2712 = vunpack.c.l.b16 %v615
    %v2713 = vunpack.c.h.b16 %v615
    %v2714 = vunpack.c.l.b16 %v616
    %v2715 = vunpack.c.h.b16 %v616
    %v2716 = vunpack.c.l.b16 %v617
    %v2717 = vunpack.c.h.b16 %v617
    %v2718 = vunpack.c.l.b16 %v618
    %v2719 = vunpack.c.h.b16 %v618
    %v2720 = vunpack.c.l.b16 %v619
    %v2721 = vunpack.c.h.b16 %v619
    %v2722 = vunpack.c.l.b16 %v620
    %v2723 = vunpack.c.h.b16 %v620
    %v2724 = vunpack.c.l.b16 %v621
    %v2725 = vunpack.c.h.b16 %v621
    %v2726 = vunpack.c.l.b16 %v622
    %v2727 = vunpack.c.h.b16 %v622
    %v2728 = vunpack.c.l.b16 %v623
    %v2729 = vunpack.c.h.b16 %v623
    %v2730 = vunpack.c.l.b16 %v624
    %v2731 = vunpack.c.h.b16 %v624
    %v2732 = vunpack.c.l.b16 %v625
    %v2733 = vunpack.c.h.b16 %v625
    %v2734 = vunpack.c.l.b16 %v626
    %v2735 = vunpack.c.h.b16 %v626
    %v2736 = vunpack.c.l.b16 %v627
    %v2737 = vunpack.c.h.b16 %v627
    %v2738 = vunpack.c.l.b16 %v628
    %v2739 = vunpack.c.h.b16 %v628
    %v2740 = vunpack.c.l.b16 %v629
    %v2741 = vunpack.c.h.b16 %v629
    %v2742 = vunpack.c.l.b16 %v630
    %v2743 = vunpack.c.h.b16 %v630
    %v2744 = vunpack.c.l.b16 %v631
    %v2745 = vunpack.c.h.b16 %v631
    %v2746 = vunpack.c.l.b16 %v632
    %v2747 = vunpack.c.h.b16 %v632
    %v2748 = vunpack.c.l.b16 %v633
    %v2749 = vunpack.c.h.b16 %v633
    %v2750 = vunpack.c.l.b16 %v634
    %v2751 = vunpack.c.h.b16 %v634
    %v2752 = vunpack.c.l.b16 %v635
    %v2753 = vunpack.c.h.b16 %v635
    %v2754 = vunpack.c.l.b16 %v636
    %v2755 = vunpack.c.h.b16 %v636
    %v2756 = vunpack.c.l.b16 %v637
    %v2757 = vunpack.c.h.b16 %v637
    %v2758 = vunpack.c.l.b16 %v638
    %v2759 = vunpack.c.h.b16 %v638
    %v2760 = vunpack.c.l.b16 %v639
    %v2761 = vunpack.c.h.b16 %v639
    %v2762 = vunpack.c.l.b16 %v640
    %v2763 = vunpack.c.h.b16 %v640
    %v2764 = vunpack.c.l.b16 %v641
    %v2765 = vunpack.c.h.b16 %v641
    %v2766 = vunpack.c.l.b16 %v642
    %v2767 = vunpack.c.h.b16 %v642
    %v2768 = vunpack.c.l.b16 %v643
    %v2769 = vunpack.c.h.b16 %v643
    %v2770 = vunpack.c.l.b16 %v644
    %v2771 = vunpack.c.h.b16 %v644
    %v2772 = vunpack.c.l.b16 %v645
    %v2773 = vunpack.c.h.b16 %v645
    %v2774 = vunpack.c.l.b16 %v646
    %v2775 = vunpack.c.h.b16 %v646
    %v2776 = vunpack.c.l.b16 %v647
    %v2777 = vunpack.c.h.b16 %v647
    %v2778 = vunpack.c.l.b16 %v648
    %v2779 = vunpack.c.h.b16 %v648
    %v2780 = vunpack.c.l.b16 %v649
    %v2781 = vunpack.c.h.b16 %v649
    %v2782 = vunpack.c.l.b16 %v650
    %v2783 = vunpack.c.h.b16 %v650
    %v2784 = vunpack.c.l.b16 %v651
    %v2785 = vunpack.c.h.b16 %v651
    %v2786 = vunpack.c.l.b16 %v652
    %v2787 = vunpack.c.h.b16 %v652
    %v2788 = vunpack.c.l.b16 %v653
    %v2789 = vunpack.c.h.b16 %v653
    %v2790 = vunpack.c.l.b16 %v654
    %v2791 = vunpack.c.h.b16 %v654
    %v2792 = vunpack.c.l.b16 %v655
    %v2793 = vunpack.c.h.b16 %v655
    %v2794 = vunpack.c.l.b16 %v656
    %v2795 = vunpack.c.h.b16 %v656
    %v2796 = vunpack.c.l.b16 %v657
    %v2797 = vunpack.c.h.b16 %v657
    %v2798 = vunpack.c.l.b16 %v658
    %v2799 = vunpack.c.h.b16 %v658
    %v2800 = vunpack.c.l.b16 %v659
    %v2801 = vunpack.c.h.b16 %v659
    %v2802 = vunpack.c.l.b16 %v660
    %v2803 = vunpack.c.h.b16 %v660
    %v2804 = vunpack.c.l.b16 %v661
    %v2805 = vunpack.c.h.b16 %v661
    %v2806 = vunpack.c.l.b16 %v662
    %v2807 = vunpack.c.h.b16 %v662
    %v2808 = vunpack.c.l.b16 %v663
    %v2809 = vunpack.c.h.b16 %v663
    %v2810 = vunpack.c.l.b16 %v664
    %v2811 = vunpack.c.h.b16 %v664
    %v2812 = vunpack.c.l.b16 %v665
    %v2813 = vunpack.c.h.b16 %v665
    %v2814 = vunpack.c.l.b16 %v666
    %v2815 = vunpack.c.h.b16 %v666
    %v2816 = vunpack.c.l.b16 %v667
    %v2817 = vunpack.c.h.b16 %v667
    %v2818 = vunpack.c.l.b16 %v668
    %v2819 = vunpack.c.h.b16 %v668
    %v2820 = vunpack.c.l.b16 %v669
    %v2821 = vunpack.c.h.b16 %v669
    %v2822 = vunpack.c.l.b16 %v670
    %v2823 = vunpack.c.h.b16 %v670
    %v2824 = vunpack.c.l.b16 %v671
    %v2825 = vunpack.c.h.b16 %v671
    %v2826 = vunpack.c.l.b16 %v672
    %v2827 = vunpack.c.h.b16 %v672
    %v2828 = vunpack.c.l.b16 %v673
    %v2829 = vunpack.c.h.b16 %v673
    %v2830 = vunpack.c.l.b16 %v674
    %v2831 = vunpack.c.h.b16 %v674
    %v2832 = vunpack.c.l.b16 %v675
    %v2833 = vunpack.c.h.b16 %v675
    %v2834 = vunpack.c.l.b16 %v676
    %v2835 = vunpack.c.h.b16 %v676
    %v2836 = vunpack.c.l.b16 %v677
    %v2837 = vunpack.c.h.b16 %v677
    %v2838 = vunpack.c.l.b16 %v678
    %v2839 = vunpack.c.h.b16 %v678
    %v2840 = vunpack.c.l.b16 %v679
    %v2841 = vunpack.c.h.b16 %v679
    %v2842 = vunpack.c.l.b16 %v680
    %v2843 = vunpack.c.h.b16 %v680
    %v2844 = vunpack.c.l.b16 %v681
    %v2845 = vunpack.c.h.b16 %v681
    %v2846 = vunpack.c.l.b16 %v682
    %v2847 = vunpack.c.h.b16 %v682
    %v2848 = vunpack.c.l.b16 %v683
    %v2849 = vunpack.c.h.b16 %v683
    %v2850 = vunpack.c.l.b16 %v684
    %v2851 = vunpack.c.h.b16 %v684
    %v2852 = vunpack.c.l.b16 %v685
    %v2853 = vunpack.c.h.b16 %v685
    %v2854 = vunpack.c.l.b16 %v686
    %v2855 = vunpack.c.h.b16 %v686
    %v2856 = vunpack.c.l.b16 %v687
    %v2857 = vunpack.c.h.b16 %v687
    %v2858 = vunpack.c.l.b16 %v688
    %v2859 = vunpack.c.h.b16 %v688
    %v2860 = vunpack.c.l.b16 %v689
    %v2861 = vunpack.c.h.b16 %v689
    %v2862 = vunpack.c.l.b16 %v690
    %v2863 = vunpack.c.h.b16 %v690
    %v2864 = vunpack.c.l.b16 %v691
    %v2865 = vunpack.c.h.b16 %v691
    %v2866 = vunpack.c.l.b16 %v692
    %v2867 = vunpack.c.h.b16 %v692
    %v2868 = vunpack.c.l.b16 %v693
    %v2869 = vunpack.c.h.b16 %v693
    %v2870 = vunpack.c.l.b16 %v694
    %v2871 = vunpack.c.h.b16 %v694
    %v2872 = vunpack.c.l.b16 %v695
    %v2873 = vunpack.c.h.b16 %v695
    %v2874 = vunpack.c.l.b16 %v696
    %v2875 = vunpack.c.h.b16 %v696
    %v2876 = vunpack.c.l.b16 %v697
    %v2877 = vunpack.c.h.b16 %v697
    %v2878 = vunpack.c.l.b16 %v698
    %v2879 = vunpack.c.h.b16 %v698
    %v2880 = vunpack.c.l.b16 %v699
    %v2881 = vunpack.c.h.b16 %v699
    %v2882 = vunpack.c.l.b16 %v700
    %v2883 = vunpack.c.h.b16 %v700
    %v2884 = vunpack.c.l.b16 %v701
    %v2885 = vunpack.c.h.b16 %v701
    %v2886 = vunpack.c.l.b16 %v702
    %v2887 = vunpack.c.h.b16 %v702
    %v2888 = vunpack.c.l.b16 %v703
    %v2889 = vunpack.c.h.b16 %v703
    %v2890 = vunpack.c.l.b16 %v704
    %v2891 = vunpack.c.h.b16 %v704
    %v2892 = vunpack.c.l.b16 %v705
    %v2893 = vunpack.c.h.b16 %v705
    %v2894 = vunpack.c.l.b16 %v706
    %v2895 = vunpack.c.h.b16 %v706
    %v2896 = vunpack.c.l.b16 %v707
    %v2897 = vunpack.c.h.b16 %v707
    %v2898 = vunpack.c.l.b16 %v708
    %v2899 = vunpack.c.h.b16 %v708
    %v2900 = vunpack.c.l.b16 %v709
    %v2901 = vunpack.c.h.b16 %v709
    %v2902 = vunpack.c.l.b16 %v710
    %v2903 = vunpack.c.h.b16 %v710
    %v2904 = vunpack.c.l.b16 %v711
    %v2905 = vunpack.c.h.b16 %v711
    %v2906 = vunpack.c.l.b16 %v712
    %v2907 = vunpack.c.h.b16 %v712
    %v2908 = vunpack.c.l.b16 %v713
    %v2909 = vunpack.c.h.b16 %v713
    %v2910 = vunpack.c.l.b16 %v714
    %v2911 = vunpack.c.h.b16 %v714
    %v2912 = vunpack.c.l.b16 %v715
    %v2913 = vunpack.c.h.b16 %v715
    %v2914 = vunpack.c.l.b16 %v716
    %v2915 = vunpack.c.h.b16 %v716
    %v2916 = vunpack.c.l.b16 %v717
    %v2917 = vunpack.c.h.b16 %v717
    %v2918 = vunpack.c.l.b16 %v718
    %v2919 = vunpack.c.h.b16 %v718
    %v2920 = vunpack.c.l.b16 %v719
    %v2921 = vunpack.c.h.b16 %v719
    %v2922 = vunpack.c.l.b16 %v720
    %v2923 = vunpack.c.h.b16 %v720
    %v2924 = vunpack.c.l.b16 %v721
    %v2925 = vunpack.c.h.b16 %v721
    %v2926 = vunpack.c.l.b16 %v722
    %v2927 = vunpack.c.h.b16 %v722
    %v2928 = vunpack.c.l.b16 %v723
    %v2929 = vunpack.c.h.b16 %v723
    %v2930 = vunpack.c.l.b16 %v724
    %v2931 = vunpack.c.h.b16 %v724
    %v2932 = vunpack.c.l.b16 %v725
    %v2933 = vunpack.c.h.b16 %v725
    %v2934 = vunpack.c.l.b16 %v726
    %v2935 = vunpack.c.h.b16 %v726
    %v2936 = vunpack.c.l.b16 %v727
    %v2937 = vunpack.c.h.b16 %v727
    %v2938 = vunpack.c.l.b16 %v728
    %v2939 = vunpack.c.h.b16 %v728
    %v2940 = vunpack.c.l.b16 %v729
    %v2941 = vunpack.c.h.b16 %v729
    %v2942 = vunpack.c.l.b16 %v730
    %v2943 = vunpack.c.h.b16 %v730
    %v2944 = vunpack.c.l.b16 %v731
    %v2945 = vunpack.c.h.b16 %v731
    %v2946 = vunpack.c.l.b16 %v732
    %v2947 = vunpack.c.h.b16 %v732
    %v2948 = vunpack.c.l.b16 %v733
    %v2949 = vunpack.c.h.b16 %v733
    %v2950 = vunpack.c.l.b16 %v734
    %v2951 = vunpack.c.h.b16 %v734
    %v2952 = vunpack.c.l.b16 %v735
    %v2953 = vunpack.c.h.b16 %v735
    %v2954 = vunpack.c.l.b16 %v736
    %v2955 = vunpack.c.h.b16 %v736
    %v2956 = vunpack.c.l.b16 %v737
    %v2957 = vunpack.c.h.b16 %v737
    %v2958 = vunpack.c.l.b16 %v738
    %v2959 = vunpack.c.h.b16 %v738
    %v2960 = vunpack.c.l.b16 %v739
    %v2961 = vunpack.c.h.b16 %v739
    %v2962 = vunpack.c.l.b16 %v740
    %v2963 = vunpack.c.h.b16 %v740
    %v2964 = vunpack.c.l.b16 %v741
    %v2965 = vunpack.c.h.b16 %v741
    %v2966 = vunpack.c.l.b16 %v742
    %v2967 = vunpack.c.h.b16 %v742
    %v2968 = vunpack.c.l.b16 %v743
    %v2969 = vunpack.c.h.b16 %v743
    %v2970 = vunpack.c.l.b16 %v744
    %v2971 = vunpack.c.h.b16 %v744
    %v2972 = vunpack.c.l.b16 %v745
    %v2973 = vunpack.c.h.b16 %v745
    %v2974 = vunpack.c.l.b16 %v746
    %v2975 = vunpack.c.h.b16 %v746
    %v2976 = vunpack.c.l.b16 %v747
    %v2977 = vunpack.c.h.b16 %v747
    %v2978 = vunpack.c.l.b16 %v748
    %v2979 = vunpack.c.h.b16 %v748
    %v2980 = vunpack.c.l.b16 %v749
    %v2981 = vunpack.c.h.b16 %v749
    %v2982 = vunpack.c.l.b16 %v750
    %v2983 = vunpack.c.h.b16 %v750
    %v2984 = vunpack.c.l.b16 %v751
    %v2985 = vunpack.c.h.b16 %v751
    %v2986 = vunpack.c.l.b16 %v752
    %v2987 = vunpack.c.h.b16 %v752
    %v2988 = vunpack.c.l.b16 %v753
    %v2989 = vunpack.c.h.b16 %v753
    %v2990 = vunpack.c.l.b16 %v754
    %v2991 = vunpack.c.h.b16 %v754
    %v2992 = vunpack.c.l.b16 %v755
    %v2993 = vunpack.c.h.b16 %v755
    %v2994 = vunpack.c.l.b16 %v756
    %v2995 = vunpack.c.h.b16 %v756
    %v2996 = vunpack.c.l.b16 %v757
    %v2997 = vunpack.c.h.b16 %v757
    %v2998 = vunpack.c.l.b16 %v758
    %v2999 = vunpack.c.h.b16 %v758
    %v3000 = vunpack.c.l.b16 %v759
    %v3001 = vunpack.c.h.b16 %v759
    %v3002 = vunpack.c.l.b16 %v760
    %v3003 = vunpack.c.h.b16 %v760
    %v3004 = vunpack.c.l.b16 %v761
    %v3005 = vunpack.c.h.b16 %v761
    %v3006 = vunpack.c.l.b16 %v762
    %v3007 = vunpack.c.h.b16 %v762
    %v3008 = vunpack.c.l.b16 %v763
    %v3009 = vunpack.c.h.b16 %v763
    %v3010 = vunpack.c.l.b16 %v764
    %v3011 = vunpack.c.h.b16 %v764
    %v3012 = vunpack.c.l.b16 %v765
    %v3013 = vunpack.c.h.b16 %v765
    %v3014 = vunpack.c.l.b16 %v766
    %v3015 = vunpack.c.h.b16 %v766
    %v3016 = vunpack.c.l.b16 %v767
    %v3017 = vunpack.c.h.b16 %v767
    %v3018 = vunpack.c.l.b16 %v768
    %v3019 = vunpack.c.h.b16 %v768
    %v3020 = vunpack.c.l.b16 %v769
    %v3021 = vunpack.c.h.b16 %v769
    %v3022 = vunpack.c.l.b16 %v770
    %v3023 = vunpack.c.h.b16 %v770
    %v3024 = vunpack.c.l.b16 %v771
    %v3025 = vunpack.c.h.b16 %v771
    %v3026 = vunpack.c.l.b16 %v772
    %v3027 = vunpack.c.h.b16 %v772
    %v3028 = vunpack.c.l.b16 %v773
    %v3029 = vunpack.c.h.b16 %v773
    %v3030 = vunpack.c.l.b16 %v774
    %v3031 = vunpack.c.h.b16 %v774
    %v3032 = vunpack.c.l.b16 %v775
    %v3033 = vunpack.c.h.b16 %v775
    %v3034 = vunpack.c.l.b16 %v776
    %v3035 = vunpack.c.h.b16 %v776
    %v3036 = vunpack.c.l.b16 %v777
    %v3037 = vunpack.c.h.b16 %v777
    %v3038 = vunpack.c.l.b16 %v778
    %v3039 = vunpack.c.h.b16 %v778
    %v3040 = vunpack.c.l.b16 %v779
    %v3041 = vunpack.c.h.b16 %v779
    %v3042 = vunpack.c.l.b16 %v780
    %v3043 = vunpack.c.h.b16 %v780
    %v3044 = vunpack.c.l.b16 %v781
    %v3045 = vunpack.c.h.b16 %v781
    %v3046 = vunpack.c.l.b16 %v782
    %v3047 = vunpack.c.h.b16 %v782
    %v3048 = vunpack.c.l.b16 %v783
    %v3049 = vunpack.c.h.b16 %v783
    %v3050 = vunpack.c.l.b16 %v784
    %v3051 = vunpack.c.h.b16 %v784
    %v3052 = vunpack.c.l.b16 %v785
    %v3053 = vunpack.c.h.b16 %v785
    %v3054 = vunpack.c.l.b16 %v786
    %v3055 = vunpack.c.h.b16 %v786
    %v3056 = vunpack.c.l.b16 %v787
    %v3057 = vunpack.c.h.b16 %v787
    %v3058 = vunpack.c.l.b16 %v788
    %v3059 = vunpack.c.h.b16 %v788
    %v3060 = vunpack.c.l.b16 %v789
    %v3061 = vunpack.c.h.b16 %v789
    %v3062 = vunpack.c.l.b16 %v790
    %v3063 = vunpack.c.h.b16 %v790
    %v3064 = vunpack.c.l.b16 %v791
    %v3065 = vunpack.c.h.b16 %v791
    %v3066 = vunpack.c.l.b16 %v792
    %v3067 = vunpack.c.h.b16 %v792
    %v3068 = vunpack.c.l.b16 %v793
    %v3069 = vunpack.c.h.b16 %v793
    %v3070 = vunpack.c.l.b16 %v794
    %v3071 = vunpack.c.h.b16 %v794
    %v3072 = vunpack.c.l.b16 %v795
    %v3073 = vunpack.c.h.b16 %v795
    %v3074 = vunpack.c.l.b16 %v796
    %v3075 = vunpack.c.h.b16 %v796
    %v3076 = vunpack.c.l.b16 %v797
    %v3077 = vunpack.c.h.b16 %v797
    %v3078 = vunpack.c.l.b16 %v798
    %v3079 = vunpack.c.h.b16 %v798
    %v3080 = vunpack.c.l.b16 %v799
    %v3081 = vunpack.c.h.b16 %v799
    %v3082 = vunpack.c.l.b16 %v800
    %v3083 = vunpack.c.h.b16 %v800
    %v3084 = vunpack.c.l.b16 %v801
    %v3085 = vunpack.c.h.b16 %v801
    %v3086 = vunpack.c.l.b16 %v802
    %v3087 = vunpack.c.h.b16 %v802
    %v3088 = vunpack.c.l.b16 %v803
    %v3089 = vunpack.c.h.b16 %v803
    %v3090 = vunpack.c.l.b16 %v804
    %v3091 = vunpack.c.h.b16 %v804
    %v3092 = vunpack.c.l.b16 %v805
    %v3093 = vunpack.c.h.b16 %v805
    %v3094 = vunpack.c.l.b16 %v806
    %v3095 = vunpack.c.h.b16 %v806
    %v3096 = vunpack.c.l.b16 %v807
    %v3097 = vunpack.c.h.b16 %v807
    %v3098 = vunpack.c.l.b16 %v808
    %v3099 = vunpack.c.h.b16 %v808
    %v3100 = vunpack.c.l.b16 %v809
    %v3101 = vunpack.c.h.b16 %v809
    %v3102 = vunpack.c.l.b16 %v810
    %v3103 = vunpack.c.h.b16 %v810
    %v3104 = vunpack.c.l.b16 %v811
    %v3105 = vunpack.c.h.b16 %v811
    %v3106 = vunpack.c.l.b16 %v812
    %v3107 = vunpack.c.h.b16 %v812
    %v3108 = vunpack.c.l.b16 %v813
    %v3109 = vunpack.c.h.b16 %v813
    %v3110 = vunpack.c.l.b16 %v814
    %v3111 = vunpack.c.h.b16 %v814
    %v3112 = vunpack.c.l.b16 %v815
    %v3113 = vunpack.c.h.b16 %v815
    %v3114 = vunpack.c.l.b16 %v816
    %v3115 = vunpack.c.h.b16 %v816
    %v3116 = vunpack.c.l.b16 %v817
    %v3117 = vunpack.c.h.b16 %v817
    %v3118 = vunpack.c.l.b16 %v818
    %v3119 = vunpack.c.h.b16 %v818
    %v3120 = vunpack.c.l.b16 %v819
    %v3121 = vunpack.c.h.b16 %v819
    %v3122 = vunpack.c.l.b16 %v820
    %v3123 = vunpack.c.h.b16 %v820
    %v3124 = vunpack.c.l.b16 %v821
    %v3125 = vunpack.c.h.b16 %v821
    %v3126 = vunpack.c.l.b16 %v822
    %v3127 = vunpack.c.h.b16 %v822
    %v3128 = vunpack.c.l.b16 %v823
    %v3129 = vunpack.c.h.b16 %v823
    %v3130 = vunpack.c.l.b16 %v824
    %v3131 = vunpack.c.h.b16 %v824
    %v3132 = vunpack.c.l.b16 %v825
    %v3133 = vunpack.c.h.b16 %v825
    %v3134 = vunpack.c.l.b16 %v826
    %v3135 = vunpack.c.h.b16 %v826
    %v3136 = vunpack.c.l.b16 %v827
    %v3137 = vunpack.c.h.b16 %v827
    %v3138 = vunpack.c.l.b16 %v828
    %v3139 = vunpack.c.h.b16 %v828
    %v3140 = vunpack.c.l.b16 %v829
    %v3141 = vunpack.c.h.b16 %v829
    %v3142 = vunpack.c.l.b16 %v830
    %v3143 = vunpack.c.h.b16 %v830
    %v3144 = vunpack.c.l.b16 %v831
    %v3145 = vunpack.c.h.b16 %v831
    %v3146 = vunpack.c.l.b16 %v832
    %v3147 = vunpack.c.h.b16 %v832
    %v3148 = vunpack.c.l.b16 %v833
    %v3149 = vunpack.c.h.b16 %v833
    %v3150 = vunpack.c.l.b16 %v834
    %v3151 = vunpack.c.h.b16 %v834
    %v3152 = vunpack.c.l.b16 %v835
    %v3153 = vunpack.c.h.b16 %v835
    %v3154 = vunpack.c.l.b16 %v836
    %v3155 = vunpack.c.h.b16 %v836
    %v3156 = vunpack.c.l.b16 %v837
    %v3157 = vunpack.c.h.b16 %v837
    %v3158 = vunpack.c.l.b16 %v838
    %v3159 = vunpack.c.h.b16 %v838
    %v3160 = vunpack.c.l.b16 %v839
    %v3161 = vunpack.c.h.b16 %v839
    %v3162 = vunpack.c.l.b16 %v840
    %v3163 = vunpack.c.h.b16 %v840
    %v3164 = vunpack.c.l.b16 %v841
    %v3165 = vunpack.c.h.b16 %v841
    %v3166 = vunpack.c.l.b16 %v842
    %v3167 = vunpack.c.h.b16 %v842
    %v3168 = vunpack.c.l.b16 %v843
    %v3169 = vunpack.c.h.b16 %v843
    %v3170 = vunpack.c.l.b16 %v844
    %v3171 = vunpack.c.h.b16 %v844
    %v3172 = vunpack.c.l.b16 %v845
    %v3173 = vunpack.c.h.b16 %v845
    %v3174 = vunpack.c.l.b16 %v846
    %v3175 = vunpack.c.h.b16 %v846
    %v3176 = vunpack.c.l.b16 %v847
    %v3177 = vunpack.c.h.b16 %v847
    %v3178 = vunpack.c.l.b16 %v848
    %v3179 = vunpack.c.h.b16 %v848
    %v3180 = vunpack.c.l.b16 %v849
    %v3181 = vunpack.c.h.b16 %v849
    %v3182 = vunpack.c.l.b16 %v850
    %v3183 = vunpack.c.h.b16 %v850
    %v3184 = vunpack.c.l.b16 %v851
    %v3185 = vunpack.c.h.b16 %v851
    %v3186 = vunpack.c.l.b16 %v852
    %v3187 = vunpack.c.h.b16 %v852
    %v3188 = vunpack.c.l.b16 %v853
    %v3189 = vunpack.c.h.b16 %v853
    %v3190 = vunpack.c.l.b16 %v854
    %v3191 = vunpack.c.h.b16 %v854
    %v3192 = vunpack.c.l.b16 %v855
    %v3193 = vunpack.c.h.b16 %v855
    %v3194 = vunpack.c.l.b16 %v856
    %v3195 = vunpack.c.h.b16 %v856
    %v3196 = vunpack.c.l.b16 %v857
    %v3197 = vunpack.c.h.b16 %v857
    %v3198 = vunpack.c.l.b16 %v858
    %v3199 = vunpack.c.h.b16 %v858
    %v3200 = vunpack.c.l.b16 %v859
    %v3201 = vunpack.c.h.b16 %v859
    %v3202 = vpack.c.b16 %v2002, %v1922
    %v3203 = vpack.c.b16 %v2003, %v1923
    %v3204 = vpack.c.b16 %v2004, %v1924
    %v3205 = vpack.c.b16 %v2005, %v1925
    %v3206 = vpack.c.b16 %v2006, %v1926
    %v3207 = vpack.c.b16 %v2007, %v1927
    %v3208 = vpack.c.b16 %v2008, %v1928
    %v3209 = vpack.c.b16 %v2009, %v1929
    %v3210 = vpack.c.b16 %v2010, %v1930
    %v3211 = vpack.c.b16 %v2011, %v1931
    %v3212 = vpack.c.b16 %v2012, %v1932
    %v3213 = vpack.c.b16 %v2013, %v1933
    %v3214 = vpack.c.b16 %v2014, %v1934
    %v3215 = vpack.c.b16 %v2015, %v1935
    %v3216 = vpack.c.b16 %v2016, %v1936
    %v3217 = vpack.c.b16 %v2017, %v1937
    %v3218 = vpack.c.b16 %v2018, %v1938
    %v3219 = vpack.c.b16 %v2019, %v1939
    %v3220 = vpack.c.b16 %v2020, %v1940
    %v3221 = vpack.c.b16 %v2021, %v1941
    %v3222 = vpack.c.b16 %v2022, %v1942
    %v3223 = vpack.c.b16 %v2023, %v1943
    %v3224 = vpack.c.b16 %v2024, %v1944
    %v3225 = vpack.c.b16 %v2025, %v1945
    %v3226 = vpack.c.b16 %v2026, %v1946
    %v3227 = vpack.c.b16 %v2027, %v1947
    %v3228 = vpack.c.b16 %v2028, %v1948
    %v3229 = vpack.c.b16 %v2029, %v1949
    %v3230 = vpack.c.b16 %v2030, %v1950
    %v3231 = vpack.c.b16 %v2031, %v1951
    %v3232 = vpack.c.b16 %v2032, %v1952
    %v3233 = vpack.c.b16 %v2033, %v1953
    %v3234 = vpack.c.b16 %v2034, %v1954
    %v3235 = vpack.c.b16 %v2035, %v1955
    %v3236 = vpack.c.b16 %v2036, %v1956
    %v3237 = vpack.c.b16 %v2037, %v1957
    %v3238 = vpack.c.b16 %v2038, %v1958
    %v3239 = vpack.c.b16 %v2039, %v1959
    %v3240 = vpack.c.b16 %v2040, %v1960
    %v3241 = vpack.c.b16 %v2041, %v1961
    %v3242 = vpack.c.b16 %v2042, %v1962
    %v3243 = vpack.c.b16 %v2043, %v1963
    %v3244 = vpack.c.b16 %v2044, %v1964
    %v3245 = vpack.c.b16 %v2045, %v1965
    %v3246 = vpack.c.b16 %v2046, %v1966
    %v3247 = vpack.c.b16 %v2047, %v1967
    %v3248 = vpack.c.b16 %v2048, %v1968
    %v3249 = vpack.c.b16 %v2049, %v1969
    %v3250 = vpack.c.b16 %v2050, %v1970
    %v3251 = vpack.c.b16 %v2051, %v1971
    %v3252 = vpack.c.b16 %v2052, %v1972
    %v3253 = vpack.c.b16 %v2053, %v1973
    %v3254 = vpack.c.b16 %v2054, %v1974
    %v3255 = vpack.c.b16 %v2055, %v1975
    %v3256 = vpack.c.b16 %v2056, %v1976
    %v3257 = vpack.c.b16 %v2057, %v1977
    %v3258 = vpack.c.b16 %v2058, %v1978
    %v3259 = vpack.c.b16 %v2059, %v1979
    %v3260 = vpack.c.b16 %v2060, %v1980
    %v3261 = vpack.c.b16 %v2061, %v1981
    %v3262 = vpack.c.b16 %v2062, %v1982
    %v3263 = vpack.c.b16 %v2063, %v1983
    %v3264 = vpack.c.b16 %v2064, %v1984
    %v3265 = vpack.c.b16 %v2065, %v1985
    %v3266 = vpack.c.b16 %v2066, %v1986
    %v3267 = vpack.c.b16 %v2067, %v1987
    %v3268 = vpack.c.b16 %v2068, %v1988
    %v3269 = vpack.c.b16 %v2069, %v1989
    %v3270 = vpack.c.b16 %v2070, %v1990
    %v3271 = vpack.c.b16 %v2071, %v1991
    %v3272 = vpack.c.b16 %v2072, %v1992
    %v3273 = vpack.c.b16 %v2073, %v1993
    %v3274 = vpack.c.b16 %v2074, %v1994
    %v3275 = vpack.c.b16 %v2075, %v1995
    %v3276 = vpack.c.b16 %v2076, %v1996
    %v3277 = vpack.c.b16 %v2077, %v1997
    %v3278 = vpack.c.b16 %v2078, %v1998
    %v3279 = vpack.c.b16 %v2079, %v1999
    %v3280 = vpack.c.b16 %v2080, %v2000
    %v3281 = vpack.c.b16 %v2081, %v2001
    %v3282 = vpack.c.b16 %v2162, %v2082
    %v3283 = vpack.c.b16 %v2163, %v2083
    %v3284 = vpack.c.b16 %v2164, %v2084
    %v3285 = vpack.c.b16 %v2165, %v2085
    %v3286 = vpack.c.b16 %v2166, %v2086
    %v3287 = vpack.c.b16 %v2167, %v2087
    %v3288 = vpack.c.b16 %v2168, %v2088
    %v3289 = vpack.c.b16 %v2169, %v2089
    %v3290 = vpack.c.b16 %v2170, %v2090
    %v3291 = vpack.c.b16 %v2171, %v2091
    %v3292 = vpack.c.b16 %v2172, %v2092
    %v3293 = vpack.c.b16 %v2173, %v2093
    %v3294 = vpack.c.b16 %v2174, %v2094
    %v3295 = vpack.c.b16 %v2175, %v2095
    %v3296 = vpack.c.b16 %v2176, %v2096
    %v3297 = vpack.c.b16 %v2177, %v2097
    %v3298 = vpack.c.b16 %v2178, %v2098
    %v3299 = vpack.c.b16 %v2179, %v2099
    %v3300 = vpack.c.b16 %v2180, %v2100
    %v3301 = vpack.c.b16 %v2181, %v2101
    %v3302 = vpack.c.b16 %v2182, %v2102
    %v3303 = vpack.c.b16 %v2183, %v2103
    %v3304 = vpack.c.b16 %v2184, %v2104
    %v3305 = vpack.c.b16 %v2185, %v2105
    %v3306 = vpack.c.b16 %v2186, %v2106
    %v3307 = vpack.c.b16 %v2187, %v2107
    %v3308 = vpack.c.b16 %v2188, %v2108
    %v3309 = vpack.c.b16 %v2189, %v2109
    %v3310 = vpack.c.b16 %v2190, %v2110
    %v3311 = vpack.c.b16 %v2191, %v2111
    %v3312 = vpack.c.b16 %v2192, %v2112
    %v3313 = vpack.c.b16 %v2193, %v2113
    %v3314 = vpack.c.b16 %v2194, %v2114
    %v3315 = vpack.c.b16 %v2195, %v2115
    %v3316 = vpack.c.b16 %v2196, %v2116
    %v3317 = vpack.c.b16 %v2197, %v2117
    %v3318 = vpack.c.b16 %v2198, %v2118
    %v3319 = vpack.c.b16 %v2199, %v2119
    %v3320 = vpack.c.b16 %v2200, %v2120
    %v3321 = vpack.c.b16 %v2201, %v2121
    %v3322 = vpack.c.b16 %v2202, %v2122
    %v3323 = vpack.c.b16 %v2203, %v2123
    %v3324 = vpack.c.b16 %v2204, %v2124
    %v3325 = vpack.c.b16 %v2205, %v2125
    %v3326 = vpack.c.b16 %v2206, %v2126
    %v3327 = vpack.c.b16 %v2207, %v2127
    %v3328 = vpack.c.b16 %v2208, %v2128
    %v3329 = vpack.c.b16 %v2209, %v2129
    %v3330 = vpack.c.b16 %v2210, %v2130
    %v3331 = vpack.c.b16 %v2211, %v2131
    %v3332 = vpack.c.b16 %v2212, %v2132
    %v3333 = vpack.c.b16 %v2213, %v2133
    %v3334 = vpack.c.b16 %v2214, %v2134
    %v3335 = vpack.c.b16 %v2215, %v2135
    %v3336 = vpack.c.b16 %v2216, %v2136
    %v3337 = vpack.c.b16 %v2217, %v2137
    %v3338 = vpack.c.b16 %v2218, %v2138
    %v3339 = vpack.c.b16 %v2219, %v2139
    %v3340 = vpack.c.b16 %v2220, %v2140
    %v3341 = vpack.c.b16 %v2221, %v2141
    %v3342 = vpack.c.b16 %v2222, %v2142
    %v3343 = vpack.c.b16 %v2223, %v2143
    %v3344 = vpack.c.b16 %v2224, %v2144
    %v3345 = vpack.c.b16 %v2225, %v2145
    %v3346 = vpack.c.b16 %v2226, %v2146
    %v3347 = vpack.c.b16 %v2227, %v2147
    %v3348 = vpack.c.b16 %v2228, %v2148
    %v3349 = vpack.c.b16 %v2229, %v2149
    %v3350 = vpack.c.b16 %v2230, %v2150
    %v3351 = vpack.c.b16 %v2231, %v2151
    %v3352 = vpack.c.b16 %v2232, %v2152
    %v3353 = vpack.c.b16 %v2233, %v2153
    %v3354 = vpack.c.b16 %v2234, %v2154
    %v3355 = vpack.c.b16 %v2235, %v2155
    %v3356 = vpack.c.b16 %v2236, %v2156
    %v3357 = vpack.c.b16 %v2237, %v2157
    %v3358 = vpack.c.b16 %v2238, %v2158
    %v3359 = vpack.c.b16 %v2239, %v2159
    %v3360 = vpack.c.b16 %v2240, %v2160
    %v3361 = vpack.c.b16 %v2241, %v2161
    %v3362 = vpack.c.b16 %v2322, %v2242
    %v3363 = vpack.c.b16 %v2323, %v2243
    %v3364 = vpack.c.b16 %v2324, %v2244
    %v3365 = vpack.c.b16 %v2325, %v2245
    %v3366 = vpack.c.b16 %v2326, %v2246
    %v3367 = vpack.c.b16 %v2327, %v2247
    %v3368 = vpack.c.b16 %v2328, %v2248
    %v3369 = vpack.c.b16 %v2329, %v2249
    %v3370 = vpack.c.b16 %v2330, %v2250
    %v3371 = vpack.c.b16 %v2331, %v2251
    %v3372 = vpack.c.b16 %v2332, %v2252
    %v3373 = vpack.c.b16 %v2333, %v2253
    %v3374 = vpack.c.b16 %v2334, %v2254
    %v3375 = vpack.c.b16 %v2335, %v2255
    %v3376 = vpack.c.b16 %v2336, %v2256
    %v3377 = vpack.c.b16 %v2337, %v2257
    %v3378 = vpack.c.b16 %v2338, %v2258
    %v3379 = vpack.c.b16 %v2339, %v2259
    %v3380 = vpack.c.b16 %v2340, %v2260
    %v3381 = vpack.c.b16 %v2341, %v2261
    %v3382 = vpack.c.b16 %v2342, %v2262
    %v3383 = vpack.c.b16 %v2343, %v2263
    %v3384 = vpack.c.b16 %v2344, %v2264
    %v3385 = vpack.c.b16 %v2345, %v2265
    %v3386 = vpack.c.b16 %v2346, %v2266
    %v3387 = vpack.c.b16 %v2347, %v2267
    %v3388 = vpack.c.b16 %v2348, %v2268
    %v3389 = vpack.c.b16 %v2349, %v2269
    %v3390 = vpack.c.b16 %v2350, %v2270
    %v3391 = vpack.c.b16 %v2351, %v2271
    %v3392 = vpack.c.b16 %v2352, %v2272
    %v3393 = vpack.c.b16 %v2353, %v2273
    %v3394 = vpack.c.b16 %v2354, %v2274
    %v3395 = vpack.c.b16 %v2355, %v2275
    %v3396 = vpack.c.b16 %v2356, %v2276
    %v3397 = vpack.c.b16 %v2357, %v2277
    %v3398 = vpack.c.b16 %v2358, %v2278
    %v3399 = vpack.c.b16 %v2359, %v2279
    %v3400 = vpack.c.b16 %v2360, %v2280
    %v3401 = vpack.c.b16 %v2361, %v2281
    %v3402 = vpack.c.b16 %v2362, %v2282
    %v3403 = vpack.c.b16 %v2363, %v2283
    %v3404 = vpack.c.b16 %v2364, %v2284
    %v3405 = vpack.c.b16 %v2365, %v2285
    %v3406 = vpack.c.b16 %v2366, %v2286
    %v3407 = vpack.c.b16 %v2367, %v2287
    %v3408 = vpack.c.b16 %v2368, %v2288
    %v3409 = vpack.c.b16 %v2369, %v2289
    %v3410 = vpack.c.b16 %v2370, %v2290
    %v3411 = vpack.c.b16 %v2371, %v2291
    %v3412 = vpack.c.b16 %v2372, %v2292
    %v3413 = vpack.c.b16 %v2373, %v2293
    %v3414 = vpack.c.b16 %v2374, %v2294
    %v3415 = vpack.c.b16 %v2375, %v2295
    %v3416 = vpack.c.b16 %v2376, %v2296
    %v3417 = vpack.c.b16 %v2377, %v2297
    %v3418 = vpack.c.b16 %v2378, %v2298
    %v3419 = vpack.c.b16 %v2379, %v2299
    %v3420 = vpack.c.b16 %v2380, %v2300
    %v3421 = vpack.c.b16 %v2381, %v2301
    %v3422 = vpack.c.b16 %v2382, %v2302
    %v3423 = vpack.c.b16 %v2383, %v2303
    %v3424 = vpack.c.b16 %v2384, %v2304
    %v3425 = vpack.c.b16 %v2385, %v2305
    %v3426 = vpack.c.b16 %v2386, %v2306
    %v3427 = vpack.c.b16 %v2387, %v2307
    %v3428 = vpack.c.b16 %v2388, %v2308
    %v3429 = vpack.c.b16 %v2389, %v2309
    %v3430 = vpack.c.b16 %v2390, %v2310
    %v3431 = vpack.c.b16 %v2391, %v2311
    %v3432 = vpack.c.b16 %v2392, %v2312
    %v3433 = vpack.c.b16 %v2393, %v2313
    %v3434 = vpack.c.b16 %v2394, %v2314
    %v3435 = vpack.c.b16 %v2395, %v2315
    %v3436 = vpack.c.b16 %v2396, %v2316
    %v3437 = vpack.c.b16 %v2397, %v2317
    %v3438 = vpack.c.b16 %v2398, %v2318
    %v3439 = vpack.c.b16 %v2399, %v2319
    %v3440 = vpack.c.b16 %v2400, %v2320
    %v3441 = vpack.c.b16 %v2401, %v2321
    %v3442 = vpack.c.b16 %v2482, %v2402
    %v3443 = vpack.c.b16 %v2483, %v2403
    %v3444 = vpack.c.b16 %v2484, %v2404
    %v3445 = vpack.c.b16 %v2485, %v2405
    %v3446 = vpack.c.b16 %v2486, %v2406
    %v3447 = vpack.c.b16 %v2487, %v2407
    %v3448 = vpack.c.b16 %v2488, %v2408
    %v3449 = vpack.c.b16 %v2489, %v2409
    %v3450 = vpack.c.b16 %v2490, %v2410
    %v3451 = vpack.c.b16 %v2491, %v2411
    %v3452 = vpack.c.b16 %v2492, %v2412
    %v3453 = vpack.c.b16 %v2493, %v2413
    %v3454 = vpack.c.b16 %v2494, %v2414
    %v3455 = vpack.c.b16 %v2495, %v2415
    %v3456 = vpack.c.b16 %v2496, %v2416
    %v3457 = vpack.c.b16 %v2497, %v2417
    %v3458 = vpack.c.b16 %v2498, %v2418
    %v3459 = vpack.c.b16 %v2499, %v2419
    %v3460 = vpack.c.b16 %v2500, %v2420
    %v3461 = vpack.c.b16 %v2501, %v2421
    %v3462 = vpack.c.b16 %v2502, %v2422
    %v3463 = vpack.c.b16 %v2503, %v2423
    %v3464 = vpack.c.b16 %v2504, %v2424
    %v3465 = vpack.c.b16 %v2505, %v2425
    %v3466 = vpack.c.b16 %v2506, %v2426
    %v3467 = vpack.c.b16 %v2507, %v2427
    %v3468 = vpack.c.b16 %v2508, %v2428
    %v3469 = vpack.c.b16 %v2509, %v2429
    %v3470 = vpack.c.b16 %v2510, %v2430
    %v3471 = vpack.c.b16 %v2511, %v2431
    %v3472 = vpack.c.b16 %v2512, %v2432
    %v3473 = vpack.c.b16 %v2513, %v2433
    %v3474 = vpack.c.b16 %v2514, %v2434
    %v3475 = vpack.c.b16 %v2515, %v2435
    %v3476 = vpack.c.b16 %v2516, %v2436
    %v3477 = vpack.c.b16 %v2517, %v2437
    %v3478 = vpack.c.b16 %v2518, %v2438
    %v3479 = vpack.c.b16 %v2519, %v2439
    %v3480 = vpack.c.b16 %v2520, %v2440
    %v3481 = vpack.c.b16 %v2521, %v2441
    %v3482 = vpack.c.b16 %v2522, %v2442
    %v3483 = vpack.c.b16 %v2523, %v2443
    %v3484 = vpack.c.b16 %v2524, %v2444
    %v3485 = vpack.c.b16 %v2525, %v2445
    %v3486 = vpack.c.b16 %v2526, %v2446
    %v3487 = vpack.c.b16 %v2527, %v2447
    %v3488 = vpack.c.b16 %v2528, %v2448
    %v3489 = vpack.c.b16 %v2529, %v2449
    %v3490 = vpack.c.b16 %v2530, %v2450
    %v3491 = vpack.c.b16 %v2531, %v2451
    %v3492 = vpack.c.b16 %v2532, %v2452
    %v3493 = vpack.c.b16 %v2533, %v2453
    %v3494 = vpack.c.b16 %v2534, %v2454
    %v3495 = vpack.c.b16 %v2535, %v2455
    %v3496 = vpack.c.b16 %v2536, %v2456
    %v3497 = vpack.c.b16 %v2537, %v2457
    %v3498 = vpack.c.b16 %v2538, %v2458
    %v3499 = vpack.c.b16 %v2539, %v2459
    %v3500 = vpack.c.b16 %v2540, %v2460
    %v3501 = vpack.c.b16 %v2541, %v2461
    %v3502 = vpack.c.b16 %v2542, %v2462
    %v3503 = vpack.c.b16 %v2543, %v2463
    %v3504 = vpack.c.b16 %v2544, %v2464
    %v3505 = vpack.c.b16 %v2545, %v2465
    %v3506 = vpack.c.b16 %v2546, %v2466
    %v3507 = vpack.c.b16 %v2547, %v2467
    %v3508 = vpack.c.b16 %v2548, %v2468
    %v3509 = vpack.c.b16 %v2549, %v2469
    %v3510 = vpack.c.b16 %v2550, %v2470
    %v3511 = vpack.c.b16 %v2551, %v2471
    %v3512 = vpack.c.b16 %v2552, %v2472
    %v3513 = vpack.c.b16 %v2553, %v2473
    %v3514 = vpack.c.b16 %v2554, %v2474
    %v3515 = vpack.c.b16 %v2555, %v2475
    %v3516 = vpack.c.b16 %v2556, %v2476
    %v3517 = vpack.c.b16 %v2557, %v2477
    %v3518 = vpack.c.b16 %v2558, %v2478
    %v3519 = vpack.c.b16 %v2559, %v2479
    %v3520 = vpack.c.b16 %v2560, %v2480
    %v3521 = vpack.c.b16 %v2561, %v2481
    %v3522 = vpack.c.b16 %v2642, %v2562
    %v3523 = vpack.c.b16 %v2643, %v2563
    %v3524 = vpack.c.b16 %v2644, %v2564
    %v3525 = vpack.c.b16 %v2645, %v2565
    %v3526 = vpack.c.b16 %v2646, %v2566
    %v3527 = vpack.c.b16 %v2647, %v2567
    %v3528 = vpack.c.b16 %v2648, %v2568
    %v3529 = vpack.c.b16 %v2649, %v2569
    %v3530 = vpack.c.b16 %v2650, %v2570
    %v3531 = vpack.c.b16 %v2651, %v2571
    %v3532 = vpack.c.b16 %v2652, %v2572
    %v3533 = vpack.c.b16 %v2653, %v2573
    %v3534 = vpack.c.b16 %v2654, %v2574
    %v3535 = vpack.c.b16 %v2655, %v2575
    %v3536 = vpack.c.b16 %v2656, %v2576
    %v3537 = vpack.c.b16 %v2657, %v2577
    %v3538 = vpack.c.b16 %v2658, %v2578
    %v3539 = vpack.c.b16 %v2659, %v2579
    %v3540 = vpack.c.b16 %v2660, %v2580
    %v3541 = vpack.c.b16 %v2661, %v2581
    %v3542 = vpack.c.b16 %v2662, %v2582
    %v3543 = vpack.c.b16 %v2663, %v2583
    %v3544 = vpack.c.b16 %v2664, %v2584
    %v3545 = vpack.c.b16 %v2665, %v2585
    %v3546 = vpack.c.b16 %v2666, %v2586
    %v3547 = vpack.c.b16 %v2667, %v2587
    %v3548 = vpack.c.b16 %v2668, %v2588
    %v3549 = vpack.c.b16 %v2669, %v2589
    %v3550 = vpack.c.b16 %v2670, %v2590
    %v3551 = vpack.c.b16 %v2671, %v2591
    %v3552 = vpack.c.b16 %v2672, %v2592
    %v3553 = vpack.c.b16 %v2673, %v2593
    %v3554 = vpack.c.b16 %v2674, %v2594
    %v3555 = vpack.c.b16 %v2675, %v2595
    %v3556 = vpack.c.b16 %v2676, %v2596
    %v3557 = vpack.c.b16 %v2677, %v2597
    %v3558 = vpack.c.b16 %v2678, %v2598
    %v3559 = vpack.c.b16 %v2679, %v2599
    %v3560 = vpack.c.b16 %v2680, %v2600
    %v3561 = vpack.c.b16 %v2681, %v2601
    %v3562 = vpack.c.b16 %v2682, %v2602
    %v3563 = vpack.c.b16 %v2683, %v2603
    %v3564 = vpack.c.b16 %v2684, %v2604
    %v3565 = vpack.c.b16 %v2685, %v2605
    %v3566 = vpack.c.b16 %v2686, %v2606
    %v3567 = vpack.c.b16 %v2687, %v2607
    %v3568 = vpack.c.b16 %v2688, %v2608
    %v3569 = vpack.c.b16 %v2689, %v2609
    %v3570 = vpack.c.b16 %v2690, %v2610
    %v3571 = vpack.c.b16 %v2691, %v2611
    %v3572 = vpack.c.b16 %v2692, %v2612
    %v3573 = vpack.c.b16 %v2693, %v2613
    %v3574 = vpack.c.b16 %v2694, %v2614
    %v3575 = vpack.c.b16 %v2695, %v2615
    %v3576 = vpack.c.b16 %v2696, %v2616
    %v3577 = vpack.c.b16 %v2697, %v2617
    %v3578 = vpack.c.b16 %v2698, %v2618
    %v3579 = vpack.c.b16 %v2699, %v2619
    %v3580 = vpack.c.b16 %v2700, %v2620
    %v3581 = vpack.c.b16 %v2701, %v2621
    %v3582 = vpack.c.b16 %v2702, %v2622
    %v3583 = vpack.c.b16 %v2703, %v2623
    %v3584 = vpack.c.b16 %v2704, %v2624
    %v3585 = vpack.c.b16 %v2705, %v2625
    %v3586 = vpack.c.b16 %v2706, %v2626
    %v3587 = vpack.c.b16 %v2707, %v2627
    %v3588 = vpack.c.b16 %v2708, %v2628
    %v3589 = vpack.c.b16 %v2709, %v2629
    %v3590 = vpack.c.b16 %v2710, %v2630
    %v3591 = vpack.c.b16 %v2711, %v2631
    %v3592 = vpack.c.b16 %v2712, %v2632
    %v3593 = vpack.c.b16 %v2713, %v2633
    %v3594 = vpack.c.b16 %v2714, %v2634
    %v3595 = vpack.c.b16 %v2715, %v2635
    %v3596 = vpack.c.b16 %v2716, %v2636
    %v3597 = vpack.c.b16 %v2717, %v2637
    %v3598 = vpack.c.b16 %v2718, %v2638
    %v3599 = vpack.c.b16 %v2719, %v2639
    %v3600 = vpack.c.b16 %v2720, %v2640
    %v3601 = vpack.c.b16 %v2721, %v2641
    %v3602 = vpack.c.b16 %v2802, %v2722
    %v3603 = vpack.c.b16 %v2803, %v2723
    %v3604 = vpack.c.b16 %v2804, %v2724
    %v3605 = vpack.c.b16 %v2805, %v2725
    %v3606 = vpack.c.b16 %v2806, %v2726
    %v3607 = vpack.c.b16 %v2807, %v2727
    %v3608 = vpack.c.b16 %v2808, %v2728
    %v3609 = vpack.c.b16 %v2809, %v2729
    %v3610 = vpack.c.b16 %v2810, %v2730
    %v3611 = vpack.c.b16 %v2811, %v2731
    %v3612 = vpack.c.b16 %v2812, %v2732
    %v3613 = vpack.c.b16 %v2813, %v2733
    %v3614 = vpack.c.b16 %v2814, %v2734
    %v3615 = vpack.c.b16 %v2815, %v2735
    %v3616 = vpack.c.b16 %v2816, %v2736
    %v3617 = vpack.c.b16 %v2817, %v2737
    %v3618 = vpack.c.b16 %v2818, %v2738
    %v3619 = vpack.c.b16 %v2819, %v2739
    %v3620 = vpack.c.b16 %v2820, %v2740
    %v3621 = vpack.c.b16 %v2821, %v2741
    %v3622 = vpack.c.b16 %v2822, %v2742
    %v3623 = vpack.c.b16 %v2823, %v2743
    %v3624 = vpack.c.b16 %v2824, %v2744
    %v3625 = vpack.c.b16 %v2825, %v2745
    %v3626 = vpack.c.b16 %v2826, %v2746
    %v3627 = vpack.c.b16 %v2827, %v2747
    %v3628 = vpack.c.b16 %v2828, %v2748
    %v3629 = vpack.c.b16 %v2829, %v2749
    %v3630 = vpack.c.b16 %v2830, %v2750
    %v3631 = vpack.c.b16 %v2831, %v2751
    %v3632 = vpack.c.b16 %v2832, %v2752
    %v3633 = vpack.c.b16 %v2833, %v2753
    %v3634 = vpack.c.b16 %v2834, %v2754
    %v3635 = vpack.c.b16 %v2835, %v2755
    %v3636 = vpack.c.b16 %v2836, %v2756
    %v3637 = vpack.c.b16 %v2837, %v2757
    %v3638 = vpack.c.b16 %v2838, %v2758
    %v3639 = vpack.c.b16 %v2839, %v2759
    %v3640 = vpack.c.b16 %v2840, %v2760
    %v3641 = vpack.c.b16 %v2841, %v2761
    %v3642 = vpack.c.b16 %v2842, %v2762
    %v3643 = vpack.c.b16 %v2843, %v2763
    %v3644 = vpack.c.b16 %v2844, %v2764
    %v3645 = vpack.c.b16 %v2845, %v2765
    %v3646 = vpack.c.b16 %v2846, %v2766
    %v3647 = vpack.c.b16 %v2847, %v2767
    %v3648 = vpack.c.b16 %v2848, %v2768
    %v3649 = vpack.c.b16 %v2849, %v2769
    %v3650 = vpack.c.b16 %v2850, %v2770
    %v3651 = vpack.c.b16 %v2851, %v2771
    %v3652 = vpack.c.b16 %v2852, %v2772
    %v3653 = vpack.c.b16 %v2853, %v2773
    %v3654 = vpack.c.b16 %v2854, %v2774
    %v3655 = vpack.c.b16 %v2855, %v2775
    %v3656 = vpack.c.b16 %v2856, %v2776
    %v3657 = vpack.c.b16 %v2857, %v2777
    %v3658 = vpack.c.b16 %v2858, %v2778
    %v3659 = vpack.c.b16 %v2859, %v2779
    %v3660 = vpack.c.b16 %v2860, %v2780
    %v3661 = vpack.c.b16 %v2861, %v2781
    %v3662 = vpack.c.b16 %v2862, %v2782
    %v3663 = vpack.c.b16 %v2863, %v2783
    %v3664 = vpack.c.b16 %v2864, %v2784
    %v3665 = vpack.c.b16 %v2865, %v2785
    %v3666 = vpack.c.b16 %v2866, %v2786
    %v3667 = vpack.c.b16 %v2867, %v2787
    %v3668 = vpack.c.b16 %v2868, %v2788
    %v3669 = vpack.c.b16 %v2869, %v2789
    %v3670 = vpack.c.b16 %v2870, %v2790
    %v3671 = vpack.c.b16 %v2871, %v2791
    %v3672 = vpack.c.b16 %v2872, %v2792
    %v3673 = vpack.c.b16 %v2873, %v2793
    %v3674 = vpack.c.b16 %v2874, %v2794
    %v3675 = vpack.c.b16 %v2875, %v2795
    %v3676 = vpack.c.b16 %v2876, %v2796
    %v3677 = vpack.c.b16 %v2877, %v2797
    %v3678 = vpack.c.b16 %v2878, %v2798
    %v3679 = vpack.c.b16 %v2879, %v2799
    %v3680 = vpack.c.b16 %v2880, %v2800
    %v3681 = vpack.c.b16 %v2881, %v2801
    %v3682 = vpack.c.b16 %v2962, %v2882
    %v3683 = vpack.c.b16 %v2963, %v2883
    %v3684 = vpack.c.b16 %v2964, %v2884
    %v3685 = vpack.c.b16 %v2965, %v2885
    %v3686 = vpack.c.b16 %v2966, %v2886
    %v3687 = vpack.c.b16 %v2967, %v2887
    %v3688 = vpack.c.b16 %v2968, %v2888
    %v3689 = vpack.c.b16 %v2969, %v2889
    %v3690 = vpack.c.b16 %v2970, %v2890
    %v3691 = vpack.c.b16 %v2971, %v2891
    %v3692 = vpack.c.b16 %v2972, %v2892
    %v3693 = vpack.c.b16 %v2973, %v2893
    %v3694 = vpack.c.b16 %v2974, %v2894
    %v3695 = vpack.c.b16 %v2975, %v2895
    %v3696 = vpack.c.b16 %v2976, %v2896
    %v3697 = vpack.c.b16 %v2977, %v2897
    %v3698 = vpack.c.b16 %v2978, %v2898
    %v3699 = vpack.c.b16 %v2979, %v2899
    %v3700 = vpack.c.b16 %v2980, %v2900
    %v3701 = vpack.c.b16 %v2981, %v2901
    %v3702 = vpack.c.b16 %v2982, %v2902
    %v3703 = vpack.c.b16 %v2983, %v2903
    %v3704 = vpack.c.b16 %v2984, %v2904
    %v3705 = vpack.c.b16 %v2985, %v2905
    %v3706 = vpack.c.b16 %v2986, %v2906
    %v3707 = vpack.c.b16 %v2987, %v2907
    %v3708 = vpack.c.b16 %v2988, %v2908
    %v3709 = vpack.c.b16 %v2989, %v2909
    %v3710 = vpack.c.b16 %v2990, %v2910
    %v3711 = vpack.c.b16 %v2991, %v2911
    %v3712 = vpack.c.b16 %v2992, %v2912
    %v3713 = vpack.c.b16 %v2993, %v2913
    %v3714 = vpack.c.b16 %v2994, %v2914
    %v3715 = vpack.c.b16 %v2995, %v2915
    %v3716 = vpack.c.b16 %v2996, %v2916
    %v3717 = vpack.c.b16 %v2997, %v2917
    %v3718 = vpack.c.b16 %v2998, %v2918
    %v3719 = vpack.c.b16 %v2999, %v2919
    %v3720 = vpack.c.b16 %v3000, %v2920
    %v3721 = vpack.c.b16 %v3001, %v2921
    %v3722 = vpack.c.b16 %v3002, %v2922
    %v3723 = vpack.c.b16 %v3003, %v2923
    %v3724 = vpack.c.b16 %v3004, %v2924
    %v3725 = vpack.c.b16 %v3005, %v2925
    %v3726 = vpack.c.b16 %v3006, %v2926
    %v3727 = vpack.c.b16 %v3007, %v2927
    %v3728 = vpack.c.b16 %v3008, %v2928
    %v3729 = vpack.c.b16 %v3009, %v2929
    %v3730 = vpack.c.b16 %v3010, %v2930
    %v3731 = vpack.c.b16 %v3011, %v2931
    %v3732 = vpack.c.b16 %v3012, %v2932
    %v3733 = vpack.c.b16 %v3013, %v2933
    %v3734 = vpack.c.b16 %v3014, %v2934
    %v3735 = vpack.c.b16 %v3015, %v2935
    %v3736 = vpack.c.b16 %v3016, %v2936
    %v3737 = vpack.c.b16 %v3017, %v2937
    %v3738 = vpack.c.b16 %v3018, %v2938
    %v3739 = vpack.c.b16 %v3019, %v2939
    %v3740 = vpack.c.b16 %v3020, %v2940
    %v3741 = vpack.c.b16 %v3021, %v2941
    %v3742 = vpack.c.b16 %v3022, %v2942
    %v3743 = vpack.c.b16 %v3023, %v2943
    %v3744 = vpack.c.b16 %v3024, %v2944
    %v3745 = vpack.c.b16 %v3025, %v2945
    %v3746 = vpack.c.b16 %v3026, %v2946
    %v3747 = vpack.c.b16 %v3027, %v2947
    %v3748 = vpack.c.b16 %v3028, %v2948
    %v3749 = vpack.c.b16 %v3029, %v2949
    %v3750 = vpack.c.b16 %v3030, %v2950
    %v3751 = vpack.c.b16 %v3031, %v2951
    %v3752 = vpack.c.b16 %v3032, %v2952
    %v3753 = vpack.c.b16 %v3033, %v2953
    %v3754 = vpack.c.b16 %v3034, %v2954
    %v3755 = vpack.c.b16 %v3035, %v2955
    %v3756 = vpack.c.b16 %v3036, %v2956
    %v3757 = vpack.c.b16 %v3037, %v2957
    %v3758 = vpack.c.b16 %v3038, %v2958
    %v3759 = vpack.c.b16 %v3039, %v2959
    %v3760 = vpack.c.b16 %v3040, %v2960
    %v3761 = vpack.c.b16 %v3041, %v2961
    %v3762 = vpack.c.b16 %v3122, %v3042
    %v3763 = vpack.c.b16 %v3123, %v3043
    %v3764 = vpack.c.b16 %v3124, %v3044
    %v3765 = vpack.c.b16 %v3125, %v3045
    %v3766 = vpack.c.b16 %v3126, %v3046
    %v3767 = vpack.c.b16 %v3127, %v3047
    %v3768 = vpack.c.b16 %v3128, %v3048
    %v3769 = vpack.c.b16 %v3129, %v3049
    %v3770 = vpack.c.b16 %v3130, %v3050
    %v3771 = vpack.c.b16 %v3131, %v3051
    %v3772 = vpack.c.b16 %v3132, %v3052
    %v3773 = vpack.c.b16 %v3133, %v3053
    %v3774 = vpack.c.b16 %v3134, %v3054
    %v3775 = vpack.c.b16 %v3135, %v3055
    %v3776 = vpack.c.b16 %v3136, %v3056
    %v3777 = vpack.c.b16 %v3137, %v3057
    %v3778 = vpack.c.b16 %v3138, %v3058
    %v3779 = vpack.c.b16 %v3139, %v3059
    %v3780 = vpack.c.b16 %v3140, %v3060
    %v3781 = vpack.c.b16 %v3141, %v3061
    %v3782 = vpack.c.b16 %v3142, %v3062
    %v3783 = vpack.c.b16 %v3143, %v3063
    %v3784 = vpack.c.b16 %v3144, %v3064
    %v3785 = vpack.c.b16 %v3145, %v3065
    %v3786 = vpack.c.b16 %v3146, %v3066
    %v3787 = vpack.c.b16 %v3147, %v3067
    %v3788 = vpack.c.b16 %v3148, %v3068
    %v3789 = vpack.c.b16 %v3149, %v3069
    %v3790 = vpack.c.b16 %v3150, %v3070
    %v3791 = vpack.c.b16 %v3151, %v3071
    %v3792 = vpack.c.b16 %v3152, %v3072
    %v3793 = vpack.c.b16 %v3153, %v3073
    %v3794 = vpack.c.b16 %v3154, %v3074
    %v3795 = vpack.c.b16 %v3155, %v3075
    %v3796 = vpack.c.b16 %v3156, %v3076
    %v3797 = vpack.c.b16 %v3157, %v3077
    %v3798 = vpack.c.b16 %v3158, %v3078
    %v3799 = vpack.c.b16 %v3159, %v3079
    %v3800 = vpack.c.b16 %v3160, %v3080
    %v3801 = vpack.c.b16 %v3161, %v3081
    %v3802 = vpack.c.b16 %v3162, %v3082
    %v3803 = vpack.c.b16 %v3163, %v3083
    %v3804 = vpack.c.b16 %v3164, %v3084
    %v3805 = vpack.c.b16 %v3165, %v3085
    %v3806 = vpack.c.b16 %v3166, %v3086
    %v3807 = vpack.c.b16 %v3167, %v3087
    %v3808 = vpack.c.b16 %v3168, %v3088
    %v3809 = vpack.c.b16 %v3169, %v3089
    %v3810 = vpack.c.b16 %v3170, %v3090
    %v3811 = vpack.c.b16 %v3171, %v3091
    %v3812 = vpack.c.b16 %v3172, %v3092
    %v3813 = vpack.c.b16 %v3173, %v3093
    %v3814 = vpack.c.b16 %v3174, %v3094
    %v3815 = vpack.c.b16 %v3175, %v3095
    %v3816 = vpack.c.b16 %v3176, %v3096
    %v3817 = vpack.c.b16 %v3177, %v3097
    %v3818 = vpack.c.b16 %v3178, %v3098
    %v3819 = vpack.c.b16 %v3179, %v3099
    %v3820 = vpack.c.b16 %v3180, %v3100
    %v3821 = vpack.c.b16 %v3181, %v3101
    %v3822 = vpack.c.b16 %v3182, %v3102
    %v3823 = vpack.c.b16 %v3183, %v3103
    %v3824 = vpack.c.b16 %v3184, %v3104
    %v3825 = vpack.c.b16 %v3185, %v3105
    %v3826 = vpack.c.b16 %v3186, %v3106
    %v3827 = vpack.c.b16 %v3187, %v3107
    %v3828 = vpack.c.b16 %v3188, %v3108
    %v3829 = vpack.c.b16 %v3189, %v3109
    %v3830 = vpack.c.b16 %v3190, %v3110
    %v3831 = vpack.c.b16 %v3191, %v3111
    %v3832 = vpack.c.b16 %v3192, %v3112
    %v3833 = vpack.c.b16 %v3193, %v3113
    %v3834 = vpack.c.b16 %v3194, %v3114
    %v3835 = vpack.c.b16 %v3195, %v3115
    %v3836 = vpack.c.b16 %v3196, %v3116
    %v3837 = vpack.c.b16 %v3197, %v3117
    %v3838 = vpack.c.b16 %v3198, %v3118
    %v3839 = vpack.c.b16 %v3199, %v3119
    %v3840 = vpack.c.b16 %v3200, %v3120
    %v3841 = vpack.c.b16 %v3201, %v3121
    %4482 = vmatprep.subr.bf16.mxu0 %v3203
    %4483 = vmatpush1.bf16.msra.mxu0 %v3202
    %4484 = vmatprep.subr.bf16.mxu0 %v3283
    %4485 = vmatpush1.bf16.msra.mxu0 %v3282
    %4486 = vmatprep.subr.bf16.mxu0 %v3363
    %4487 = vmatpush1.bf16.msra.mxu0 %v3362
    %4488 = vmatprep.subr.bf16.mxu0 %v3443
    %4489 = vmatpush1.bf16.msra.mxu0 %v3442
    %4490 = vmatprep.subr.bf16.mxu0 %v3523
    %4491 = vmatpush1.bf16.msra.mxu0 %v3522
    %4492 = vmatprep.subr.bf16.mxu0 %v3603
    %4493 = vmatpush1.bf16.msra.mxu0 %v3602
    %4494 = vmatprep.subr.bf16.mxu0 %v3683
    %4495 = vmatpush1.bf16.msra.mxu0 %v3682
    %4496 = vmatprep.subr.bf16.mxu0 %v3763
    %4497 = vmatpush1.bf16.msra.mxu0 %v3762
    %4498 = vmatprep.subr.bf16.mxu0 0
    %4499 = vmatpush1.bf16.msra.mxu0 0
    %4500 = vmatprep.subr.bf16.mxu0 0
    %4501 = vmatpush1.bf16.msra.mxu0 0
    %4502 = vmatprep.subr.bf16.mxu0 0
    %4503 = vmatpush1.bf16.msra.mxu0 0
    %4504 = vmatprep.subr.bf16.mxu0 0
    %4505 = vmatpush1.bf16.msra.mxu0 0
    %4506 = vmatprep.subr.bf16.mxu0 0
    %4507 = vmatpush1.bf16.msra.mxu0 0
    %4508 = vmatprep.subr.bf16.mxu0 0
    %4509 = vmatpush1.bf16.msra.mxu0 0
    %4510 = vmatprep.subr.bf16.mxu0 0
    %4511 = vmatpush1.bf16.msra.mxu0 0
    %4512 = vmatprep.subr.bf16.mxu0 0
    %4513 = vmatpush1.bf16.msra.mxu0 0
    %4514 = vmatprep.mubr.bf16.mxu0 0
    %4515 = vmatmul.mubr.bf16.gmra.mrb[0].mxu0 %v216
    %v4516 = vpop.f32.mrb[0].mxu0
    %v4517 = vadd.f32 %v885, %v4516
    %v4518 = vpop.f32.mrb[0].mxu0
    %v4519 = vadd.f32 %v889, %v4518
    %v4520 = vpop.f32.mrb[0].mxu0
    %v4521 = vpop.f32.mrb[0].mxu0
    %4522 = vdwg.mxu0
    %4523 = vmatprep.subr.bf16.mxu0 %v3205
    %4524 = vmatpush1.bf16.msra.mxu0 %v3204
    %4525 = vmatprep.subr.bf16.mxu0 %v3285
    %4526 = vmatpush1.bf16.msra.mxu0 %v3284
    %4527 = vmatprep.subr.bf16.mxu0 %v3365
    %4528 = vmatpush1.bf16.msra.mxu0 %v3364
    %4529 = vmatprep.subr.bf16.mxu0 %v3445
    %4530 = vmatpush1.bf16.msra.mxu0 %v3444
    %4531 = vmatprep.subr.bf16.mxu0 %v3525
    %4532 = vmatpush1.bf16.msra.mxu0 %v3524
    %4533 = vmatprep.subr.bf16.mxu0 %v3605
    %4534 = vmatpush1.bf16.msra.mxu0 %v3604
    %4535 = vmatprep.subr.bf16.mxu0 %v3685
    %4536 = vmatpush1.bf16.msra.mxu0 %v3684
    %4537 = vmatprep.subr.bf16.mxu0 %v3765
    %4538 = vmatpush1.bf16.msra.mxu0 %v3764
    %4539 = vmatprep.subr.bf16.mxu0 0
    %4540 = vmatpush1.bf16.msra.mxu0 0
    %4541 = vmatprep.subr.bf16.mxu0 0
    %4542 = vmatpush1.bf16.msra.mxu0 0
    %4543 = vmatprep.subr.bf16.mxu0 0
    %4544 = vmatpush1.bf16.msra.mxu0 0
    %4545 = vmatprep.subr.bf16.mxu0 0
    %4546 = vmatpush1.bf16.msra.mxu0 0
    %4547 = vmatprep.subr.bf16.mxu0 0
    %4548 = vmatpush1.bf16.msra.mxu0 0
    %4549 = vmatprep.subr.bf16.mxu0 0
    %4550 = vmatpush1.bf16.msra.mxu0 0
    %4551 = vmatprep.subr.bf16.mxu0 0
    %4552 = vmatpush1.bf16.msra.mxu0 0
    %4553 = vmatprep.subr.bf16.mxu0 0
    %4554 = vmatpush1.bf16.msra.mxu0 0
    %4555 = vmatprep.mubr.bf16.mxu0 0
    %4556 = vmatmul.mubr.bf16.gmra.mrb[0].mxu0 %v216
    %v4557 = vpop.f32.mrb[0].mxu0
    %v4558 = vadd.f32 %v893, %v4557
    %v4559 = vpop.f32.mrb[0].mxu0
    %v4560 = vadd.f32 %v897, %v4559
    %v4561 = vpop.f32.mrb[0].mxu0
    %v4562 = vpop.f32.mrb[0].mxu0
    %4563 = vdwg.mxu0
    %4564 = vmatprep.subr.bf16.mxu0 %v3207
    %4565 = vmatpush1.bf16.msra.mxu0 %v3206
    %4566 = vmatprep.subr.bf16.mxu0 %v3287
    %4567 = vmatpush1.bf16.msra.mxu0 %v3286
    %4568 = vmatprep.subr.bf16.mxu0 %v3367
    %4569 = vmatpush1.bf16.msra.mxu0 %v3366
    %4570 = vmatprep.subr.bf16.mxu0 %v3447
    %4571 = vmatpush1.bf16.msra.mxu0 %v3446
    %4572 = vmatprep.subr.bf16.mxu0 %v3527
    %4573 = vmatpush1.bf16.msra.mxu0 %v3526
    %4574 = vmatprep.subr.bf16.mxu0 %v3607
    %4575 = vmatpush1.bf16.msra.mxu0 %v3606
    %4576 = vmatprep.subr.bf16.mxu0 %v3687
    %4577 = vmatpush1.bf16.msra.mxu0 %v3686
    %4578 = vmatprep.subr.bf16.mxu0 %v3767
    %4579 = vmatpush1.bf16.msra.mxu0 %v3766
    %4580 = vmatprep.subr.bf16.mxu0 0
    %4581 = vmatpush1.bf16.msra.mxu0 0
    %4582 = vmatprep.subr.bf16.mxu0 0
    %4583 = vmatpush1.bf16.msra.mxu0 0
    %4584 = vmatprep.subr.bf16.mxu0 0
    %4585 = vmatpush1.bf16.msra.mxu0 0
    %4586 = vmatprep.subr.bf16.mxu0 0
    %4587 = vmatpush1.bf16.msra.mxu0 0
    %4588 = vmatprep.subr.bf16.mxu0 0
    %4589 = vmatpush1.bf16.msra.mxu0 0
    %4590 = vmatprep.subr.bf16.mxu0 0
    %4591 = vmatpush1.bf16.msra.mxu0 0
    %4592 = vmatprep.subr.bf16.mxu0 0
    %4593 = vmatpush1.bf16.msra.mxu0 0
    %4594 = vmatprep.subr.bf16.mxu0 0
    %4595 = vmatpush1.bf16.msra.mxu0 0
    %4596 = vmatprep.mubr.bf16.mxu0 0
    %4597 = vmatmul.mubr.bf16.gmra.mrb[0].mxu0 %v216
    %v4598 = vpop.f32.mrb[0].mxu0
    %v4599 = vadd.f32 %v901, %v4598
    %v4600 = vpop.f32.mrb[0].mxu0
    %v4601 = vadd.f32 %v905, %v4600
    %v4602 = vpop.f32.mrb[0].mxu0
    %v4603 = vpop.f32.mrb[0].mxu0
    %4604 = vdwg.mxu0
    %4605 = vmatprep.subr.bf16.mxu0 %v3209
    %4606 = vmatpush1.bf16.msra.mxu0 %v3208
    %4607 = vmatprep.subr.bf16.mxu0 %v3289
    %4608 = vmatpush1.bf16.msra.mxu0 %v3288
    %4609 = vmatprep.subr.bf16.mxu0 %v3369
    %4610 = vmatpush1.bf16.msra.mxu0 %v3368
    %4611 = vmatprep.subr.bf16.mxu0 %v3449
    %4612 = vmatpush1.bf16.msra.mxu0 %v3448
    %4613 = vmatprep.subr.bf16.mxu0 %v3529
    %4614 = vmatpush1.bf16.msra.mxu0 %v3528
    %4615 = vmatprep.subr.bf16.mxu0 %v3609
    %4616 = vmatpush1.bf16.msra.mxu0 %v3608
    %4617 = vmatprep.subr.bf16.mxu0 %v3689
    %4618 = vmatpush1.bf16.msra.mxu0 %v3688
    %4619 = vmatprep.subr.bf16.mxu0 %v3769
    %4620 = vmatpush1.bf16.msra.mxu0 %v3768
    %4621 = vmatprep.subr.bf16.mxu0 0
    %4622 = vmatpush1.bf16.msra.mxu0 0
    %4623 = vmatprep.subr.bf16.mxu0 0
    %4624 = vmatpush1.bf16.msra.mxu0 0
    %4625 = vmatprep.subr.bf16.mxu0 0
    %4626 = vmatpush1.bf16.msra.mxu0 0
    %4627 = vmatprep.subr.bf16.mxu0 0
    %4628 = vmatpush1.bf16.msra.mxu0 0
    %4629 = vmatprep.subr.bf16.mxu0 0
    %4630 = vmatpush1.bf16.msra.mxu0 0
    %4631 = vmatprep.subr.bf16.mxu0 0
    %4632 = vmatpush1.bf16.msra.mxu0 0
    %4633 = vmatprep.subr.bf16.mxu0 0
    %4634 = vmatpush1.bf16.msra.mxu0 0
    %4635 = vmatprep.subr.bf16.mxu0 0
    %4636 = vmatpush1.bf16.msra.mxu0 0
    %4637 = vmatprep.mubr.bf16.mxu0 0
    %4638 = vmatmul.mubr.bf16.gmra.mrb[0].mxu0 %v216
    %v4639 = vpop.f32.mrb[0].mxu0
    %v4640 = vadd.f32 %v909, %v4639
    %v4641 = vpop.f32.mrb[0].mxu0
    %v4642 = vadd.f32 %v913, %v4641
    %v4643 = vpop.f32.mrb[0].mxu0
    %v4644 = vpop.f32.mrb[0].mxu0
    %4645 = vdwg.mxu0
    %4646 = vmatprep.subr.bf16.mxu0 %v3211
    %4647 = vmatpush1.bf16.msra.mxu0 %v3210
    %4648 = vmatprep.subr.bf16.mxu0 %v3291
    %4649 = vmatpush1.bf16.msra.mxu0 %v3290
    %4650 = vmatprep.subr.bf16.mxu0 %v3371
    %4651 = vmatpush1.bf16.msra.mxu0 %v3370
    %4652 = vmatprep.subr.bf16.mxu0 %v3451
    %4653 = vmatpush1.bf16.msra.mxu0 %v3450
    %4654 = vmatprep.subr.bf16.mxu0 %v3531
    %4655 = vmatpush1.bf16.msra.mxu0 %v3530
    %4656 = vmatprep.subr.bf16.mxu0 %v3611
    %4657 = vmatpush1.bf16.msra.mxu0 %v3610
    %4658 = vmatprep.subr.bf16.mxu0 %v3691
    %4659 = vmatpush1.bf16.msra.mxu0 %v3690
    %4660 = vmatprep.subr.bf16.mxu0 %v3771
    %4661 = vmatpush1.bf16.msra.mxu0 %v3770
    %4662 = vmatprep.subr.bf16.mxu0 0
    %4663 = vmatpush1.bf16.msra.mxu0 0
    %4664 = vmatprep.subr.bf16.mxu0 0
    %4665 = vmatpush1.bf16.msra.mxu0 0
    %4666 = vmatprep.subr.bf16.mxu0 0
    %4667 = vmatpush1.bf16.msra.mxu0 0
    %4668 = vmatprep.subr.bf16.mxu0 0
    %4669 = vmatpush1.bf16.msra.mxu0 0
    %4670 = vmatprep.subr.bf16.mxu0 0
    %4671 = vmatpush1.bf16.msra.mxu0 0
    %4672 = vmatprep.subr.bf16.mxu0 0
    %4673 = vmatpush1.bf16.msra.mxu0 0
    %4674 = vmatprep.subr.bf16.mxu0 0
    %4675 = vmatpush1.bf16.msra.mxu0 0
    %4676 = vmatprep.subr.bf16.mxu0 0
    %4677 = vmatpush1.bf16.msra.mxu0 0
    %4678 = vmatprep.mubr.bf16.mxu0 0
    %4679 = vmatmul.mubr.bf16.gmra.mrb[0].mxu0 %v216
    %v4680 = vpop.f32.mrb[0].mxu0
    %v4681 = vadd.f32 %v917, %v4680
    %v4682 = vpop.f32.mrb[0].mxu0
    %v4683 = vadd.f32 %v921, %v4682
    %v4684 = vpop.f32.mrb[0].mxu0
    %v4685 = vpop.f32.mrb[0].mxu0
    %4686 = vdwg.mxu0
    %4687 = vmatprep.subr.bf16.mxu0 %v3213
    %4688 = vmatpush1.bf16.msra.mxu0 %v3212
    %4689 = vmatprep.subr.bf16.mxu0 %v3293
    %4690 = vmatpush1.bf16.msra.mxu0 %v3292
    %4691 = vmatprep.subr.bf16.mxu0 %v3373
    %4692 = vmatpush1.bf16.msra.mxu0 %v3372
    %4693 = vmatprep.subr.bf16.mxu0 %v3453
    %4694 = vmatpush1.bf16.msra.mxu0 %v3452
    %4695 = vmatprep.subr.bf16.mxu0 %v3533
    %4696 = vmatpush1.bf16.msra.mxu0 %v3532
    %4697 = vmatprep.subr.bf16.mxu0 %v3613
    %4698 = vmatpush1.bf16.msra.mxu0 %v3612
    %4699 = vmatprep.subr.bf16.mxu0 %v3693
    %4700 = vmatpush1.bf16.msra.mxu0 %v3692
    %4701 = vmatprep.subr.bf16.mxu0 %v3773
    %4702 = vmatpush1.bf16.msra.mxu0 %v3772
    %4703 = vmatprep.subr.bf16.mxu0 0
    %4704 = vmatpush1.bf16.msra.mxu0 0
    %4705 = vmatprep.subr.bf16.mxu0 0
    %4706 = vmatpush1.bf16.msra.mxu0 0
    %4707 = vmatprep.subr.bf16.mxu0 0
    %4708 = vmatpush1.bf16.msra.mxu0 0
    %4709 = vmatprep.subr.bf16.mxu0 0
    %4710 = vmatpush1.bf16.msra.mxu0 0
    %4711 = vmatprep.subr.bf16.mxu0 0
    %4712 = vmatpush1.bf16.msra.mxu0 0
    %4713 = vmatprep.subr.bf16.mxu0 0
    %4714 = vmatpush1.bf16.msra.mxu0 0
    %4715 = vmatprep.subr.bf16.mxu0 0
    %4716 = vmatpush1.bf16.msra.mxu0 0
    %4717 = vmatprep.subr.bf16.mxu0 0
    %4718 = vmatpush1.bf16.msra.mxu0 0
    %4719 = vmatprep.mubr.bf16.mxu0 0
    %4720 = vmatmul.mubr.bf16.gmra.mrb[0].mxu0 %v216
    %v4721 = vpop.f32.mrb[0].mxu0
    %v4722 = vadd.f32 %v925, %v4721
    %v4723 = vpop.f32.mrb[0].mxu0
    %v4724 = vadd.f32 %v929, %v4723
    %v4725 = vpop.f32.mrb[0].mxu0
    %v4726 = vpop.f32.mrb[0].mxu0
    %4727 = vdwg.mxu0
    %4728 = vmatprep.subr.bf16.mxu0 %v3215
    %4729 = vmatpush1.bf16.msra.mxu0 %v3214
    %4730 = vmatprep.subr.bf16.mxu0 %v3295
    %4731 = vmatpush1.bf16.msra.mxu0 %v3294
    %4732 = vmatprep.subr.bf16.mxu0 %v3375
    %4733 = vmatpush1.bf16.msra.mxu0 %v3374
    %4734 = vmatprep.subr.bf16.mxu0 %v3455
    %4735 = vmatpush1.bf16.msra.mxu0 %v3454
    %4736 = vmatprep.subr.bf16.mxu0 %v3535
    %4737 = vmatpush1.bf16.msra.mxu0 %v3534
    %4738 = vmatprep.subr.bf16.mxu0 %v3615
    %4739 = vmatpush1.bf16.msra.mxu0 %v3614
    %4740 = vmatprep.subr.bf16.mxu0 %v3695
    %4741 = vmatpush1.bf16.msra.mxu0 %v3694
    %4742 = vmatprep.subr.bf16.mxu0 %v3775
    %4743 = vmatpush1.bf16.msra.mxu0 %v3774
    %4744 = vmatprep.subr.bf16.mxu0 0
    %4745 = vmatpush1.bf16.msra.mxu0 0
    %4746 = vmatprep.subr.bf16.mxu0 0
    %4747 = vmatpush1.bf16.msra.mxu0 0
    %4748 = vmatprep.subr.bf16.mxu0 0
    %4749 = vmatpush1.bf16.msra.mxu0 0
    %4750 = vmatprep.subr.bf16.mxu0 0
    %4751 = vmatpush1.bf16.msra.mxu0 0
    %4752 = vmatprep.subr.bf16.mxu0 0
    %4753 = vmatpush1.bf16.msra.mxu0 0
    %4754 = vmatprep.subr.bf16.mxu0 0
    %4755 = vmatpush1.bf16.msra.mxu0 0
    %4756 = vmatprep.subr.bf16.mxu0 0
    %4757 = vmatpush1.bf16.msra.mxu0 0
    %4758 = vmatprep.subr.bf16.mxu0 0
    %4759 = vmatpush1.bf16.msra.mxu0 0
    %4760 = vmatprep.mubr.bf16.mxu0 0
    %4761 = vmatmul.mubr.bf16.gmra.mrb[0].mxu0 %v216
    %v4762 = vpop.f32.mrb[0].mxu0
    %v4763 = vadd.f32 %v933, %v4762
    %v4764 = vpop.f32.mrb[0].mxu0
    %v4765 = vadd.f32 %v937, %v4764
    %v4766 = vpop.f32.mrb[0].mxu0
    %v4767 = vpop.f32.mrb[0].mxu0
    %4768 = vdwg.mxu0
    %4769 = vmatprep.subr.bf16.mxu0 %v3217
    %4770 = vmatpush1.bf16.msra.mxu0 %v3216
    %4771 = vmatprep.subr.bf16.mxu0 %v3297
    %4772 = vmatpush1.bf16.msra.mxu0 %v3296
    %4773 = vmatprep.subr.bf16.mxu0 %v3377
    %4774 = vmatpush1.bf16.msra.mxu0 %v3376
    %4775 = vmatprep.subr.bf16.mxu0 %v3457
    %4776 = vmatpush1.bf16.msra.mxu0 %v3456
    %4777 = vmatprep.subr.bf16.mxu0 %v3537
    %4778 = vmatpush1.bf16.msra.mxu0 %v3536
    %4779 = vmatprep.subr.bf16.mxu0 %v3617
    %4780 = vmatpush1.bf16.msra.mxu0 %v3616
    %4781 = vmatprep.subr.bf16.mxu0 %v3697
    %4782 = vmatpush1.bf16.msra.mxu0 %v3696
    %4783 = vmatprep.subr.bf16.mxu0 %v3777
    %4784 = vmatpush1.bf16.msra.mxu0 %v3776
    %4785 = vmatprep.subr.bf16.mxu0 0
    %4786 = vmatpush1.bf16.msra.mxu0 0
    %4787 = vmatprep.subr.bf16.mxu0 0
    %4788 = vmatpush1.bf16.msra.mxu0 0
    %4789 = vmatprep.subr.bf16.mxu0 0
    %4790 = vmatpush1.bf16.msra.mxu0 0
    %4791 = vmatprep.subr.bf16.mxu0 0
    %4792 = vmatpush1.bf16.msra.mxu0 0
    %4793 = vmatprep.subr.bf16.mxu0 0
    %4794 = vmatpush1.bf16.msra.mxu0 0
    %4795 = vmatprep.subr.bf16.mxu0 0
    %4796 = vmatpush1.bf16.msra.mxu0 0
    %4797 = vmatprep.subr.bf16.mxu0 0
    %4798 = vmatpush1.bf16.msra.mxu0 0
    %4799 = vmatprep.subr.bf16.mxu0 0
    %4800 = vmatpush1.bf16.msra.mxu0 0
    %4801 = vmatprep.mubr.bf16.mxu0 0
    %4802 = vmatmul.mubr.bf16.gmra.mrb[0].mxu0 %v216
    %v4803 = vpop.f32.mrb[0].mxu0
    %v4804 = vadd.f32 %v941, %v4803
    %v4805 = vpop.f32.mrb[0].mxu0
    %v4806 = vadd.f32 %v945, %v4805
    %v4807 = vpop.f32.mrb[0].mxu0
    %v4808 = vpop.f32.mrb[0].mxu0
    %4809 = vdwg.mxu0
    %4810 = vmatprep.subr.bf16.mxu0 %v3219
    %4811 = vmatpush1.bf16.msra.mxu0 %v3218
    %4812 = vmatprep.subr.bf16.mxu0 %v3299
    %4813 = vmatpush1.bf16.msra.mxu0 %v3298
    %4814 = vmatprep.subr.bf16.mxu0 %v3379
    %4815 = vmatpush1.bf16.msra.mxu0 %v3378
    %4816 = vmatprep.subr.bf16.mxu0 %v3459
    %4817 = vmatpush1.bf16.msra.mxu0 %v3458
    %4818 = vmatprep.subr.bf16.mxu0 %v3539
    %4819 = vmatpush1.bf16.msra.mxu0 %v3538
    %4820 = vmatprep.subr.bf16.mxu0 %v3619
    %4821 = vmatpush1.bf16.msra.mxu0 %v3618
    %4822 = vmatprep.subr.bf16.mxu0 %v3699
    %4823 = vmatpush1.bf16.msra.mxu0 %v3698
    %4824 = vmatprep.subr.bf16.mxu0 %v3779
    %4825 = vmatpush1.bf16.msra.mxu0 %v3778
    %4826 = vmatprep.subr.bf16.mxu0 0
    %4827 = vmatpush1.bf16.msra.mxu0 0
    %4828 = vmatprep.subr.bf16.mxu0 0
    %4829 = vmatpush1.bf16.msra.mxu0 0
    %4830 = vmatprep.subr.bf16.mxu0 0
    %4831 = vmatpush1.bf16.msra.mxu0 0
    %4832 = vmatprep.subr.bf16.mxu0 0
    %4833 = vmatpush1.bf16.msra.mxu0 0
    %4834 = vmatprep.subr.bf16.mxu0 0
    %4835 = vmatpush1.bf16.msra.mxu0 0
    %4836 = vmatprep.subr.bf16.mxu0 0
    %4837 = vmatpush1.bf16.msra.mxu0 0
    %4838 = vmatprep.subr.bf16.mxu0 0
    %4839 = vmatpush1.bf16.msra.mxu0 0
    %4840 = vmatprep.subr.bf16.mxu0 0
    %4841 = vmatpush1.bf16.msra.mxu0 0
    %4842 = vmatprep.mubr.bf16.mxu0 0
    %4843 = vmatmul.mubr.bf16.gmra.mrb[0].mxu0 %v216
    %v4844 = vpop.f32.mrb[0].mxu0
    %v4845 = vadd.f32 %v949, %v4844
    %v4846 = vpop.f32.mrb[0].mxu0
    %v4847 = vadd.f32 %v953, %v4846
    %v4848 = vpop.f32.mrb[0].mxu0
    %v4849 = vpop.f32.mrb[0].mxu0
    %4850 = vdwg.mxu0
    %4851 = vmatprep.subr.bf16.mxu0 %v3221
    %4852 = vmatpush1.bf16.msra.mxu0 %v3220
    %4853 = vmatprep.subr.bf16.mxu0 %v3301
    %4854 = vmatpush1.bf16.msra.mxu0 %v3300
    %4855 = vmatprep.subr.bf16.mxu0 %v3381
    %4856 = vmatpush1.bf16.msra.mxu0 %v3380
    %4857 = vmatprep.subr.bf16.mxu0 %v3461
    %4858 = vmatpush1.bf16.msra.mxu0 %v3460
    %4859 = vmatprep.subr.bf16.mxu0 %v3541
    %4860 = vmatpush1.bf16.msra.mxu0 %v3540
    %4861 = vmatprep.subr.bf16.mxu0 %v3621
    %4862 = vmatpush1.bf16.msra.mxu0 %v3620
    %4863 = vmatprep.subr.bf16.mxu0 %v3701
    %4864 = vmatpush1.bf16.msra.mxu0 %v3700
    %4865 = vmatprep.subr.bf16.mxu0 %v3781
    %4866 = vmatpush1.bf16.msra.mxu0 %v3780
    %4867 = vmatprep.subr.bf16.mxu0 0
    %4868 = vmatpush1.bf16.msra.mxu0 0
    %4869 = vmatprep.subr.bf16.mxu0 0
    %4870 = vmatpush1.bf16.msra.mxu0 0
    %4871 = vmatprep.subr.bf16.mxu0 0
    %4872 = vmatpush1.bf16.msra.mxu0 0
    %4873 = vmatprep.subr.bf16.mxu0 0
    %4874 = vmatpush1.bf16.msra.mxu0 0
    %4875 = vmatprep.subr.bf16.mxu0 0
    %4876 = vmatpush1.bf16.msra.mxu0 0
    %4877 = vmatprep.subr.bf16.mxu0 0
    %4878 = vmatpush1.bf16.msra.mxu0 0
    %4879 = vmatprep.subr.bf16.mxu0 0
    %4880 = vmatpush1.bf16.msra.mxu0 0
    %4881 = vmatprep.subr.bf16.mxu0 0
    %4882 = vmatpush1.bf16.msra.mxu0 0
    %4883 = vmatprep.mubr.bf16.mxu0 0
    %4884 = vmatmul.mubr.bf16.gmra.mrb[0].mxu0 %v216
    %v4885 = vpop.f32.mrb[0].mxu0
    %v4886 = vadd.f32 %v957, %v4885
    %v4887 = vpop.f32.mrb[0].mxu0
    %v4888 = vadd.f32 %v961, %v4887
    %v4889 = vpop.f32.mrb[0].mxu0
    %v4890 = vpop.f32.mrb[0].mxu0
    %4891 = vdwg.mxu0
    %4892 = vmatprep.subr.bf16.mxu0 %v3223
    %4893 = vmatpush1.bf16.msra.mxu0 %v3222
    %4894 = vmatprep.subr.bf16.mxu0 %v3303
    %4895 = vmatpush1.bf16.msra.mxu0 %v3302
    %4896 = vmatprep.subr.bf16.mxu0 %v3383
    %4897 = vmatpush1.bf16.msra.mxu0 %v3382
    %4898 = vmatprep.subr.bf16.mxu0 %v3463
    %4899 = vmatpush1.bf16.msra.mxu0 %v3462
    %4900 = vmatprep.subr.bf16.mxu0 %v3543
    %4901 = vmatpush1.bf16.msra.mxu0 %v3542
    %4902 = vmatprep.subr.bf16.mxu0 %v3623
    %4903 = vmatpush1.bf16.msra.mxu0 %v3622
    %4904 = vmatprep.subr.bf16.mxu0 %v3703
    %4905 = vmatpush1.bf16.msra.mxu0 %v3702
    %4906 = vmatprep.subr.bf16.mxu0 %v3783
    %4907 = vmatpush1.bf16.msra.mxu0 %v3782
    %4908 = vmatprep.subr.bf16.mxu0 0
    %4909 = vmatpush1.bf16.msra.mxu0 0
    %4910 = vmatprep.subr.bf16.mxu0 0
    %4911 = vmatpush1.bf16.msra.mxu0 0
    %4912 = vmatprep.subr.bf16.mxu0 0
    %4913 = vmatpush1.bf16.msra.mxu0 0
    %4914 = vmatprep.subr.bf16.mxu0 0
    %4915 = vmatpush1.bf16.msra.mxu0 0
    %4916 = vmatprep.subr.bf16.mxu0 0
    %4917 = vmatpush1.bf16.msra.mxu0 0
    %4918 = vmatprep.subr.bf16.mxu0 0
    %4919 = vmatpush1.bf16.msra.mxu0 0
    %4920 = vmatprep.subr.bf16.mxu0 0
    %4921 = vmatpush1.bf16.msra.mxu0 0
    %4922 = vmatprep.subr.bf16.mxu0 0
    %4923 = vmatpush1.bf16.msra.mxu0 0
    %4924 = vmatprep.mubr.bf16.mxu0 0
    %4925 = vmatmul.mubr.bf16.gmra.mrb[0].mxu0 %v216
    %v4926 = vpop.f32.mrb[0].mxu0
    %v4927 = vadd.f32 %v965, %v4926
    %v4928 = vpop.f32.mrb[0].mxu0
    %v4929 = vadd.f32 %v969, %v4928
    %v4930 = vpop.f32.mrb[0].mxu0
    %v4931 = vpop.f32.mrb[0].mxu0
    %4932 = vdwg.mxu0
    %4933 = vmatprep.subr.bf16.mxu0 %v3225
    %4934 = vmatpush1.bf16.msra.mxu0 %v3224
    %4935 = vmatprep.subr.bf16.mxu0 %v3305
    %4936 = vmatpush1.bf16.msra.mxu0 %v3304
    %4937 = vmatprep.subr.bf16.mxu0 %v3385
    %4938 = vmatpush1.bf16.msra.mxu0 %v3384
    %4939 = vmatprep.subr.bf16.mxu0 %v3465
    %4940 = vmatpush1.bf16.msra.mxu0 %v3464
    %4941 = vmatprep.subr.bf16.mxu0 %v3545
    %4942 = vmatpush1.bf16.msra.mxu0 %v3544
    %4943 = vmatprep.subr.bf16.mxu0 %v3625
    %4944 = vmatpush1.bf16.msra.mxu0 %v3624
    %4945 = vmatprep.subr.bf16.mxu0 %v3705
    %4946 = vmatpush1.bf16.msra.mxu0 %v3704
    %4947 = vmatprep.subr.bf16.mxu0 %v3785
    %4948 = vmatpush1.bf16.msra.mxu0 %v3784
    %4949 = vmatprep.subr.bf16.mxu0 0
    %4950 = vmatpush1.bf16.msra.mxu0 0
    %4951 = vmatprep.subr.bf16.mxu0 0
    %4952 = vmatpush1.bf16.msra.mxu0 0
    %4953 = vmatprep.subr.bf16.mxu0 0
    %4954 = vmatpush1.bf16.msra.mxu0 0
    %4955 = vmatprep.subr.bf16.mxu0 0
    %4956 = vmatpush1.bf16.msra.mxu0 0
    %4957 = vmatprep.subr.bf16.mxu0 0
    %4958 = vmatpush1.bf16.msra.mxu0 0
    %4959 = vmatprep.subr.bf16.mxu0 0
    %4960 = vmatpush1.bf16.msra.mxu0 0
    %4961 = vmatprep.subr.bf16.mxu0 0
    %4962 = vmatpush1.bf16.msra.mxu0 0
    %4963 = vmatprep.subr.bf16.mxu0 0
    %4964 = vmatpush1.bf16.msra.mxu0 0
    %4965 = vmatprep.mubr.bf16.mxu0 0
    %4966 = vmatmul.mubr.bf16.gmra.mrb[0].mxu0 %v216
    %v4967 = vpop.f32.mrb[0].mxu0
    %v4968 = vadd.f32 %v973, %v4967
    %v4969 = vpop.f32.mrb[0].mxu0
    %v4970 = vadd.f32 %v977, %v4969
    %v4971 = vpop.f32.mrb[0].mxu0
    %v4972 = vpop.f32.mrb[0].mxu0
    %4973 = vdwg.mxu0
    %4974 = vmatprep.subr.bf16.mxu0 %v3227
    %4975 = vmatpush1.bf16.msra.mxu0 %v3226
    %4976 = vmatprep.subr.bf16.mxu0 %v3307
    %4977 = vmatpush1.bf16.msra.mxu0 %v3306
    %4978 = vmatprep.subr.bf16.mxu0 %v3387
    %4979 = vmatpush1.bf16.msra.mxu0 %v3386
    %4980 = vmatprep.subr.bf16.mxu0 %v3467
    %4981 = vmatpush1.bf16.msra.mxu0 %v3466
    %4982 = vmatprep.subr.bf16.mxu0 %v3547
    %4983 = vmatpush1.bf16.msra.mxu0 %v3546
    %4984 = vmatprep.subr.bf16.mxu0 %v3627
    %4985 = vmatpush1.bf16.msra.mxu0 %v3626
    %4986 = vmatprep.subr.bf16.mxu0 %v3707
    %4987 = vmatpush1.bf16.msra.mxu0 %v3706
    %4988 = vmatprep.subr.bf16.mxu0 %v3787
    %4989 = vmatpush1.bf16.msra.mxu0 %v3786
    %4990 = vmatprep.subr.bf16.mxu0 0
    %4991 = vmatpush1.bf16.msra.mxu0 0
    %4992 = vmatprep.subr.bf16.mxu0 0
    %4993 = vmatpush1.bf16.msra.mxu0 0
    %4994 = vmatprep.subr.bf16.mxu0 0
    %4995 = vmatpush1.bf16.msra.mxu0 0
    %4996 = vmatprep.subr.bf16.mxu0 0
    %4997 = vmatpush1.bf16.msra.mxu0 0
    %4998 = vmatprep.subr.bf16.mxu0 0
    %4999 = vmatpush1.bf16.msra.mxu0 0
    %5000 = vmatprep.subr.bf16.mxu0 0
    %5001 = vmatpush1.bf16.msra.mxu0 0
    %5002 = vmatprep.subr.bf16.mxu0 0
    %5003 = vmatpush1.bf16.msra.mxu0 0
    %5004 = vmatprep.subr.bf16.mxu0 0
    %5005 = vmatpush1.bf16.msra.mxu0 0
    %5006 = vmatprep.mubr.bf16.mxu0 0
    %5007 = vmatmul.mubr.bf16.gmra.mrb[0].mxu0 %v216
    %v5008 = vpop.f32.mrb[0].mxu0
    %v5009 = vadd.f32 %v981, %v5008
    %v5010 = vpop.f32.mrb[0].mxu0
    %v5011 = vadd.f32 %v985, %v5010
    %v5012 = vpop.f32.mrb[0].mxu0
    %v5013 = vpop.f32.mrb[0].mxu0
    %5014 = vdwg.mxu0
    %5015 = vmatprep.subr.bf16.mxu0 %v3229
    %5016 = vmatpush1.bf16.msra.mxu0 %v3228
    %5017 = vmatprep.subr.bf16.mxu0 %v3309
    %5018 = vmatpush1.bf16.msra.mxu0 %v3308
    %5019 = vmatprep.subr.bf16.mxu0 %v3389
    %5020 = vmatpush1.bf16.msra.mxu0 %v3388
    %5021 = vmatprep.subr.bf16.mxu0 %v3469
    %5022 = vmatpush1.bf16.msra.mxu0 %v3468
    %5023 = vmatprep.subr.bf16.mxu0 %v3549
    %5024 = vmatpush1.bf16.msra.mxu0 %v3548
    %5025 = vmatprep.subr.bf16.mxu0 %v3629
    %5026 = vmatpush1.bf16.msra.mxu0 %v3628
    %5027 = vmatprep.subr.bf16.mxu0 %v3709
    %5028 = vmatpush1.bf16.msra.mxu0 %v3708
    %5029 = vmatprep.subr.bf16.mxu0 %v3789
    %5030 = vmatpush1.bf16.msra.mxu0 %v3788
    %5031 = vmatprep.subr.bf16.mxu0 0
    %5032 = vmatpush1.bf16.msra.mxu0 0
    %5033 = vmatprep.subr.bf16.mxu0 0
    %5034 = vmatpush1.bf16.msra.mxu0 0
    %5035 = vmatprep.subr.bf16.mxu0 0
    %5036 = vmatpush1.bf16.msra.mxu0 0
    %5037 = vmatprep.subr.bf16.mxu0 0
    %5038 = vmatpush1.bf16.msra.mxu0 0
    %5039 = vmatprep.subr.bf16.mxu0 0
    %5040 = vmatpush1.bf16.msra.mxu0 0
    %5041 = vmatprep.subr.bf16.mxu0 0
    %5042 = vmatpush1.bf16.msra.mxu0 0
    %5043 = vmatprep.subr.bf16.mxu0 0
    %5044 = vmatpush1.bf16.msra.mxu0 0
    %5045 = vmatprep.subr.bf16.mxu0 0
    %5046 = vmatpush1.bf16.msra.mxu0 0
    %5047 = vmatprep.mubr.bf16.mxu0 0
    %5048 = vmatmul.mubr.bf16.gmra.mrb[0].mxu0 %v216
    %v5049 = vpop.f32.mrb[0].mxu0
    %v5050 = vadd.f32 %v989, %v5049
    %v5051 = vpop.f32.mrb[0].mxu0
    %v5052 = vadd.f32 %v993, %v5051
    %v5053 = vpop.f32.mrb[0].mxu0
    %v5054 = vpop.f32.mrb[0].mxu0
    %5055 = vdwg.mxu0
    %5056 = vmatprep.subr.bf16.mxu0 %v3231
    %5057 = vmatpush1.bf16.msra.mxu0 %v3230
    %5058 = vmatprep.subr.bf16.mxu0 %v3311
    %5059 = vmatpush1.bf16.msra.mxu0 %v3310
    %5060 = vmatprep.subr.bf16.mxu0 %v3391
    %5061 = vmatpush1.bf16.msra.mxu0 %v3390
    %5062 = vmatprep.subr.bf16.mxu0 %v3471
    %5063 = vmatpush1.bf16.msra.mxu0 %v3470
    %5064 = vmatprep.subr.bf16.mxu0 %v3551
    %5065 = vmatpush1.bf16.msra.mxu0 %v3550
    %5066 = vmatprep.subr.bf16.mxu0 %v3631
    %5067 = vmatpush1.bf16.msra.mxu0 %v3630
    %5068 = vmatprep.subr.bf16.mxu0 %v3711
    %5069 = vmatpush1.bf16.msra.mxu0 %v3710
    %5070 = vmatprep.subr.bf16.mxu0 %v3791
    %5071 = vmatpush1.bf16.msra.mxu0 %v3790
    %5072 = vmatprep.subr.bf16.mxu0 0
    %5073 = vmatpush1.bf16.msra.mxu0 0
    %5074 = vmatprep.subr.bf16.mxu0 0
    %5075 = vmatpush1.bf16.msra.mxu0 0
    %5076 = vmatprep.subr.bf16.mxu0 0
    %5077 = vmatpush1.bf16.msra.mxu0 0
    %5078 = vmatprep.subr.bf16.mxu0 0
    %5079 = vmatpush1.bf16.msra.mxu0 0
    %5080 = vmatprep.subr.bf16.mxu0 0
    %5081 = vmatpush1.bf16.msra.mxu0 0
    %5082 = vmatprep.subr.bf16.mxu0 0
    %5083 = vmatpush1.bf16.msra.mxu0 0
    %5084 = vmatprep.subr.bf16.mxu0 0
    %5085 = vmatpush1.bf16.msra.mxu0 0
    %5086 = vmatprep.subr.bf16.mxu0 0
    %5087 = vmatpush1.bf16.msra.mxu0 0
    %5088 = vmatprep.mubr.bf16.mxu0 0
    %5089 = vmatmul.mubr.bf16.gmra.mrb[0].mxu0 %v216
    %v5090 = vpop.f32.mrb[0].mxu0
    %v5091 = vadd.f32 %v997, %v5090
    %v5092 = vpop.f32.mrb[0].mxu0
    %v5093 = vadd.f32 %v1001, %v5092
    %v5094 = vpop.f32.mrb[0].mxu0
    %v5095 = vpop.f32.mrb[0].mxu0
    %5096 = vdwg.mxu0
    %5097 = vmatprep.subr.bf16.mxu0 %v3233
    %5098 = vmatpush1.bf16.msra.mxu0 %v3232
    %5099 = vmatprep.subr.bf16.mxu0 %v3313
    %5100 = vmatpush1.bf16.msra.mxu0 %v3312
    %5101 = vmatprep.subr.bf16.mxu0 %v3393
    %5102 = vmatpush1.bf16.msra.mxu0 %v3392
    %5103 = vmatprep.subr.bf16.mxu0 %v3473
    %5104 = vmatpush1.bf16.msra.mxu0 %v3472
    %5105 = vmatprep.subr.bf16.mxu0 %v3553
    %5106 = vmatpush1.bf16.msra.mxu0 %v3552
    %5107 = vmatprep.subr.bf16.mxu0 %v3633
    %5108 = vmatpush1.bf16.msra.mxu0 %v3632
    %5109 = vmatprep.subr.bf16.mxu0 %v3713
    %5110 = vmatpush1.bf16.msra.mxu0 %v3712
    %5111 = vmatprep.subr.bf16.mxu0 %v3793
    %5112 = vmatpush1.bf16.msra.mxu0 %v3792
    %5113 = vmatprep.subr.bf16.mxu0 0
    %5114 = vmatpush1.bf16.msra.mxu0 0
    %5115 = vmatprep.subr.bf16.mxu0 0
    %5116 = vmatpush1.bf16.msra.mxu0 0
    %5117 = vmatprep.subr.bf16.mxu0 0
    %5118 = vmatpush1.bf16.msra.mxu0 0
    %5119 = vmatprep.subr.bf16.mxu0 0
    %5120 = vmatpush1.bf16.msra.mxu0 0
    %5121 = vmatprep.subr.bf16.mxu0 0
    %5122 = vmatpush1.bf16.msra.mxu0 0
    %5123 = vmatprep.subr.bf16.mxu0 0
    %5124 = vmatpush1.bf16.msra.mxu0 0
    %5125 = vmatprep.subr.bf16.mxu0 0
    %5126 = vmatpush1.bf16.msra.mxu0 0
    %5127 = vmatprep.subr.bf16.mxu0 0
    %5128 = vmatpush1.bf16.msra.mxu0 0
    %5129 = vmatprep.mubr.bf16.mxu0 0
    %5130 = vmatmul.mubr.bf16.gmra.mrb[0].mxu0 %v216
    %v5131 = vpop.f32.mrb[0].mxu0
    %v5132 = vadd.f32 %v1005, %v5131
    %v5133 = vpop.f32.mrb[0].mxu0
    %v5134 = vadd.f32 %v1009, %v5133
    %v5135 = vpop.f32.mrb[0].mxu0
    %v5136 = vpop.f32.mrb[0].mxu0
    %5137 = vdwg.mxu0
    %5138 = vmatprep.subr.bf16.mxu0 %v3235
    %5139 = vmatpush1.bf16.msra.mxu0 %v3234
    %5140 = vmatprep.subr.bf16.mxu0 %v3315
    %5141 = vmatpush1.bf16.msra.mxu0 %v3314
    %5142 = vmatprep.subr.bf16.mxu0 %v3395
    %5143 = vmatpush1.bf16.msra.mxu0 %v3394
    %5144 = vmatprep.subr.bf16.mxu0 %v3475
    %5145 = vmatpush1.bf16.msra.mxu0 %v3474
    %5146 = vmatprep.subr.bf16.mxu0 %v3555
    %5147 = vmatpush1.bf16.msra.mxu0 %v3554
    %5148 = vmatprep.subr.bf16.mxu0 %v3635
    %5149 = vmatpush1.bf16.msra.mxu0 %v3634
    %5150 = vmatprep.subr.bf16.mxu0 %v3715
    %5151 = vmatpush1.bf16.msra.mxu0 %v3714
    %5152 = vmatprep.subr.bf16.mxu0 %v3795
    %5153 = vmatpush1.bf16.msra.mxu0 %v3794
    %5154 = vmatprep.subr.bf16.mxu0 0
    %5155 = vmatpush1.bf16.msra.mxu0 0
    %5156 = vmatprep.subr.bf16.mxu0 0
    %5157 = vmatpush1.bf16.msra.mxu0 0
    %5158 = vmatprep.subr.bf16.mxu0 0
    %5159 = vmatpush1.bf16.msra.mxu0 0
    %5160 = vmatprep.subr.bf16.mxu0 0
    %5161 = vmatpush1.bf16.msra.mxu0 0
    %5162 = vmatprep.subr.bf16.mxu0 0
    %5163 = vmatpush1.bf16.msra.mxu0 0
    %5164 = vmatprep.subr.bf16.mxu0 0
    %5165 = vmatpush1.bf16.msra.mxu0 0
    %5166 = vmatprep.subr.bf16.mxu0 0
    %5167 = vmatpush1.bf16.msra.mxu0 0
    %5168 = vmatprep.subr.bf16.mxu0 0
    %5169 = vmatpush1.bf16.msra.mxu0 0
    %5170 = vmatprep.mubr.bf16.mxu0 0
    %5171 = vmatmul.mubr.bf16.gmra.mrb[0].mxu0 %v216
    %v5172 = vpop.f32.mrb[0].mxu0
    %v5173 = vadd.f32 %v1013, %v5172
    %v5174 = vpop.f32.mrb[0].mxu0
    %v5175 = vadd.f32 %v1017, %v5174
    %v5176 = vpop.f32.mrb[0].mxu0
    %v5177 = vpop.f32.mrb[0].mxu0
    %5178 = vdwg.mxu0
    %5179 = vmatprep.subr.bf16.mxu0 %v3237
    %5180 = vmatpush1.bf16.msra.mxu0 %v3236
    %5181 = vmatprep.subr.bf16.mxu0 %v3317
    %5182 = vmatpush1.bf16.msra.mxu0 %v3316
    %5183 = vmatprep.subr.bf16.mxu0 %v3397
    %5184 = vmatpush1.bf16.msra.mxu0 %v3396
    %5185 = vmatprep.subr.bf16.mxu0 %v3477
    %5186 = vmatpush1.bf16.msra.mxu0 %v3476
    %5187 = vmatprep.subr.bf16.mxu0 %v3557
    %5188 = vmatpush1.bf16.msra.mxu0 %v3556
    %5189 = vmatprep.subr.bf16.mxu0 %v3637
    %5190 = vmatpush1.bf16.msra.mxu0 %v3636
    %5191 = vmatprep.subr.bf16.mxu0 %v3717
    %5192 = vmatpush1.bf16.msra.mxu0 %v3716
    %5193 = vmatprep.subr.bf16.mxu0 %v3797
    %5194 = vmatpush1.bf16.msra.mxu0 %v3796
    %5195 = vmatprep.subr.bf16.mxu0 0
    %5196 = vmatpush1.bf16.msra.mxu0 0
    %5197 = vmatprep.subr.bf16.mxu0 0
    %5198 = vmatpush1.bf16.msra.mxu0 0
    %5199 = vmatprep.subr.bf16.mxu0 0
    %5200 = vmatpush1.bf16.msra.mxu0 0
    %5201 = vmatprep.subr.bf16.mxu0 0
    %5202 = vmatpush1.bf16.msra.mxu0 0
    %5203 = vmatprep.subr.bf16.mxu0 0
    %5204 = vmatpush1.bf16.msra.mxu0 0
    %5205 = vmatprep.subr.bf16.mxu0 0
    %5206 = vmatpush1.bf16.msra.mxu0 0
    %5207 = vmatprep.subr.bf16.mxu0 0
    %5208 = vmatpush1.bf16.msra.mxu0 0
    %5209 = vmatprep.subr.bf16.mxu0 0
    %5210 = vmatpush1.bf16.msra.mxu0 0
    %5211 = vmatprep.mubr.bf16.mxu0 0
    %5212 = vmatmul.mubr.bf16.gmra.mrb[0].mxu0 %v216
    %v5213 = vpop.f32.mrb[0].mxu0
    %v5214 = vadd.f32 %v1021, %v5213
    %v5215 = vpop.f32.mrb[0].mxu0
    %v5216 = vadd.f32 %v1025, %v5215
    %v5217 = vpop.f32.mrb[0].mxu0
    %v5218 = vpop.f32.mrb[0].mxu0
    %5219 = vdwg.mxu0
    %5220 = vmatprep.subr.bf16.mxu0 %v3239
    %5221 = vmatpush1.bf16.msra.mxu0 %v3238
    %5222 = vmatprep.subr.bf16.mxu0 %v3319
    %5223 = vmatpush1.bf16.msra.mxu0 %v3318
    %5224 = vmatprep.subr.bf16.mxu0 %v3399
    %5225 = vmatpush1.bf16.msra.mxu0 %v3398
    %5226 = vmatprep.subr.bf16.mxu0 %v3479
    %5227 = vmatpush1.bf16.msra.mxu0 %v3478
    %5228 = vmatprep.subr.bf16.mxu0 %v3559
    %5229 = vmatpush1.bf16.msra.mxu0 %v3558
    %5230 = vmatprep.subr.bf16.mxu0 %v3639
    %5231 = vmatpush1.bf16.msra.mxu0 %v3638
    %5232 = vmatprep.subr.bf16.mxu0 %v3719
    %5233 = vmatpush1.bf16.msra.mxu0 %v3718
    %5234 = vmatprep.subr.bf16.mxu0 %v3799
    %5235 = vmatpush1.bf16.msra.mxu0 %v3798
    %5236 = vmatprep.subr.bf16.mxu0 0
    %5237 = vmatpush1.bf16.msra.mxu0 0
    %5238 = vmatprep.subr.bf16.mxu0 0
    %5239 = vmatpush1.bf16.msra.mxu0 0
    %5240 = vmatprep.subr.bf16.mxu0 0
    %5241 = vmatpush1.bf16.msra.mxu0 0
    %5242 = vmatprep.subr.bf16.mxu0 0
    %5243 = vmatpush1.bf16.msra.mxu0 0
    %5244 = vmatprep.subr.bf16.mxu0 0
    %5245 = vmatpush1.bf16.msra.mxu0 0
    %5246 = vmatprep.subr.bf16.mxu0 0
    %5247 = vmatpush1.bf16.msra.mxu0 0
    %5248 = vmatprep.subr.bf16.mxu0 0
    %5249 = vmatpush1.bf16.msra.mxu0 0
    %5250 = vmatprep.subr.bf16.mxu0 0
    %5251 = vmatpush1.bf16.msra.mxu0 0
    %5252 = vmatprep.mubr.bf16.mxu0 0
    %5253 = vmatmul.mubr.bf16.gmra.mrb[0].mxu0 %v216
    %v5254 = vpop.f32.mrb[0].mxu0
    %v5255 = vadd.f32 %v1029, %v5254
    %v5256 = vpop.f32.mrb[0].mxu0
    %v5257 = vadd.f32 %v1033, %v5256
    %v5258 = vpop.f32.mrb[0].mxu0
    %v5259 = vpop.f32.mrb[0].mxu0
    %5260 = vdwg.mxu0
    %5261 = vmatprep.subr.bf16.mxu0 %v3241
    %5262 = vmatpush1.bf16.msra.mxu0 %v3240
    %5263 = vmatprep.subr.bf16.mxu0 %v3321
    %5264 = vmatpush1.bf16.msra.mxu0 %v3320
    %5265 = vmatprep.subr.bf16.mxu0 %v3401
    %5266 = vmatpush1.bf16.msra.mxu0 %v3400
    %5267 = vmatprep.subr.bf16.mxu0 %v3481
    %5268 = vmatpush1.bf16.msra.mxu0 %v3480
    %5269 = vmatprep.subr.bf16.mxu0 %v3561
    %5270 = vmatpush1.bf16.msra.mxu0 %v3560
    %5271 = vmatprep.subr.bf16.mxu0 %v3641
    %5272 = vmatpush1.bf16.msra.mxu0 %v3640
    %5273 = vmatprep.subr.bf16.mxu0 %v3721
    %5274 = vmatpush1.bf16.msra.mxu0 %v3720
    %5275 = vmatprep.subr.bf16.mxu0 %v3801
    %5276 = vmatpush1.bf16.msra.mxu0 %v3800
    %5277 = vmatprep.subr.bf16.mxu0 0
    %5278 = vmatpush1.bf16.msra.mxu0 0
    %5279 = vmatprep.subr.bf16.mxu0 0
    %5280 = vmatpush1.bf16.msra.mxu0 0
    %5281 = vmatprep.subr.bf16.mxu0 0
    %5282 = vmatpush1.bf16.msra.mxu0 0
    %5283 = vmatprep.subr.bf16.mxu0 0
    %5284 = vmatpush1.bf16.msra.mxu0 0
    %5285 = vmatprep.subr.bf16.mxu0 0
    %5286 = vmatpush1.bf16.msra.mxu0 0
    %5287 = vmatprep.subr.bf16.mxu0 0
    %5288 = vmatpush1.bf16.msra.mxu0 0
    %5289 = vmatprep.subr.bf16.mxu0 0
    %5290 = vmatpush1.bf16.msra.mxu0 0
    %5291 = vmatprep.subr.bf16.mxu0 0
    %5292 = vmatpush1.bf16.msra.mxu0 0
    %5293 = vmatprep.mubr.bf16.mxu0 0
    %5294 = vmatmul.mubr.bf16.gmra.mrb[0].mxu0 %v216
    %v5295 = vpop.f32.mrb[0].mxu0
    %v5296 = vadd.f32 %v1037, %v5295
    %v5297 = vpop.f32.mrb[0].mxu0
    %v5298 = vadd.f32 %v1041, %v5297
    %v5299 = vpop.f32.mrb[0].mxu0
    %v5300 = vpop.f32.mrb[0].mxu0
    %5301 = vdwg.mxu0
    %5302 = vmatprep.subr.bf16.mxu0 %v3243
    %5303 = vmatpush1.bf16.msra.mxu0 %v3242
    %5304 = vmatprep.subr.bf16.mxu0 %v3323
    %5305 = vmatpush1.bf16.msra.mxu0 %v3322
    %5306 = vmatprep.subr.bf16.mxu0 %v3403
    %5307 = vmatpush1.bf16.msra.mxu0 %v3402
    %5308 = vmatprep.subr.bf16.mxu0 %v3483
    %5309 = vmatpush1.bf16.msra.mxu0 %v3482
    %5310 = vmatprep.subr.bf16.mxu0 %v3563
    %5311 = vmatpush1.bf16.msra.mxu0 %v3562
    %5312 = vmatprep.subr.bf16.mxu0 %v3643
    %5313 = vmatpush1.bf16.msra.mxu0 %v3642
    %5314 = vmatprep.subr.bf16.mxu0 %v3723
    %5315 = vmatpush1.bf16.msra.mxu0 %v3722
    %5316 = vmatprep.subr.bf16.mxu0 %v3803
    %5317 = vmatpush1.bf16.msra.mxu0 %v3802
    %5318 = vmatprep.subr.bf16.mxu0 0
    %5319 = vmatpush1.bf16.msra.mxu0 0
    %5320 = vmatprep.subr.bf16.mxu0 0
    %5321 = vmatpush1.bf16.msra.mxu0 0
    %5322 = vmatprep.subr.bf16.mxu0 0
    %5323 = vmatpush1.bf16.msra.mxu0 0
    %5324 = vmatprep.subr.bf16.mxu0 0
    %5325 = vmatpush1.bf16.msra.mxu0 0
    %5326 = vmatprep.subr.bf16.mxu0 0
    %5327 = vmatpush1.bf16.msra.mxu0 0
    %5328 = vmatprep.subr.bf16.mxu0 0
    %5329 = vmatpush1.bf16.msra.mxu0 0
    %5330 = vmatprep.subr.bf16.mxu0 0
    %5331 = vmatpush1.bf16.msra.mxu0 0
    %5332 = vmatprep.subr.bf16.mxu0 0
    %5333 = vmatpush1.bf16.msra.mxu0 0
    %5334 = vmatprep.mubr.bf16.mxu0 0
    %5335 = vmatmul.mubr.bf16.gmra.mrb[0].mxu0 %v216
    %v5336 = vpop.f32.mrb[0].mxu0
    %v5337 = vadd.f32 %v1045, %v5336
    %v5338 = vpop.f32.mrb[0].mxu0
    %v5339 = vadd.f32 %v1049, %v5338
    %v5340 = vpop.f32.mrb[0].mxu0
    %v5341 = vpop.f32.mrb[0].mxu0
    %5342 = vdwg.mxu0
    %5343 = vmatprep.subr.bf16.mxu0 %v3245
    %5344 = vmatpush1.bf16.msra.mxu0 %v3244
    %5345 = vmatprep.subr.bf16.mxu0 %v3325
    %5346 = vmatpush1.bf16.msra.mxu0 %v3324
    %5347 = vmatprep.subr.bf16.mxu0 %v3405
    %5348 = vmatpush1.bf16.msra.mxu0 %v3404
    %5349 = vmatprep.subr.bf16.mxu0 %v3485
    %5350 = vmatpush1.bf16.msra.mxu0 %v3484
    %5351 = vmatprep.subr.bf16.mxu0 %v3565
    %5352 = vmatpush1.bf16.msra.mxu0 %v3564
    %5353 = vmatprep.subr.bf16.mxu0 %v3645
    %5354 = vmatpush1.bf16.msra.mxu0 %v3644
    %5355 = vmatprep.subr.bf16.mxu0 %v3725
    %5356 = vmatpush1.bf16.msra.mxu0 %v3724
    %5357 = vmatprep.subr.bf16.mxu0 %v3805
    %5358 = vmatpush1.bf16.msra.mxu0 %v3804
    %5359 = vmatprep.subr.bf16.mxu0 0
    %5360 = vmatpush1.bf16.msra.mxu0 0
    %5361 = vmatprep.subr.bf16.mxu0 0
    %5362 = vmatpush1.bf16.msra.mxu0 0
    %5363 = vmatprep.subr.bf16.mxu0 0
    %5364 = vmatpush1.bf16.msra.mxu0 0
    %5365 = vmatprep.subr.bf16.mxu0 0
    %5366 = vmatpush1.bf16.msra.mxu0 0
    %5367 = vmatprep.subr.bf16.mxu0 0
    %5368 = vmatpush1.bf16.msra.mxu0 0
    %5369 = vmatprep.subr.bf16.mxu0 0
    %5370 = vmatpush1.bf16.msra.mxu0 0
    %5371 = vmatprep.subr.bf16.mxu0 0
    %5372 = vmatpush1.bf16.msra.mxu0 0
    %5373 = vmatprep.subr.bf16.mxu0 0
    %5374 = vmatpush1.bf16.msra.mxu0 0
    %5375 = vmatprep.mubr.bf16.mxu0 0
    %5376 = vmatmul.mubr.bf16.gmra.mrb[0].mxu0 %v216
    %v5377 = vpop.f32.mrb[0].mxu0
    %v5378 = vadd.f32 %v1053, %v5377
    %v5379 = vpop.f32.mrb[0].mxu0
    %v5380 = vadd.f32 %v1057, %v5379
    %v5381 = vpop.f32.mrb[0].mxu0
    %v5382 = vpop.f32.mrb[0].mxu0
    %5383 = vdwg.mxu0
    %5384 = vmatprep.subr.bf16.mxu0 %v3247
    %5385 = vmatpush1.bf16.msra.mxu0 %v3246
    %5386 = vmatprep.subr.bf16.mxu0 %v3327
    %5387 = vmatpush1.bf16.msra.mxu0 %v3326
    %5388 = vmatprep.subr.bf16.mxu0 %v3407
    %5389 = vmatpush1.bf16.msra.mxu0 %v3406
    %5390 = vmatprep.subr.bf16.mxu0 %v3487
    %5391 = vmatpush1.bf16.msra.mxu0 %v3486
    %5392 = vmatprep.subr.bf16.mxu0 %v3567
    %5393 = vmatpush1.bf16.msra.mxu0 %v3566
    %5394 = vmatprep.subr.bf16.mxu0 %v3647
    %5395 = vmatpush1.bf16.msra.mxu0 %v3646
    %5396 = vmatprep.subr.bf16.mxu0 %v3727
    %5397 = vmatpush1.bf16.msra.mxu0 %v3726
    %5398 = vmatprep.subr.bf16.mxu0 %v3807
    %5399 = vmatpush1.bf16.msra.mxu0 %v3806
    %5400 = vmatprep.subr.bf16.mxu0 0
    %5401 = vmatpush1.bf16.msra.mxu0 0
    %5402 = vmatprep.subr.bf16.mxu0 0
    %5403 = vmatpush1.bf16.msra.mxu0 0
    %5404 = vmatprep.subr.bf16.mxu0 0
    %5405 = vmatpush1.bf16.msra.mxu0 0
    %5406 = vmatprep.subr.bf16.mxu0 0
    %5407 = vmatpush1.bf16.msra.mxu0 0
    %5408 = vmatprep.subr.bf16.mxu0 0
    %5409 = vmatpush1.bf16.msra.mxu0 0
    %5410 = vmatprep.subr.bf16.mxu0 0
    %5411 = vmatpush1.bf16.msra.mxu0 0
    %5412 = vmatprep.subr.bf16.mxu0 0
    %5413 = vmatpush1.bf16.msra.mxu0 0
    %5414 = vmatprep.subr.bf16.mxu0 0
    %5415 = vmatpush1.bf16.msra.mxu0 0
    %5416 = vmatprep.mubr.bf16.mxu0 0
    %5417 = vmatmul.mubr.bf16.gmra.mrb[0].mxu0 %v216
    %v5418 = vpop.f32.mrb[0].mxu0
    %v5419 = vadd.f32 %v1061, %v5418
    %v5420 = vpop.f32.mrb[0].mxu0
    %v5421 = vadd.f32 %v1065, %v5420
    %v5422 = vpop.f32.mrb[0].mxu0
    %v5423 = vpop.f32.mrb[0].mxu0
    %5424 = vdwg.mxu0
    %5425 = vmatprep.subr.bf16.mxu0 %v3249
    %5426 = vmatpush1.bf16.msra.mxu0 %v3248
    %5427 = vmatprep.subr.bf16.mxu0 %v3329
    %5428 = vmatpush1.bf16.msra.mxu0 %v3328
    %5429 = vmatprep.subr.bf16.mxu0 %v3409
    %5430 = vmatpush1.bf16.msra.mxu0 %v3408
    %5431 = vmatprep.subr.bf16.mxu0 %v3489
    %5432 = vmatpush1.bf16.msra.mxu0 %v3488
    %5433 = vmatprep.subr.bf16.mxu0 %v3569
    %5434 = vmatpush1.bf16.msra.mxu0 %v3568
    %5435 = vmatprep.subr.bf16.mxu0 %v3649
    %5436 = vmatpush1.bf16.msra.mxu0 %v3648
    %5437 = vmatprep.subr.bf16.mxu0 %v3729
    %5438 = vmatpush1.bf16.msra.mxu0 %v3728
    %5439 = vmatprep.subr.bf16.mxu0 %v3809
    %5440 = vmatpush1.bf16.msra.mxu0 %v3808
    %5441 = vmatprep.subr.bf16.mxu0 0
    %5442 = vmatpush1.bf16.msra.mxu0 0
    %5443 = vmatprep.subr.bf16.mxu0 0
    %5444 = vmatpush1.bf16.msra.mxu0 0
    %5445 = vmatprep.subr.bf16.mxu0 0
    %5446 = vmatpush1.bf16.msra.mxu0 0
    %5447 = vmatprep.subr.bf16.mxu0 0
    %5448 = vmatpush1.bf16.msra.mxu0 0
    %5449 = vmatprep.subr.bf16.mxu0 0
    %5450 = vmatpush1.bf16.msra.mxu0 0
    %5451 = vmatprep.subr.bf16.mxu0 0
    %5452 = vmatpush1.bf16.msra.mxu0 0
    %5453 = vmatprep.subr.bf16.mxu0 0
    %5454 = vmatpush1.bf16.msra.mxu0 0
    %5455 = vmatprep.subr.bf16.mxu0 0
    %5456 = vmatpush1.bf16.msra.mxu0 0
    %5457 = vmatprep.mubr.bf16.mxu0 0
    %5458 = vmatmul.mubr.bf16.gmra.mrb[0].mxu0 %v216
    %v5459 = vpop.f32.mrb[0].mxu0
    %v5460 = vadd.f32 %v1069, %v5459
    %v5461 = vpop.f32.mrb[0].mxu0
    %v5462 = vadd.f32 %v1073, %v5461
    %v5463 = vpop.f32.mrb[0].mxu0
    %v5464 = vpop.f32.mrb[0].mxu0
    %5465 = vdwg.mxu0
    %5466 = vmatprep.subr.bf16.mxu0 %v3251
    %5467 = vmatpush1.bf16.msra.mxu0 %v3250
    %5468 = vmatprep.subr.bf16.mxu0 %v3331
    %5469 = vmatpush1.bf16.msra.mxu0 %v3330
    %5470 = vmatprep.subr.bf16.mxu0 %v3411
    %5471 = vmatpush1.bf16.msra.mxu0 %v3410
    %5472 = vmatprep.subr.bf16.mxu0 %v3491
    %5473 = vmatpush1.bf16.msra.mxu0 %v3490
    %5474 = vmatprep.subr.bf16.mxu0 %v3571
    %5475 = vmatpush1.bf16.msra.mxu0 %v3570
    %5476 = vmatprep.subr.bf16.mxu0 %v3651
    %5477 = vmatpush1.bf16.msra.mxu0 %v3650
    %5478 = vmatprep.subr.bf16.mxu0 %v3731
    %5479 = vmatpush1.bf16.msra.mxu0 %v3730
    %5480 = vmatprep.subr.bf16.mxu0 %v3811
    %5481 = vmatpush1.bf16.msra.mxu0 %v3810
    %5482 = vmatprep.subr.bf16.mxu0 0
    %5483 = vmatpush1.bf16.msra.mxu0 0
    %5484 = vmatprep.subr.bf16.mxu0 0
    %5485 = vmatpush1.bf16.msra.mxu0 0
    %5486 = vmatprep.subr.bf16.mxu0 0
    %5487 = vmatpush1.bf16.msra.mxu0 0
    %5488 = vmatprep.subr.bf16.mxu0 0
    %5489 = vmatpush1.bf16.msra.mxu0 0
    %5490 = vmatprep.subr.bf16.mxu0 0
    %5491 = vmatpush1.bf16.msra.mxu0 0
    %5492 = vmatprep.subr.bf16.mxu0 0
    %5493 = vmatpush1.bf16.msra.mxu0 0
    %5494 = vmatprep.subr.bf16.mxu0 0
    %5495 = vmatpush1.bf16.msra.mxu0 0
    %5496 = vmatprep.subr.bf16.mxu0 0
    %5497 = vmatpush1.bf16.msra.mxu0 0
    %5498 = vmatprep.mubr.bf16.mxu0 0
    %5499 = vmatmul.mubr.bf16.gmra.mrb[0].mxu0 %v216
    %v5500 = vpop.f32.mrb[0].mxu0
    %v5501 = vadd.f32 %v1077, %v5500
    %v5502 = vpop.f32.mrb[0].mxu0
    %v5503 = vadd.f32 %v1081, %v5502
    %v5504 = vpop.f32.mrb[0].mxu0
    %v5505 = vpop.f32.mrb[0].mxu0
    %5506 = vdwg.mxu0
    %5507 = vmatprep.subr.bf16.mxu0 %v3253
    %5508 = vmatpush1.bf16.msra.mxu0 %v3252
    %5509 = vmatprep.subr.bf16.mxu0 %v3333
    %5510 = vmatpush1.bf16.msra.mxu0 %v3332
    %5511 = vmatprep.subr.bf16.mxu0 %v3413
    %5512 = vmatpush1.bf16.msra.mxu0 %v3412
    %5513 = vmatprep.subr.bf16.mxu0 %v3493
    %5514 = vmatpush1.bf16.msra.mxu0 %v3492
    %5515 = vmatprep.subr.bf16.mxu0 %v3573
    %5516 = vmatpush1.bf16.msra.mxu0 %v3572
    %5517 = vmatprep.subr.bf16.mxu0 %v3653
    %5518 = vmatpush1.bf16.msra.mxu0 %v3652
    %5519 = vmatprep.subr.bf16.mxu0 %v3733
    %5520 = vmatpush1.bf16.msra.mxu0 %v3732
    %5521 = vmatprep.subr.bf16.mxu0 %v3813
    %5522 = vmatpush1.bf16.msra.mxu0 %v3812
    %5523 = vmatprep.subr.bf16.mxu0 0
    %5524 = vmatpush1.bf16.msra.mxu0 0
    %5525 = vmatprep.subr.bf16.mxu0 0
    %5526 = vmatpush1.bf16.msra.mxu0 0
    %5527 = vmatprep.subr.bf16.mxu0 0
    %5528 = vmatpush1.bf16.msra.mxu0 0
    %5529 = vmatprep.subr.bf16.mxu0 0
    %5530 = vmatpush1.bf16.msra.mxu0 0
    %5531 = vmatprep.subr.bf16.mxu0 0
    %5532 = vmatpush1.bf16.msra.mxu0 0
    %5533 = vmatprep.subr.bf16.mxu0 0
    %5534 = vmatpush1.bf16.msra.mxu0 0
    %5535 = vmatprep.subr.bf16.mxu0 0
    %5536 = vmatpush1.bf16.msra.mxu0 0
    %5537 = vmatprep.subr.bf16.mxu0 0
    %5538 = vmatpush1.bf16.msra.mxu0 0
    %5539 = vmatprep.mubr.bf16.mxu0 0
    %5540 = vmatmul.mubr.bf16.gmra.mrb[0].mxu0 %v216
    %v5541 = vpop.f32.mrb[0].mxu0
    %v5542 = vadd.f32 %v1085, %v5541
    %v5543 = vpop.f32.mrb[0].mxu0
    %v5544 = vadd.f32 %v1089, %v5543
    %v5545 = vpop.f32.mrb[0].mxu0
    %v5546 = vpop.f32.mrb[0].mxu0
    %5547 = vdwg.mxu0
    %5548 = vmatprep.subr.bf16.mxu0 %v3255
    %5549 = vmatpush1.bf16.msra.mxu0 %v3254
    %5550 = vmatprep.subr.bf16.mxu0 %v3335
    %5551 = vmatpush1.bf16.msra.mxu0 %v3334
    %5552 = vmatprep.subr.bf16.mxu0 %v3415
    %5553 = vmatpush1.bf16.msra.mxu0 %v3414
    %5554 = vmatprep.subr.bf16.mxu0 %v3495
    %5555 = vmatpush1.bf16.msra.mxu0 %v3494
    %5556 = vmatprep.subr.bf16.mxu0 %v3575
    %5557 = vmatpush1.bf16.msra.mxu0 %v3574
    %5558 = vmatprep.subr.bf16.mxu0 %v3655
    %5559 = vmatpush1.bf16.msra.mxu0 %v3654
    %5560 = vmatprep.subr.bf16.mxu0 %v3735
    %5561 = vmatpush1.bf16.msra.mxu0 %v3734
    %5562 = vmatprep.subr.bf16.mxu0 %v3815
    %5563 = vmatpush1.bf16.msra.mxu0 %v3814
    %5564 = vmatprep.subr.bf16.mxu0 0
    %5565 = vmatpush1.bf16.msra.mxu0 0
    %5566 = vmatprep.subr.bf16.mxu0 0
    %5567 = vmatpush1.bf16.msra.mxu0 0
    %5568 = vmatprep.subr.bf16.mxu0 0
    %5569 = vmatpush1.bf16.msra.mxu0 0
    %5570 = vmatprep.subr.bf16.mxu0 0
    %5571 = vmatpush1.bf16.msra.mxu0 0
    %5572 = vmatprep.subr.bf16.mxu0 0
    %5573 = vmatpush1.bf16.msra.mxu0 0
    %5574 = vmatprep.subr.bf16.mxu0 0
    %5575 = vmatpush1.bf16.msra.mxu0 0
    %5576 = vmatprep.subr.bf16.mxu0 0
    %5577 = vmatpush1.bf16.msra.mxu0 0
    %5578 = vmatprep.subr.bf16.mxu0 0
    %5579 = vmatpush1.bf16.msra.mxu0 0
    %5580 = vmatprep.mubr.bf16.mxu0 0
    %5581 = vmatmul.mubr.bf16.gmra.mrb[0].mxu0 %v216
    %v5582 = vpop.f32.mrb[0].mxu0
    %v5583 = vadd.f32 %v1093, %v5582
    %v5584 = vpop.f32.mrb[0].mxu0
    %v5585 = vadd.f32 %v1097, %v5584
    %v5586 = vpop.f32.mrb[0].mxu0
    %v5587 = vpop.f32.mrb[0].mxu0
    %5588 = vdwg.mxu0
    %5589 = vmatprep.subr.bf16.mxu0 %v3257
    %5590 = vmatpush1.bf16.msra.mxu0 %v3256
    %5591 = vmatprep.subr.bf16.mxu0 %v3337
    %5592 = vmatpush1.bf16.msra.mxu0 %v3336
    %5593 = vmatprep.subr.bf16.mxu0 %v3417
    %5594 = vmatpush1.bf16.msra.mxu0 %v3416
    %5595 = vmatprep.subr.bf16.mxu0 %v3497
    %5596 = vmatpush1.bf16.msra.mxu0 %v3496
    %5597 = vmatprep.subr.bf16.mxu0 %v3577
    %5598 = vmatpush1.bf16.msra.mxu0 %v3576
    %5599 = vmatprep.subr.bf16.mxu0 %v3657
    %5600 = vmatpush1.bf16.msra.mxu0 %v3656
    %5601 = vmatprep.subr.bf16.mxu0 %v3737
    %5602 = vmatpush1.bf16.msra.mxu0 %v3736
    %5603 = vmatprep.subr.bf16.mxu0 %v3817
    %5604 = vmatpush1.bf16.msra.mxu0 %v3816
    %5605 = vmatprep.subr.bf16.mxu0 0
    %5606 = vmatpush1.bf16.msra.mxu0 0
    %5607 = vmatprep.subr.bf16.mxu0 0
    %5608 = vmatpush1.bf16.msra.mxu0 0
    %5609 = vmatprep.subr.bf16.mxu0 0
    %5610 = vmatpush1.bf16.msra.mxu0 0
    %5611 = vmatprep.subr.bf16.mxu0 0
    %5612 = vmatpush1.bf16.msra.mxu0 0
    %5613 = vmatprep.subr.bf16.mxu0 0
    %5614 = vmatpush1.bf16.msra.mxu0 0
    %5615 = vmatprep.subr.bf16.mxu0 0
    %5616 = vmatpush1.bf16.msra.mxu0 0
    %5617 = vmatprep.subr.bf16.mxu0 0
    %5618 = vmatpush1.bf16.msra.mxu0 0
    %5619 = vmatprep.subr.bf16.mxu0 0
    %5620 = vmatpush1.bf16.msra.mxu0 0
    %5621 = vmatprep.mubr.bf16.mxu0 0
    %5622 = vmatmul.mubr.bf16.gmra.mrb[0].mxu0 %v216
    %v5623 = vpop.f32.mrb[0].mxu0
    %v5624 = vadd.f32 %v1101, %v5623
    %v5625 = vpop.f32.mrb[0].mxu0
    %v5626 = vadd.f32 %v1105, %v5625
    %v5627 = vpop.f32.mrb[0].mxu0
    %v5628 = vpop.f32.mrb[0].mxu0
    %5629 = vdwg.mxu0
    %5630 = vmatprep.subr.bf16.mxu0 %v3259
    %5631 = vmatpush1.bf16.msra.mxu0 %v3258
    %5632 = vmatprep.subr.bf16.mxu0 %v3339
    %5633 = vmatpush1.bf16.msra.mxu0 %v3338
    %5634 = vmatprep.subr.bf16.mxu0 %v3419
    %5635 = vmatpush1.bf16.msra.mxu0 %v3418
    %5636 = vmatprep.subr.bf16.mxu0 %v3499
    %5637 = vmatpush1.bf16.msra.mxu0 %v3498
    %5638 = vmatprep.subr.bf16.mxu0 %v3579
    %5639 = vmatpush1.bf16.msra.mxu0 %v3578
    %5640 = vmatprep.subr.bf16.mxu0 %v3659
    %5641 = vmatpush1.bf16.msra.mxu0 %v3658
    %5642 = vmatprep.subr.bf16.mxu0 %v3739
    %5643 = vmatpush1.bf16.msra.mxu0 %v3738
    %5644 = vmatprep.subr.bf16.mxu0 %v3819
    %5645 = vmatpush1.bf16.msra.mxu0 %v3818
    %5646 = vmatprep.subr.bf16.mxu0 0
    %5647 = vmatpush1.bf16.msra.mxu0 0
    %5648 = vmatprep.subr.bf16.mxu0 0
    %5649 = vmatpush1.bf16.msra.mxu0 0
    %5650 = vmatprep.subr.bf16.mxu0 0
    %5651 = vmatpush1.bf16.msra.mxu0 0
    %5652 = vmatprep.subr.bf16.mxu0 0
    %5653 = vmatpush1.bf16.msra.mxu0 0
    %5654 = vmatprep.subr.bf16.mxu0 0
    %5655 = vmatpush1.bf16.msra.mxu0 0
    %5656 = vmatprep.subr.bf16.mxu0 0
    %5657 = vmatpush1.bf16.msra.mxu0 0
    %5658 = vmatprep.subr.bf16.mxu0 0
    %5659 = vmatpush1.bf16.msra.mxu0 0
    %5660 = vmatprep.subr.bf16.mxu0 0
    %5661 = vmatpush1.bf16.msra.mxu0 0
    %5662 = vmatprep.mubr.bf16.mxu0 0
    %5663 = vmatmul.mubr.bf16.gmra.mrb[0].mxu0 %v216
    %v5664 = vpop.f32.mrb[0].mxu0
    %v5665 = vadd.f32 %v1109, %v5664
    %v5666 = vpop.f32.mrb[0].mxu0
    %v5667 = vadd.f32 %v1113, %v5666
    %v5668 = vpop.f32.mrb[0].mxu0
    %v5669 = vpop.f32.mrb[0].mxu0
    %5670 = vdwg.mxu0
    %5671 = vmatprep.subr.bf16.mxu0 %v3261
    %5672 = vmatpush1.bf16.msra.mxu0 %v3260
    %5673 = vmatprep.subr.bf16.mxu0 %v3341
    %5674 = vmatpush1.bf16.msra.mxu0 %v3340
    %5675 = vmatprep.subr.bf16.mxu0 %v3421
    %5676 = vmatpush1.bf16.msra.mxu0 %v3420
    %5677 = vmatprep.subr.bf16.mxu0 %v3501
    %5678 = vmatpush1.bf16.msra.mxu0 %v3500
    %5679 = vmatprep.subr.bf16.mxu0 %v3581
    %5680 = vmatpush1.bf16.msra.mxu0 %v3580
    %5681 = vmatprep.subr.bf16.mxu0 %v3661
    %5682 = vmatpush1.bf16.msra.mxu0 %v3660
    %5683 = vmatprep.subr.bf16.mxu0 %v3741
    %5684 = vmatpush1.bf16.msra.mxu0 %v3740
    %5685 = vmatprep.subr.bf16.mxu0 %v3821
    %5686 = vmatpush1.bf16.msra.mxu0 %v3820
    %5687 = vmatprep.subr.bf16.mxu0 0
    %5688 = vmatpush1.bf16.msra.mxu0 0
    %5689 = vmatprep.subr.bf16.mxu0 0
    %5690 = vmatpush1.bf16.msra.mxu0 0
    %5691 = vmatprep.subr.bf16.mxu0 0
    %5692 = vmatpush1.bf16.msra.mxu0 0
    %5693 = vmatprep.subr.bf16.mxu0 0
    %5694 = vmatpush1.bf16.msra.mxu0 0
    %5695 = vmatprep.subr.bf16.mxu0 0
    %5696 = vmatpush1.bf16.msra.mxu0 0
    %5697 = vmatprep.subr.bf16.mxu0 0
    %5698 = vmatpush1.bf16.msra.mxu0 0
    %5699 = vmatprep.subr.bf16.mxu0 0
    %5700 = vmatpush1.bf16.msra.mxu0 0
    %5701 = vmatprep.subr.bf16.mxu0 0
    %5702 = vmatpush1.bf16.msra.mxu0 0
    %5703 = vmatprep.mubr.bf16.mxu0 0
    %5704 = vmatmul.mubr.bf16.gmra.mrb[0].mxu0 %v216
    %v5705 = vpop.f32.mrb[0].mxu0
    %v5706 = vadd.f32 %v1117, %v5705
    %v5707 = vpop.f32.mrb[0].mxu0
    %v5708 = vadd.f32 %v1121, %v5707
    %v5709 = vpop.f32.mrb[0].mxu0
    %v5710 = vpop.f32.mrb[0].mxu0
    %5711 = vdwg.mxu0
    %5712 = vmatprep.subr.bf16.mxu0 %v3263
    %5713 = vmatpush1.bf16.msra.mxu0 %v3262
    %5714 = vmatprep.subr.bf16.mxu0 %v3343
    %5715 = vmatpush1.bf16.msra.mxu0 %v3342
    %5716 = vmatprep.subr.bf16.mxu0 %v3423
    %5717 = vmatpush1.bf16.msra.mxu0 %v3422
    %5718 = vmatprep.subr.bf16.mxu0 %v3503
    %5719 = vmatpush1.bf16.msra.mxu0 %v3502
    %5720 = vmatprep.subr.bf16.mxu0 %v3583
    %5721 = vmatpush1.bf16.msra.mxu0 %v3582
    %5722 = vmatprep.subr.bf16.mxu0 %v3663
    %5723 = vmatpush1.bf16.msra.mxu0 %v3662
    %5724 = vmatprep.subr.bf16.mxu0 %v3743
    %5725 = vmatpush1.bf16.msra.mxu0 %v3742
    %5726 = vmatprep.subr.bf16.mxu0 %v3823
    %5727 = vmatpush1.bf16.msra.mxu0 %v3822
    %5728 = vmatprep.subr.bf16.mxu0 0
    %5729 = vmatpush1.bf16.msra.mxu0 0
    %5730 = vmatprep.subr.bf16.mxu0 0
    %5731 = vmatpush1.bf16.msra.mxu0 0
    %5732 = vmatprep.subr.bf16.mxu0 0
    %5733 = vmatpush1.bf16.msra.mxu0 0
    %5734 = vmatprep.subr.bf16.mxu0 0
    %5735 = vmatpush1.bf16.msra.mxu0 0
    %5736 = vmatprep.subr.bf16.mxu0 0
    %5737 = vmatpush1.bf16.msra.mxu0 0
    %5738 = vmatprep.subr.bf16.mxu0 0
    %5739 = vmatpush1.bf16.msra.mxu0 0
    %5740 = vmatprep.subr.bf16.mxu0 0
    %5741 = vmatpush1.bf16.msra.mxu0 0
    %5742 = vmatprep.subr.bf16.mxu0 0
    %5743 = vmatpush1.bf16.msra.mxu0 0
    %5744 = vmatprep.mubr.bf16.mxu0 0
    %5745 = vmatmul.mubr.bf16.gmra.mrb[0].mxu0 %v216
    %v5746 = vpop.f32.mrb[0].mxu0
    %v5747 = vadd.f32 %v1125, %v5746
    %v5748 = vpop.f32.mrb[0].mxu0
    %v5749 = vadd.f32 %v1129, %v5748
    %v5750 = vpop.f32.mrb[0].mxu0
    %v5751 = vpop.f32.mrb[0].mxu0
    %5752 = vdwg.mxu0
    %5753 = vmatprep.subr.bf16.mxu0 %v3265
    %5754 = vmatpush1.bf16.msra.mxu0 %v3264
    %5755 = vmatprep.subr.bf16.mxu0 %v3345
    %5756 = vmatpush1.bf16.msra.mxu0 %v3344
    %5757 = vmatprep.subr.bf16.mxu0 %v3425
    %5758 = vmatpush1.bf16.msra.mxu0 %v3424
    %5759 = vmatprep.subr.bf16.mxu0 %v3505
    %5760 = vmatpush1.bf16.msra.mxu0 %v3504
    %5761 = vmatprep.subr.bf16.mxu0 %v3585
    %5762 = vmatpush1.bf16.msra.mxu0 %v3584
    %5763 = vmatprep.subr.bf16.mxu0 %v3665
    %5764 = vmatpush1.bf16.msra.mxu0 %v3664
    %5765 = vmatprep.subr.bf16.mxu0 %v3745
    %5766 = vmatpush1.bf16.msra.mxu0 %v3744
    %5767 = vmatprep.subr.bf16.mxu0 %v3825
    %5768 = vmatpush1.bf16.msra.mxu0 %v3824
    %5769 = vmatprep.subr.bf16.mxu0 0
    %5770 = vmatpush1.bf16.msra.mxu0 0
    %5771 = vmatprep.subr.bf16.mxu0 0
    %5772 = vmatpush1.bf16.msra.mxu0 0
    %5773 = vmatprep.subr.bf16.mxu0 0
    %5774 = vmatpush1.bf16.msra.mxu0 0
    %5775 = vmatprep.subr.bf16.mxu0 0
    %5776 = vmatpush1.bf16.msra.mxu0 0
    %5777 = vmatprep.subr.bf16.mxu0 0
    %5778 = vmatpush1.bf16.msra.mxu0 0
    %5779 = vmatprep.subr.bf16.mxu0 0
    %5780 = vmatpush1.bf16.msra.mxu0 0
    %5781 = vmatprep.subr.bf16.mxu0 0
    %5782 = vmatpush1.bf16.msra.mxu0 0
    %5783 = vmatprep.subr.bf16.mxu0 0
    %5784 = vmatpush1.bf16.msra.mxu0 0
    %5785 = vmatprep.mubr.bf16.mxu0 0
    %5786 = vmatmul.mubr.bf16.gmra.mrb[0].mxu0 %v216
    %v5787 = vpop.f32.mrb[0].mxu0
    %v5788 = vadd.f32 %v1133, %v5787
    %v5789 = vpop.f32.mrb[0].mxu0
    %v5790 = vadd.f32 %v1137, %v5789
    %v5791 = vpop.f32.mrb[0].mxu0
    %v5792 = vpop.f32.mrb[0].mxu0
    %5793 = vdwg.mxu0
    %5794 = vmatprep.subr.bf16.mxu0 %v3267
    %5795 = vmatpush1.bf16.msra.mxu0 %v3266
    %5796 = vmatprep.subr.bf16.mxu0 %v3347
    %5797 = vmatpush1.bf16.msra.mxu0 %v3346
    %5798 = vmatprep.subr.bf16.mxu0 %v3427
    %5799 = vmatpush1.bf16.msra.mxu0 %v3426
    %5800 = vmatprep.subr.bf16.mxu0 %v3507
    %5801 = vmatpush1.bf16.msra.mxu0 %v3506
    %5802 = vmatprep.subr.bf16.mxu0 %v3587
    %5803 = vmatpush1.bf16.msra.mxu0 %v3586
    %5804 = vmatprep.subr.bf16.mxu0 %v3667
    %5805 = vmatpush1.bf16.msra.mxu0 %v3666
    %5806 = vmatprep.subr.bf16.mxu0 %v3747
    %5807 = vmatpush1.bf16.msra.mxu0 %v3746
    %5808 = vmatprep.subr.bf16.mxu0 %v3827
    %5809 = vmatpush1.bf16.msra.mxu0 %v3826
    %5810 = vmatprep.subr.bf16.mxu0 0
    %5811 = vmatpush1.bf16.msra.mxu0 0
    %5812 = vmatprep.subr.bf16.mxu0 0
    %5813 = vmatpush1.bf16.msra.mxu0 0
    %5814 = vmatprep.subr.bf16.mxu0 0
    %5815 = vmatpush1.bf16.msra.mxu0 0
    %5816 = vmatprep.subr.bf16.mxu0 0
    %5817 = vmatpush1.bf16.msra.mxu0 0
    %5818 = vmatprep.subr.bf16.mxu0 0
    %5819 = vmatpush1.bf16.msra.mxu0 0
    %5820 = vmatprep.subr.bf16.mxu0 0
    %5821 = vmatpush1.bf16.msra.mxu0 0
    %5822 = vmatprep.subr.bf16.mxu0 0
    %5823 = vmatpush1.bf16.msra.mxu0 0
    %5824 = vmatprep.subr.bf16.mxu0 0
    %5825 = vmatpush1.bf16.msra.mxu0 0
    %5826 = vmatprep.mubr.bf16.mxu0 0
    %5827 = vmatmul.mubr.bf16.gmra.mrb[0].mxu0 %v216
    %v5828 = vpop.f32.mrb[0].mxu0
    %v5829 = vadd.f32 %v1141, %v5828
    %v5830 = vpop.f32.mrb[0].mxu0
    %v5831 = vadd.f32 %v1145, %v5830
    %v5832 = vpop.f32.mrb[0].mxu0
    %v5833 = vpop.f32.mrb[0].mxu0
    %5834 = vdwg.mxu0
    %5835 = vmatprep.subr.bf16.mxu0 %v3269
    %5836 = vmatpush1.bf16.msra.mxu0 %v3268
    %5837 = vmatprep.subr.bf16.mxu0 %v3349
    %5838 = vmatpush1.bf16.msra.mxu0 %v3348
    %5839 = vmatprep.subr.bf16.mxu0 %v3429
    %5840 = vmatpush1.bf16.msra.mxu0 %v3428
    %5841 = vmatprep.subr.bf16.mxu0 %v3509
    %5842 = vmatpush1.bf16.msra.mxu0 %v3508
    %5843 = vmatprep.subr.bf16.mxu0 %v3589
    %5844 = vmatpush1.bf16.msra.mxu0 %v3588
    %5845 = vmatprep.subr.bf16.mxu0 %v3669
    %5846 = vmatpush1.bf16.msra.mxu0 %v3668
    %5847 = vmatprep.subr.bf16.mxu0 %v3749
    %5848 = vmatpush1.bf16.msra.mxu0 %v3748
    %5849 = vmatprep.subr.bf16.mxu0 %v3829
    %5850 = vmatpush1.bf16.msra.mxu0 %v3828
    %5851 = vmatprep.subr.bf16.mxu0 0
    %5852 = vmatpush1.bf16.msra.mxu0 0
    %5853 = vmatprep.subr.bf16.mxu0 0
    %5854 = vmatpush1.bf16.msra.mxu0 0
    %5855 = vmatprep.subr.bf16.mxu0 0
    %5856 = vmatpush1.bf16.msra.mxu0 0
    %5857 = vmatprep.subr.bf16.mxu0 0
    %5858 = vmatpush1.bf16.msra.mxu0 0
    %5859 = vmatprep.subr.bf16.mxu0 0
    %5860 = vmatpush1.bf16.msra.mxu0 0
    %5861 = vmatprep.subr.bf16.mxu0 0
    %5862 = vmatpush1.bf16.msra.mxu0 0
    %5863 = vmatprep.subr.bf16.mxu0 0
    %5864 = vmatpush1.bf16.msra.mxu0 0
    %5865 = vmatprep.subr.bf16.mxu0 0
    %5866 = vmatpush1.bf16.msra.mxu0 0
    %5867 = vmatprep.mubr.bf16.mxu0 0
    %5868 = vmatmul.mubr.bf16.gmra.mrb[0].mxu0 %v216
    %v5869 = vpop.f32.mrb[0].mxu0
    %v5870 = vadd.f32 %v1149, %v5869
    %v5871 = vpop.f32.mrb[0].mxu0
    %v5872 = vadd.f32 %v1153, %v5871
    %v5873 = vpop.f32.mrb[0].mxu0
    %v5874 = vpop.f32.mrb[0].mxu0
    %5875 = vdwg.mxu0
    %5876 = vmatprep.subr.bf16.mxu0 %v3271
    %5877 = vmatpush1.bf16.msra.mxu0 %v3270
    %5878 = vmatprep.subr.bf16.mxu0 %v3351
    %5879 = vmatpush1.bf16.msra.mxu0 %v3350
    %5880 = vmatprep.subr.bf16.mxu0 %v3431
    %5881 = vmatpush1.bf16.msra.mxu0 %v3430
    %5882 = vmatprep.subr.bf16.mxu0 %v3511
    %5883 = vmatpush1.bf16.msra.mxu0 %v3510
    %5884 = vmatprep.subr.bf16.mxu0 %v3591
    %5885 = vmatpush1.bf16.msra.mxu0 %v3590
    %5886 = vmatprep.subr.bf16.mxu0 %v3671
    %5887 = vmatpush1.bf16.msra.mxu0 %v3670
    %5888 = vmatprep.subr.bf16.mxu0 %v3751
    %5889 = vmatpush1.bf16.msra.mxu0 %v3750
    %5890 = vmatprep.subr.bf16.mxu0 %v3831
    %5891 = vmatpush1.bf16.msra.mxu0 %v3830
    %5892 = vmatprep.subr.bf16.mxu0 0
    %5893 = vmatpush1.bf16.msra.mxu0 0
    %5894 = vmatprep.subr.bf16.mxu0 0
    %5895 = vmatpush1.bf16.msra.mxu0 0
    %5896 = vmatprep.subr.bf16.mxu0 0
    %5897 = vmatpush1.bf16.msra.mxu0 0
    %5898 = vmatprep.subr.bf16.mxu0 0
    %5899 = vmatpush1.bf16.msra.mxu0 0
    %5900 = vmatprep.subr.bf16.mxu0 0
    %5901 = vmatpush1.bf16.msra.mxu0 0
    %5902 = vmatprep.subr.bf16.mxu0 0
    %5903 = vmatpush1.bf16.msra.mxu0 0
    %5904 = vmatprep.subr.bf16.mxu0 0
    %5905 = vmatpush1.bf16.msra.mxu0 0
    %5906 = vmatprep.subr.bf16.mxu0 0
    %5907 = vmatpush1.bf16.msra.mxu0 0
    %5908 = vmatprep.mubr.bf16.mxu0 0
    %5909 = vmatmul.mubr.bf16.gmra.mrb[0].mxu0 %v216
    %v5910 = vpop.f32.mrb[0].mxu0
    %v5911 = vadd.f32 %v1157, %v5910
    %v5912 = vpop.f32.mrb[0].mxu0
    %v5913 = vadd.f32 %v1161, %v5912
    %v5914 = vpop.f32.mrb[0].mxu0
    %v5915 = vpop.f32.mrb[0].mxu0
    %5916 = vdwg.mxu0
    %5917 = vmatprep.subr.bf16.mxu0 %v3273
    %5918 = vmatpush1.bf16.msra.mxu0 %v3272
    %5919 = vmatprep.subr.bf16.mxu0 %v3353
    %5920 = vmatpush1.bf16.msra.mxu0 %v3352
    %5921 = vmatprep.subr.bf16.mxu0 %v3433
    %5922 = vmatpush1.bf16.msra.mxu0 %v3432
    %5923 = vmatprep.subr.bf16.mxu0 %v3513
    %5924 = vmatpush1.bf16.msra.mxu0 %v3512
    %5925 = vmatprep.subr.bf16.mxu0 %v3593
    %5926 = vmatpush1.bf16.msra.mxu0 %v3592
    %5927 = vmatprep.subr.bf16.mxu0 %v3673
    %5928 = vmatpush1.bf16.msra.mxu0 %v3672
    %5929 = vmatprep.subr.bf16.mxu0 %v3753
    %5930 = vmatpush1.bf16.msra.mxu0 %v3752
    %5931 = vmatprep.subr.bf16.mxu0 %v3833
    %5932 = vmatpush1.bf16.msra.mxu0 %v3832
    %5933 = vmatprep.subr.bf16.mxu0 0
    %5934 = vmatpush1.bf16.msra.mxu0 0
    %5935 = vmatprep.subr.bf16.mxu0 0
    %5936 = vmatpush1.bf16.msra.mxu0 0
    %5937 = vmatprep.subr.bf16.mxu0 0
    %5938 = vmatpush1.bf16.msra.mxu0 0
    %5939 = vmatprep.subr.bf16.mxu0 0
    %5940 = vmatpush1.bf16.msra.mxu0 0
    %5941 = vmatprep.subr.bf16.mxu0 0
    %5942 = vmatpush1.bf16.msra.mxu0 0
    %5943 = vmatprep.subr.bf16.mxu0 0
    %5944 = vmatpush1.bf16.msra.mxu0 0
    %5945 = vmatprep.subr.bf16.mxu0 0
    %5946 = vmatpush1.bf16.msra.mxu0 0
    %5947 = vmatprep.subr.bf16.mxu0 0
    %5948 = vmatpush1.bf16.msra.mxu0 0
    %5949 = vmatprep.mubr.bf16.mxu0 0
    %5950 = vmatmul.mubr.bf16.gmra.mrb[0].mxu0 %v216
    %v5951 = vpop.f32.mrb[0].mxu0
    %v5952 = vadd.f32 %v1165, %v5951
    %v5953 = vpop.f32.mrb[0].mxu0
    %v5954 = vadd.f32 %v1169, %v5953
    %v5955 = vpop.f32.mrb[0].mxu0
    %v5956 = vpop.f32.mrb[0].mxu0
    %5957 = vdwg.mxu0
    %5958 = vmatprep.subr.bf16.mxu0 %v3275
    %5959 = vmatpush1.bf16.msra.mxu0 %v3274
    %5960 = vmatprep.subr.bf16.mxu0 %v3355
    %5961 = vmatpush1.bf16.msra.mxu0 %v3354
    %5962 = vmatprep.subr.bf16.mxu0 %v3435
    %5963 = vmatpush1.bf16.msra.mxu0 %v3434
    %5964 = vmatprep.subr.bf16.mxu0 %v3515
    %5965 = vmatpush1.bf16.msra.mxu0 %v3514
    %5966 = vmatprep.subr.bf16.mxu0 %v3595
    %5967 = vmatpush1.bf16.msra.mxu0 %v3594
    %5968 = vmatprep.subr.bf16.mxu0 %v3675
    %5969 = vmatpush1.bf16.msra.mxu0 %v3674
    %5970 = vmatprep.subr.bf16.mxu0 %v3755
    %5971 = vmatpush1.bf16.msra.mxu0 %v3754
    %5972 = vmatprep.subr.bf16.mxu0 %v3835
    %5973 = vmatpush1.bf16.msra.mxu0 %v3834
    %5974 = vmatprep.subr.bf16.mxu0 0
    %5975 = vmatpush1.bf16.msra.mxu0 0
    %5976 = vmatprep.subr.bf16.mxu0 0
    %5977 = vmatpush1.bf16.msra.mxu0 0
    %5978 = vmatprep.subr.bf16.mxu0 0
    %5979 = vmatpush1.bf16.msra.mxu0 0
    %5980 = vmatprep.subr.bf16.mxu0 0
    %5981 = vmatpush1.bf16.msra.mxu0 0
    %5982 = vmatprep.subr.bf16.mxu0 0
    %5983 = vmatpush1.bf16.msra.mxu0 0
    %5984 = vmatprep.subr.bf16.mxu0 0
    %5985 = vmatpush1.bf16.msra.mxu0 0
    %5986 = vmatprep.subr.bf16.mxu0 0
    %5987 = vmatpush1.bf16.msra.mxu0 0
    %5988 = vmatprep.subr.bf16.mxu0 0
    %5989 = vmatpush1.bf16.msra.mxu0 0
    %5990 = vmatprep.mubr.bf16.mxu0 0
    %5991 = vmatmul.mubr.bf16.gmra.mrb[0].mxu0 %v216
    %v5992 = vpop.f32.mrb[0].mxu0
    %v5993 = vadd.f32 %v1173, %v5992
    %v5994 = vpop.f32.mrb[0].mxu0
    %v5995 = vadd.f32 %v1177, %v5994
    %v5996 = vpop.f32.mrb[0].mxu0
    %v5997 = vpop.f32.mrb[0].mxu0
    %5998 = vdwg.mxu0
    %5999 = vmatprep.subr.bf16.mxu0 %v3277
    %6000 = vmatpush1.bf16.msra.mxu0 %v3276
    %6001 = vmatprep.subr.bf16.mxu0 %v3357
    %6002 = vmatpush1.bf16.msra.mxu0 %v3356
    %6003 = vmatprep.subr.bf16.mxu0 %v3437
    %6004 = vmatpush1.bf16.msra.mxu0 %v3436
    %6005 = vmatprep.subr.bf16.mxu0 %v3517
    %6006 = vmatpush1.bf16.msra.mxu0 %v3516
    %6007 = vmatprep.subr.bf16.mxu0 %v3597
    %6008 = vmatpush1.bf16.msra.mxu0 %v3596
    %6009 = vmatprep.subr.bf16.mxu0 %v3677
    %6010 = vmatpush1.bf16.msra.mxu0 %v3676
    %6011 = vmatprep.subr.bf16.mxu0 %v3757
    %6012 = vmatpush1.bf16.msra.mxu0 %v3756
    %6013 = vmatprep.subr.bf16.mxu0 %v3837
    %6014 = vmatpush1.bf16.msra.mxu0 %v3836
    %6015 = vmatprep.subr.bf16.mxu0 0
    %6016 = vmatpush1.bf16.msra.mxu0 0
    %6017 = vmatprep.subr.bf16.mxu0 0
    %6018 = vmatpush1.bf16.msra.mxu0 0
    %6019 = vmatprep.subr.bf16.mxu0 0
    %6020 = vmatpush1.bf16.msra.mxu0 0
    %6021 = vmatprep.subr.bf16.mxu0 0
    %6022 = vmatpush1.bf16.msra.mxu0 0
    %6023 = vmatprep.subr.bf16.mxu0 0
    %6024 = vmatpush1.bf16.msra.mxu0 0
    %6025 = vmatprep.subr.bf16.mxu0 0
    %6026 = vmatpush1.bf16.msra.mxu0 0
    %6027 = vmatprep.subr.bf16.mxu0 0
    %6028 = vmatpush1.bf16.msra.mxu0 0
    %6029 = vmatprep.subr.bf16.mxu0 0
    %6030 = vmatpush1.bf16.msra.mxu0 0
    %6031 = vmatprep.mubr.bf16.mxu0 0
    %6032 = vmatmul.mubr.bf16.gmra.mrb[0].mxu0 %v216
    %v6033 = vpop.f32.mrb[0].mxu0
    %v6034 = vadd.f32 %v1181, %v6033
    %v6035 = vpop.f32.mrb[0].mxu0
    %v6036 = vadd.f32 %v1185, %v6035
    %v6037 = vpop.f32.mrb[0].mxu0
    %v6038 = vpop.f32.mrb[0].mxu0
    %6039 = vdwg.mxu0
    %6040 = vmatprep.subr.bf16.mxu0 %v3279
    %6041 = vmatpush1.bf16.msra.mxu0 %v3278
    %6042 = vmatprep.subr.bf16.mxu0 %v3359
    %6043 = vmatpush1.bf16.msra.mxu0 %v3358
    %6044 = vmatprep.subr.bf16.mxu0 %v3439
    %6045 = vmatpush1.bf16.msra.mxu0 %v3438
    %6046 = vmatprep.subr.bf16.mxu0 %v3519
    %6047 = vmatpush1.bf16.msra.mxu0 %v3518
    %6048 = vmatprep.subr.bf16.mxu0 %v3599
    %6049 = vmatpush1.bf16.msra.mxu0 %v3598
    %6050 = vmatprep.subr.bf16.mxu0 %v3679
    %6051 = vmatpush1.bf16.msra.mxu0 %v3678
    %6052 = vmatprep.subr.bf16.mxu0 %v3759
    %6053 = vmatpush1.bf16.msra.mxu0 %v3758
    %6054 = vmatprep.subr.bf16.mxu0 %v3839
    %6055 = vmatpush1.bf16.msra.mxu0 %v3838
    %6056 = vmatprep.subr.bf16.mxu0 0
    %6057 = vmatpush1.bf16.msra.mxu0 0
    %6058 = vmatprep.subr.bf16.mxu0 0
    %6059 = vmatpush1.bf16.msra.mxu0 0
    %6060 = vmatprep.subr.bf16.mxu0 0
    %6061 = vmatpush1.bf16.msra.mxu0 0
    %6062 = vmatprep.subr.bf16.mxu0 0
    %6063 = vmatpush1.bf16.msra.mxu0 0
    %6064 = vmatprep.subr.bf16.mxu0 0
    %6065 = vmatpush1.bf16.msra.mxu0 0
    %6066 = vmatprep.subr.bf16.mxu0 0
    %6067 = vmatpush1.bf16.msra.mxu0 0
    %6068 = vmatprep.subr.bf16.mxu0 0
    %6069 = vmatpush1.bf16.msra.mxu0 0
    %6070 = vmatprep.subr.bf16.mxu0 0
    %6071 = vmatpush1.bf16.msra.mxu0 0
    %6072 = vmatprep.mubr.bf16.mxu0 0
    %6073 = vmatmul.mubr.bf16.gmra.mrb[0].mxu0 %v216
    %v6074 = vpop.f32.mrb[0].mxu0
    %v6075 = vadd.f32 %v1189, %v6074
    %v6076 = vpop.f32.mrb[0].mxu0
    %v6077 = vadd.f32 %v1193, %v6076
    %v6078 = vpop.f32.mrb[0].mxu0
    %v6079 = vpop.f32.mrb[0].mxu0
    %6080 = vdwg.mxu0
    %6081 = vmatprep.subr.bf16.mxu0 %v3281
    %6082 = vmatpush1.bf16.msra.mxu0 %v3280
    %6083 = vmatprep.subr.bf16.mxu0 %v3361
    %6084 = vmatpush1.bf16.msra.mxu0 %v3360
    %6085 = vmatprep.subr.bf16.mxu0 %v3441
    %6086 = vmatpush1.bf16.msra.mxu0 %v3440
    %6087 = vmatprep.subr.bf16.mxu0 %v3521
    %6088 = vmatpush1.bf16.msra.mxu0 %v3520
    %6089 = vmatprep.subr.bf16.mxu0 %v3601
    %6090 = vmatpush1.bf16.msra.mxu0 %v3600
    %6091 = vmatprep.subr.bf16.mxu0 %v3681
    %6092 = vmatpush1.bf16.msra.mxu0 %v3680
    %6093 = vmatprep.subr.bf16.mxu0 %v3761
    %6094 = vmatpush1.bf16.msra.mxu0 %v3760
    %6095 = vmatprep.subr.bf16.mxu0 %v3841
    %6096 = vmatpush1.bf16.msra.mxu0 %v3840
    %6097 = vmatprep.subr.bf16.mxu0 0
    %6098 = vmatpush1.bf16.msra.mxu0 0
    %6099 = vmatprep.subr.bf16.mxu0 0
    %6100 = vmatpush1.bf16.msra.mxu0 0
    %6101 = vmatprep.subr.bf16.mxu0 0
    %6102 = vmatpush1.bf16.msra.mxu0 0
    %6103 = vmatprep.subr.bf16.mxu0 0
    %6104 = vmatpush1.bf16.msra.mxu0 0
    %6105 = vmatprep.subr.bf16.mxu0 0
    %6106 = vmatpush1.bf16.msra.mxu0 0
    %6107 = vmatprep.subr.bf16.mxu0 0
    %6108 = vmatpush1.bf16.msra.mxu0 0
    %6109 = vmatprep.subr.bf16.mxu0 0
    %6110 = vmatpush1.bf16.msra.mxu0 0
    %6111 = vmatprep.subr.bf16.mxu0 0
    %6112 = vmatpush1.bf16.msra.mxu0 0
    %6113 = vmatprep.mubr.bf16.mxu0 0
    %6114 = vmatmul.mubr.bf16.gmra.mrb[0].mxu0 %v216
    %v6115 = vpop.f32.mrb[0].mxu0
    %v6116 = vadd.f32 %v1197, %v6115
    %v6117 = vpop.f32.mrb[0].mxu0
    %v6118 = vadd.f32 %v1201, %v6117
    %v6119 = vpop.f32.mrb[0].mxu0
    %v6120 = vpop.f32.mrb[0].mxu0
    %6121 = vdwg.mxu0
    %v6122 = vmax.f32 %v4517, 0.0
    %v6123 = vmax.f32 %v4519, 0.0
    %v6124 = vmax.f32 %v4558, 0.0
    %v6125 = vmax.f32 %v4560, 0.0
    %v6126 = vmax.f32 %v4599, 0.0
    %v6127 = vmax.f32 %v4601, 0.0
    %v6128 = vmax.f32 %v4640, 0.0
    %v6129 = vmax.f32 %v4642, 0.0
    %v6130 = vmax.f32 %v4681, 0.0
    %v6131 = vmax.f32 %v4683, 0.0
    %v6132 = vmax.f32 %v4722, 0.0
    %v6133 = vmax.f32 %v4724, 0.0
    %v6134 = vmax.f32 %v4763, 0.0
    %v6135 = vmax.f32 %v4765, 0.0
    %v6136 = vmax.f32 %v4804, 0.0
    %v6137 = vmax.f32 %v4806, 0.0
    %v6138 = vmax.f32 %v4845, 0.0
    %v6139 = vmax.f32 %v4847, 0.0
    %v6140 = vmax.f32 %v4886, 0.0
    %v6141 = vmax.f32 %v4888, 0.0
    %v6142 = vmax.f32 %v4927, 0.0
    %v6143 = vmax.f32 %v4929, 0.0
    %v6144 = vmax.f32 %v4968, 0.0
    %v6145 = vmax.f32 %v4970, 0.0
    %v6146 = vmax.f32 %v5009, 0.0
    %v6147 = vmax.f32 %v5011, 0.0
    %v6148 = vmax.f32 %v5050, 0.0
    %v6149 = vmax.f32 %v5052, 0.0
    %v6150 = vmax.f32 %v5091, 0.0
    %v6151 = vmax.f32 %v5093, 0.0
    %v6152 = vmax.f32 %v5132, 0.0
    %v6153 = vmax.f32 %v5134, 0.0
    %v6154 = vmax.f32 %v5173, 0.0
    %v6155 = vmax.f32 %v5175, 0.0
    %v6156 = vmax.f32 %v5214, 0.0
    %v6157 = vmax.f32 %v5216, 0.0
    %v6158 = vmax.f32 %v5255, 0.0
    %v6159 = vmax.f32 %v5257, 0.0
    %v6160 = vmax.f32 %v5296, 0.0
    %v6161 = vmax.f32 %v5298, 0.0
    %v6162 = vmax.f32 %v5337, 0.0
    %v6163 = vmax.f32 %v5339, 0.0
    %v6164 = vmax.f32 %v5378, 0.0
    %v6165 = vmax.f32 %v5380, 0.0
    %v6166 = vmax.f32 %v5419, 0.0
    %v6167 = vmax.f32 %v5421, 0.0
    %v6168 = vmax.f32 %v5460, 0.0
    %v6169 = vmax.f32 %v5462, 0.0
    %v6170 = vmax.f32 %v5501, 0.0
    %v6171 = vmax.f32 %v5503, 0.0
    %v6172 = vmax.f32 %v5542, 0.0
    %v6173 = vmax.f32 %v5544, 0.0
    %v6174 = vmax.f32 %v5583, 0.0
    %v6175 = vmax.f32 %v5585, 0.0
    %v6176 = vmax.f32 %v5624, 0.0
    %v6177 = vmax.f32 %v5626, 0.0
    %v6178 = vmax.f32 %v5665, 0.0
    %v6179 = vmax.f32 %v5667, 0.0
    %v6180 = vmax.f32 %v5706, 0.0
    %v6181 = vmax.f32 %v5708, 0.0
    %v6182 = vmax.f32 %v5747, 0.0
    %v6183 = vmax.f32 %v5749, 0.0
    %v6184 = vmax.f32 %v5788, 0.0
    %v6185 = vmax.f32 %v5790, 0.0
    %v6186 = vmax.f32 %v5829, 0.0
    %v6187 = vmax.f32 %v5831, 0.0
    %v6188 = vmax.f32 %v5870, 0.0
    %v6189 = vmax.f32 %v5872, 0.0
    %v6190 = vmax.f32 %v5911, 0.0
    %v6191 = vmax.f32 %v5913, 0.0
    %v6192 = vmax.f32 %v5952, 0.0
    %v6193 = vmax.f32 %v5954, 0.0
    %v6194 = vmax.f32 %v5993, 0.0
    %v6195 = vmax.f32 %v5995, 0.0
    %v6196 = vmax.f32 %v6034, 0.0
    %v6197 = vmax.f32 %v6036, 0.0
    %v6198 = vmax.f32 %v6075, 0.0
    %v6199 = vmax.f32 %v6077, 0.0
    %v6200 = vmax.f32 %v6116, 0.0
    %v6201 = vmax.f32 %v6118, 0.0
    %v6202 = vld [vmem:[#allocation15] sm:$0xff]
    %v6203 = vpack.c.bf16 %v6122, %v6122
    %v6204 = vpack.c.bf16 %v6123, %v6123
    %v6205 = vpack.c.bf16 %v6124, %v6124
    %v6206 = vpack.c.bf16 %v6125, %v6125
    %v6207 = vpack.c.bf16 %v6126, %v6126
    %v6208 = vpack.c.bf16 %v6127, %v6127
    %v6209 = vpack.c.bf16 %v6128, %v6128
    %v6210 = vpack.c.bf16 %v6129, %v6129
    %v6211 = vpack.c.bf16 %v6130, %v6130
    %v6212 = vpack.c.bf16 %v6131, %v6131
    %v6213 = vpack.c.bf16 %v6132, %v6132
    %v6214 = vpack.c.bf16 %v6133, %v6133
    %v6215 = vpack.c.bf16 %v6134, %v6134
    %v6216 = vpack.c.bf16 %v6135, %v6135
    %v6217 = vpack.c.bf16 %v6136, %v6136
    %v6218 = vpack.c.bf16 %v6137, %v6137
    %v6219 = vpack.c.bf16 %v6138, %v6138
    %v6220 = vpack.c.bf16 %v6139, %v6139
    %v6221 = vpack.c.bf16 %v6140, %v6140
    %v6222 = vpack.c.bf16 %v6141, %v6141
    %v6223 = vpack.c.bf16 %v6142, %v6142
    %v6224 = vpack.c.bf16 %v6143, %v6143
    %v6225 = vpack.c.bf16 %v6144, %v6144
    %v6226 = vpack.c.bf16 %v6145, %v6145
    %v6227 = vpack.c.bf16 %v6146, %v6146
    %v6228 = vpack.c.bf16 %v6147, %v6147
    %v6229 = vpack.c.bf16 %v6148, %v6148
    %v6230 = vpack.c.bf16 %v6149, %v6149
    %v6231 = vpack.c.bf16 %v6150, %v6150
    %v6232 = vpack.c.bf16 %v6151, %v6151
    %v6233 = vpack.c.bf16 %v6152, %v6152
    %v6234 = vpack.c.bf16 %v6153, %v6153
    %v6235 = vpack.c.bf16 %v6154, %v6154
    %v6236 = vpack.c.bf16 %v6155, %v6155
    %v6237 = vpack.c.bf16 %v6156, %v6156
    %v6238 = vpack.c.bf16 %v6157, %v6157
    %v6239 = vpack.c.bf16 %v6158, %v6158
    %v6240 = vpack.c.bf16 %v6159, %v6159
    %v6241 = vpack.c.bf16 %v6160, %v6160
    %v6242 = vpack.c.bf16 %v6161, %v6161
    %v6243 = vpack.c.bf16 %v6162, %v6162
    %v6244 = vpack.c.bf16 %v6163, %v6163
    %v6245 = vpack.c.bf16 %v6164, %v6164
    %v6246 = vpack.c.bf16 %v6165, %v6165
    %v6247 = vpack.c.bf16 %v6166, %v6166
    %v6248 = vpack.c.bf16 %v6167, %v6167
    %v6249 = vpack.c.bf16 %v6168, %v6168
    %v6250 = vpack.c.bf16 %v6169, %v6169
    %v6251 = vpack.c.bf16 %v6170, %v6170
    %v6252 = vpack.c.bf16 %v6171, %v6171
    %v6253 = vpack.c.bf16 %v6172, %v6172
    %v6254 = vpack.c.bf16 %v6173, %v6173
    %v6255 = vpack.c.bf16 %v6174, %v6174
    %v6256 = vpack.c.bf16 %v6175, %v6175
    %v6257 = vpack.c.bf16 %v6176, %v6176
    %v6258 = vpack.c.bf16 %v6177, %v6177
    %v6259 = vpack.c.bf16 %v6178, %v6178
    %v6260 = vpack.c.bf16 %v6179, %v6179
    %v6261 = vpack.c.bf16 %v6180, %v6180
    %v6262 = vpack.c.bf16 %v6181, %v6181
    %v6263 = vpack.c.bf16 %v6182, %v6182
    %v6264 = vpack.c.bf16 %v6183, %v6183
    %v6265 = vpack.c.bf16 %v6184, %v6184
    %v6266 = vpack.c.bf16 %v6185, %v6185
    %v6267 = vpack.c.bf16 %v6186, %v6186
    %v6268 = vpack.c.bf16 %v6187, %v6187
    %v6269 = vpack.c.bf16 %v6188, %v6188
    %v6270 = vpack.c.bf16 %v6189, %v6189
    %v6271 = vpack.c.bf16 %v6190, %v6190
    %v6272 = vpack.c.bf16 %v6191, %v6191
    %v6273 = vpack.c.bf16 %v6192, %v6192
    %v6274 = vpack.c.bf16 %v6193, %v6193
    %v6275 = vpack.c.bf16 %v6194, %v6194
    %v6276 = vpack.c.bf16 %v6195, %v6195
    %v6277 = vpack.c.bf16 %v6196, %v6196
    %v6278 = vpack.c.bf16 %v6197, %v6197
    %v6279 = vpack.c.bf16 %v6198, %v6198
    %v6280 = vpack.c.bf16 %v6199, %v6199
    %v6281 = vpack.c.bf16 %v6200, %v6200
    %v6282 = vpack.c.bf16 %v6201, %v6201
    %v6283 = vld [vmem:[#allocation12] sm:$0xf]
    %v6284 = vld [vmem:[#allocation12 + $0x4] sm:$0xf]
    %v6285 = vld [vmem:[#allocation12 + $0x8] sm:$0xf]
    %v6286 = vld [vmem:[#allocation12 + $0xc] sm:$0xf]
    %v6287 = vld [vmem:[#allocation12 + $0x10] sm:$0xf]
    %v6288 = vld [vmem:[#allocation12 + $0x14] sm:$0xf]
    %v6289 = vld [vmem:[#allocation12 + $0x18] sm:$0xf]
    %v6290 = vld [vmem:[#allocation12 + $0x1c] sm:$0xf]
    %v6291 = vld [vmem:[#allocation12 + $0x20] sm:$0xf]
    %v6292 = vld [vmem:[#allocation12 + $0x24] sm:$0xf]
    %v6293 = vld [vmem:[#allocation12 + $0x28] sm:$0xf]
    %v6294 = vld [vmem:[#allocation12 + $0x2c] sm:$0xf]
    %v6295 = vld [vmem:[#allocation12 + $0x30] sm:$0xf]
    %v6296 = vld [vmem:[#allocation12 + $0x34] sm:$0xf]
    %v6297 = vld [vmem:[#allocation12 + $0x38] sm:$0xf]
    %v6298 = vld [vmem:[#allocation12 + $0x3c] sm:$0xf]
    %v6299 = vld [vmem:[#allocation12 + $0x40] sm:$0xf]
    %v6300 = vld [vmem:[#allocation12 + $0x44] sm:$0xf]
    %v6301 = vld [vmem:[#allocation12 + $0x48] sm:$0xf]
    %v6302 = vld [vmem:[#allocation12 + $0x4c] sm:$0xf]
    %v6303 = vld [vmem:[#allocation12 + $0x50] sm:$0xf]
    %v6304 = vld [vmem:[#allocation12 + $0x54] sm:$0xf]
    %v6305 = vld [vmem:[#allocation12 + $0x58] sm:$0xf]
    %v6306 = vld [vmem:[#allocation12 + $0x5c] sm:$0xf]
    %v6307 = vld [vmem:[#allocation12 + $0x60] sm:$0xf]
    %v6308 = vld [vmem:[#allocation12 + $0x64] sm:$0xf]
    %v6309 = vld [vmem:[#allocation12 + $0x68] sm:$0xf]
    %v6310 = vld [vmem:[#allocation12 + $0x6c] sm:$0xf]
    %v6311 = vld [vmem:[#allocation12 + $0x70] sm:$0xf]
    %v6312 = vld [vmem:[#allocation12 + $0x74] sm:$0xf]
    %v6313 = vld [vmem:[#allocation12 + $0x78] sm:$0xf]
    %v6314 = vld [vmem:[#allocation12 + $0x7c] sm:$0xf]
    %v6315 = vld [vmem:[#allocation12 + $0x80] sm:$0xf]
    %v6316 = vld [vmem:[#allocation12 + $0x84] sm:$0xf]
    %v6317 = vld [vmem:[#allocation12 + $0x88] sm:$0xf]
    %v6318 = vld [vmem:[#allocation12 + $0x8c] sm:$0xf]
    %v6319 = vld [vmem:[#allocation12 + $0x90] sm:$0xf]
    %v6320 = vld [vmem:[#allocation12 + $0x94] sm:$0xf]
    %v6321 = vld [vmem:[#allocation12 + $0x98] sm:$0xf]
    %v6322 = vld [vmem:[#allocation12 + $0x9c] sm:$0xf]
    %v6323 = vld [vmem:[#allocation12 + $0xa0] sm:$0xf]
    %v6324 = vld [vmem:[#allocation12 + $0xa4] sm:$0xf]
    %v6325 = vld [vmem:[#allocation12 + $0xa8] sm:$0xf]
    %v6326 = vld [vmem:[#allocation12 + $0xac] sm:$0xf]
    %v6327 = vld [vmem:[#allocation12 + $0xb0] sm:$0xf]
    %v6328 = vld [vmem:[#allocation12 + $0xb4] sm:$0xf]
    %v6329 = vld [vmem:[#allocation12 + $0xb8] sm:$0xf]
    %v6330 = vld [vmem:[#allocation12 + $0xbc] sm:$0xf]
    %v6331 = vld [vmem:[#allocation12 + $0xc0] sm:$0xf]
    %v6332 = vld [vmem:[#allocation12 + $0xc4] sm:$0xf]
    %v6333 = vld [vmem:[#allocation12 + $0xc8] sm:$0xf]
    %v6334 = vld [vmem:[#allocation12 + $0xcc] sm:$0xf]
    %v6335 = vld [vmem:[#allocation12 + $0xd0] sm:$0xf]
    %v6336 = vld [vmem:[#allocation12 + $0xd4] sm:$0xf]
    %v6337 = vld [vmem:[#allocation12 + $0xd8] sm:$0xf]
    %v6338 = vld [vmem:[#allocation12 + $0xdc] sm:$0xf]
    %v6339 = vld [vmem:[#allocation12 + $0xe0] sm:$0xf]
    %v6340 = vld [vmem:[#allocation12 + $0xe4] sm:$0xf]
    %v6341 = vld [vmem:[#allocation12 + $0xe8] sm:$0xf]
    %v6342 = vld [vmem:[#allocation12 + $0xec] sm:$0xf]
    %v6343 = vld [vmem:[#allocation12 + $0xf0] sm:$0xf]
    %v6344 = vld [vmem:[#allocation12 + $0xf4] sm:$0xf]
    %v6345 = vld [vmem:[#allocation12 + $0xf8] sm:$0xf]
    %v6346 = vld [vmem:[#allocation12 + $0xfc] sm:$0xf]
    %v6347 = vld [vmem:[#allocation12 + $0x100] sm:$0xf]
    %v6348 = vld [vmem:[#allocation12 + $0x104] sm:$0xf]
    %v6349 = vld [vmem:[#allocation12 + $0x108] sm:$0xf]
    %v6350 = vld [vmem:[#allocation12 + $0x10c] sm:$0xf]
    %v6351 = vld [vmem:[#allocation12 + $0x110] sm:$0xf]
    %v6352 = vld [vmem:[#allocation12 + $0x114] sm:$0xf]
    %v6353 = vld [vmem:[#allocation12 + $0x118] sm:$0xf]
    %v6354 = vld [vmem:[#allocation12 + $0x11c] sm:$0xf]
    %v6355 = vld [vmem:[#allocation12 + $0x120] sm:$0xf]
    %v6356 = vld [vmem:[#allocation12 + $0x124] sm:$0xf]
    %v6357 = vld [vmem:[#allocation12 + $0x128] sm:$0xf]
    %v6358 = vld [vmem:[#allocation12 + $0x12c] sm:$0xf]
    %v6359 = vld [vmem:[#allocation12 + $0x130] sm:$0xf]
    %v6360 = vld [vmem:[#allocation12 + $0x134] sm:$0xf]
    %v6361 = vld [vmem:[#allocation12 + $0x138] sm:$0xf]
    %v6362 = vld [vmem:[#allocation12 + $0x13c] sm:$0xf]
    %v6363 = vld [vmem:[#allocation12 + $0x140] sm:$0xf]
    %v6364 = vld [vmem:[#allocation12 + $0x144] sm:$0xf]
    %v6365 = vld [vmem:[#allocation12 + $0x148] sm:$0xf]
    %v6366 = vld [vmem:[#allocation12 + $0x14c] sm:$0xf]
    %v6367 = vld [vmem:[#allocation12 + $0x150] sm:$0xf]
    %v6368 = vld [vmem:[#allocation12 + $0x154] sm:$0xf]
    %v6369 = vld [vmem:[#allocation12 + $0x158] sm:$0xf]
    %v6370 = vld [vmem:[#allocation12 + $0x15c] sm:$0xf]
    %v6371 = vld [vmem:[#allocation12 + $0x160] sm:$0xf]
    %v6372 = vld [vmem:[#allocation12 + $0x164] sm:$0xf]
    %v6373 = vld [vmem:[#allocation12 + $0x168] sm:$0xf]
    %v6374 = vld [vmem:[#allocation12 + $0x16c] sm:$0xf]
    %v6375 = vld [vmem:[#allocation12 + $0x170] sm:$0xf]
    %v6376 = vld [vmem:[#allocation12 + $0x174] sm:$0xf]
    %v6377 = vld [vmem:[#allocation12 + $0x178] sm:$0xf]
    %v6378 = vld [vmem:[#allocation12 + $0x17c] sm:$0xf]
    %v6379 = vld [vmem:[#allocation12 + $0x180] sm:$0xf]
    %v6380 = vld [vmem:[#allocation12 + $0x184] sm:$0xf]
    %v6381 = vld [vmem:[#allocation12 + $0x188] sm:$0xf]
    %v6382 = vld [vmem:[#allocation12 + $0x18c] sm:$0xf]
    %v6383 = vld [vmem:[#allocation12 + $0x190] sm:$0xf]
    %v6384 = vld [vmem:[#allocation12 + $0x194] sm:$0xf]
    %v6385 = vld [vmem:[#allocation12 + $0x198] sm:$0xf]
    %v6386 = vld [vmem:[#allocation12 + $0x19c] sm:$0xf]
    %v6387 = vld [vmem:[#allocation12 + $0x1a0] sm:$0xf]
    %v6388 = vld [vmem:[#allocation12 + $0x1a4] sm:$0xf]
    %v6389 = vld [vmem:[#allocation12 + $0x1a8] sm:$0xf]
    %v6390 = vld [vmem:[#allocation12 + $0x1ac] sm:$0xf]
    %v6391 = vld [vmem:[#allocation12 + $0x1b0] sm:$0xf]
    %v6392 = vld [vmem:[#allocation12 + $0x1b4] sm:$0xf]
    %v6393 = vld [vmem:[#allocation12 + $0x1b8] sm:$0xf]
    %v6394 = vld [vmem:[#allocation12 + $0x1bc] sm:$0xf]
    %v6395 = vld [vmem:[#allocation12 + $0x1c0] sm:$0xf]
    %v6396 = vld [vmem:[#allocation12 + $0x1c4] sm:$0xf]
    %v6397 = vld [vmem:[#allocation12 + $0x1c8] sm:$0xf]
    %v6398 = vld [vmem:[#allocation12 + $0x1cc] sm:$0xf]
    %v6399 = vld [vmem:[#allocation12 + $0x1d0] sm:$0xf]
    %v6400 = vld [vmem:[#allocation12 + $0x1d4] sm:$0xf]
    %v6401 = vld [vmem:[#allocation12 + $0x1d8] sm:$0xf]
    %v6402 = vld [vmem:[#allocation12 + $0x1dc] sm:$0xf]
    %v6403 = vld [vmem:[#allocation12 + $0x1e0] sm:$0xf]
    %v6404 = vld [vmem:[#allocation12 + $0x1e4] sm:$0xf]
    %v6405 = vld [vmem:[#allocation12 + $0x1e8] sm:$0xf]
    %v6406 = vld [vmem:[#allocation12 + $0x1ec] sm:$0xf]
    %v6407 = vld [vmem:[#allocation12 + $0x1f0] sm:$0xf]
    %v6408 = vld [vmem:[#allocation12 + $0x1f4] sm:$0xf]
    %v6409 = vld [vmem:[#allocation12 + $0x1f8] sm:$0xf]
    %v6410 = vld [vmem:[#allocation12 + $0x1fc] sm:$0xf]
    %v6411 = vld [vmem:[#allocation12 + $0x200] sm:$0xf]
    %v6412 = vld [vmem:[#allocation12 + $0x204] sm:$0xf]
    %v6413 = vld [vmem:[#allocation12 + $0x208] sm:$0xf]
    %v6414 = vld [vmem:[#allocation12 + $0x20c] sm:$0xf]
    %v6415 = vld [vmem:[#allocation12 + $0x210] sm:$0xf]
    %v6416 = vld [vmem:[#allocation12 + $0x214] sm:$0xf]
    %v6417 = vld [vmem:[#allocation12 + $0x218] sm:$0xf]
    %v6418 = vld [vmem:[#allocation12 + $0x21c] sm:$0xf]
    %v6419 = vld [vmem:[#allocation12 + $0x220] sm:$0xf]
    %v6420 = vld [vmem:[#allocation12 + $0x224] sm:$0xf]
    %v6421 = vld [vmem:[#allocation12 + $0x228] sm:$0xf]
    %v6422 = vld [vmem:[#allocation12 + $0x22c] sm:$0xf]
    %v6423 = vld [vmem:[#allocation12 + $0x230] sm:$0xf]
    %v6424 = vld [vmem:[#allocation12 + $0x234] sm:$0xf]
    %v6425 = vld [vmem:[#allocation12 + $0x238] sm:$0xf]
    %v6426 = vld [vmem:[#allocation12 + $0x23c] sm:$0xf]
    %v6427 = vld [vmem:[#allocation12 + $0x240] sm:$0xf]
    %v6428 = vld [vmem:[#allocation12 + $0x244] sm:$0xf]
    %v6429 = vld [vmem:[#allocation12 + $0x248] sm:$0xf]
    %v6430 = vld [vmem:[#allocation12 + $0x24c] sm:$0xf]
    %v6431 = vld [vmem:[#allocation12 + $0x250] sm:$0xf]
    %v6432 = vld [vmem:[#allocation12 + $0x254] sm:$0xf]
    %v6433 = vld [vmem:[#allocation12 + $0x258] sm:$0xf]
    %v6434 = vld [vmem:[#allocation12 + $0x25c] sm:$0xf]
    %v6435 = vld [vmem:[#allocation12 + $0x260] sm:$0xf]
    %v6436 = vld [vmem:[#allocation12 + $0x264] sm:$0xf]
    %v6437 = vld [vmem:[#allocation12 + $0x268] sm:$0xf]
    %v6438 = vld [vmem:[#allocation12 + $0x26c] sm:$0xf]
    %v6439 = vld [vmem:[#allocation12 + $0x270] sm:$0xf]
    %v6440 = vld [vmem:[#allocation12 + $0x274] sm:$0xf]
    %v6441 = vld [vmem:[#allocation12 + $0x278] sm:$0xf]
    %v6442 = vld [vmem:[#allocation12 + $0x27c] sm:$0xf]
    %v6443 = vld [vmem:[#allocation12 + $0x280] sm:$0xf]
    %v6444 = vld [vmem:[#allocation12 + $0x284] sm:$0xf]
    %v6445 = vld [vmem:[#allocation12 + $0x288] sm:$0xf]
    %v6446 = vld [vmem:[#allocation12 + $0x28c] sm:$0xf]
    %v6447 = vld [vmem:[#allocation12 + $0x290] sm:$0xf]
    %v6448 = vld [vmem:[#allocation12 + $0x294] sm:$0xf]
    %v6449 = vld [vmem:[#allocation12 + $0x298] sm:$0xf]
    %v6450 = vld [vmem:[#allocation12 + $0x29c] sm:$0xf]
    %v6451 = vld [vmem:[#allocation12 + $0x2a0] sm:$0xf]
    %v6452 = vld [vmem:[#allocation12 + $0x2a4] sm:$0xf]
    %v6453 = vld [vmem:[#allocation12 + $0x2a8] sm:$0xf]
    %v6454 = vld [vmem:[#allocation12 + $0x2ac] sm:$0xf]
    %v6455 = vld [vmem:[#allocation12 + $0x2b0] sm:$0xf]
    %v6456 = vld [vmem:[#allocation12 + $0x2b4] sm:$0xf]
    %v6457 = vld [vmem:[#allocation12 + $0x2b8] sm:$0xf]
    %v6458 = vld [vmem:[#allocation12 + $0x2bc] sm:$0xf]
    %v6459 = vld [vmem:[#allocation12 + $0x2c0] sm:$0xf]
    %v6460 = vld [vmem:[#allocation12 + $0x2c4] sm:$0xf]
    %v6461 = vld [vmem:[#allocation12 + $0x2c8] sm:$0xf]
    %v6462 = vld [vmem:[#allocation12 + $0x2cc] sm:$0xf]
    %v6463 = vld [vmem:[#allocation12 + $0x2d0] sm:$0xf]
    %v6464 = vld [vmem:[#allocation12 + $0x2d4] sm:$0xf]
    %v6465 = vld [vmem:[#allocation12 + $0x2d8] sm:$0xf]
    %v6466 = vld [vmem:[#allocation12 + $0x2dc] sm:$0xf]
    %v6467 = vld [vmem:[#allocation12 + $0x2e0] sm:$0xf]
    %v6468 = vld [vmem:[#allocation12 + $0x2e4] sm:$0xf]
    %v6469 = vld [vmem:[#allocation12 + $0x2e8] sm:$0xf]
    %v6470 = vld [vmem:[#allocation12 + $0x2ec] sm:$0xf]
    %v6471 = vld [vmem:[#allocation12 + $0x2f0] sm:$0xf]
    %v6472 = vld [vmem:[#allocation12 + $0x2f4] sm:$0xf]
    %v6473 = vld [vmem:[#allocation12 + $0x2f8] sm:$0xf]
    %v6474 = vld [vmem:[#allocation12 + $0x2fc] sm:$0xf]
    %v6475 = vld [vmem:[#allocation12 + $0x300] sm:$0xf]
    %v6476 = vld [vmem:[#allocation12 + $0x304] sm:$0xf]
    %v6477 = vld [vmem:[#allocation12 + $0x308] sm:$0xf]
    %v6478 = vld [vmem:[#allocation12 + $0x30c] sm:$0xf]
    %v6479 = vld [vmem:[#allocation12 + $0x310] sm:$0xf]
    %v6480 = vld [vmem:[#allocation12 + $0x314] sm:$0xf]
    %v6481 = vld [vmem:[#allocation12 + $0x318] sm:$0xf]
    %v6482 = vld [vmem:[#allocation12 + $0x31c] sm:$0xf]
    %v6483 = vld [vmem:[#allocation12 + $0x320] sm:$0xf]
    %v6484 = vld [vmem:[#allocation12 + $0x324] sm:$0xf]
    %v6485 = vld [vmem:[#allocation12 + $0x328] sm:$0xf]
    %v6486 = vld [vmem:[#allocation12 + $0x32c] sm:$0xf]
    %v6487 = vld [vmem:[#allocation12 + $0x330] sm:$0xf]
    %v6488 = vld [vmem:[#allocation12 + $0x334] sm:$0xf]
    %v6489 = vld [vmem:[#allocation12 + $0x338] sm:$0xf]
    %v6490 = vld [vmem:[#allocation12 + $0x33c] sm:$0xf]
    %v6491 = vld [vmem:[#allocation12 + $0x340] sm:$0xf]
    %v6492 = vld [vmem:[#allocation12 + $0x344] sm:$0xf]
    %v6493 = vld [vmem:[#allocation12 + $0x348] sm:$0xf]
    %v6494 = vld [vmem:[#allocation12 + $0x34c] sm:$0xf]
    %v6495 = vld [vmem:[#allocation12 + $0x350] sm:$0xf]
    %v6496 = vld [vmem:[#allocation12 + $0x354] sm:$0xf]
    %v6497 = vld [vmem:[#allocation12 + $0x358] sm:$0xf]
    %v6498 = vld [vmem:[#allocation12 + $0x35c] sm:$0xf]
    %v6499 = vld [vmem:[#allocation12 + $0x360] sm:$0xf]
    %v6500 = vld [vmem:[#allocation12 + $0x364] sm:$0xf]
    %v6501 = vld [vmem:[#allocation12 + $0x368] sm:$0xf]
    %v6502 = vld [vmem:[#allocation12 + $0x36c] sm:$0xf]
    %v6503 = vld [vmem:[#allocation12 + $0x370] sm:$0xf]
    %v6504 = vld [vmem:[#allocation12 + $0x374] sm:$0xf]
    %v6505 = vld [vmem:[#allocation12 + $0x378] sm:$0xf]
    %v6506 = vld [vmem:[#allocation12 + $0x37c] sm:$0xf]
    %v6507 = vld [vmem:[#allocation12 + $0x380] sm:$0xf]
    %v6508 = vld [vmem:[#allocation12 + $0x384] sm:$0xf]
    %v6509 = vld [vmem:[#allocation12 + $0x388] sm:$0xf]
    %v6510 = vld [vmem:[#allocation12 + $0x38c] sm:$0xf]
    %v6511 = vld [vmem:[#allocation12 + $0x390] sm:$0xf]
    %v6512 = vld [vmem:[#allocation12 + $0x394] sm:$0xf]
    %v6513 = vld [vmem:[#allocation12 + $0x398] sm:$0xf]
    %v6514 = vld [vmem:[#allocation12 + $0x39c] sm:$0xf]
    %v6515 = vld [vmem:[#allocation12 + $0x3a0] sm:$0xf]
    %v6516 = vld [vmem:[#allocation12 + $0x3a4] sm:$0xf]
    %v6517 = vld [vmem:[#allocation12 + $0x3a8] sm:$0xf]
    %v6518 = vld [vmem:[#allocation12 + $0x3ac] sm:$0xf]
    %v6519 = vld [vmem:[#allocation12 + $0x3b0] sm:$0xf]
    %v6520 = vld [vmem:[#allocation12 + $0x3b4] sm:$0xf]
    %v6521 = vld [vmem:[#allocation12 + $0x3b8] sm:$0xf]
    %v6522 = vld [vmem:[#allocation12 + $0x3bc] sm:$0xf]
    %v6523 = vld [vmem:[#allocation12 + $0x3c0] sm:$0xf]
    %v6524 = vld [vmem:[#allocation12 + $0x3c4] sm:$0xf]
    %v6525 = vld [vmem:[#allocation12 + $0x3c8] sm:$0xf]
    %v6526 = vld [vmem:[#allocation12 + $0x3cc] sm:$0xf]
    %v6527 = vld [vmem:[#allocation12 + $0x3d0] sm:$0xf]
    %v6528 = vld [vmem:[#allocation12 + $0x3d4] sm:$0xf]
    %v6529 = vld [vmem:[#allocation12 + $0x3d8] sm:$0xf]
    %v6530 = vld [vmem:[#allocation12 + $0x3dc] sm:$0xf]
    %v6531 = vld [vmem:[#allocation12 + $0x3e0] sm:$0xf]
    %v6532 = vld [vmem:[#allocation12 + $0x3e4] sm:$0xf]
    %v6533 = vld [vmem:[#allocation12 + $0x3e8] sm:$0xf]
    %v6534 = vld [vmem:[#allocation12 + $0x3ec] sm:$0xf]
    %v6535 = vld [vmem:[#allocation12 + $0x3f0] sm:$0xf]
    %v6536 = vld [vmem:[#allocation12 + $0x3f4] sm:$0xf]
    %v6537 = vld [vmem:[#allocation12 + $0x3f8] sm:$0xf]
    %v6538 = vld [vmem:[#allocation12 + $0x3fc] sm:$0xf]
    %v6539 = vld [vmem:[#allocation12 + $0x400] sm:$0xf]
    %v6540 = vld [vmem:[#allocation12 + $0x404] sm:$0xf]
    %v6541 = vld [vmem:[#allocation12 + $0x408] sm:$0xf]
    %v6542 = vld [vmem:[#allocation12 + $0x40c] sm:$0xf]
    %v6543 = vld [vmem:[#allocation12 + $0x410] sm:$0xf]
    %v6544 = vld [vmem:[#allocation12 + $0x414] sm:$0xf]
    %v6545 = vld [vmem:[#allocation12 + $0x418] sm:$0xf]
    %v6546 = vld [vmem:[#allocation12 + $0x41c] sm:$0xf]
    %v6547 = vld [vmem:[#allocation12 + $0x420] sm:$0xf]
    %v6548 = vld [vmem:[#allocation12 + $0x424] sm:$0xf]
    %v6549 = vld [vmem:[#allocation12 + $0x428] sm:$0xf]
    %v6550 = vld [vmem:[#allocation12 + $0x42c] sm:$0xf]
    %v6551 = vld [vmem:[#allocation12 + $0x430] sm:$0xf]
    %v6552 = vld [vmem:[#allocation12 + $0x434] sm:$0xf]
    %v6553 = vld [vmem:[#allocation12 + $0x438] sm:$0xf]
    %v6554 = vld [vmem:[#allocation12 + $0x43c] sm:$0xf]
    %v6555 = vld [vmem:[#allocation12 + $0x440] sm:$0xf]
    %v6556 = vld [vmem:[#allocation12 + $0x444] sm:$0xf]
    %v6557 = vld [vmem:[#allocation12 + $0x448] sm:$0xf]
    %v6558 = vld [vmem:[#allocation12 + $0x44c] sm:$0xf]
    %v6559 = vld [vmem:[#allocation12 + $0x450] sm:$0xf]
    %v6560 = vld [vmem:[#allocation12 + $0x454] sm:$0xf]
    %v6561 = vld [vmem:[#allocation12 + $0x458] sm:$0xf]
    %v6562 = vld [vmem:[#allocation12 + $0x45c] sm:$0xf]
    %v6563 = vld [vmem:[#allocation12 + $0x460] sm:$0xf]
    %v6564 = vld [vmem:[#allocation12 + $0x464] sm:$0xf]
    %v6565 = vld [vmem:[#allocation12 + $0x468] sm:$0xf]
    %v6566 = vld [vmem:[#allocation12 + $0x46c] sm:$0xf]
    %v6567 = vld [vmem:[#allocation12 + $0x470] sm:$0xf]
    %v6568 = vld [vmem:[#allocation12 + $0x474] sm:$0xf]
    %v6569 = vld [vmem:[#allocation12 + $0x478] sm:$0xf]
    %v6570 = vld [vmem:[#allocation12 + $0x47c] sm:$0xf]
    %v6571 = vld [vmem:[#allocation12 + $0x480] sm:$0xf]
    %v6572 = vld [vmem:[#allocation12 + $0x484] sm:$0xf]
    %v6573 = vld [vmem:[#allocation12 + $0x488] sm:$0xf]
    %v6574 = vld [vmem:[#allocation12 + $0x48c] sm:$0xf]
    %v6575 = vld [vmem:[#allocation12 + $0x490] sm:$0xf]
    %v6576 = vld [vmem:[#allocation12 + $0x494] sm:$0xf]
    %v6577 = vld [vmem:[#allocation12 + $0x498] sm:$0xf]
    %v6578 = vld [vmem:[#allocation12 + $0x49c] sm:$0xf]
    %v6579 = vld [vmem:[#allocation12 + $0x4a0] sm:$0xf]
    %v6580 = vld [vmem:[#allocation12 + $0x4a4] sm:$0xf]
    %v6581 = vld [vmem:[#allocation12 + $0x4a8] sm:$0xf]
    %v6582 = vld [vmem:[#allocation12 + $0x4ac] sm:$0xf]
    %v6583 = vld [vmem:[#allocation12 + $0x4b0] sm:$0xf]
    %v6584 = vld [vmem:[#allocation12 + $0x4b4] sm:$0xf]
    %v6585 = vld [vmem:[#allocation12 + $0x4b8] sm:$0xf]
    %v6586 = vld [vmem:[#allocation12 + $0x4bc] sm:$0xf]
    %v6587 = vld [vmem:[#allocation12 + $0x4c0] sm:$0xf]
    %v6588 = vld [vmem:[#allocation12 + $0x4c4] sm:$0xf]
    %v6589 = vld [vmem:[#allocation12 + $0x4c8] sm:$0xf]
    %v6590 = vld [vmem:[#allocation12 + $0x4cc] sm:$0xf]
    %v6591 = vld [vmem:[#allocation12 + $0x4d0] sm:$0xf]
    %v6592 = vld [vmem:[#allocation12 + $0x4d4] sm:$0xf]
    %v6593 = vld [vmem:[#allocation12 + $0x4d8] sm:$0xf]
    %v6594 = vld [vmem:[#allocation12 + $0x4dc] sm:$0xf]
    %v6595 = vld [vmem:[#allocation12 + $0x4e0] sm:$0xf]
    %v6596 = vld [vmem:[#allocation12 + $0x4e4] sm:$0xf]
    %v6597 = vld [vmem:[#allocation12 + $0x4e8] sm:$0xf]
    %v6598 = vld [vmem:[#allocation12 + $0x4ec] sm:$0xf]
    %v6599 = vld [vmem:[#allocation12 + $0x4f0] sm:$0xf]
    %v6600 = vld [vmem:[#allocation12 + $0x4f4] sm:$0xf]
    %v6601 = vld [vmem:[#allocation12 + $0x4f8] sm:$0xf]
    %v6602 = vld [vmem:[#allocation12 + $0x4fc] sm:$0xf]
    %v6603 = vld [vmem:[#allocation12 + $0x500] sm:$0xf]
    %v6604 = vld [vmem:[#allocation12 + $0x504] sm:$0xf]
    %v6605 = vld [vmem:[#allocation12 + $0x508] sm:$0xf]
    %v6606 = vld [vmem:[#allocation12 + $0x50c] sm:$0xf]
    %v6607 = vld [vmem:[#allocation12 + $0x510] sm:$0xf]
    %v6608 = vld [vmem:[#allocation12 + $0x514] sm:$0xf]
    %v6609 = vld [vmem:[#allocation12 + $0x518] sm:$0xf]
    %v6610 = vld [vmem:[#allocation12 + $0x51c] sm:$0xf]
    %v6611 = vld [vmem:[#allocation12 + $0x520] sm:$0xf]
    %v6612 = vld [vmem:[#allocation12 + $0x524] sm:$0xf]
    %v6613 = vld [vmem:[#allocation12 + $0x528] sm:$0xf]
    %v6614 = vld [vmem:[#allocation12 + $0x52c] sm:$0xf]
    %v6615 = vld [vmem:[#allocation12 + $0x530] sm:$0xf]
    %v6616 = vld [vmem:[#allocation12 + $0x534] sm:$0xf]
    %v6617 = vld [vmem:[#allocation12 + $0x538] sm:$0xf]
    %v6618 = vld [vmem:[#allocation12 + $0x53c] sm:$0xf]
    %v6619 = vld [vmem:[#allocation12 + $0x540] sm:$0xf]
    %v6620 = vld [vmem:[#allocation12 + $0x544] sm:$0xf]
    %v6621 = vld [vmem:[#allocation12 + $0x548] sm:$0xf]
    %v6622 = vld [vmem:[#allocation12 + $0x54c] sm:$0xf]
    %v6623 = vld [vmem:[#allocation12 + $0x550] sm:$0xf]
    %v6624 = vld [vmem:[#allocation12 + $0x554] sm:$0xf]
    %v6625 = vld [vmem:[#allocation12 + $0x558] sm:$0xf]
    %v6626 = vld [vmem:[#allocation12 + $0x55c] sm:$0xf]
    %v6627 = vld [vmem:[#allocation12 + $0x560] sm:$0xf]
    %v6628 = vld [vmem:[#allocation12 + $0x564] sm:$0xf]
    %v6629 = vld [vmem:[#allocation12 + $0x568] sm:$0xf]
    %v6630 = vld [vmem:[#allocation12 + $0x56c] sm:$0xf]
    %v6631 = vld [vmem:[#allocation12 + $0x570] sm:$0xf]
    %v6632 = vld [vmem:[#allocation12 + $0x574] sm:$0xf]
    %v6633 = vld [vmem:[#allocation12 + $0x578] sm:$0xf]
    %v6634 = vld [vmem:[#allocation12 + $0x57c] sm:$0xf]
    %v6635 = vld [vmem:[#allocation12 + $0x580] sm:$0xf]
    %v6636 = vld [vmem:[#allocation12 + $0x584] sm:$0xf]
    %v6637 = vld [vmem:[#allocation12 + $0x588] sm:$0xf]
    %v6638 = vld [vmem:[#allocation12 + $0x58c] sm:$0xf]
    %v6639 = vld [vmem:[#allocation12 + $0x590] sm:$0xf]
    %v6640 = vld [vmem:[#allocation12 + $0x594] sm:$0xf]
    %v6641 = vld [vmem:[#allocation12 + $0x598] sm:$0xf]
    %v6642 = vld [vmem:[#allocation12 + $0x59c] sm:$0xf]
    %v6643 = vld [vmem:[#allocation12 + $0x5a0] sm:$0xf]
    %v6644 = vld [vmem:[#allocation12 + $0x5a4] sm:$0xf]
    %v6645 = vld [vmem:[#allocation12 + $0x5a8] sm:$0xf]
    %v6646 = vld [vmem:[#allocation12 + $0x5ac] sm:$0xf]
    %v6647 = vld [vmem:[#allocation12 + $0x5b0] sm:$0xf]
    %v6648 = vld [vmem:[#allocation12 + $0x5b4] sm:$0xf]
    %v6649 = vld [vmem:[#allocation12 + $0x5b8] sm:$0xf]
    %v6650 = vld [vmem:[#allocation12 + $0x5bc] sm:$0xf]
    %v6651 = vld [vmem:[#allocation12 + $0x5c0] sm:$0xf]
    %v6652 = vld [vmem:[#allocation12 + $0x5c4] sm:$0xf]
    %v6653 = vld [vmem:[#allocation12 + $0x5c8] sm:$0xf]
    %v6654 = vld [vmem:[#allocation12 + $0x5cc] sm:$0xf]
    %v6655 = vld [vmem:[#allocation12 + $0x5d0] sm:$0xf]
    %v6656 = vld [vmem:[#allocation12 + $0x5d4] sm:$0xf]
    %v6657 = vld [vmem:[#allocation12 + $0x5d8] sm:$0xf]
    %v6658 = vld [vmem:[#allocation12 + $0x5dc] sm:$0xf]
    %v6659 = vld [vmem:[#allocation12 + $0x5e0] sm:$0xf]
    %v6660 = vld [vmem:[#allocation12 + $0x5e4] sm:$0xf]
    %v6661 = vld [vmem:[#allocation12 + $0x5e8] sm:$0xf]
    %v6662 = vld [vmem:[#allocation12 + $0x5ec] sm:$0xf]
    %v6663 = vld [vmem:[#allocation12 + $0x5f0] sm:$0xf]
    %v6664 = vld [vmem:[#allocation12 + $0x5f4] sm:$0xf]
    %v6665 = vld [vmem:[#allocation12 + $0x5f8] sm:$0xf]
    %v6666 = vld [vmem:[#allocation12 + $0x5fc] sm:$0xf]
    %v6667 = vld [vmem:[#allocation12 + $0x600] sm:$0xf]
    %v6668 = vld [vmem:[#allocation12 + $0x604] sm:$0xf]
    %v6669 = vld [vmem:[#allocation12 + $0x608] sm:$0xf]
    %v6670 = vld [vmem:[#allocation12 + $0x60c] sm:$0xf]
    %v6671 = vld [vmem:[#allocation12 + $0x610] sm:$0xf]
    %v6672 = vld [vmem:[#allocation12 + $0x614] sm:$0xf]
    %v6673 = vld [vmem:[#allocation12 + $0x618] sm:$0xf]
    %v6674 = vld [vmem:[#allocation12 + $0x61c] sm:$0xf]
    %v6675 = vld [vmem:[#allocation12 + $0x620] sm:$0xf]
    %v6676 = vld [vmem:[#allocation12 + $0x624] sm:$0xf]
    %v6677 = vld [vmem:[#allocation12 + $0x628] sm:$0xf]
    %v6678 = vld [vmem:[#allocation12 + $0x62c] sm:$0xf]
    %v6679 = vld [vmem:[#allocation12 + $0x630] sm:$0xf]
    %v6680 = vld [vmem:[#allocation12 + $0x634] sm:$0xf]
    %v6681 = vld [vmem:[#allocation12 + $0x638] sm:$0xf]
    %v6682 = vld [vmem:[#allocation12 + $0x63c] sm:$0xf]
    %v6683 = vld [vmem:[#allocation12 + $0x640] sm:$0xf]
    %v6684 = vld [vmem:[#allocation12 + $0x644] sm:$0xf]
    %v6685 = vld [vmem:[#allocation12 + $0x648] sm:$0xf]
    %v6686 = vld [vmem:[#allocation12 + $0x64c] sm:$0xf]
    %v6687 = vld [vmem:[#allocation12 + $0x650] sm:$0xf]
    %v6688 = vld [vmem:[#allocation12 + $0x654] sm:$0xf]
    %v6689 = vld [vmem:[#allocation12 + $0x658] sm:$0xf]
    %v6690 = vld [vmem:[#allocation12 + $0x65c] sm:$0xf]
    %v6691 = vld [vmem:[#allocation12 + $0x660] sm:$0xf]
    %v6692 = vld [vmem:[#allocation12 + $0x664] sm:$0xf]
    %v6693 = vld [vmem:[#allocation12 + $0x668] sm:$0xf]
    %v6694 = vld [vmem:[#allocation12 + $0x66c] sm:$0xf]
    %v6695 = vld [vmem:[#allocation12 + $0x670] sm:$0xf]
    %v6696 = vld [vmem:[#allocation12 + $0x674] sm:$0xf]
    %v6697 = vld [vmem:[#allocation12 + $0x678] sm:$0xf]
    %v6698 = vld [vmem:[#allocation12 + $0x67c] sm:$0xf]
    %v6699 = vld [vmem:[#allocation12 + $0x680] sm:$0xf]
    %v6700 = vld [vmem:[#allocation12 + $0x684] sm:$0xf]
    %v6701 = vld [vmem:[#allocation12 + $0x688] sm:$0xf]
    %v6702 = vld [vmem:[#allocation12 + $0x68c] sm:$0xf]
    %v6703 = vld [vmem:[#allocation12 + $0x690] sm:$0xf]
    %v6704 = vld [vmem:[#allocation12 + $0x694] sm:$0xf]
    %v6705 = vld [vmem:[#allocation12 + $0x698] sm:$0xf]
    %v6706 = vld [vmem:[#allocation12 + $0x69c] sm:$0xf]
    %v6707 = vld [vmem:[#allocation12 + $0x6a0] sm:$0xf]
    %v6708 = vld [vmem:[#allocation12 + $0x6a4] sm:$0xf]
    %v6709 = vld [vmem:[#allocation12 + $0x6a8] sm:$0xf]
    %v6710 = vld [vmem:[#allocation12 + $0x6ac] sm:$0xf]
    %v6711 = vld [vmem:[#allocation12 + $0x6b0] sm:$0xf]
    %v6712 = vld [vmem:[#allocation12 + $0x6b4] sm:$0xf]
    %v6713 = vld [vmem:[#allocation12 + $0x6b8] sm:$0xf]
    %v6714 = vld [vmem:[#allocation12 + $0x6bc] sm:$0xf]
    %v6715 = vld [vmem:[#allocation12 + $0x6c0] sm:$0xf]
    %v6716 = vld [vmem:[#allocation12 + $0x6c4] sm:$0xf]
    %v6717 = vld [vmem:[#allocation12 + $0x6c8] sm:$0xf]
    %v6718 = vld [vmem:[#allocation12 + $0x6cc] sm:$0xf]
    %v6719 = vld [vmem:[#allocation12 + $0x6d0] sm:$0xf]
    %v6720 = vld [vmem:[#allocation12 + $0x6d4] sm:$0xf]
    %v6721 = vld [vmem:[#allocation12 + $0x6d8] sm:$0xf]
    %v6722 = vld [vmem:[#allocation12 + $0x6dc] sm:$0xf]
    %v6723 = vld [vmem:[#allocation12 + $0x6e0] sm:$0xf]
    %v6724 = vld [vmem:[#allocation12 + $0x6e4] sm:$0xf]
    %v6725 = vld [vmem:[#allocation12 + $0x6e8] sm:$0xf]
    %v6726 = vld [vmem:[#allocation12 + $0x6ec] sm:$0xf]
    %v6727 = vld [vmem:[#allocation12 + $0x6f0] sm:$0xf]
    %v6728 = vld [vmem:[#allocation12 + $0x6f4] sm:$0xf]
    %v6729 = vld [vmem:[#allocation12 + $0x6f8] sm:$0xf]
    %v6730 = vld [vmem:[#allocation12 + $0x6fc] sm:$0xf]
    %v6731 = vld [vmem:[#allocation12 + $0x700] sm:$0xf]
    %v6732 = vld [vmem:[#allocation12 + $0x704] sm:$0xf]
    %v6733 = vld [vmem:[#allocation12 + $0x708] sm:$0xf]
    %v6734 = vld [vmem:[#allocation12 + $0x70c] sm:$0xf]
    %v6735 = vld [vmem:[#allocation12 + $0x710] sm:$0xf]
    %v6736 = vld [vmem:[#allocation12 + $0x714] sm:$0xf]
    %v6737 = vld [vmem:[#allocation12 + $0x718] sm:$0xf]
    %v6738 = vld [vmem:[#allocation12 + $0x71c] sm:$0xf]
    %v6739 = vld [vmem:[#allocation12 + $0x720] sm:$0xf]
    %v6740 = vld [vmem:[#allocation12 + $0x724] sm:$0xf]
    %v6741 = vld [vmem:[#allocation12 + $0x728] sm:$0xf]
    %v6742 = vld [vmem:[#allocation12 + $0x72c] sm:$0xf]
    %v6743 = vld [vmem:[#allocation12 + $0x730] sm:$0xf]
    %v6744 = vld [vmem:[#allocation12 + $0x734] sm:$0xf]
    %v6745 = vld [vmem:[#allocation12 + $0x738] sm:$0xf]
    %v6746 = vld [vmem:[#allocation12 + $0x73c] sm:$0xf]
    %v6747 = vld [vmem:[#allocation12 + $0x740] sm:$0xf]
    %v6748 = vld [vmem:[#allocation12 + $0x744] sm:$0xf]
    %v6749 = vld [vmem:[#allocation12 + $0x748] sm:$0xf]
    %v6750 = vld [vmem:[#allocation12 + $0x74c] sm:$0xf]
    %v6751 = vld [vmem:[#allocation12 + $0x750] sm:$0xf]
    %v6752 = vld [vmem:[#allocation12 + $0x754] sm:$0xf]
    %v6753 = vld [vmem:[#allocation12 + $0x758] sm:$0xf]
    %v6754 = vld [vmem:[#allocation12 + $0x75c] sm:$0xf]
    %v6755 = vld [vmem:[#allocation12 + $0x760] sm:$0xf]
    %v6756 = vld [vmem:[#allocation12 + $0x764] sm:$0xf]
    %v6757 = vld [vmem:[#allocation12 + $0x768] sm:$0xf]
    %v6758 = vld [vmem:[#allocation12 + $0x76c] sm:$0xf]
    %v6759 = vld [vmem:[#allocation12 + $0x770] sm:$0xf]
    %v6760 = vld [vmem:[#allocation12 + $0x774] sm:$0xf]
    %v6761 = vld [vmem:[#allocation12 + $0x778] sm:$0xf]
    %v6762 = vld [vmem:[#allocation12 + $0x77c] sm:$0xf]
    %v6763 = vld [vmem:[#allocation12 + $0x780] sm:$0xf]
    %v6764 = vld [vmem:[#allocation12 + $0x784] sm:$0xf]
    %v6765 = vld [vmem:[#allocation12 + $0x788] sm:$0xf]
    %v6766 = vld [vmem:[#allocation12 + $0x78c] sm:$0xf]
    %v6767 = vld [vmem:[#allocation12 + $0x790] sm:$0xf]
    %v6768 = vld [vmem:[#allocation12 + $0x794] sm:$0xf]
    %v6769 = vld [vmem:[#allocation12 + $0x798] sm:$0xf]
    %v6770 = vld [vmem:[#allocation12 + $0x79c] sm:$0xf]
    %v6771 = vld [vmem:[#allocation12 + $0x7a0] sm:$0xf]
    %v6772 = vld [vmem:[#allocation12 + $0x7a4] sm:$0xf]
    %v6773 = vld [vmem:[#allocation12 + $0x7a8] sm:$0xf]
    %v6774 = vld [vmem:[#allocation12 + $0x7ac] sm:$0xf]
    %v6775 = vld [vmem:[#allocation12 + $0x7b0] sm:$0xf]
    %v6776 = vld [vmem:[#allocation12 + $0x7b4] sm:$0xf]
    %v6777 = vld [vmem:[#allocation12 + $0x7b8] sm:$0xf]
    %v6778 = vld [vmem:[#allocation12 + $0x7bc] sm:$0xf]
    %v6779 = vld [vmem:[#allocation12 + $0x7c0] sm:$0xf]
    %v6780 = vld [vmem:[#allocation12 + $0x7c4] sm:$0xf]
    %v6781 = vld [vmem:[#allocation12 + $0x7c8] sm:$0xf]
    %v6782 = vld [vmem:[#allocation12 + $0x7cc] sm:$0xf]
    %v6783 = vld [vmem:[#allocation12 + $0x7d0] sm:$0xf]
    %v6784 = vld [vmem:[#allocation12 + $0x7d4] sm:$0xf]
    %v6785 = vld [vmem:[#allocation12 + $0x7d8] sm:$0xf]
    %v6786 = vld [vmem:[#allocation12 + $0x7dc] sm:$0xf]
    %v6787 = vld [vmem:[#allocation12 + $0x7e0] sm:$0xf]
    %v6788 = vld [vmem:[#allocation12 + $0x7e4] sm:$0xf]
    %v6789 = vld [vmem:[#allocation12 + $0x7e8] sm:$0xf]
    %v6790 = vld [vmem:[#allocation12 + $0x7ec] sm:$0xf]
    %v6791 = vld [vmem:[#allocation12 + $0x7f0] sm:$0xf]
    %v6792 = vld [vmem:[#allocation12 + $0x7f4] sm:$0xf]
    %v6793 = vld [vmem:[#allocation12 + $0x7f8] sm:$0xf]
    %v6794 = vld [vmem:[#allocation12 + $0x7fc] sm:$0xf]
    %v6795 = vld [vmem:[#allocation12 + $0x800] sm:$0xf]
    %v6796 = vld [vmem:[#allocation12 + $0x804] sm:$0xf]
    %v6797 = vld [vmem:[#allocation12 + $0x808] sm:$0xf]
    %v6798 = vld [vmem:[#allocation12 + $0x80c] sm:$0xf]
    %v6799 = vld [vmem:[#allocation12 + $0x810] sm:$0xf]
    %v6800 = vld [vmem:[#allocation12 + $0x814] sm:$0xf]
    %v6801 = vld [vmem:[#allocation12 + $0x818] sm:$0xf]
    %v6802 = vld [vmem:[#allocation12 + $0x81c] sm:$0xf]
    %v6803 = vld [vmem:[#allocation12 + $0x820] sm:$0xf]
    %v6804 = vld [vmem:[#allocation12 + $0x824] sm:$0xf]
    %v6805 = vld [vmem:[#allocation12 + $0x828] sm:$0xf]
    %v6806 = vld [vmem:[#allocation12 + $0x82c] sm:$0xf]
    %v6807 = vld [vmem:[#allocation12 + $0x830] sm:$0xf]
    %v6808 = vld [vmem:[#allocation12 + $0x834] sm:$0xf]
    %v6809 = vld [vmem:[#allocation12 + $0x838] sm:$0xf]
    %v6810 = vld [vmem:[#allocation12 + $0x83c] sm:$0xf]
    %v6811 = vld [vmem:[#allocation12 + $0x840] sm:$0xf]
    %v6812 = vld [vmem:[#allocation12 + $0x844] sm:$0xf]
    %v6813 = vld [vmem:[#allocation12 + $0x848] sm:$0xf]
    %v6814 = vld [vmem:[#allocation12 + $0x84c] sm:$0xf]
    %v6815 = vld [vmem:[#allocation12 + $0x850] sm:$0xf]
    %v6816 = vld [vmem:[#allocation12 + $0x854] sm:$0xf]
    %v6817 = vld [vmem:[#allocation12 + $0x858] sm:$0xf]
    %v6818 = vld [vmem:[#allocation12 + $0x85c] sm:$0xf]
    %v6819 = vld [vmem:[#allocation12 + $0x860] sm:$0xf]
    %v6820 = vld [vmem:[#allocation12 + $0x864] sm:$0xf]
    %v6821 = vld [vmem:[#allocation12 + $0x868] sm:$0xf]
    %v6822 = vld [vmem:[#allocation12 + $0x86c] sm:$0xf]
    %v6823 = vld [vmem:[#allocation12 + $0x870] sm:$0xf]
    %v6824 = vld [vmem:[#allocation12 + $0x874] sm:$0xf]
    %v6825 = vld [vmem:[#allocation12 + $0x878] sm:$0xf]
    %v6826 = vld [vmem:[#allocation12 + $0x87c] sm:$0xf]
    %v6827 = vld [vmem:[#allocation12 + $0x880] sm:$0xf]
    %v6828 = vld [vmem:[#allocation12 + $0x884] sm:$0xf]
    %v6829 = vld [vmem:[#allocation12 + $0x888] sm:$0xf]
    %v6830 = vld [vmem:[#allocation12 + $0x88c] sm:$0xf]
    %v6831 = vld [vmem:[#allocation12 + $0x890] sm:$0xf]
    %v6832 = vld [vmem:[#allocation12 + $0x894] sm:$0xf]
    %v6833 = vld [vmem:[#allocation12 + $0x898] sm:$0xf]
    %v6834 = vld [vmem:[#allocation12 + $0x89c] sm:$0xf]
    %v6835 = vld [vmem:[#allocation12 + $0x8a0] sm:$0xf]
    %v6836 = vld [vmem:[#allocation12 + $0x8a4] sm:$0xf]
    %v6837 = vld [vmem:[#allocation12 + $0x8a8] sm:$0xf]
    %v6838 = vld [vmem:[#allocation12 + $0x8ac] sm:$0xf]
    %v6839 = vld [vmem:[#allocation12 + $0x8b0] sm:$0xf]
    %v6840 = vld [vmem:[#allocation12 + $0x8b4] sm:$0xf]
    %v6841 = vld [vmem:[#allocation12 + $0x8b8] sm:$0xf]
    %v6842 = vld [vmem:[#allocation12 + $0x8bc] sm:$0xf]
    %v6843 = vld [vmem:[#allocation12 + $0x8c0] sm:$0xf]
    %v6844 = vld [vmem:[#allocation12 + $0x8c4] sm:$0xf]
    %v6845 = vld [vmem:[#allocation12 + $0x8c8] sm:$0xf]
    %v6846 = vld [vmem:[#allocation12 + $0x8cc] sm:$0xf]
    %v6847 = vld [vmem:[#allocation12 + $0x8d0] sm:$0xf]
    %v6848 = vld [vmem:[#allocation12 + $0x8d4] sm:$0xf]
    %v6849 = vld [vmem:[#allocation12 + $0x8d8] sm:$0xf]
    %v6850 = vld [vmem:[#allocation12 + $0x8dc] sm:$0xf]
    %v6851 = vld [vmem:[#allocation12 + $0x8e0] sm:$0xf]
    %v6852 = vld [vmem:[#allocation12 + $0x8e4] sm:$0xf]
    %v6853 = vld [vmem:[#allocation12 + $0x8e8] sm:$0xf]
    %v6854 = vld [vmem:[#allocation12 + $0x8ec] sm:$0xf]
    %v6855 = vld [vmem:[#allocation12 + $0x8f0] sm:$0xf]
    %v6856 = vld [vmem:[#allocation12 + $0x8f4] sm:$0xf]
    %v6857 = vld [vmem:[#allocation12 + $0x8f8] sm:$0xf]
    %v6858 = vld [vmem:[#allocation12 + $0x8fc] sm:$0xf]
    %v6859 = vld [vmem:[#allocation12 + $0x900] sm:$0xf]
    %v6860 = vld [vmem:[#allocation12 + $0x904] sm:$0xf]
    %v6861 = vld [vmem:[#allocation12 + $0x908] sm:$0xf]
    %v6862 = vld [vmem:[#allocation12 + $0x90c] sm:$0xf]
    %v6863 = vld [vmem:[#allocation12 + $0x910] sm:$0xf]
    %v6864 = vld [vmem:[#allocation12 + $0x914] sm:$0xf]
    %v6865 = vld [vmem:[#allocation12 + $0x918] sm:$0xf]
    %v6866 = vld [vmem:[#allocation12 + $0x91c] sm:$0xf]
    %v6867 = vld [vmem:[#allocation12 + $0x920] sm:$0xf]
    %v6868 = vld [vmem:[#allocation12 + $0x924] sm:$0xf]
    %v6869 = vld [vmem:[#allocation12 + $0x928] sm:$0xf]
    %v6870 = vld [vmem:[#allocation12 + $0x92c] sm:$0xf]
    %v6871 = vld [vmem:[#allocation12 + $0x930] sm:$0xf]
    %v6872 = vld [vmem:[#allocation12 + $0x934] sm:$0xf]
    %v6873 = vld [vmem:[#allocation12 + $0x938] sm:$0xf]
    %v6874 = vld [vmem:[#allocation12 + $0x93c] sm:$0xf]
    %v6875 = vld [vmem:[#allocation12 + $0x940] sm:$0xf]
    %v6876 = vld [vmem:[#allocation12 + $0x944] sm:$0xf]
    %v6877 = vld [vmem:[#allocation12 + $0x948] sm:$0xf]
    %v6878 = vld [vmem:[#allocation12 + $0x94c] sm:$0xf]
    %v6879 = vld [vmem:[#allocation12 + $0x950] sm:$0xf]
    %v6880 = vld [vmem:[#allocation12 + $0x954] sm:$0xf]
    %v6881 = vld [vmem:[#allocation12 + $0x958] sm:$0xf]
    %v6882 = vld [vmem:[#allocation12 + $0x95c] sm:$0xf]
    %v6883 = vld [vmem:[#allocation12 + $0x960] sm:$0xf]
    %v6884 = vld [vmem:[#allocation12 + $0x964] sm:$0xf]
    %v6885 = vld [vmem:[#allocation12 + $0x968] sm:$0xf]
    %v6886 = vld [vmem:[#allocation12 + $0x96c] sm:$0xf]
    %v6887 = vld [vmem:[#allocation12 + $0x970] sm:$0xf]
    %v6888 = vld [vmem:[#allocation12 + $0x974] sm:$0xf]
    %v6889 = vld [vmem:[#allocation12 + $0x978] sm:$0xf]
    %v6890 = vld [vmem:[#allocation12 + $0x97c] sm:$0xf]
    %v6891 = vld [vmem:[#allocation12 + $0x980] sm:$0xf]
    %v6892 = vld [vmem:[#allocation12 + $0x984] sm:$0xf]
    %v6893 = vld [vmem:[#allocation12 + $0x988] sm:$0xf]
    %v6894 = vld [vmem:[#allocation12 + $0x98c] sm:$0xf]
    %v6895 = vld [vmem:[#allocation12 + $0x990] sm:$0xf]
    %v6896 = vld [vmem:[#allocation12 + $0x994] sm:$0xf]
    %v6897 = vld [vmem:[#allocation12 + $0x998] sm:$0xf]
    %v6898 = vld [vmem:[#allocation12 + $0x99c] sm:$0xf]
    %v6899 = vld [vmem:[#allocation12 + $0x9a0] sm:$0xf]
    %v6900 = vld [vmem:[#allocation12 + $0x9a4] sm:$0xf]
    %v6901 = vld [vmem:[#allocation12 + $0x9a8] sm:$0xf]
    %v6902 = vld [vmem:[#allocation12 + $0x9ac] sm:$0xf]
    %v6903 = vld [vmem:[#allocation12 + $0x9b0] sm:$0xf]
    %v6904 = vld [vmem:[#allocation12 + $0x9b4] sm:$0xf]
    %v6905 = vld [vmem:[#allocation12 + $0x9b8] sm:$0xf]
    %v6906 = vld [vmem:[#allocation12 + $0x9bc] sm:$0xf]
    %v6907 = vld [vmem:[#allocation12 + $0x9c0] sm:$0xf]
    %v6908 = vld [vmem:[#allocation12 + $0x9c4] sm:$0xf]
    %v6909 = vld [vmem:[#allocation12 + $0x9c8] sm:$0xf]
    %v6910 = vld [vmem:[#allocation12 + $0x9cc] sm:$0xf]
    %v6911 = vld [vmem:[#allocation12 + $0x9d0] sm:$0xf]
    %v6912 = vld [vmem:[#allocation12 + $0x9d4] sm:$0xf]
    %v6913 = vld [vmem:[#allocation12 + $0x9d8] sm:$0xf]
    %v6914 = vld [vmem:[#allocation12 + $0x9dc] sm:$0xf]
    %v6915 = vld [vmem:[#allocation12 + $0x9e0] sm:$0xf]
    %v6916 = vld [vmem:[#allocation12 + $0x9e4] sm:$0xf]
    %v6917 = vld [vmem:[#allocation12 + $0x9e8] sm:$0xf]
    %v6918 = vld [vmem:[#allocation12 + $0x9ec] sm:$0xf]
    %v6919 = vld [vmem:[#allocation12 + $0x9f0] sm:$0xf]
    %v6920 = vld [vmem:[#allocation12 + $0x9f4] sm:$0xf]
    %v6921 = vld [vmem:[#allocation12 + $0x9f8] sm:$0xf]
    %v6922 = vld [vmem:[#allocation12 + $0x9fc] sm:$0xf]
    %v6923 = vld [vmem:[#allocation12 + $0xa00] sm:$0xf]
    %v6924 = vld [vmem:[#allocation12 + $0xa04] sm:$0xf]
    %v6925 = vld [vmem:[#allocation12 + $0xa08] sm:$0xf]
    %v6926 = vld [vmem:[#allocation12 + $0xa0c] sm:$0xf]
    %v6927 = vld [vmem:[#allocation12 + $0xa10] sm:$0xf]
    %v6928 = vld [vmem:[#allocation12 + $0xa14] sm:$0xf]
    %v6929 = vld [vmem:[#allocation12 + $0xa18] sm:$0xf]
    %v6930 = vld [vmem:[#allocation12 + $0xa1c] sm:$0xf]
    %v6931 = vld [vmem:[#allocation12 + $0xa20] sm:$0xf]
    %v6932 = vld [vmem:[#allocation12 + $0xa24] sm:$0xf]
    %v6933 = vld [vmem:[#allocation12 + $0xa28] sm:$0xf]
    %v6934 = vld [vmem:[#allocation12 + $0xa2c] sm:$0xf]
    %v6935 = vld [vmem:[#allocation12 + $0xa30] sm:$0xf]
    %v6936 = vld [vmem:[#allocation12 + $0xa34] sm:$0xf]
    %v6937 = vld [vmem:[#allocation12 + $0xa38] sm:$0xf]
    %v6938 = vld [vmem:[#allocation12 + $0xa3c] sm:$0xf]
    %v6939 = vld [vmem:[#allocation12 + $0xa40] sm:$0xf]
    %v6940 = vld [vmem:[#allocation12 + $0xa44] sm:$0xf]
    %v6941 = vld [vmem:[#allocation12 + $0xa48] sm:$0xf]
    %v6942 = vld [vmem:[#allocation12 + $0xa4c] sm:$0xf]
    %v6943 = vld [vmem:[#allocation12 + $0xa50] sm:$0xf]
    %v6944 = vld [vmem:[#allocation12 + $0xa54] sm:$0xf]
    %v6945 = vld [vmem:[#allocation12 + $0xa58] sm:$0xf]
    %v6946 = vld [vmem:[#allocation12 + $0xa5c] sm:$0xf]
    %v6947 = vld [vmem:[#allocation12 + $0xa60] sm:$0xf]
    %v6948 = vld [vmem:[#allocation12 + $0xa64] sm:$0xf]
    %v6949 = vld [vmem:[#allocation12 + $0xa68] sm:$0xf]
    %v6950 = vld [vmem:[#allocation12 + $0xa6c] sm:$0xf]
    %v6951 = vld [vmem:[#allocation12 + $0xa70] sm:$0xf]
    %v6952 = vld [vmem:[#allocation12 + $0xa74] sm:$0xf]
    %v6953 = vld [vmem:[#allocation12 + $0xa78] sm:$0xf]
    %v6954 = vld [vmem:[#allocation12 + $0xa7c] sm:$0xf]
    %v6955 = vld [vmem:[#allocation12 + $0xa80] sm:$0xf]
    %v6956 = vld [vmem:[#allocation12 + $0xa84] sm:$0xf]
    %v6957 = vld [vmem:[#allocation12 + $0xa88] sm:$0xf]
    %v6958 = vld [vmem:[#allocation12 + $0xa8c] sm:$0xf]
    %v6959 = vld [vmem:[#allocation12 + $0xa90] sm:$0xf]
    %v6960 = vld [vmem:[#allocation12 + $0xa94] sm:$0xf]
    %v6961 = vld [vmem:[#allocation12 + $0xa98] sm:$0xf]
    %v6962 = vld [vmem:[#allocation12 + $0xa9c] sm:$0xf]
    %v6963 = vld [vmem:[#allocation12 + $0xaa0] sm:$0xf]
    %v6964 = vld [vmem:[#allocation12 + $0xaa4] sm:$0xf]
    %v6965 = vld [vmem:[#allocation12 + $0xaa8] sm:$0xf]
    %v6966 = vld [vmem:[#allocation12 + $0xaac] sm:$0xf]
    %v6967 = vld [vmem:[#allocation12 + $0xab0] sm:$0xf]
    %v6968 = vld [vmem:[#allocation12 + $0xab4] sm:$0xf]
    %v6969 = vld [vmem:[#allocation12 + $0xab8] sm:$0xf]
    %v6970 = vld [vmem:[#allocation12 + $0xabc] sm:$0xf]
    %v6971 = vld [vmem:[#allocation12 + $0xac0] sm:$0xf]
    %v6972 = vld [vmem:[#allocation12 + $0xac4] sm:$0xf]
    %v6973 = vld [vmem:[#allocation12 + $0xac8] sm:$0xf]
    %v6974 = vld [vmem:[#allocation12 + $0xacc] sm:$0xf]
    %v6975 = vld [vmem:[#allocation12 + $0xad0] sm:$0xf]
    %v6976 = vld [vmem:[#allocation12 + $0xad4] sm:$0xf]
    %v6977 = vld [vmem:[#allocation12 + $0xad8] sm:$0xf]
    %v6978 = vld [vmem:[#allocation12 + $0xadc] sm:$0xf]
    %v6979 = vld [vmem:[#allocation12 + $0xae0] sm:$0xf]
    %v6980 = vld [vmem:[#allocation12 + $0xae4] sm:$0xf]
    %v6981 = vld [vmem:[#allocation12 + $0xae8] sm:$0xf]
    %v6982 = vld [vmem:[#allocation12 + $0xaec] sm:$0xf]
    %v6983 = vld [vmem:[#allocation12 + $0xaf0] sm:$0xf]
    %v6984 = vld [vmem:[#allocation12 + $0xaf4] sm:$0xf]
    %v6985 = vld [vmem:[#allocation12 + $0xaf8] sm:$0xf]
    %v6986 = vld [vmem:[#allocation12 + $0xafc] sm:$0xf]
    %v6987 = vld [vmem:[#allocation12 + $0xb00] sm:$0xf]
    %v6988 = vld [vmem:[#allocation12 + $0xb04] sm:$0xf]
    %v6989 = vld [vmem:[#allocation12 + $0xb08] sm:$0xf]
    %v6990 = vld [vmem:[#allocation12 + $0xb0c] sm:$0xf]
    %v6991 = vld [vmem:[#allocation12 + $0xb10] sm:$0xf]
    %v6992 = vld [vmem:[#allocation12 + $0xb14] sm:$0xf]
    %v6993 = vld [vmem:[#allocation12 + $0xb18] sm:$0xf]
    %v6994 = vld [vmem:[#allocation12 + $0xb1c] sm:$0xf]
    %v6995 = vld [vmem:[#allocation12 + $0xb20] sm:$0xf]
    %v6996 = vld [vmem:[#allocation12 + $0xb24] sm:$0xf]
    %v6997 = vld [vmem:[#allocation12 + $0xb28] sm:$0xf]
    %v6998 = vld [vmem:[#allocation12 + $0xb2c] sm:$0xf]
    %v6999 = vld [vmem:[#allocation12 + $0xb30] sm:$0xf]
    %v7000 = vld [vmem:[#allocation12 + $0xb34] sm:$0xf]
    %v7001 = vld [vmem:[#allocation12 + $0xb38] sm:$0xf]
    %v7002 = vld [vmem:[#allocation12 + $0xb3c] sm:$0xf]
    %v7003 = vld [vmem:[#allocation12 + $0xb40] sm:$0xf]
    %v7004 = vld [vmem:[#allocation12 + $0xb44] sm:$0xf]
    %v7005 = vld [vmem:[#allocation12 + $0xb48] sm:$0xf]
    %v7006 = vld [vmem:[#allocation12 + $0xb4c] sm:$0xf]
    %v7007 = vld [vmem:[#allocation12 + $0xb50] sm:$0xf]
    %v7008 = vld [vmem:[#allocation12 + $0xb54] sm:$0xf]
    %v7009 = vld [vmem:[#allocation12 + $0xb58] sm:$0xf]
    %v7010 = vld [vmem:[#allocation12 + $0xb5c] sm:$0xf]
    %v7011 = vld [vmem:[#allocation12 + $0xb60] sm:$0xf]
    %v7012 = vld [vmem:[#allocation12 + $0xb64] sm:$0xf]
    %v7013 = vld [vmem:[#allocation12 + $0xb68] sm:$0xf]
    %v7014 = vld [vmem:[#allocation12 + $0xb6c] sm:$0xf]
    %v7015 = vld [vmem:[#allocation12 + $0xb70] sm:$0xf]
    %v7016 = vld [vmem:[#allocation12 + $0xb74] sm:$0xf]
    %v7017 = vld [vmem:[#allocation12 + $0xb78] sm:$0xf]
    %v7018 = vld [vmem:[#allocation12 + $0xb7c] sm:$0xf]
    %v7019 = vld [vmem:[#allocation12 + $0xb80] sm:$0xf]
    %v7020 = vld [vmem:[#allocation12 + $0xb84] sm:$0xf]
    %v7021 = vld [vmem:[#allocation12 + $0xb88] sm:$0xf]
    %v7022 = vld [vmem:[#allocation12 + $0xb8c] sm:$0xf]
    %v7023 = vld [vmem:[#allocation12 + $0xb90] sm:$0xf]
    %v7024 = vld [vmem:[#allocation12 + $0xb94] sm:$0xf]
    %v7025 = vld [vmem:[#allocation12 + $0xb98] sm:$0xf]
    %v7026 = vld [vmem:[#allocation12 + $0xb9c] sm:$0xf]
    %v7027 = vld [vmem:[#allocation12 + $0xba0] sm:$0xf]
    %v7028 = vld [vmem:[#allocation12 + $0xba4] sm:$0xf]
    %v7029 = vld [vmem:[#allocation12 + $0xba8] sm:$0xf]
    %v7030 = vld [vmem:[#allocation12 + $0xbac] sm:$0xf]
    %v7031 = vld [vmem:[#allocation12 + $0xbb0] sm:$0xf]
    %v7032 = vld [vmem:[#allocation12 + $0xbb4] sm:$0xf]
    %v7033 = vld [vmem:[#allocation12 + $0xbb8] sm:$0xf]
    %v7034 = vld [vmem:[#allocation12 + $0xbbc] sm:$0xf]
    %v7035 = vld [vmem:[#allocation12 + $0xbc0] sm:$0xf]
    %v7036 = vld [vmem:[#allocation12 + $0xbc4] sm:$0xf]
    %v7037 = vld [vmem:[#allocation12 + $0xbc8] sm:$0xf]
    %v7038 = vld [vmem:[#allocation12 + $0xbcc] sm:$0xf]
    %v7039 = vld [vmem:[#allocation12 + $0xbd0] sm:$0xf]
    %v7040 = vld [vmem:[#allocation12 + $0xbd4] sm:$0xf]
    %v7041 = vld [vmem:[#allocation12 + $0xbd8] sm:$0xf]
    %v7042 = vld [vmem:[#allocation12 + $0xbdc] sm:$0xf]
    %v7043 = vld [vmem:[#allocation12 + $0xbe0] sm:$0xf]
    %v7044 = vld [vmem:[#allocation12 + $0xbe4] sm:$0xf]
    %v7045 = vld [vmem:[#allocation12 + $0xbe8] sm:$0xf]
    %v7046 = vld [vmem:[#allocation12 + $0xbec] sm:$0xf]
    %v7047 = vld [vmem:[#allocation12 + $0xbf0] sm:$0xf]
    %v7048 = vld [vmem:[#allocation12 + $0xbf4] sm:$0xf]
    %v7049 = vld [vmem:[#allocation12 + $0xbf8] sm:$0xf]
    %v7050 = vld [vmem:[#allocation12 + $0xbfc] sm:$0xf]
    %v7051 = vld [vmem:[#allocation12 + $0xc00] sm:$0xf]
    %v7052 = vld [vmem:[#allocation12 + $0xc04] sm:$0xf]
    %v7053 = vld [vmem:[#allocation12 + $0xc08] sm:$0xf]
    %v7054 = vld [vmem:[#allocation12 + $0xc0c] sm:$0xf]
    %v7055 = vld [vmem:[#allocation12 + $0xc10] sm:$0xf]
    %v7056 = vld [vmem:[#allocation12 + $0xc14] sm:$0xf]
    %v7057 = vld [vmem:[#allocation12 + $0xc18] sm:$0xf]
    %v7058 = vld [vmem:[#allocation12 + $0xc1c] sm:$0xf]
    %v7059 = vld [vmem:[#allocation12 + $0xc20] sm:$0xf]
    %v7060 = vld [vmem:[#allocation12 + $0xc24] sm:$0xf]
    %v7061 = vld [vmem:[#allocation12 + $0xc28] sm:$0xf]
    %v7062 = vld [vmem:[#allocation12 + $0xc2c] sm:$0xf]
    %v7063 = vld [vmem:[#allocation12 + $0xc30] sm:$0xf]
    %v7064 = vld [vmem:[#allocation12 + $0xc34] sm:$0xf]
    %v7065 = vld [vmem:[#allocation12 + $0xc38] sm:$0xf]
    %v7066 = vld [vmem:[#allocation12 + $0xc3c] sm:$0xf]
    %v7067 = vld [vmem:[#allocation12 + $0xc40] sm:$0xf]
    %v7068 = vld [vmem:[#allocation12 + $0xc44] sm:$0xf]
    %v7069 = vld [vmem:[#allocation12 + $0xc48] sm:$0xf]
    %v7070 = vld [vmem:[#allocation12 + $0xc4c] sm:$0xf]
    %v7071 = vld [vmem:[#allocation12 + $0xc50] sm:$0xf]
    %v7072 = vld [vmem:[#allocation12 + $0xc54] sm:$0xf]
    %v7073 = vld [vmem:[#allocation12 + $0xc58] sm:$0xf]
    %v7074 = vld [vmem:[#allocation12 + $0xc5c] sm:$0xf]
    %v7075 = vld [vmem:[#allocation12 + $0xc60] sm:$0xf]
    %v7076 = vld [vmem:[#allocation12 + $0xc64] sm:$0xf]
    %v7077 = vld [vmem:[#allocation12 + $0xc68] sm:$0xf]
    %v7078 = vld [vmem:[#allocation12 + $0xc6c] sm:$0xf]
    %v7079 = vld [vmem:[#allocation12 + $0xc70] sm:$0xf]
    %v7080 = vld [vmem:[#allocation12 + $0xc74] sm:$0xf]
    %v7081 = vld [vmem:[#allocation12 + $0xc78] sm:$0xf]
    %v7082 = vld [vmem:[#allocation12 + $0xc7c] sm:$0xf]
    %v7083 = vld [vmem:[#allocation12 + $0xc80] sm:$0xf]
    %v7084 = vld [vmem:[#allocation12 + $0xc84] sm:$0xf]
    %v7085 = vld [vmem:[#allocation12 + $0xc88] sm:$0xf]
    %v7086 = vld [vmem:[#allocation12 + $0xc8c] sm:$0xf]
    %v7087 = vld [vmem:[#allocation12 + $0xc90] sm:$0xf]
    %v7088 = vld [vmem:[#allocation12 + $0xc94] sm:$0xf]
    %v7089 = vld [vmem:[#allocation12 + $0xc98] sm:$0xf]
    %v7090 = vld [vmem:[#allocation12 + $0xc9c] sm:$0xf]
    %v7091 = vld [vmem:[#allocation12 + $0xca0] sm:$0xf]
    %v7092 = vld [vmem:[#allocation12 + $0xca4] sm:$0xf]
    %v7093 = vld [vmem:[#allocation12 + $0xca8] sm:$0xf]
    %v7094 = vld [vmem:[#allocation12 + $0xcac] sm:$0xf]
    %v7095 = vld [vmem:[#allocation12 + $0xcb0] sm:$0xf]
    %v7096 = vld [vmem:[#allocation12 + $0xcb4] sm:$0xf]
    %v7097 = vld [vmem:[#allocation12 + $0xcb8] sm:$0xf]
    %v7098 = vld [vmem:[#allocation12 + $0xcbc] sm:$0xf]
    %v7099 = vld [vmem:[#allocation12 + $0xcc0] sm:$0xf]
    %v7100 = vld [vmem:[#allocation12 + $0xcc4] sm:$0xf]
    %v7101 = vld [vmem:[#allocation12 + $0xcc8] sm:$0xf]
    %v7102 = vld [vmem:[#allocation12 + $0xccc] sm:$0xf]
    %v7103 = vld [vmem:[#allocation12 + $0xcd0] sm:$0xf]
    %v7104 = vld [vmem:[#allocation12 + $0xcd4] sm:$0xf]
    %v7105 = vld [vmem:[#allocation12 + $0xcd8] sm:$0xf]
    %v7106 = vld [vmem:[#allocation12 + $0xcdc] sm:$0xf]
    %v7107 = vld [vmem:[#allocation12 + $0xce0] sm:$0xf]
    %v7108 = vld [vmem:[#allocation12 + $0xce4] sm:$0xf]
    %v7109 = vld [vmem:[#allocation12 + $0xce8] sm:$0xf]
    %v7110 = vld [vmem:[#allocation12 + $0xcec] sm:$0xf]
    %v7111 = vld [vmem:[#allocation12 + $0xcf0] sm:$0xf]
    %v7112 = vld [vmem:[#allocation12 + $0xcf4] sm:$0xf]
    %v7113 = vld [vmem:[#allocation12 + $0xcf8] sm:$0xf]
    %v7114 = vld [vmem:[#allocation12 + $0xcfc] sm:$0xf]
    %v7115 = vld [vmem:[#allocation12 + $0xd00] sm:$0xf]
    %v7116 = vld [vmem:[#allocation12 + $0xd04] sm:$0xf]
    %v7117 = vld [vmem:[#allocation12 + $0xd08] sm:$0xf]
    %v7118 = vld [vmem:[#allocation12 + $0xd0c] sm:$0xf]
    %v7119 = vld [vmem:[#allocation12 + $0xd10] sm:$0xf]
    %v7120 = vld [vmem:[#allocation12 + $0xd14] sm:$0xf]
    %v7121 = vld [vmem:[#allocation12 + $0xd18] sm:$0xf]
    %v7122 = vld [vmem:[#allocation12 + $0xd1c] sm:$0xf]
    %v7123 = vld [vmem:[#allocation12 + $0xd20] sm:$0xf]
    %v7124 = vld [vmem:[#allocation12 + $0xd24] sm:$0xf]
    %v7125 = vld [vmem:[#allocation12 + $0xd28] sm:$0xf]
    %v7126 = vld [vmem:[#allocation12 + $0xd2c] sm:$0xf]
    %v7127 = vld [vmem:[#allocation12 + $0xd30] sm:$0xf]
    %v7128 = vld [vmem:[#allocation12 + $0xd34] sm:$0xf]
    %v7129 = vld [vmem:[#allocation12 + $0xd38] sm:$0xf]
    %v7130 = vld [vmem:[#allocation12 + $0xd3c] sm:$0xf]
    %v7131 = vld [vmem:[#allocation12 + $0xd40] sm:$0xf]
    %v7132 = vld [vmem:[#allocation12 + $0xd44] sm:$0xf]
    %v7133 = vld [vmem:[#allocation12 + $0xd48] sm:$0xf]
    %v7134 = vld [vmem:[#allocation12 + $0xd4c] sm:$0xf]
    %v7135 = vld [vmem:[#allocation12 + $0xd50] sm:$0xf]
    %v7136 = vld [vmem:[#allocation12 + $0xd54] sm:$0xf]
    %v7137 = vld [vmem:[#allocation12 + $0xd58] sm:$0xf]
    %v7138 = vld [vmem:[#allocation12 + $0xd5c] sm:$0xf]
    %v7139 = vld [vmem:[#allocation12 + $0xd60] sm:$0xf]
    %v7140 = vld [vmem:[#allocation12 + $0xd64] sm:$0xf]
    %v7141 = vld [vmem:[#allocation12 + $0xd68] sm:$0xf]
    %v7142 = vld [vmem:[#allocation12 + $0xd6c] sm:$0xf]
    %v7143 = vld [vmem:[#allocation12 + $0xd70] sm:$0xf]
    %v7144 = vld [vmem:[#allocation12 + $0xd74] sm:$0xf]
    %v7145 = vld [vmem:[#allocation12 + $0xd78] sm:$0xf]
    %v7146 = vld [vmem:[#allocation12 + $0xd7c] sm:$0xf]
    %v7147 = vld [vmem:[#allocation12 + $0xd80] sm:$0xf]
    %v7148 = vld [vmem:[#allocation12 + $0xd84] sm:$0xf]
    %v7149 = vld [vmem:[#allocation12 + $0xd88] sm:$0xf]
    %v7150 = vld [vmem:[#allocation12 + $0xd8c] sm:$0xf]
    %v7151 = vld [vmem:[#allocation12 + $0xd90] sm:$0xf]
    %v7152 = vld [vmem:[#allocation12 + $0xd94] sm:$0xf]
    %v7153 = vld [vmem:[#allocation12 + $0xd98] sm:$0xf]
    %v7154 = vld [vmem:[#allocation12 + $0xd9c] sm:$0xf]
    %v7155 = vld [vmem:[#allocation12 + $0xda0] sm:$0xf]
    %v7156 = vld [vmem:[#allocation12 + $0xda4] sm:$0xf]
    %v7157 = vld [vmem:[#allocation12 + $0xda8] sm:$0xf]
    %v7158 = vld [vmem:[#allocation12 + $0xdac] sm:$0xf]
    %v7159 = vld [vmem:[#allocation12 + $0xdb0] sm:$0xf]
    %v7160 = vld [vmem:[#allocation12 + $0xdb4] sm:$0xf]
    %v7161 = vld [vmem:[#allocation12 + $0xdb8] sm:$0xf]
    %v7162 = vld [vmem:[#allocation12 + $0xdbc] sm:$0xf]
    %v7163 = vld [vmem:[#allocation12 + $0xdc0] sm:$0xf]
    %v7164 = vld [vmem:[#allocation12 + $0xdc4] sm:$0xf]
    %v7165 = vld [vmem:[#allocation12 + $0xdc8] sm:$0xf]
    %v7166 = vld [vmem:[#allocation12 + $0xdcc] sm:$0xf]
    %v7167 = vld [vmem:[#allocation12 + $0xdd0] sm:$0xf]
    %v7168 = vld [vmem:[#allocation12 + $0xdd4] sm:$0xf]
    %v7169 = vld [vmem:[#allocation12 + $0xdd8] sm:$0xf]
    %v7170 = vld [vmem:[#allocation12 + $0xddc] sm:$0xf]
    %v7171 = vld [vmem:[#allocation12 + $0xde0] sm:$0xf]
    %v7172 = vld [vmem:[#allocation12 + $0xde4] sm:$0xf]
    %v7173 = vld [vmem:[#allocation12 + $0xde8] sm:$0xf]
    %v7174 = vld [vmem:[#allocation12 + $0xdec] sm:$0xf]
    %v7175 = vld [vmem:[#allocation12 + $0xdf0] sm:$0xf]
    %v7176 = vld [vmem:[#allocation12 + $0xdf4] sm:$0xf]
    %v7177 = vld [vmem:[#allocation12 + $0xdf8] sm:$0xf]
    %v7178 = vld [vmem:[#allocation12 + $0xdfc] sm:$0xf]
    %v7179 = vld [vmem:[#allocation12 + $0xe00] sm:$0xf]
    %v7180 = vld [vmem:[#allocation12 + $0xe04] sm:$0xf]
    %v7181 = vld [vmem:[#allocation12 + $0xe08] sm:$0xf]
    %v7182 = vld [vmem:[#allocation12 + $0xe0c] sm:$0xf]
    %v7183 = vld [vmem:[#allocation12 + $0xe10] sm:$0xf]
    %v7184 = vld [vmem:[#allocation12 + $0xe14] sm:$0xf]
    %v7185 = vld [vmem:[#allocation12 + $0xe18] sm:$0xf]
    %v7186 = vld [vmem:[#allocation12 + $0xe1c] sm:$0xf]
    %v7187 = vld [vmem:[#allocation12 + $0xe20] sm:$0xf]
    %v7188 = vld [vmem:[#allocation12 + $0xe24] sm:$0xf]
    %v7189 = vld [vmem:[#allocation12 + $0xe28] sm:$0xf]
    %v7190 = vld [vmem:[#allocation12 + $0xe2c] sm:$0xf]
    %v7191 = vld [vmem:[#allocation12 + $0xe30] sm:$0xf]
    %v7192 = vld [vmem:[#allocation12 + $0xe34] sm:$0xf]
    %v7193 = vld [vmem:[#allocation12 + $0xe38] sm:$0xf]
    %v7194 = vld [vmem:[#allocation12 + $0xe3c] sm:$0xf]
    %v7195 = vld [vmem:[#allocation12 + $0xe40] sm:$0xf]
    %v7196 = vld [vmem:[#allocation12 + $0xe44] sm:$0xf]
    %v7197 = vld [vmem:[#allocation12 + $0xe48] sm:$0xf]
    %v7198 = vld [vmem:[#allocation12 + $0xe4c] sm:$0xf]
    %v7199 = vld [vmem:[#allocation12 + $0xe50] sm:$0xf]
    %v7200 = vld [vmem:[#allocation12 + $0xe54] sm:$0xf]
    %v7201 = vld [vmem:[#allocation12 + $0xe58] sm:$0xf]
    %v7202 = vld [vmem:[#allocation12 + $0xe5c] sm:$0xf]
    %v7203 = vld [vmem:[#allocation12 + $0xe60] sm:$0xf]
    %v7204 = vld [vmem:[#allocation12 + $0xe64] sm:$0xf]
    %v7205 = vld [vmem:[#allocation12 + $0xe68] sm:$0xf]
    %v7206 = vld [vmem:[#allocation12 + $0xe6c] sm:$0xf]
    %v7207 = vld [vmem:[#allocation12 + $0xe70] sm:$0xf]
    %v7208 = vld [vmem:[#allocation12 + $0xe74] sm:$0xf]
    %v7209 = vld [vmem:[#allocation12 + $0xe78] sm:$0xf]
    %v7210 = vld [vmem:[#allocation12 + $0xe7c] sm:$0xf]
    %v7211 = vld [vmem:[#allocation12 + $0xe80] sm:$0xf]
    %v7212 = vld [vmem:[#allocation12 + $0xe84] sm:$0xf]
    %v7213 = vld [vmem:[#allocation12 + $0xe88] sm:$0xf]
    %v7214 = vld [vmem:[#allocation12 + $0xe8c] sm:$0xf]
    %v7215 = vld [vmem:[#allocation12 + $0xe90] sm:$0xf]
    %v7216 = vld [vmem:[#allocation12 + $0xe94] sm:$0xf]
    %v7217 = vld [vmem:[#allocation12 + $0xe98] sm:$0xf]
    %v7218 = vld [vmem:[#allocation12 + $0xe9c] sm:$0xf]
    %v7219 = vld [vmem:[#allocation12 + $0xea0] sm:$0xf]
    %v7220 = vld [vmem:[#allocation12 + $0xea4] sm:$0xf]
    %v7221 = vld [vmem:[#allocation12 + $0xea8] sm:$0xf]
    %v7222 = vld [vmem:[#allocation12 + $0xeac] sm:$0xf]
    %v7223 = vld [vmem:[#allocation12 + $0xeb0] sm:$0xf]
    %v7224 = vld [vmem:[#allocation12 + $0xeb4] sm:$0xf]
    %v7225 = vld [vmem:[#allocation12 + $0xeb8] sm:$0xf]
    %v7226 = vld [vmem:[#allocation12 + $0xebc] sm:$0xf]
    %v7227 = vld [vmem:[#allocation12 + $0xec0] sm:$0xf]
    %v7228 = vld [vmem:[#allocation12 + $0xec4] sm:$0xf]
    %v7229 = vld [vmem:[#allocation12 + $0xec8] sm:$0xf]
    %v7230 = vld [vmem:[#allocation12 + $0xecc] sm:$0xf]
    %v7231 = vld [vmem:[#allocation12 + $0xed0] sm:$0xf]
    %v7232 = vld [vmem:[#allocation12 + $0xed4] sm:$0xf]
    %v7233 = vld [vmem:[#allocation12 + $0xed8] sm:$0xf]
    %v7234 = vld [vmem:[#allocation12 + $0xedc] sm:$0xf]
    %v7235 = vld [vmem:[#allocation12 + $0xee0] sm:$0xf]
    %v7236 = vld [vmem:[#allocation12 + $0xee4] sm:$0xf]
    %v7237 = vld [vmem:[#allocation12 + $0xee8] sm:$0xf]
    %v7238 = vld [vmem:[#allocation12 + $0xeec] sm:$0xf]
    %v7239 = vld [vmem:[#allocation12 + $0xef0] sm:$0xf]
    %v7240 = vld [vmem:[#allocation12 + $0xef4] sm:$0xf]
    %v7241 = vld [vmem:[#allocation12 + $0xef8] sm:$0xf]
    %v7242 = vld [vmem:[#allocation12 + $0xefc] sm:$0xf]
    %v7243 = vld [vmem:[#allocation12 + $0xf00] sm:$0xf]
    %v7244 = vld [vmem:[#allocation12 + $0xf04] sm:$0xf]
    %v7245 = vld [vmem:[#allocation12 + $0xf08] sm:$0xf]
    %v7246 = vld [vmem:[#allocation12 + $0xf0c] sm:$0xf]
    %v7247 = vld [vmem:[#allocation12 + $0xf10] sm:$0xf]
    %v7248 = vld [vmem:[#allocation12 + $0xf14] sm:$0xf]
    %v7249 = vld [vmem:[#allocation12 + $0xf18] sm:$0xf]
    %v7250 = vld [vmem:[#allocation12 + $0xf1c] sm:$0xf]
    %v7251 = vld [vmem:[#allocation12 + $0xf20] sm:$0xf]
    %v7252 = vld [vmem:[#allocation12 + $0xf24] sm:$0xf]
    %v7253 = vld [vmem:[#allocation12 + $0xf28] sm:$0xf]
    %v7254 = vld [vmem:[#allocation12 + $0xf2c] sm:$0xf]
    %v7255 = vld [vmem:[#allocation12 + $0xf30] sm:$0xf]
    %v7256 = vld [vmem:[#allocation12 + $0xf34] sm:$0xf]
    %v7257 = vld [vmem:[#allocation12 + $0xf38] sm:$0xf]
    %v7258 = vld [vmem:[#allocation12 + $0xf3c] sm:$0xf]
    %v7259 = vld [vmem:[#allocation12 + $0xf40] sm:$0xf]
    %v7260 = vld [vmem:[#allocation12 + $0xf44] sm:$0xf]
    %v7261 = vld [vmem:[#allocation12 + $0xf48] sm:$0xf]
    %v7262 = vld [vmem:[#allocation12 + $0xf4c] sm:$0xf]
    %v7263 = vld [vmem:[#allocation12 + $0xf50] sm:$0xf]
    %v7264 = vld [vmem:[#allocation12 + $0xf54] sm:$0xf]
    %v7265 = vld [vmem:[#allocation12 + $0xf58] sm:$0xf]
    %v7266 = vld [vmem:[#allocation12 + $0xf5c] sm:$0xf]
    %v7267 = vld [vmem:[#allocation12 + $0xf60] sm:$0xf]
    %v7268 = vld [vmem:[#allocation12 + $0xf64] sm:$0xf]
    %v7269 = vld [vmem:[#allocation12 + $0xf68] sm:$0xf]
    %v7270 = vld [vmem:[#allocation12 + $0xf6c] sm:$0xf]
    %v7271 = vld [vmem:[#allocation12 + $0xf70] sm:$0xf]
    %v7272 = vld [vmem:[#allocation12 + $0xf74] sm:$0xf]
    %v7273 = vld [vmem:[#allocation12 + $0xf78] sm:$0xf]
    %v7274 = vld [vmem:[#allocation12 + $0xf7c] sm:$0xf]
    %v7275 = vld [vmem:[#allocation12 + $0xf80] sm:$0xf]
    %v7276 = vld [vmem:[#allocation12 + $0xf84] sm:$0xf]
    %v7277 = vld [vmem:[#allocation12 + $0xf88] sm:$0xf]
    %v7278 = vld [vmem:[#allocation12 + $0xf8c] sm:$0xf]
    %v7279 = vld [vmem:[#allocation12 + $0xf90] sm:$0xf]
    %v7280 = vld [vmem:[#allocation12 + $0xf94] sm:$0xf]
    %v7281 = vld [vmem:[#allocation12 + $0xf98] sm:$0xf]
    %v7282 = vld [vmem:[#allocation12 + $0xf9c] sm:$0xf]
    %v7283 = vld [vmem:[#allocation12 + $0xfa0] sm:$0xf]
    %v7284 = vld [vmem:[#allocation12 + $0xfa4] sm:$0xf]
    %v7285 = vld [vmem:[#allocation12 + $0xfa8] sm:$0xf]
    %v7286 = vld [vmem:[#allocation12 + $0xfac] sm:$0xf]
    %v7287 = vld [vmem:[#allocation12 + $0xfb0] sm:$0xf]
    %v7288 = vld [vmem:[#allocation12 + $0xfb4] sm:$0xf]
    %v7289 = vld [vmem:[#allocation12 + $0xfb8] sm:$0xf]
    %v7290 = vld [vmem:[#allocation12 + $0xfbc] sm:$0xf]
    %v7291 = vld [vmem:[#allocation12 + $0xfc0] sm:$0xf]
    %v7292 = vld [vmem:[#allocation12 + $0xfc4] sm:$0xf]
    %v7293 = vld [vmem:[#allocation12 + $0xfc8] sm:$0xf]
    %v7294 = vld [vmem:[#allocation12 + $0xfcc] sm:$0xf]
    %v7295 = vld [vmem:[#allocation12 + $0xfd0] sm:$0xf]
    %v7296 = vld [vmem:[#allocation12 + $0xfd4] sm:$0xf]
    %v7297 = vld [vmem:[#allocation12 + $0xfd8] sm:$0xf]
    %v7298 = vld [vmem:[#allocation12 + $0xfdc] sm:$0xf]
    %v7299 = vld [vmem:[#allocation12 + $0xfe0] sm:$0xf]
    %v7300 = vld [vmem:[#allocation12 + $0xfe4] sm:$0xf]
    %v7301 = vld [vmem:[#allocation12 + $0xfe8] sm:$0xf]
    %v7302 = vld [vmem:[#allocation12 + $0xfec] sm:$0xf]
    %v7303 = vld [vmem:[#allocation12 + $0xff0] sm:$0xf]
    %v7304 = vld [vmem:[#allocation12 + $0xff4] sm:$0xf]
    %v7305 = vld [vmem:[#allocation12 + $0xff8] sm:$0xf]
    %v7306 = vld [vmem:[#allocation12 + $0xffc] sm:$0xf]
    %v7307 = vld [vmem:[#allocation12 + $0x1000] sm:$0xf]
    %v7308 = vld [vmem:[#allocation12 + $0x1004] sm:$0xf]
    %v7309 = vld [vmem:[#allocation12 + $0x1008] sm:$0xf]
    %v7310 = vld [vmem:[#allocation12 + $0x100c] sm:$0xf]
    %v7311 = vld [vmem:[#allocation12 + $0x1010] sm:$0xf]
    %v7312 = vld [vmem:[#allocation12 + $0x1014] sm:$0xf]
    %v7313 = vld [vmem:[#allocation12 + $0x1018] sm:$0xf]
    %v7314 = vld [vmem:[#allocation12 + $0x101c] sm:$0xf]
    %v7315 = vld [vmem:[#allocation12 + $0x1020] sm:$0xf]
    %v7316 = vld [vmem:[#allocation12 + $0x1024] sm:$0xf]
    %v7317 = vld [vmem:[#allocation12 + $0x1028] sm:$0xf]
    %v7318 = vld [vmem:[#allocation12 + $0x102c] sm:$0xf]
    %v7319 = vld [vmem:[#allocation12 + $0x1030] sm:$0xf]
    %v7320 = vld [vmem:[#allocation12 + $0x1034] sm:$0xf]
    %v7321 = vld [vmem:[#allocation12 + $0x1038] sm:$0xf]
    %v7322 = vld [vmem:[#allocation12 + $0x103c] sm:$0xf]
    %v7323 = vld [vmem:[#allocation12 + $0x1040] sm:$0xf]
    %v7324 = vld [vmem:[#allocation12 + $0x1044] sm:$0xf]
    %v7325 = vld [vmem:[#allocation12 + $0x1048] sm:$0xf]
    %v7326 = vld [vmem:[#allocation12 + $0x104c] sm:$0xf]
    %v7327 = vld [vmem:[#allocation12 + $0x1050] sm:$0xf]
    %v7328 = vld [vmem:[#allocation12 + $0x1054] sm:$0xf]
    %v7329 = vld [vmem:[#allocation12 + $0x1058] sm:$0xf]
    %v7330 = vld [vmem:[#allocation12 + $0x105c] sm:$0xf]
    %v7331 = vld [vmem:[#allocation12 + $0x1060] sm:$0xf]
    %v7332 = vld [vmem:[#allocation12 + $0x1064] sm:$0xf]
    %v7333 = vld [vmem:[#allocation12 + $0x1068] sm:$0xf]
    %v7334 = vld [vmem:[#allocation12 + $0x106c] sm:$0xf]
    %v7335 = vld [vmem:[#allocation12 + $0x1070] sm:$0xf]
    %v7336 = vld [vmem:[#allocation12 + $0x1074] sm:$0xf]
    %v7337 = vld [vmem:[#allocation12 + $0x1078] sm:$0xf]
    %v7338 = vld [vmem:[#allocation12 + $0x107c] sm:$0xf]
    %v7339 = vld [vmem:[#allocation12 + $0x1080] sm:$0xf]
    %v7340 = vld [vmem:[#allocation12 + $0x1084] sm:$0xf]
    %v7341 = vld [vmem:[#allocation12 + $0x1088] sm:$0xf]
    %v7342 = vld [vmem:[#allocation12 + $0x108c] sm:$0xf]
    %v7343 = vld [vmem:[#allocation12 + $0x1090] sm:$0xf]
    %v7344 = vld [vmem:[#allocation12 + $0x1094] sm:$0xf]
    %v7345 = vld [vmem:[#allocation12 + $0x1098] sm:$0xf]
    %v7346 = vld [vmem:[#allocation12 + $0x109c] sm:$0xf]
    %v7347 = vld [vmem:[#allocation12 + $0x10a0] sm:$0xf]
    %v7348 = vld [vmem:[#allocation12 + $0x10a4] sm:$0xf]
    %v7349 = vld [vmem:[#allocation12 + $0x10a8] sm:$0xf]
    %v7350 = vld [vmem:[#allocation12 + $0x10ac] sm:$0xf]
    %v7351 = vld [vmem:[#allocation12 + $0x10b0] sm:$0xf]
    %v7352 = vld [vmem:[#allocation12 + $0x10b4] sm:$0xf]
    %v7353 = vld [vmem:[#allocation12 + $0x10b8] sm:$0xf]
    %v7354 = vld [vmem:[#allocation12 + $0x10bc] sm:$0xf]
    %v7355 = vld [vmem:[#allocation12 + $0x10c0] sm:$0xf]
    %v7356 = vld [vmem:[#allocation12 + $0x10c4] sm:$0xf]
    %v7357 = vld [vmem:[#allocation12 + $0x10c8] sm:$0xf]
    %v7358 = vld [vmem:[#allocation12 + $0x10cc] sm:$0xf]
    %v7359 = vld [vmem:[#allocation12 + $0x10d0] sm:$0xf]
    %v7360 = vld [vmem:[#allocation12 + $0x10d4] sm:$0xf]
    %v7361 = vld [vmem:[#allocation12 + $0x10d8] sm:$0xf]
    %v7362 = vld [vmem:[#allocation12 + $0x10dc] sm:$0xf]
    %v7363 = vld [vmem:[#allocation12 + $0x10e0] sm:$0xf]
    %v7364 = vld [vmem:[#allocation12 + $0x10e4] sm:$0xf]
    %v7365 = vld [vmem:[#allocation12 + $0x10e8] sm:$0xf]
    %v7366 = vld [vmem:[#allocation12 + $0x10ec] sm:$0xf]
    %v7367 = vld [vmem:[#allocation12 + $0x10f0] sm:$0xf]
    %v7368 = vld [vmem:[#allocation12 + $0x10f4] sm:$0xf]
    %v7369 = vld [vmem:[#allocation12 + $0x10f8] sm:$0xf]
    %v7370 = vld [vmem:[#allocation12 + $0x10fc] sm:$0xf]
    %v7371 = vld [vmem:[#allocation12 + $0x1100] sm:$0xf]
    %v7372 = vld [vmem:[#allocation12 + $0x1104] sm:$0xf]
    %v7373 = vld [vmem:[#allocation12 + $0x1108] sm:$0xf]
    %v7374 = vld [vmem:[#allocation12 + $0x110c] sm:$0xf]
    %v7375 = vld [vmem:[#allocation12 + $0x1110] sm:$0xf]
    %v7376 = vld [vmem:[#allocation12 + $0x1114] sm:$0xf]
    %v7377 = vld [vmem:[#allocation12 + $0x1118] sm:$0xf]
    %v7378 = vld [vmem:[#allocation12 + $0x111c] sm:$0xf]
    %v7379 = vld [vmem:[#allocation12 + $0x1120] sm:$0xf]
    %v7380 = vld [vmem:[#allocation12 + $0x1124] sm:$0xf]
    %v7381 = vld [vmem:[#allocation12 + $0x1128] sm:$0xf]
    %v7382 = vld [vmem:[#allocation12 + $0x112c] sm:$0xf]
    %v7383 = vld [vmem:[#allocation12 + $0x1130] sm:$0xf]
    %v7384 = vld [vmem:[#allocation12 + $0x1134] sm:$0xf]
    %v7385 = vld [vmem:[#allocation12 + $0x1138] sm:$0xf]
    %v7386 = vld [vmem:[#allocation12 + $0x113c] sm:$0xf]
    %v7387 = vld [vmem:[#allocation12 + $0x1140] sm:$0xf]
    %v7388 = vld [vmem:[#allocation12 + $0x1144] sm:$0xf]
    %v7389 = vld [vmem:[#allocation12 + $0x1148] sm:$0xf]
    %v7390 = vld [vmem:[#allocation12 + $0x114c] sm:$0xf]
    %v7391 = vld [vmem:[#allocation12 + $0x1150] sm:$0xf]
    %v7392 = vld [vmem:[#allocation12 + $0x1154] sm:$0xf]
    %v7393 = vld [vmem:[#allocation12 + $0x1158] sm:$0xf]
    %v7394 = vld [vmem:[#allocation12 + $0x115c] sm:$0xf]
    %v7395 = vld [vmem:[#allocation12 + $0x1160] sm:$0xf]
    %v7396 = vld [vmem:[#allocation12 + $0x1164] sm:$0xf]
    %v7397 = vld [vmem:[#allocation12 + $0x1168] sm:$0xf]
    %v7398 = vld [vmem:[#allocation12 + $0x116c] sm:$0xf]
    %v7399 = vld [vmem:[#allocation12 + $0x1170] sm:$0xf]
    %v7400 = vld [vmem:[#allocation12 + $0x1174] sm:$0xf]
    %v7401 = vld [vmem:[#allocation12 + $0x1178] sm:$0xf]
    %v7402 = vld [vmem:[#allocation12 + $0x117c] sm:$0xf]
    %v7403 = vld [vmem:[#allocation12 + $0x1180] sm:$0xf]
    %v7404 = vld [vmem:[#allocation12 + $0x1184] sm:$0xf]
    %v7405 = vld [vmem:[#allocation12 + $0x1188] sm:$0xf]
    %v7406 = vld [vmem:[#allocation12 + $0x118c] sm:$0xf]
    %v7407 = vld [vmem:[#allocation12 + $0x1190] sm:$0xf]
    %v7408 = vld [vmem:[#allocation12 + $0x1194] sm:$0xf]
    %v7409 = vld [vmem:[#allocation12 + $0x1198] sm:$0xf]
    %v7410 = vld [vmem:[#allocation12 + $0x119c] sm:$0xf]
    %v7411 = vld [vmem:[#allocation12 + $0x11a0] sm:$0xf]
    %v7412 = vld [vmem:[#allocation12 + $0x11a4] sm:$0xf]
    %v7413 = vld [vmem:[#allocation12 + $0x11a8] sm:$0xf]
    %v7414 = vld [vmem:[#allocation12 + $0x11ac] sm:$0xf]
    %v7415 = vld [vmem:[#allocation12 + $0x11b0] sm:$0xf]
    %v7416 = vld [vmem:[#allocation12 + $0x11b4] sm:$0xf]
    %v7417 = vld [vmem:[#allocation12 + $0x11b8] sm:$0xf]
    %v7418 = vld [vmem:[#allocation12 + $0x11bc] sm:$0xf]
    %v7419 = vld [vmem:[#allocation12 + $0x11c0] sm:$0xf]
    %v7420 = vld [vmem:[#allocation12 + $0x11c4] sm:$0xf]
    %v7421 = vld [vmem:[#allocation12 + $0x11c8] sm:$0xf]
    %v7422 = vld [vmem:[#allocation12 + $0x11cc] sm:$0xf]
    %v7423 = vld [vmem:[#allocation12 + $0x11d0] sm:$0xf]
    %v7424 = vld [vmem:[#allocation12 + $0x11d4] sm:$0xf]
    %v7425 = vld [vmem:[#allocation12 + $0x11d8] sm:$0xf]
    %v7426 = vld [vmem:[#allocation12 + $0x11dc] sm:$0xf]
    %v7427 = vld [vmem:[#allocation12 + $0x11e0] sm:$0xf]
    %v7428 = vld [vmem:[#allocation12 + $0x11e4] sm:$0xf]
    %v7429 = vld [vmem:[#allocation12 + $0x11e8] sm:$0xf]
    %v7430 = vld [vmem:[#allocation12 + $0x11ec] sm:$0xf]
    %v7431 = vld [vmem:[#allocation12 + $0x11f0] sm:$0xf]
    %v7432 = vld [vmem:[#allocation12 + $0x11f4] sm:$0xf]
    %v7433 = vld [vmem:[#allocation12 + $0x11f8] sm:$0xf]
    %v7434 = vld [vmem:[#allocation12 + $0x11fc] sm:$0xf]
    %v7435 = vld [vmem:[#allocation12 + $0x1200] sm:$0xf]
    %v7436 = vld [vmem:[#allocation12 + $0x1204] sm:$0xf]
    %v7437 = vld [vmem:[#allocation12 + $0x1208] sm:$0xf]
    %v7438 = vld [vmem:[#allocation12 + $0x120c] sm:$0xf]
    %v7439 = vld [vmem:[#allocation12 + $0x1210] sm:$0xf]
    %v7440 = vld [vmem:[#allocation12 + $0x1214] sm:$0xf]
    %v7441 = vld [vmem:[#allocation12 + $0x1218] sm:$0xf]
    %v7442 = vld [vmem:[#allocation12 + $0x121c] sm:$0xf]
    %v7443 = vld [vmem:[#allocation12 + $0x1220] sm:$0xf]
    %v7444 = vld [vmem:[#allocation12 + $0x1224] sm:$0xf]
    %v7445 = vld [vmem:[#allocation12 + $0x1228] sm:$0xf]
    %v7446 = vld [vmem:[#allocation12 + $0x122c] sm:$0xf]
    %v7447 = vld [vmem:[#allocation12 + $0x1230] sm:$0xf]
    %v7448 = vld [vmem:[#allocation12 + $0x1234] sm:$0xf]
    %v7449 = vld [vmem:[#allocation12 + $0x1238] sm:$0xf]
    %v7450 = vld [vmem:[#allocation12 + $0x123c] sm:$0xf]
    %v7451 = vld [vmem:[#allocation12 + $0x1240] sm:$0xf]
    %v7452 = vld [vmem:[#allocation12 + $0x1244] sm:$0xf]
    %v7453 = vld [vmem:[#allocation12 + $0x1248] sm:$0xf]
    %v7454 = vld [vmem:[#allocation12 + $0x124c] sm:$0xf]
    %v7455 = vld [vmem:[#allocation12 + $0x1250] sm:$0xf]
    %v7456 = vld [vmem:[#allocation12 + $0x1254] sm:$0xf]
    %v7457 = vld [vmem:[#allocation12 + $0x1258] sm:$0xf]
    %v7458 = vld [vmem:[#allocation12 + $0x125c] sm:$0xf]
    %v7459 = vld [vmem:[#allocation12 + $0x1260] sm:$0xf]
    %v7460 = vld [vmem:[#allocation12 + $0x1264] sm:$0xf]
    %v7461 = vld [vmem:[#allocation12 + $0x1268] sm:$0xf]
    %v7462 = vld [vmem:[#allocation12 + $0x126c] sm:$0xf]
    %v7463 = vld [vmem:[#allocation12 + $0x1270] sm:$0xf]
    %v7464 = vld [vmem:[#allocation12 + $0x1274] sm:$0xf]
    %v7465 = vld [vmem:[#allocation12 + $0x1278] sm:$0xf]
    %v7466 = vld [vmem:[#allocation12 + $0x127c] sm:$0xf]
    %v7467 = vld [vmem:[#allocation12 + $0x1280] sm:$0xf]
    %v7468 = vld [vmem:[#allocation12 + $0x1284] sm:$0xf]
    %v7469 = vld [vmem:[#allocation12 + $0x1288] sm:$0xf]
    %v7470 = vld [vmem:[#allocation12 + $0x128c] sm:$0xf]
    %v7471 = vld [vmem:[#allocation12 + $0x1290] sm:$0xf]
    %v7472 = vld [vmem:[#allocation12 + $0x1294] sm:$0xf]
    %v7473 = vld [vmem:[#allocation12 + $0x1298] sm:$0xf]
    %v7474 = vld [vmem:[#allocation12 + $0x129c] sm:$0xf]
    %v7475 = vld [vmem:[#allocation12 + $0x12a0] sm:$0xf]
    %v7476 = vld [vmem:[#allocation12 + $0x12a4] sm:$0xf]
    %v7477 = vld [vmem:[#allocation12 + $0x12a8] sm:$0xf]
    %v7478 = vld [vmem:[#allocation12 + $0x12ac] sm:$0xf]
    %v7479 = vld [vmem:[#allocation12 + $0x12b0] sm:$0xf]
    %v7480 = vld [vmem:[#allocation12 + $0x12b4] sm:$0xf]
    %v7481 = vld [vmem:[#allocation12 + $0x12b8] sm:$0xf]
    %v7482 = vld [vmem:[#allocation12 + $0x12bc] sm:$0xf]
    %v7483 = vld [vmem:[#allocation12 + $0x12c0] sm:$0xf]
    %v7484 = vld [vmem:[#allocation12 + $0x12c4] sm:$0xf]
    %v7485 = vld [vmem:[#allocation12 + $0x12c8] sm:$0xf]
    %v7486 = vld [vmem:[#allocation12 + $0x12cc] sm:$0xf]
    %v7487 = vld [vmem:[#allocation12 + $0x12d0] sm:$0xf]
    %v7488 = vld [vmem:[#allocation12 + $0x12d4] sm:$0xf]
    %v7489 = vld [vmem:[#allocation12 + $0x12d8] sm:$0xf]
    %v7490 = vld [vmem:[#allocation12 + $0x12dc] sm:$0xf]
    %v7491 = vld [vmem:[#allocation12 + $0x12e0] sm:$0xf]
    %v7492 = vld [vmem:[#allocation12 + $0x12e4] sm:$0xf]
    %v7493 = vld [vmem:[#allocation12 + $0x12e8] sm:$0xf]
    %v7494 = vld [vmem:[#allocation12 + $0x12ec] sm:$0xf]
    %v7495 = vld [vmem:[#allocation12 + $0x12f0] sm:$0xf]
    %v7496 = vld [vmem:[#allocation12 + $0x12f4] sm:$0xf]
    %v7497 = vld [vmem:[#allocation12 + $0x12f8] sm:$0xf]
    %v7498 = vld [vmem:[#allocation12 + $0x12fc] sm:$0xf]
    %v7499 = vld [vmem:[#allocation12 + $0x1300] sm:$0xf]
    %v7500 = vld [vmem:[#allocation12 + $0x1304] sm:$0xf]
    %v7501 = vld [vmem:[#allocation12 + $0x1308] sm:$0xf]
    %v7502 = vld [vmem:[#allocation12 + $0x130c] sm:$0xf]
    %v7503 = vld [vmem:[#allocation12 + $0x1310] sm:$0xf]
    %v7504 = vld [vmem:[#allocation12 + $0x1314] sm:$0xf]
    %v7505 = vld [vmem:[#allocation12 + $0x1318] sm:$0xf]
    %v7506 = vld [vmem:[#allocation12 + $0x131c] sm:$0xf]
    %v7507 = vld [vmem:[#allocation12 + $0x1320] sm:$0xf]
    %v7508 = vld [vmem:[#allocation12 + $0x1324] sm:$0xf]
    %v7509 = vld [vmem:[#allocation12 + $0x1328] sm:$0xf]
    %v7510 = vld [vmem:[#allocation12 + $0x132c] sm:$0xf]
    %v7511 = vld [vmem:[#allocation12 + $0x1330] sm:$0xf]
    %v7512 = vld [vmem:[#allocation12 + $0x1334] sm:$0xf]
    %v7513 = vld [vmem:[#allocation12 + $0x1338] sm:$0xf]
    %v7514 = vld [vmem:[#allocation12 + $0x133c] sm:$0xf]
    %v7515 = vld [vmem:[#allocation12 + $0x1340] sm:$0xf]
    %v7516 = vld [vmem:[#allocation12 + $0x1344] sm:$0xf]
    %v7517 = vld [vmem:[#allocation12 + $0x1348] sm:$0xf]
    %v7518 = vld [vmem:[#allocation12 + $0x134c] sm:$0xf]
    %v7519 = vld [vmem:[#allocation12 + $0x1350] sm:$0xf]
    %v7520 = vld [vmem:[#allocation12 + $0x1354] sm:$0xf]
    %v7521 = vld [vmem:[#allocation12 + $0x1358] sm:$0xf]
    %v7522 = vld [vmem:[#allocation12 + $0x135c] sm:$0xf]
    %v7523 = vld [vmem:[#allocation12 + $0x1360] sm:$0xf]
    %v7524 = vld [vmem:[#allocation12 + $0x1364] sm:$0xf]
    %v7525 = vld [vmem:[#allocation12 + $0x1368] sm:$0xf]
    %v7526 = vld [vmem:[#allocation12 + $0x136c] sm:$0xf]
    %v7527 = vld [vmem:[#allocation12 + $0x1370] sm:$0xf]
    %v7528 = vld [vmem:[#allocation12 + $0x1374] sm:$0xf]
    %v7529 = vld [vmem:[#allocation12 + $0x1378] sm:$0xf]
    %v7530 = vld [vmem:[#allocation12 + $0x137c] sm:$0xf]
    %v7531 = vld [vmem:[#allocation12 + $0x1380] sm:$0xf]
    %v7532 = vld [vmem:[#allocation12 + $0x1384] sm:$0xf]
    %v7533 = vld [vmem:[#allocation12 + $0x1388] sm:$0xf]
    %v7534 = vld [vmem:[#allocation12 + $0x138c] sm:$0xf]
    %v7535 = vld [vmem:[#allocation12 + $0x1390] sm:$0xf]
    %v7536 = vld [vmem:[#allocation12 + $0x1394] sm:$0xf]
    %v7537 = vld [vmem:[#allocation12 + $0x1398] sm:$0xf]
    %v7538 = vld [vmem:[#allocation12 + $0x139c] sm:$0xf]
    %v7539 = vld [vmem:[#allocation12 + $0x13a0] sm:$0xf]
    %v7540 = vld [vmem:[#allocation12 + $0x13a4] sm:$0xf]
    %v7541 = vld [vmem:[#allocation12 + $0x13a8] sm:$0xf]
    %v7542 = vld [vmem:[#allocation12 + $0x13ac] sm:$0xf]
    %v7543 = vld [vmem:[#allocation12 + $0x13b0] sm:$0xf]
    %v7544 = vld [vmem:[#allocation12 + $0x13b4] sm:$0xf]
    %v7545 = vld [vmem:[#allocation12 + $0x13b8] sm:$0xf]
    %v7546 = vld [vmem:[#allocation12 + $0x13bc] sm:$0xf]
    %v7547 = vld [vmem:[#allocation12 + $0x13c0] sm:$0xf]
    %v7548 = vld [vmem:[#allocation12 + $0x13c4] sm:$0xf]
    %v7549 = vld [vmem:[#allocation12 + $0x13c8] sm:$0xf]
    %v7550 = vld [vmem:[#allocation12 + $0x13cc] sm:$0xf]
    %v7551 = vld [vmem:[#allocation12 + $0x13d0] sm:$0xf]
    %v7552 = vld [vmem:[#allocation12 + $0x13d4] sm:$0xf]
    %v7553 = vld [vmem:[#allocation12 + $0x13d8] sm:$0xf]
    %v7554 = vld [vmem:[#allocation12 + $0x13dc] sm:$0xf]
    %v7555 = vld [vmem:[#allocation12 + $0x13e0] sm:$0xf]
    %v7556 = vld [vmem:[#allocation12 + $0x13e4] sm:$0xf]
    %v7557 = vld [vmem:[#allocation12 + $0x13e8] sm:$0xf]
    %v7558 = vld [vmem:[#allocation12 + $0x13ec] sm:$0xf]
    %v7559 = vld [vmem:[#allocation12 + $0x13f0] sm:$0xf]
    %v7560 = vld [vmem:[#allocation12 + $0x13f4] sm:$0xf]
    %v7561 = vld [vmem:[#allocation12 + $0x13f8] sm:$0xf]
    %v7562 = vld [vmem:[#allocation12 + $0x13fc] sm:$0xf]
    %v8843 = vunpack.c.l.b16 %v6283
    %v8844 = vunpack.c.l.b16 %v6284
    %v8845 = vunpack.c.l.b16 %v6285
    %v8846 = vunpack.c.l.b16 %v6286
    %v8847 = vunpack.c.l.b16 %v6287
    %v8848 = vunpack.c.l.b16 %v6288
    %v8849 = vunpack.c.l.b16 %v6289
    %v8850 = vunpack.c.l.b16 %v6290
    %v8851 = vunpack.c.l.b16 %v6291
    %v8852 = vunpack.c.l.b16 %v6292
    %v8853 = vunpack.c.l.b16 %v6293
    %v8854 = vunpack.c.l.b16 %v6294
    %v8855 = vunpack.c.l.b16 %v6295
    %v8856 = vunpack.c.l.b16 %v6296
    %v8857 = vunpack.c.l.b16 %v6297
    %v8858 = vunpack.c.l.b16 %v6298
    %v8859 = vunpack.c.l.b16 %v6299
    %v8860 = vunpack.c.l.b16 %v6300
    %v8861 = vunpack.c.l.b16 %v6301
    %v8862 = vunpack.c.l.b16 %v6302
    %v8863 = vunpack.c.l.b16 %v6303
    %v8864 = vunpack.c.l.b16 %v6304
    %v8865 = vunpack.c.l.b16 %v6305
    %v8866 = vunpack.c.l.b16 %v6306
    %v8867 = vunpack.c.l.b16 %v6307
    %v8868 = vunpack.c.l.b16 %v6308
    %v8869 = vunpack.c.l.b16 %v6309
    %v8870 = vunpack.c.l.b16 %v6310
    %v8871 = vunpack.c.l.b16 %v6311
    %v8872 = vunpack.c.l.b16 %v6312
    %v8873 = vunpack.c.l.b16 %v6313
    %v8874 = vunpack.c.l.b16 %v6314
    %v8875 = vunpack.c.l.b16 %v6315
    %v8876 = vunpack.c.l.b16 %v6316
    %v8877 = vunpack.c.l.b16 %v6317
    %v8878 = vunpack.c.l.b16 %v6318
    %v8879 = vunpack.c.l.b16 %v6319
    %v8880 = vunpack.c.l.b16 %v6320
    %v8881 = vunpack.c.l.b16 %v6321
    %v8882 = vunpack.c.l.b16 %v6322
    %v8883 = vunpack.c.l.b16 %v6323
    %v8884 = vunpack.c.l.b16 %v6324
    %v8885 = vunpack.c.l.b16 %v6325
    %v8886 = vunpack.c.l.b16 %v6326
    %v8887 = vunpack.c.l.b16 %v6327
    %v8888 = vunpack.c.l.b16 %v6328
    %v8889 = vunpack.c.l.b16 %v6329
    %v8890 = vunpack.c.l.b16 %v6330
    %v8891 = vunpack.c.l.b16 %v6331
    %v8892 = vunpack.c.l.b16 %v6332
    %v8893 = vunpack.c.l.b16 %v6333
    %v8894 = vunpack.c.l.b16 %v6334
    %v8895 = vunpack.c.l.b16 %v6335
    %v8896 = vunpack.c.l.b16 %v6336
    %v8897 = vunpack.c.l.b16 %v6337
    %v8898 = vunpack.c.l.b16 %v6338
    %v8899 = vunpack.c.l.b16 %v6339
    %v8900 = vunpack.c.l.b16 %v6340
    %v8901 = vunpack.c.l.b16 %v6341
    %v8902 = vunpack.c.l.b16 %v6342
    %v8903 = vunpack.c.l.b16 %v6343
    %v8904 = vunpack.c.l.b16 %v6344
    %v8905 = vunpack.c.l.b16 %v6345
    %v8906 = vunpack.c.l.b16 %v6346
    %v8907 = vunpack.c.l.b16 %v6347
    %v8908 = vunpack.c.l.b16 %v6348
    %v8909 = vunpack.c.l.b16 %v6349
    %v8910 = vunpack.c.l.b16 %v6350
    %v8911 = vunpack.c.l.b16 %v6351
    %v8912 = vunpack.c.l.b16 %v6352
    %v8913 = vunpack.c.l.b16 %v6353
    %v8914 = vunpack.c.l.b16 %v6354
    %v8915 = vunpack.c.l.b16 %v6355
    %v8916 = vunpack.c.l.b16 %v6356
    %v8917 = vunpack.c.l.b16 %v6357
    %v8918 = vunpack.c.l.b16 %v6358
    %v8919 = vunpack.c.l.b16 %v6359
    %v8920 = vunpack.c.l.b16 %v6360
    %v8921 = vunpack.c.l.b16 %v6361
    %v8922 = vunpack.c.l.b16 %v6362
    %v8923 = vunpack.c.l.b16 %v6363
    %v8924 = vunpack.c.l.b16 %v6364
    %v8925 = vunpack.c.l.b16 %v6365
    %v8926 = vunpack.c.l.b16 %v6366
    %v8927 = vunpack.c.l.b16 %v6367
    %v8928 = vunpack.c.l.b16 %v6368
    %v8929 = vunpack.c.l.b16 %v6369
    %v8930 = vunpack.c.l.b16 %v6370
    %v8931 = vunpack.c.l.b16 %v6371
    %v8932 = vunpack.c.l.b16 %v6372
    %v8933 = vunpack.c.l.b16 %v6373
    %v8934 = vunpack.c.l.b16 %v6374
    %v8935 = vunpack.c.l.b16 %v6375
    %v8936 = vunpack.c.l.b16 %v6376
    %v8937 = vunpack.c.l.b16 %v6377
    %v8938 = vunpack.c.l.b16 %v6378
    %v8939 = vunpack.c.l.b16 %v6379
    %v8940 = vunpack.c.l.b16 %v6380
    %v8941 = vunpack.c.l.b16 %v6381
    %v8942 = vunpack.c.l.b16 %v6382
    %v8943 = vunpack.c.l.b16 %v6383
    %v8944 = vunpack.c.l.b16 %v6384
    %v8945 = vunpack.c.l.b16 %v6385
    %v8946 = vunpack.c.l.b16 %v6386
    %v8947 = vunpack.c.l.b16 %v6387
    %v8948 = vunpack.c.l.b16 %v6388
    %v8949 = vunpack.c.l.b16 %v6389
    %v8950 = vunpack.c.l.b16 %v6390
    %v8951 = vunpack.c.l.b16 %v6391
    %v8952 = vunpack.c.l.b16 %v6392
    %v8953 = vunpack.c.l.b16 %v6393
    %v8954 = vunpack.c.l.b16 %v6394
    %v8955 = vunpack.c.l.b16 %v6395
    %v8956 = vunpack.c.l.b16 %v6396
    %v8957 = vunpack.c.l.b16 %v6397
    %v8958 = vunpack.c.l.b16 %v6398
    %v8959 = vunpack.c.l.b16 %v6399
    %v8960 = vunpack.c.l.b16 %v6400
    %v8961 = vunpack.c.l.b16 %v6401
    %v8962 = vunpack.c.l.b16 %v6402
    %v8963 = vunpack.c.l.b16 %v6403
    %v8964 = vunpack.c.l.b16 %v6404
    %v8965 = vunpack.c.l.b16 %v6405
    %v8966 = vunpack.c.l.b16 %v6406
    %v8967 = vunpack.c.l.b16 %v6407
    %v8968 = vunpack.c.l.b16 %v6408
    %v8969 = vunpack.c.l.b16 %v6409
    %v8970 = vunpack.c.l.b16 %v6410
    %v8971 = vunpack.c.l.b16 %v6411
    %v8972 = vunpack.c.l.b16 %v6412
    %v8973 = vunpack.c.l.b16 %v6413
    %v8974 = vunpack.c.l.b16 %v6414
    %v8975 = vunpack.c.l.b16 %v6415
    %v8976 = vunpack.c.l.b16 %v6416
    %v8977 = vunpack.c.l.b16 %v6417
    %v8978 = vunpack.c.l.b16 %v6418
    %v8979 = vunpack.c.l.b16 %v6419
    %v8980 = vunpack.c.l.b16 %v6420
    %v8981 = vunpack.c.l.b16 %v6421
    %v8982 = vunpack.c.l.b16 %v6422
    %v8983 = vunpack.c.l.b16 %v6423
    %v8984 = vunpack.c.l.b16 %v6424
    %v8985 = vunpack.c.l.b16 %v6425
    %v8986 = vunpack.c.l.b16 %v6426
    %v8987 = vunpack.c.l.b16 %v6427
    %v8988 = vunpack.c.l.b16 %v6428
    %v8989 = vunpack.c.l.b16 %v6429
    %v8990 = vunpack.c.l.b16 %v6430
    %v8991 = vunpack.c.l.b16 %v6431
    %v8992 = vunpack.c.l.b16 %v6432
    %v8993 = vunpack.c.l.b16 %v6433
    %v8994 = vunpack.c.l.b16 %v6434
    %v8995 = vunpack.c.l.b16 %v6435
    %v8996 = vunpack.c.l.b16 %v6436
    %v8997 = vunpack.c.l.b16 %v6437
    %v8998 = vunpack.c.l.b16 %v6438
    %v8999 = vunpack.c.l.b16 %v6439
    %v9000 = vunpack.c.l.b16 %v6440
    %v9001 = vunpack.c.l.b16 %v6441
    %v9002 = vunpack.c.l.b16 %v6442
    %v9003 = vunpack.c.l.b16 %v6443
    %v9004 = vunpack.c.l.b16 %v6444
    %v9005 = vunpack.c.l.b16 %v6445
    %v9006 = vunpack.c.l.b16 %v6446
    %v9007 = vunpack.c.l.b16 %v6447
    %v9008 = vunpack.c.l.b16 %v6448
    %v9009 = vunpack.c.l.b16 %v6449
    %v9010 = vunpack.c.l.b16 %v6450
    %v9011 = vunpack.c.l.b16 %v6451
    %v9012 = vunpack.c.l.b16 %v6452
    %v9013 = vunpack.c.l.b16 %v6453
    %v9014 = vunpack.c.l.b16 %v6454
    %v9015 = vunpack.c.l.b16 %v6455
    %v9016 = vunpack.c.l.b16 %v6456
    %v9017 = vunpack.c.l.b16 %v6457
    %v9018 = vunpack.c.l.b16 %v6458
    %v9019 = vunpack.c.l.b16 %v6459
    %v9020 = vunpack.c.l.b16 %v6460
    %v9021 = vunpack.c.l.b16 %v6461
    %v9022 = vunpack.c.l.b16 %v6462
    %v9023 = vunpack.c.l.b16 %v6463
    %v9024 = vunpack.c.l.b16 %v6464
    %v9025 = vunpack.c.l.b16 %v6465
    %v9026 = vunpack.c.l.b16 %v6466
    %v9027 = vunpack.c.l.b16 %v6467
    %v9028 = vunpack.c.l.b16 %v6468
    %v9029 = vunpack.c.l.b16 %v6469
    %v9030 = vunpack.c.l.b16 %v6470
    %v9031 = vunpack.c.l.b16 %v6471
    %v9032 = vunpack.c.l.b16 %v6472
    %v9033 = vunpack.c.l.b16 %v6473
    %v9034 = vunpack.c.l.b16 %v6474
    %v9035 = vunpack.c.l.b16 %v6475
    %v9036 = vunpack.c.l.b16 %v6476
    %v9037 = vunpack.c.l.b16 %v6477
    %v9038 = vunpack.c.l.b16 %v6478
    %v9039 = vunpack.c.l.b16 %v6479
    %v9040 = vunpack.c.l.b16 %v6480
    %v9041 = vunpack.c.l.b16 %v6481
    %v9042 = vunpack.c.l.b16 %v6482
    %v9043 = vunpack.c.l.b16 %v6483
    %v9044 = vunpack.c.l.b16 %v6484
    %v9045 = vunpack.c.l.b16 %v6485
    %v9046 = vunpack.c.l.b16 %v6486
    %v9047 = vunpack.c.l.b16 %v6487
    %v9048 = vunpack.c.l.b16 %v6488
    %v9049 = vunpack.c.l.b16 %v6489
    %v9050 = vunpack.c.l.b16 %v6490
    %v9051 = vunpack.c.l.b16 %v6491
    %v9052 = vunpack.c.l.b16 %v6492
    %v9053 = vunpack.c.l.b16 %v6493
    %v9054 = vunpack.c.l.b16 %v6494
    %v9055 = vunpack.c.l.b16 %v6495
    %v9056 = vunpack.c.l.b16 %v6496
    %v9057 = vunpack.c.l.b16 %v6497
    %v9058 = vunpack.c.l.b16 %v6498
    %v9059 = vunpack.c.l.b16 %v6499
    %v9060 = vunpack.c.l.b16 %v6500
    %v9061 = vunpack.c.l.b16 %v6501
    %v9062 = vunpack.c.l.b16 %v6502
    %v9063 = vunpack.c.l.b16 %v6503
    %v9064 = vunpack.c.l.b16 %v6504
    %v9065 = vunpack.c.l.b16 %v6505
    %v9066 = vunpack.c.l.b16 %v6506
    %v9067 = vunpack.c.l.b16 %v6507
    %v9068 = vunpack.c.l.b16 %v6508
    %v9069 = vunpack.c.l.b16 %v6509
    %v9070 = vunpack.c.l.b16 %v6510
    %v9071 = vunpack.c.l.b16 %v6511
    %v9072 = vunpack.c.l.b16 %v6512
    %v9073 = vunpack.c.l.b16 %v6513
    %v9074 = vunpack.c.l.b16 %v6514
    %v9075 = vunpack.c.l.b16 %v6515
    %v9076 = vunpack.c.l.b16 %v6516
    %v9077 = vunpack.c.l.b16 %v6517
    %v9078 = vunpack.c.l.b16 %v6518
    %v9079 = vunpack.c.l.b16 %v6519
    %v9080 = vunpack.c.l.b16 %v6520
    %v9081 = vunpack.c.l.b16 %v6521
    %v9082 = vunpack.c.l.b16 %v6522
    %v9083 = vunpack.c.l.b16 %v6523
    %v9084 = vunpack.c.l.b16 %v6524
    %v9085 = vunpack.c.l.b16 %v6525
    %v9086 = vunpack.c.l.b16 %v6526
    %v9087 = vunpack.c.l.b16 %v6527
    %v9088 = vunpack.c.l.b16 %v6528
    %v9089 = vunpack.c.l.b16 %v6529
    %v9090 = vunpack.c.l.b16 %v6530
    %v9091 = vunpack.c.l.b16 %v6531
    %v9092 = vunpack.c.l.b16 %v6532
    %v9093 = vunpack.c.l.b16 %v6533
    %v9094 = vunpack.c.l.b16 %v6534
    %v9095 = vunpack.c.l.b16 %v6535
    %v9096 = vunpack.c.l.b16 %v6536
    %v9097 = vunpack.c.l.b16 %v6537
    %v9098 = vunpack.c.l.b16 %v6538
    %v9099 = vunpack.c.l.b16 %v6539
    %v9100 = vunpack.c.l.b16 %v6540
    %v9101 = vunpack.c.l.b16 %v6541
    %v9102 = vunpack.c.l.b16 %v6542
    %v9103 = vunpack.c.l.b16 %v6543
    %v9104 = vunpack.c.l.b16 %v6544
    %v9105 = vunpack.c.l.b16 %v6545
    %v9106 = vunpack.c.l.b16 %v6546
    %v9107 = vunpack.c.l.b16 %v6547
    %v9108 = vunpack.c.l.b16 %v6548
    %v9109 = vunpack.c.l.b16 %v6549
    %v9110 = vunpack.c.l.b16 %v6550
    %v9111 = vunpack.c.l.b16 %v6551
    %v9112 = vunpack.c.l.b16 %v6552
    %v9113 = vunpack.c.l.b16 %v6553
    %v9114 = vunpack.c.l.b16 %v6554
    %v9115 = vunpack.c.l.b16 %v6555
    %v9116 = vunpack.c.l.b16 %v6556
    %v9117 = vunpack.c.l.b16 %v6557
    %v9118 = vunpack.c.l.b16 %v6558
    %v9119 = vunpack.c.l.b16 %v6559
    %v9120 = vunpack.c.l.b16 %v6560
    %v9121 = vunpack.c.l.b16 %v6561
    %v9122 = vunpack.c.l.b16 %v6562
    %v9123 = vunpack.c.l.b16 %v6563
    %v9124 = vunpack.c.l.b16 %v6564
    %v9125 = vunpack.c.l.b16 %v6565
    %v9126 = vunpack.c.l.b16 %v6566
    %v9127 = vunpack.c.l.b16 %v6567
    %v9128 = vunpack.c.l.b16 %v6568
    %v9129 = vunpack.c.l.b16 %v6569
    %v9130 = vunpack.c.l.b16 %v6570
    %v9131 = vunpack.c.l.b16 %v6571
    %v9132 = vunpack.c.l.b16 %v6572
    %v9133 = vunpack.c.l.b16 %v6573
    %v9134 = vunpack.c.l.b16 %v6574
    %v9135 = vunpack.c.l.b16 %v6575
    %v9136 = vunpack.c.l.b16 %v6576
    %v9137 = vunpack.c.l.b16 %v6577
    %v9138 = vunpack.c.l.b16 %v6578
    %v9139 = vunpack.c.l.b16 %v6579
    %v9140 = vunpack.c.l.b16 %v6580
    %v9141 = vunpack.c.l.b16 %v6581
    %v9142 = vunpack.c.l.b16 %v6582
    %v9143 = vunpack.c.l.b16 %v6583
    %v9144 = vunpack.c.l.b16 %v6584
    %v9145 = vunpack.c.l.b16 %v6585
    %v9146 = vunpack.c.l.b16 %v6586
    %v9147 = vunpack.c.l.b16 %v6587
    %v9148 = vunpack.c.l.b16 %v6588
    %v9149 = vunpack.c.l.b16 %v6589
    %v9150 = vunpack.c.l.b16 %v6590
    %v9151 = vunpack.c.l.b16 %v6591
    %v9152 = vunpack.c.l.b16 %v6592
    %v9153 = vunpack.c.l.b16 %v6593
    %v9154 = vunpack.c.l.b16 %v6594
    %v9155 = vunpack.c.l.b16 %v6595
    %v9156 = vunpack.c.l.b16 %v6596
    %v9157 = vunpack.c.l.b16 %v6597
    %v9158 = vunpack.c.l.b16 %v6598
    %v9159 = vunpack.c.l.b16 %v6599
    %v9160 = vunpack.c.l.b16 %v6600
    %v9161 = vunpack.c.l.b16 %v6601
    %v9162 = vunpack.c.l.b16 %v6602
    %v9163 = vunpack.c.l.b16 %v6603
    %v9164 = vunpack.c.l.b16 %v6604
    %v9165 = vunpack.c.l.b16 %v6605
    %v9166 = vunpack.c.l.b16 %v6606
    %v9167 = vunpack.c.l.b16 %v6607
    %v9168 = vunpack.c.l.b16 %v6608
    %v9169 = vunpack.c.l.b16 %v6609
    %v9170 = vunpack.c.l.b16 %v6610
    %v9171 = vunpack.c.l.b16 %v6611
    %v9172 = vunpack.c.l.b16 %v6612
    %v9173 = vunpack.c.l.b16 %v6613
    %v9174 = vunpack.c.l.b16 %v6614
    %v9175 = vunpack.c.l.b16 %v6615
    %v9176 = vunpack.c.l.b16 %v6616
    %v9177 = vunpack.c.l.b16 %v6617
    %v9178 = vunpack.c.l.b16 %v6618
    %v9179 = vunpack.c.l.b16 %v6619
    %v9180 = vunpack.c.l.b16 %v6620
    %v9181 = vunpack.c.l.b16 %v6621
    %v9182 = vunpack.c.l.b16 %v6622
    %v9183 = vunpack.c.l.b16 %v6623
    %v9184 = vunpack.c.l.b16 %v6624
    %v9185 = vunpack.c.l.b16 %v6625
    %v9186 = vunpack.c.l.b16 %v6626
    %v9187 = vunpack.c.l.b16 %v6627
    %v9188 = vunpack.c.l.b16 %v6628
    %v9189 = vunpack.c.l.b16 %v6629
    %v9190 = vunpack.c.l.b16 %v6630
    %v9191 = vunpack.c.l.b16 %v6631
    %v9192 = vunpack.c.l.b16 %v6632
    %v9193 = vunpack.c.l.b16 %v6633
    %v9194 = vunpack.c.l.b16 %v6634
    %v9195 = vunpack.c.l.b16 %v6635
    %v9196 = vunpack.c.l.b16 %v6636
    %v9197 = vunpack.c.l.b16 %v6637
    %v9198 = vunpack.c.l.b16 %v6638
    %v9199 = vunpack.c.l.b16 %v6639
    %v9200 = vunpack.c.l.b16 %v6640
    %v9201 = vunpack.c.l.b16 %v6641
    %v9202 = vunpack.c.l.b16 %v6642
    %v9203 = vunpack.c.l.b16 %v6643
    %v9204 = vunpack.c.l.b16 %v6644
    %v9205 = vunpack.c.l.b16 %v6645
    %v9206 = vunpack.c.l.b16 %v6646
    %v9207 = vunpack.c.l.b16 %v6647
    %v9208 = vunpack.c.l.b16 %v6648
    %v9209 = vunpack.c.l.b16 %v6649
    %v9210 = vunpack.c.l.b16 %v6650
    %v9211 = vunpack.c.l.b16 %v6651
    %v9212 = vunpack.c.l.b16 %v6652
    %v9213 = vunpack.c.l.b16 %v6653
    %v9214 = vunpack.c.l.b16 %v6654
    %v9215 = vunpack.c.l.b16 %v6655
    %v9216 = vunpack.c.l.b16 %v6656
    %v9217 = vunpack.c.l.b16 %v6657
    %v9218 = vunpack.c.l.b16 %v6658
    %v9219 = vunpack.c.l.b16 %v6659
    %v9220 = vunpack.c.l.b16 %v6660
    %v9221 = vunpack.c.l.b16 %v6661
    %v9222 = vunpack.c.l.b16 %v6662
    %v9223 = vunpack.c.l.b16 %v6663
    %v9224 = vunpack.c.l.b16 %v6664
    %v9225 = vunpack.c.l.b16 %v6665
    %v9226 = vunpack.c.l.b16 %v6666
    %v9227 = vunpack.c.l.b16 %v6667
    %v9228 = vunpack.c.l.b16 %v6668
    %v9229 = vunpack.c.l.b16 %v6669
    %v9230 = vunpack.c.l.b16 %v6670
    %v9231 = vunpack.c.l.b16 %v6671
    %v9232 = vunpack.c.l.b16 %v6672
    %v9233 = vunpack.c.l.b16 %v6673
    %v9234 = vunpack.c.l.b16 %v6674
    %v9235 = vunpack.c.l.b16 %v6675
    %v9236 = vunpack.c.l.b16 %v6676
    %v9237 = vunpack.c.l.b16 %v6677
    %v9238 = vunpack.c.l.b16 %v6678
    %v9239 = vunpack.c.l.b16 %v6679
    %v9240 = vunpack.c.l.b16 %v6680
    %v9241 = vunpack.c.l.b16 %v6681
    %v9242 = vunpack.c.l.b16 %v6682
    %v9243 = vunpack.c.l.b16 %v6683
    %v9244 = vunpack.c.l.b16 %v6684
    %v9245 = vunpack.c.l.b16 %v6685
    %v9246 = vunpack.c.l.b16 %v6686
    %v9247 = vunpack.c.l.b16 %v6687
    %v9248 = vunpack.c.l.b16 %v6688
    %v9249 = vunpack.c.l.b16 %v6689
    %v9250 = vunpack.c.l.b16 %v6690
    %v9251 = vunpack.c.l.b16 %v6691
    %v9252 = vunpack.c.l.b16 %v6692
    %v9253 = vunpack.c.l.b16 %v6693
    %v9254 = vunpack.c.l.b16 %v6694
    %v9255 = vunpack.c.l.b16 %v6695
    %v9256 = vunpack.c.l.b16 %v6696
    %v9257 = vunpack.c.l.b16 %v6697
    %v9258 = vunpack.c.l.b16 %v6698
    %v9259 = vunpack.c.l.b16 %v6699
    %v9260 = vunpack.c.l.b16 %v6700
    %v9261 = vunpack.c.l.b16 %v6701
    %v9262 = vunpack.c.l.b16 %v6702
    %v9263 = vunpack.c.l.b16 %v6703
    %v9264 = vunpack.c.l.b16 %v6704
    %v9265 = vunpack.c.l.b16 %v6705
    %v9266 = vunpack.c.l.b16 %v6706
    %v9267 = vunpack.c.l.b16 %v6707
    %v9268 = vunpack.c.l.b16 %v6708
    %v9269 = vunpack.c.l.b16 %v6709
    %v9270 = vunpack.c.l.b16 %v6710
    %v9271 = vunpack.c.l.b16 %v6711
    %v9272 = vunpack.c.l.b16 %v6712
    %v9273 = vunpack.c.l.b16 %v6713
    %v9274 = vunpack.c.l.b16 %v6714
    %v9275 = vunpack.c.l.b16 %v6715
    %v9276 = vunpack.c.l.b16 %v6716
    %v9277 = vunpack.c.l.b16 %v6717
    %v9278 = vunpack.c.l.b16 %v6718
    %v9279 = vunpack.c.l.b16 %v6719
    %v9280 = vunpack.c.l.b16 %v6720
    %v9281 = vunpack.c.l.b16 %v6721
    %v9282 = vunpack.c.l.b16 %v6722
    %v9283 = vunpack.c.l.b16 %v6723
    %v9284 = vunpack.c.l.b16 %v6724
    %v9285 = vunpack.c.l.b16 %v6725
    %v9286 = vunpack.c.l.b16 %v6726
    %v9287 = vunpack.c.l.b16 %v6727
    %v9288 = vunpack.c.l.b16 %v6728
    %v9289 = vunpack.c.l.b16 %v6729
    %v9290 = vunpack.c.l.b16 %v6730
    %v9291 = vunpack.c.l.b16 %v6731
    %v9292 = vunpack.c.l.b16 %v6732
    %v9293 = vunpack.c.l.b16 %v6733
    %v9294 = vunpack.c.l.b16 %v6734
    %v9295 = vunpack.c.l.b16 %v6735
    %v9296 = vunpack.c.l.b16 %v6736
    %v9297 = vunpack.c.l.b16 %v6737
    %v9298 = vunpack.c.l.b16 %v6738
    %v9299 = vunpack.c.l.b16 %v6739
    %v9300 = vunpack.c.l.b16 %v6740
    %v9301 = vunpack.c.l.b16 %v6741
    %v9302 = vunpack.c.l.b16 %v6742
    %v9303 = vunpack.c.l.b16 %v6743
    %v9304 = vunpack.c.l.b16 %v6744
    %v9305 = vunpack.c.l.b16 %v6745
    %v9306 = vunpack.c.l.b16 %v6746
    %v9307 = vunpack.c.l.b16 %v6747
    %v9308 = vunpack.c.l.b16 %v6748
    %v9309 = vunpack.c.l.b16 %v6749
    %v9310 = vunpack.c.l.b16 %v6750
    %v9311 = vunpack.c.l.b16 %v6751
    %v9312 = vunpack.c.l.b16 %v6752
    %v9313 = vunpack.c.l.b16 %v6753
    %v9314 = vunpack.c.l.b16 %v6754
    %v9315 = vunpack.c.l.b16 %v6755
    %v9316 = vunpack.c.l.b16 %v6756
    %v9317 = vunpack.c.l.b16 %v6757
    %v9318 = vunpack.c.l.b16 %v6758
    %v9319 = vunpack.c.l.b16 %v6759
    %v9320 = vunpack.c.l.b16 %v6760
    %v9321 = vunpack.c.l.b16 %v6761
    %v9322 = vunpack.c.l.b16 %v6762
    %v9323 = vunpack.c.l.b16 %v6763
    %v9324 = vunpack.c.l.b16 %v6764
    %v9325 = vunpack.c.l.b16 %v6765
    %v9326 = vunpack.c.l.b16 %v6766
    %v9327 = vunpack.c.l.b16 %v6767
    %v9328 = vunpack.c.l.b16 %v6768
    %v9329 = vunpack.c.l.b16 %v6769
    %v9330 = vunpack.c.l.b16 %v6770
    %v9331 = vunpack.c.l.b16 %v6771
    %v9332 = vunpack.c.l.b16 %v6772
    %v9333 = vunpack.c.l.b16 %v6773
    %v9334 = vunpack.c.l.b16 %v6774
    %v9335 = vunpack.c.l.b16 %v6775
    %v9336 = vunpack.c.l.b16 %v6776
    %v9337 = vunpack.c.l.b16 %v6777
    %v9338 = vunpack.c.l.b16 %v6778
    %v9339 = vunpack.c.l.b16 %v6779
    %v9340 = vunpack.c.l.b16 %v6780
    %v9341 = vunpack.c.l.b16 %v6781
    %v9342 = vunpack.c.l.b16 %v6782
    %v9343 = vunpack.c.l.b16 %v6783
    %v9344 = vunpack.c.l.b16 %v6784
    %v9345 = vunpack.c.l.b16 %v6785
    %v9346 = vunpack.c.l.b16 %v6786
    %v9347 = vunpack.c.l.b16 %v6787
    %v9348 = vunpack.c.l.b16 %v6788
    %v9349 = vunpack.c.l.b16 %v6789
    %v9350 = vunpack.c.l.b16 %v6790
    %v9351 = vunpack.c.l.b16 %v6791
    %v9352 = vunpack.c.l.b16 %v6792
    %v9353 = vunpack.c.l.b16 %v6793
    %v9354 = vunpack.c.l.b16 %v6794
    %v9355 = vunpack.c.l.b16 %v6795
    %v9356 = vunpack.c.l.b16 %v6796
    %v9357 = vunpack.c.l.b16 %v6797
    %v9358 = vunpack.c.l.b16 %v6798
    %v9359 = vunpack.c.l.b16 %v6799
    %v9360 = vunpack.c.l.b16 %v6800
    %v9361 = vunpack.c.l.b16 %v6801
    %v9362 = vunpack.c.l.b16 %v6802
    %v9363 = vunpack.c.l.b16 %v6803
    %v9364 = vunpack.c.l.b16 %v6804
    %v9365 = vunpack.c.l.b16 %v6805
    %v9366 = vunpack.c.l.b16 %v6806
    %v9367 = vunpack.c.l.b16 %v6807
    %v9368 = vunpack.c.l.b16 %v6808
    %v9369 = vunpack.c.l.b16 %v6809
    %v9370 = vunpack.c.l.b16 %v6810
    %v9371 = vunpack.c.l.b16 %v6811
    %v9372 = vunpack.c.l.b16 %v6812
    %v9373 = vunpack.c.l.b16 %v6813
    %v9374 = vunpack.c.l.b16 %v6814
    %v9375 = vunpack.c.l.b16 %v6815
    %v9376 = vunpack.c.l.b16 %v6816
    %v9377 = vunpack.c.l.b16 %v6817
    %v9378 = vunpack.c.l.b16 %v6818
    %v9379 = vunpack.c.l.b16 %v6819
    %v9380 = vunpack.c.l.b16 %v6820
    %v9381 = vunpack.c.l.b16 %v6821
    %v9382 = vunpack.c.l.b16 %v6822
    %v9383 = vunpack.c.l.b16 %v6823
    %v9384 = vunpack.c.l.b16 %v6824
    %v9385 = vunpack.c.l.b16 %v6825
    %v9386 = vunpack.c.l.b16 %v6826
    %v9387 = vunpack.c.l.b16 %v6827
    %v9388 = vunpack.c.l.b16 %v6828
    %v9389 = vunpack.c.l.b16 %v6829
    %v9390 = vunpack.c.l.b16 %v6830
    %v9391 = vunpack.c.l.b16 %v6831
    %v9392 = vunpack.c.l.b16 %v6832
    %v9393 = vunpack.c.l.b16 %v6833
    %v9394 = vunpack.c.l.b16 %v6834
    %v9395 = vunpack.c.l.b16 %v6835
    %v9396 = vunpack.c.l.b16 %v6836
    %v9397 = vunpack.c.l.b16 %v6837
    %v9398 = vunpack.c.l.b16 %v6838
    %v9399 = vunpack.c.l.b16 %v6839
    %v9400 = vunpack.c.l.b16 %v6840
    %v9401 = vunpack.c.l.b16 %v6841
    %v9402 = vunpack.c.l.b16 %v6842
    %v9403 = vunpack.c.l.b16 %v6843
    %v9404 = vunpack.c.l.b16 %v6844
    %v9405 = vunpack.c.l.b16 %v6845
    %v9406 = vunpack.c.l.b16 %v6846
    %v9407 = vunpack.c.l.b16 %v6847
    %v9408 = vunpack.c.l.b16 %v6848
    %v9409 = vunpack.c.l.b16 %v6849
    %v9410 = vunpack.c.l.b16 %v6850
    %v9411 = vunpack.c.l.b16 %v6851
    %v9412 = vunpack.c.l.b16 %v6852
    %v9413 = vunpack.c.l.b16 %v6853
    %v9414 = vunpack.c.l.b16 %v6854
    %v9415 = vunpack.c.l.b16 %v6855
    %v9416 = vunpack.c.l.b16 %v6856
    %v9417 = vunpack.c.l.b16 %v6857
    %v9418 = vunpack.c.l.b16 %v6858
    %v9419 = vunpack.c.l.b16 %v6859
    %v9420 = vunpack.c.l.b16 %v6860
    %v9421 = vunpack.c.l.b16 %v6861
    %v9422 = vunpack.c.l.b16 %v6862
    %v9423 = vunpack.c.l.b16 %v6863
    %v9424 = vunpack.c.l.b16 %v6864
    %v9425 = vunpack.c.l.b16 %v6865
    %v9426 = vunpack.c.l.b16 %v6866
    %v9427 = vunpack.c.l.b16 %v6867
    %v9428 = vunpack.c.l.b16 %v6868
    %v9429 = vunpack.c.l.b16 %v6869
    %v9430 = vunpack.c.l.b16 %v6870
    %v9431 = vunpack.c.l.b16 %v6871
    %v9432 = vunpack.c.l.b16 %v6872
    %v9433 = vunpack.c.l.b16 %v6873
    %v9434 = vunpack.c.l.b16 %v6874
    %v9435 = vunpack.c.l.b16 %v6875
    %v9436 = vunpack.c.l.b16 %v6876
    %v9437 = vunpack.c.l.b16 %v6877
    %v9438 = vunpack.c.l.b16 %v6878
    %v9439 = vunpack.c.l.b16 %v6879
    %v9440 = vunpack.c.l.b16 %v6880
    %v9441 = vunpack.c.l.b16 %v6881
    %v9442 = vunpack.c.l.b16 %v6882
    %v9443 = vunpack.c.l.b16 %v6883
    %v9444 = vunpack.c.l.b16 %v6884
    %v9445 = vunpack.c.l.b16 %v6885
    %v9446 = vunpack.c.l.b16 %v6886
    %v9447 = vunpack.c.l.b16 %v6887
    %v9448 = vunpack.c.l.b16 %v6888
    %v9449 = vunpack.c.l.b16 %v6889
    %v9450 = vunpack.c.l.b16 %v6890
    %v9451 = vunpack.c.l.b16 %v6891
    %v9452 = vunpack.c.l.b16 %v6892
    %v9453 = vunpack.c.l.b16 %v6893
    %v9454 = vunpack.c.l.b16 %v6894
    %v9455 = vunpack.c.l.b16 %v6895
    %v9456 = vunpack.c.l.b16 %v6896
    %v9457 = vunpack.c.l.b16 %v6897
    %v9458 = vunpack.c.l.b16 %v6898
    %v9459 = vunpack.c.l.b16 %v6899
    %v9460 = vunpack.c.l.b16 %v6900
    %v9461 = vunpack.c.l.b16 %v6901
    %v9462 = vunpack.c.l.b16 %v6902
    %v9463 = vunpack.c.l.b16 %v6903
    %v9464 = vunpack.c.l.b16 %v6904
    %v9465 = vunpack.c.l.b16 %v6905
    %v9466 = vunpack.c.l.b16 %v6906
    %v9467 = vunpack.c.l.b16 %v6907
    %v9468 = vunpack.c.l.b16 %v6908
    %v9469 = vunpack.c.l.b16 %v6909
    %v9470 = vunpack.c.l.b16 %v6910
    %v9471 = vunpack.c.l.b16 %v6911
    %v9472 = vunpack.c.l.b16 %v6912
    %v9473 = vunpack.c.l.b16 %v6913
    %v9474 = vunpack.c.l.b16 %v6914
    %v9475 = vunpack.c.l.b16 %v6915
    %v9476 = vunpack.c.l.b16 %v6916
    %v9477 = vunpack.c.l.b16 %v6917
    %v9478 = vunpack.c.l.b16 %v6918
    %v9479 = vunpack.c.l.b16 %v6919
    %v9480 = vunpack.c.l.b16 %v6920
    %v9481 = vunpack.c.l.b16 %v6921
    %v9482 = vunpack.c.l.b16 %v6922
    %v9483 = vunpack.c.l.b16 %v6923
    %v9484 = vunpack.c.l.b16 %v6924
    %v9485 = vunpack.c.l.b16 %v6925
    %v9486 = vunpack.c.l.b16 %v6926
    %v9487 = vunpack.c.l.b16 %v6927
    %v9488 = vunpack.c.l.b16 %v6928
    %v9489 = vunpack.c.l.b16 %v6929
    %v9490 = vunpack.c.l.b16 %v6930
    %v9491 = vunpack.c.l.b16 %v6931
    %v9492 = vunpack.c.l.b16 %v6932
    %v9493 = vunpack.c.l.b16 %v6933
    %v9494 = vunpack.c.l.b16 %v6934
    %v9495 = vunpack.c.l.b16 %v6935
    %v9496 = vunpack.c.l.b16 %v6936
    %v9497 = vunpack.c.l.b16 %v6937
    %v9498 = vunpack.c.l.b16 %v6938
    %v9499 = vunpack.c.l.b16 %v6939
    %v9500 = vunpack.c.l.b16 %v6940
    %v9501 = vunpack.c.l.b16 %v6941
    %v9502 = vunpack.c.l.b16 %v6942
    %v9503 = vunpack.c.l.b16 %v6943
    %v9504 = vunpack.c.l.b16 %v6944
    %v9505 = vunpack.c.l.b16 %v6945
    %v9506 = vunpack.c.l.b16 %v6946
    %v9507 = vunpack.c.l.b16 %v6947
    %v9508 = vunpack.c.l.b16 %v6948
    %v9509 = vunpack.c.l.b16 %v6949
    %v9510 = vunpack.c.l.b16 %v6950
    %v9511 = vunpack.c.l.b16 %v6951
    %v9512 = vunpack.c.l.b16 %v6952
    %v9513 = vunpack.c.l.b16 %v6953
    %v9514 = vunpack.c.l.b16 %v6954
    %v9515 = vunpack.c.l.b16 %v6955
    %v9516 = vunpack.c.l.b16 %v6956
    %v9517 = vunpack.c.l.b16 %v6957
    %v9518 = vunpack.c.l.b16 %v6958
    %v9519 = vunpack.c.l.b16 %v6959
    %v9520 = vunpack.c.l.b16 %v6960
    %v9521 = vunpack.c.l.b16 %v6961
    %v9522 = vunpack.c.l.b16 %v6962
    %v9523 = vunpack.c.l.b16 %v6963
    %v9524 = vunpack.c.l.b16 %v6964
    %v9525 = vunpack.c.l.b16 %v6965
    %v9526 = vunpack.c.l.b16 %v6966
    %v9527 = vunpack.c.l.b16 %v6967
    %v9528 = vunpack.c.l.b16 %v6968
    %v9529 = vunpack.c.l.b16 %v6969
    %v9530 = vunpack.c.l.b16 %v6970
    %v9531 = vunpack.c.l.b16 %v6971
    %v9532 = vunpack.c.l.b16 %v6972
    %v9533 = vunpack.c.l.b16 %v6973
    %v9534 = vunpack.c.l.b16 %v6974
    %v9535 = vunpack.c.l.b16 %v6975
    %v9536 = vunpack.c.l.b16 %v6976
    %v9537 = vunpack.c.l.b16 %v6977
    %v9538 = vunpack.c.l.b16 %v6978
    %v9539 = vunpack.c.l.b16 %v6979
    %v9540 = vunpack.c.l.b16 %v6980
    %v9541 = vunpack.c.l.b16 %v6981
    %v9542 = vunpack.c.l.b16 %v6982
    %v9543 = vunpack.c.l.b16 %v6983
    %v9544 = vunpack.c.l.b16 %v6984
    %v9545 = vunpack.c.l.b16 %v6985
    %v9546 = vunpack.c.l.b16 %v6986
    %v9547 = vunpack.c.l.b16 %v6987
    %v9548 = vunpack.c.l.b16 %v6988
    %v9549 = vunpack.c.l.b16 %v6989
    %v9550 = vunpack.c.l.b16 %v6990
    %v9551 = vunpack.c.l.b16 %v6991
    %v9552 = vunpack.c.l.b16 %v6992
    %v9553 = vunpack.c.l.b16 %v6993
    %v9554 = vunpack.c.l.b16 %v6994
    %v9555 = vunpack.c.l.b16 %v6995
    %v9556 = vunpack.c.l.b16 %v6996
    %v9557 = vunpack.c.l.b16 %v6997
    %v9558 = vunpack.c.l.b16 %v6998
    %v9559 = vunpack.c.l.b16 %v6999
    %v9560 = vunpack.c.l.b16 %v7000
    %v9561 = vunpack.c.l.b16 %v7001
    %v9562 = vunpack.c.l.b16 %v7002
    %v9563 = vunpack.c.l.b16 %v7003
    %v9564 = vunpack.c.l.b16 %v7004
    %v9565 = vunpack.c.l.b16 %v7005
    %v9566 = vunpack.c.l.b16 %v7006
    %v9567 = vunpack.c.l.b16 %v7007
    %v9568 = vunpack.c.l.b16 %v7008
    %v9569 = vunpack.c.l.b16 %v7009
    %v9570 = vunpack.c.l.b16 %v7010
    %v9571 = vunpack.c.l.b16 %v7011
    %v9572 = vunpack.c.l.b16 %v7012
    %v9573 = vunpack.c.l.b16 %v7013
    %v9574 = vunpack.c.l.b16 %v7014
    %v9575 = vunpack.c.l.b16 %v7015
    %v9576 = vunpack.c.l.b16 %v7016
    %v9577 = vunpack.c.l.b16 %v7017
    %v9578 = vunpack.c.l.b16 %v7018
    %v9579 = vunpack.c.l.b16 %v7019
    %v9580 = vunpack.c.l.b16 %v7020
    %v9581 = vunpack.c.l.b16 %v7021
    %v9582 = vunpack.c.l.b16 %v7022
    %v9583 = vunpack.c.l.b16 %v7023
    %v9584 = vunpack.c.l.b16 %v7024
    %v9585 = vunpack.c.l.b16 %v7025
    %v9586 = vunpack.c.l.b16 %v7026
    %v9587 = vunpack.c.l.b16 %v7027
    %v9588 = vunpack.c.l.b16 %v7028
    %v9589 = vunpack.c.l.b16 %v7029
    %v9590 = vunpack.c.l.b16 %v7030
    %v9591 = vunpack.c.l.b16 %v7031
    %v9592 = vunpack.c.l.b16 %v7032
    %v9593 = vunpack.c.l.b16 %v7033
    %v9594 = vunpack.c.l.b16 %v7034
    %v9595 = vunpack.c.l.b16 %v7035
    %v9596 = vunpack.c.l.b16 %v7036
    %v9597 = vunpack.c.l.b16 %v7037
    %v9598 = vunpack.c.l.b16 %v7038
    %v9599 = vunpack.c.l.b16 %v7039
    %v9600 = vunpack.c.l.b16 %v7040
    %v9601 = vunpack.c.l.b16 %v7041
    %v9602 = vunpack.c.l.b16 %v7042
    %v9603 = vunpack.c.l.b16 %v7043
    %v9604 = vunpack.c.l.b16 %v7044
    %v9605 = vunpack.c.l.b16 %v7045
    %v9606 = vunpack.c.l.b16 %v7046
    %v9607 = vunpack.c.l.b16 %v7047
    %v9608 = vunpack.c.l.b16 %v7048
    %v9609 = vunpack.c.l.b16 %v7049
    %v9610 = vunpack.c.l.b16 %v7050
    %v9611 = vunpack.c.l.b16 %v7051
    %v9612 = vunpack.c.l.b16 %v7052
    %v9613 = vunpack.c.l.b16 %v7053
    %v9614 = vunpack.c.l.b16 %v7054
    %v9615 = vunpack.c.l.b16 %v7055
    %v9616 = vunpack.c.l.b16 %v7056
    %v9617 = vunpack.c.l.b16 %v7057
    %v9618 = vunpack.c.l.b16 %v7058
    %v9619 = vunpack.c.l.b16 %v7059
    %v9620 = vunpack.c.l.b16 %v7060
    %v9621 = vunpack.c.l.b16 %v7061
    %v9622 = vunpack.c.l.b16 %v7062
    %v9623 = vunpack.c.l.b16 %v7063
    %v9624 = vunpack.c.l.b16 %v7064
    %v9625 = vunpack.c.l.b16 %v7065
    %v9626 = vunpack.c.l.b16 %v7066
    %v9627 = vunpack.c.l.b16 %v7067
    %v9628 = vunpack.c.l.b16 %v7068
    %v9629 = vunpack.c.l.b16 %v7069
    %v9630 = vunpack.c.l.b16 %v7070
    %v9631 = vunpack.c.l.b16 %v7071
    %v9632 = vunpack.c.l.b16 %v7072
    %v9633 = vunpack.c.l.b16 %v7073
    %v9634 = vunpack.c.l.b16 %v7074
    %v9635 = vunpack.c.l.b16 %v7075
    %v9636 = vunpack.c.l.b16 %v7076
    %v9637 = vunpack.c.l.b16 %v7077
    %v9638 = vunpack.c.l.b16 %v7078
    %v9639 = vunpack.c.l.b16 %v7079
    %v9640 = vunpack.c.l.b16 %v7080
    %v9641 = vunpack.c.l.b16 %v7081
    %v9642 = vunpack.c.l.b16 %v7082
    %v9643 = vunpack.c.l.b16 %v7083
    %v9644 = vunpack.c.l.b16 %v7084
    %v9645 = vunpack.c.l.b16 %v7085
    %v9646 = vunpack.c.l.b16 %v7086
    %v9647 = vunpack.c.l.b16 %v7087
    %v9648 = vunpack.c.l.b16 %v7088
    %v9649 = vunpack.c.l.b16 %v7089
    %v9650 = vunpack.c.l.b16 %v7090
    %v9651 = vunpack.c.l.b16 %v7091
    %v9652 = vunpack.c.l.b16 %v7092
    %v9653 = vunpack.c.l.b16 %v7093
    %v9654 = vunpack.c.l.b16 %v7094
    %v9655 = vunpack.c.l.b16 %v7095
    %v9656 = vunpack.c.l.b16 %v7096
    %v9657 = vunpack.c.l.b16 %v7097
    %v9658 = vunpack.c.l.b16 %v7098
    %v9659 = vunpack.c.l.b16 %v7099
    %v9660 = vunpack.c.l.b16 %v7100
    %v9661 = vunpack.c.l.b16 %v7101
    %v9662 = vunpack.c.l.b16 %v7102
    %v9663 = vunpack.c.l.b16 %v7103
    %v9664 = vunpack.c.l.b16 %v7104
    %v9665 = vunpack.c.l.b16 %v7105
    %v9666 = vunpack.c.l.b16 %v7106
    %v9667 = vunpack.c.l.b16 %v7107
    %v9668 = vunpack.c.l.b16 %v7108
    %v9669 = vunpack.c.l.b16 %v7109
    %v9670 = vunpack.c.l.b16 %v7110
    %v9671 = vunpack.c.l.b16 %v7111
    %v9672 = vunpack.c.l.b16 %v7112
    %v9673 = vunpack.c.l.b16 %v7113
    %v9674 = vunpack.c.l.b16 %v7114
    %v9675 = vunpack.c.l.b16 %v7115
    %v9676 = vunpack.c.l.b16 %v7116
    %v9677 = vunpack.c.l.b16 %v7117
    %v9678 = vunpack.c.l.b16 %v7118
    %v9679 = vunpack.c.l.b16 %v7119
    %v9680 = vunpack.c.l.b16 %v7120
    %v9681 = vunpack.c.l.b16 %v7121
    %v9682 = vunpack.c.l.b16 %v7122
    %v9683 = vunpack.c.l.b16 %v7123
    %v9684 = vunpack.c.l.b16 %v7124
    %v9685 = vunpack.c.l.b16 %v7125
    %v9686 = vunpack.c.l.b16 %v7126
    %v9687 = vunpack.c.l.b16 %v7127
    %v9688 = vunpack.c.l.b16 %v7128
    %v9689 = vunpack.c.l.b16 %v7129
    %v9690 = vunpack.c.l.b16 %v7130
    %v9691 = vunpack.c.l.b16 %v7131
    %v9692 = vunpack.c.l.b16 %v7132
    %v9693 = vunpack.c.l.b16 %v7133
    %v9694 = vunpack.c.l.b16 %v7134
    %v9695 = vunpack.c.l.b16 %v7135
    %v9696 = vunpack.c.l.b16 %v7136
    %v9697 = vunpack.c.l.b16 %v7137
    %v9698 = vunpack.c.l.b16 %v7138
    %v9699 = vunpack.c.l.b16 %v7139
    %v9700 = vunpack.c.l.b16 %v7140
    %v9701 = vunpack.c.l.b16 %v7141
    %v9702 = vunpack.c.l.b16 %v7142
    %v9703 = vunpack.c.l.b16 %v7143
    %v9704 = vunpack.c.l.b16 %v7144
    %v9705 = vunpack.c.l.b16 %v7145
    %v9706 = vunpack.c.l.b16 %v7146
    %v9707 = vunpack.c.l.b16 %v7147
    %v9708 = vunpack.c.l.b16 %v7148
    %v9709 = vunpack.c.l.b16 %v7149
    %v9710 = vunpack.c.l.b16 %v7150
    %v9711 = vunpack.c.l.b16 %v7151
    %v9712 = vunpack.c.l.b16 %v7152
    %v9713 = vunpack.c.l.b16 %v7153
    %v9714 = vunpack.c.l.b16 %v7154
    %v9715 = vunpack.c.l.b16 %v7155
    %v9716 = vunpack.c.l.b16 %v7156
    %v9717 = vunpack.c.l.b16 %v7157
    %v9718 = vunpack.c.l.b16 %v7158
    %v9719 = vunpack.c.l.b16 %v7159
    %v9720 = vunpack.c.l.b16 %v7160
    %v9721 = vunpack.c.l.b16 %v7161
    %v9722 = vunpack.c.l.b16 %v7162
    %v9723 = vunpack.c.l.b16 %v7163
    %v9724 = vunpack.c.l.b16 %v7164
    %v9725 = vunpack.c.l.b16 %v7165
    %v9726 = vunpack.c.l.b16 %v7166
    %v9727 = vunpack.c.l.b16 %v7167
    %v9728 = vunpack.c.l.b16 %v7168
    %v9729 = vunpack.c.l.b16 %v7169
    %v9730 = vunpack.c.l.b16 %v7170
    %v9731 = vunpack.c.l.b16 %v7171
    %v9732 = vunpack.c.l.b16 %v7172
    %v9733 = vunpack.c.l.b16 %v7173
    %v9734 = vunpack.c.l.b16 %v7174
    %v9735 = vunpack.c.l.b16 %v7175
    %v9736 = vunpack.c.l.b16 %v7176
    %v9737 = vunpack.c.l.b16 %v7177
    %v9738 = vunpack.c.l.b16 %v7178
    %v9739 = vunpack.c.l.b16 %v7179
    %v9740 = vunpack.c.l.b16 %v7180
    %v9741 = vunpack.c.l.b16 %v7181
    %v9742 = vunpack.c.l.b16 %v7182
    %v9743 = vunpack.c.l.b16 %v7183
    %v9744 = vunpack.c.l.b16 %v7184
    %v9745 = vunpack.c.l.b16 %v7185
    %v9746 = vunpack.c.l.b16 %v7186
    %v9747 = vunpack.c.l.b16 %v7187
    %v9748 = vunpack.c.l.b16 %v7188
    %v9749 = vunpack.c.l.b16 %v7189
    %v9750 = vunpack.c.l.b16 %v7190
    %v9751 = vunpack.c.l.b16 %v7191
    %v9752 = vunpack.c.l.b16 %v7192
    %v9753 = vunpack.c.l.b16 %v7193
    %v9754 = vunpack.c.l.b16 %v7194
    %v9755 = vunpack.c.l.b16 %v7195
    %v9756 = vunpack.c.l.b16 %v7196
    %v9757 = vunpack.c.l.b16 %v7197
    %v9758 = vunpack.c.l.b16 %v7198
    %v9759 = vunpack.c.l.b16 %v7199
    %v9760 = vunpack.c.l.b16 %v7200
    %v9761 = vunpack.c.l.b16 %v7201
    %v9762 = vunpack.c.l.b16 %v7202
    %v9763 = vunpack.c.l.b16 %v7203
    %v9764 = vunpack.c.l.b16 %v7204
    %v9765 = vunpack.c.l.b16 %v7205
    %v9766 = vunpack.c.l.b16 %v7206
    %v9767 = vunpack.c.l.b16 %v7207
    %v9768 = vunpack.c.l.b16 %v7208
    %v9769 = vunpack.c.l.b16 %v7209
    %v9770 = vunpack.c.l.b16 %v7210
    %v9771 = vunpack.c.l.b16 %v7211
    %v9772 = vunpack.c.l.b16 %v7212
    %v9773 = vunpack.c.l.b16 %v7213
    %v9774 = vunpack.c.l.b16 %v7214
    %v9775 = vunpack.c.l.b16 %v7215
    %v9776 = vunpack.c.l.b16 %v7216
    %v9777 = vunpack.c.l.b16 %v7217
    %v9778 = vunpack.c.l.b16 %v7218
    %v9779 = vunpack.c.l.b16 %v7219
    %v9780 = vunpack.c.l.b16 %v7220
    %v9781 = vunpack.c.l.b16 %v7221
    %v9782 = vunpack.c.l.b16 %v7222
    %v9783 = vunpack.c.l.b16 %v7223
    %v9784 = vunpack.c.l.b16 %v7224
    %v9785 = vunpack.c.l.b16 %v7225
    %v9786 = vunpack.c.l.b16 %v7226
    %v9787 = vunpack.c.l.b16 %v7227
    %v9788 = vunpack.c.l.b16 %v7228
    %v9789 = vunpack.c.l.b16 %v7229
    %v9790 = vunpack.c.l.b16 %v7230
    %v9791 = vunpack.c.l.b16 %v7231
    %v9792 = vunpack.c.l.b16 %v7232
    %v9793 = vunpack.c.l.b16 %v7233
    %v9794 = vunpack.c.l.b16 %v7234
    %v9795 = vunpack.c.l.b16 %v7235
    %v9796 = vunpack.c.l.b16 %v7236
    %v9797 = vunpack.c.l.b16 %v7237
    %v9798 = vunpack.c.l.b16 %v7238
    %v9799 = vunpack.c.l.b16 %v7239
    %v9800 = vunpack.c.l.b16 %v7240
    %v9801 = vunpack.c.l.b16 %v7241
    %v9802 = vunpack.c.l.b16 %v7242
    %v9803 = vunpack.c.l.b16 %v7243
    %v9804 = vunpack.c.l.b16 %v7244
    %v9805 = vunpack.c.l.b16 %v7245
    %v9806 = vunpack.c.l.b16 %v7246
    %v9807 = vunpack.c.l.b16 %v7247
    %v9808 = vunpack.c.l.b16 %v7248
    %v9809 = vunpack.c.l.b16 %v7249
    %v9810 = vunpack.c.l.b16 %v7250
    %v9811 = vunpack.c.l.b16 %v7251
    %v9812 = vunpack.c.l.b16 %v7252
    %v9813 = vunpack.c.l.b16 %v7253
    %v9814 = vunpack.c.l.b16 %v7254
    %v9815 = vunpack.c.l.b16 %v7255
    %v9816 = vunpack.c.l.b16 %v7256
    %v9817 = vunpack.c.l.b16 %v7257
    %v9818 = vunpack.c.l.b16 %v7258
    %v9819 = vunpack.c.l.b16 %v7259
    %v9820 = vunpack.c.l.b16 %v7260
    %v9821 = vunpack.c.l.b16 %v7261
    %v9822 = vunpack.c.l.b16 %v7262
    %v9823 = vunpack.c.l.b16 %v7263
    %v9824 = vunpack.c.l.b16 %v7264
    %v9825 = vunpack.c.l.b16 %v7265
    %v9826 = vunpack.c.l.b16 %v7266
    %v9827 = vunpack.c.l.b16 %v7267
    %v9828 = vunpack.c.l.b16 %v7268
    %v9829 = vunpack.c.l.b16 %v7269
    %v9830 = vunpack.c.l.b16 %v7270
    %v9831 = vunpack.c.l.b16 %v7271
    %v9832 = vunpack.c.l.b16 %v7272
    %v9833 = vunpack.c.l.b16 %v7273
    %v9834 = vunpack.c.l.b16 %v7274
    %v9835 = vunpack.c.l.b16 %v7275
    %v9836 = vunpack.c.l.b16 %v7276
    %v9837 = vunpack.c.l.b16 %v7277
    %v9838 = vunpack.c.l.b16 %v7278
    %v9839 = vunpack.c.l.b16 %v7279
    %v9840 = vunpack.c.l.b16 %v7280
    %v9841 = vunpack.c.l.b16 %v7281
    %v9842 = vunpack.c.l.b16 %v7282
    %v9843 = vunpack.c.l.b16 %v7283
    %v9844 = vunpack.c.l.b16 %v7284
    %v9845 = vunpack.c.l.b16 %v7285
    %v9846 = vunpack.c.l.b16 %v7286
    %v9847 = vunpack.c.l.b16 %v7287
    %v9848 = vunpack.c.l.b16 %v7288
    %v9849 = vunpack.c.l.b16 %v7289
    %v9850 = vunpack.c.l.b16 %v7290
    %v9851 = vunpack.c.l.b16 %v7291
    %v9852 = vunpack.c.l.b16 %v7292
    %v9853 = vunpack.c.l.b16 %v7293
    %v9854 = vunpack.c.l.b16 %v7294
    %v9855 = vunpack.c.l.b16 %v7295
    %v9856 = vunpack.c.l.b16 %v7296
    %v9857 = vunpack.c.l.b16 %v7297
    %v9858 = vunpack.c.l.b16 %v7298
    %v9859 = vunpack.c.l.b16 %v7299
    %v9860 = vunpack.c.l.b16 %v7300
    %v9861 = vunpack.c.l.b16 %v7301
    %v9862 = vunpack.c.l.b16 %v7302
    %v9863 = vunpack.c.l.b16 %v7303
    %v9864 = vunpack.c.l.b16 %v7304
    %v9865 = vunpack.c.l.b16 %v7305
    %v9866 = vunpack.c.l.b16 %v7306
    %v9867 = vunpack.c.l.b16 %v7307
    %v9868 = vunpack.c.l.b16 %v7308
    %v9869 = vunpack.c.l.b16 %v7309
    %v9870 = vunpack.c.l.b16 %v7310
    %v9871 = vunpack.c.l.b16 %v7311
    %v9872 = vunpack.c.l.b16 %v7312
    %v9873 = vunpack.c.l.b16 %v7313
    %v9874 = vunpack.c.l.b16 %v7314
    %v9875 = vunpack.c.l.b16 %v7315
    %v9876 = vunpack.c.l.b16 %v7316
    %v9877 = vunpack.c.l.b16 %v7317
    %v9878 = vunpack.c.l.b16 %v7318
    %v9879 = vunpack.c.l.b16 %v7319
    %v9880 = vunpack.c.l.b16 %v7320
    %v9881 = vunpack.c.l.b16 %v7321
    %v9882 = vunpack.c.l.b16 %v7322
    %v9883 = vunpack.c.l.b16 %v7323
    %v9884 = vunpack.c.l.b16 %v7324
    %v9885 = vunpack.c.l.b16 %v7325
    %v9886 = vunpack.c.l.b16 %v7326
    %v9887 = vunpack.c.l.b16 %v7327
    %v9888 = vunpack.c.l.b16 %v7328
    %v9889 = vunpack.c.l.b16 %v7329
    %v9890 = vunpack.c.l.b16 %v7330
    %v9891 = vunpack.c.l.b16 %v7331
    %v9892 = vunpack.c.l.b16 %v7332
    %v9893 = vunpack.c.l.b16 %v7333
    %v9894 = vunpack.c.l.b16 %v7334
    %v9895 = vunpack.c.l.b16 %v7335
    %v9896 = vunpack.c.l.b16 %v7336
    %v9897 = vunpack.c.l.b16 %v7337
    %v9898 = vunpack.c.l.b16 %v7338
    %v9899 = vunpack.c.l.b16 %v7339
    %v9900 = vunpack.c.l.b16 %v7340
    %v9901 = vunpack.c.l.b16 %v7341
    %v9902 = vunpack.c.l.b16 %v7342
    %v9903 = vunpack.c.l.b16 %v7343
    %v9904 = vunpack.c.l.b16 %v7344
    %v9905 = vunpack.c.l.b16 %v7345
    %v9906 = vunpack.c.l.b16 %v7346
    %v9907 = vunpack.c.l.b16 %v7347
    %v9908 = vunpack.c.l.b16 %v7348
    %v9909 = vunpack.c.l.b16 %v7349
    %v9910 = vunpack.c.l.b16 %v7350
    %v9911 = vunpack.c.l.b16 %v7351
    %v9912 = vunpack.c.l.b16 %v7352
    %v9913 = vunpack.c.l.b16 %v7353
    %v9914 = vunpack.c.l.b16 %v7354
    %v9915 = vunpack.c.l.b16 %v7355
    %v9916 = vunpack.c.l.b16 %v7356
    %v9917 = vunpack.c.l.b16 %v7357
    %v9918 = vunpack.c.l.b16 %v7358
    %v9919 = vunpack.c.l.b16 %v7359
    %v9920 = vunpack.c.l.b16 %v7360
    %v9921 = vunpack.c.l.b16 %v7361
    %v9922 = vunpack.c.l.b16 %v7362
    %v9923 = vunpack.c.l.b16 %v7363
    %v9924 = vunpack.c.l.b16 %v7364
    %v9925 = vunpack.c.l.b16 %v7365
    %v9926 = vunpack.c.l.b16 %v7366
    %v9927 = vunpack.c.l.b16 %v7367
    %v9928 = vunpack.c.l.b16 %v7368
    %v9929 = vunpack.c.l.b16 %v7369
    %v9930 = vunpack.c.l.b16 %v7370
    %v9931 = vunpack.c.l.b16 %v7371
    %v9932 = vunpack.c.l.b16 %v7372
    %v9933 = vunpack.c.l.b16 %v7373
    %v9934 = vunpack.c.l.b16 %v7374
    %v9935 = vunpack.c.l.b16 %v7375
    %v9936 = vunpack.c.l.b16 %v7376
    %v9937 = vunpack.c.l.b16 %v7377
    %v9938 = vunpack.c.l.b16 %v7378
    %v9939 = vunpack.c.l.b16 %v7379
    %v9940 = vunpack.c.l.b16 %v7380
    %v9941 = vunpack.c.l.b16 %v7381
    %v9942 = vunpack.c.l.b16 %v7382
    %v9943 = vunpack.c.l.b16 %v7383
    %v9944 = vunpack.c.l.b16 %v7384
    %v9945 = vunpack.c.l.b16 %v7385
    %v9946 = vunpack.c.l.b16 %v7386
    %v9947 = vunpack.c.l.b16 %v7387
    %v9948 = vunpack.c.l.b16 %v7388
    %v9949 = vunpack.c.l.b16 %v7389
    %v9950 = vunpack.c.l.b16 %v7390
    %v9951 = vunpack.c.l.b16 %v7391
    %v9952 = vunpack.c.l.b16 %v7392
    %v9953 = vunpack.c.l.b16 %v7393
    %v9954 = vunpack.c.l.b16 %v7394
    %v9955 = vunpack.c.l.b16 %v7395
    %v9956 = vunpack.c.l.b16 %v7396
    %v9957 = vunpack.c.l.b16 %v7397
    %v9958 = vunpack.c.l.b16 %v7398
    %v9959 = vunpack.c.l.b16 %v7399
    %v9960 = vunpack.c.l.b16 %v7400
    %v9961 = vunpack.c.l.b16 %v7401
    %v9962 = vunpack.c.l.b16 %v7402
    %v9963 = vunpack.c.l.b16 %v7403
    %v9964 = vunpack.c.l.b16 %v7404
    %v9965 = vunpack.c.l.b16 %v7405
    %v9966 = vunpack.c.l.b16 %v7406
    %v9967 = vunpack.c.l.b16 %v7407
    %v9968 = vunpack.c.l.b16 %v7408
    %v9969 = vunpack.c.l.b16 %v7409
    %v9970 = vunpack.c.l.b16 %v7410
    %v9971 = vunpack.c.l.b16 %v7411
    %v9972 = vunpack.c.l.b16 %v7412
    %v9973 = vunpack.c.l.b16 %v7413
    %v9974 = vunpack.c.l.b16 %v7414
    %v9975 = vunpack.c.l.b16 %v7415
    %v9976 = vunpack.c.l.b16 %v7416
    %v9977 = vunpack.c.l.b16 %v7417
    %v9978 = vunpack.c.l.b16 %v7418
    %v9979 = vunpack.c.l.b16 %v7419
    %v9980 = vunpack.c.l.b16 %v7420
    %v9981 = vunpack.c.l.b16 %v7421
    %v9982 = vunpack.c.l.b16 %v7422
    %v9983 = vunpack.c.l.b16 %v7423
    %v9984 = vunpack.c.l.b16 %v7424
    %v9985 = vunpack.c.l.b16 %v7425
    %v9986 = vunpack.c.l.b16 %v7426
    %v9987 = vunpack.c.l.b16 %v7427
    %v9988 = vunpack.c.l.b16 %v7428
    %v9989 = vunpack.c.l.b16 %v7429
    %v9990 = vunpack.c.l.b16 %v7430
    %v9991 = vunpack.c.l.b16 %v7431
    %v9992 = vunpack.c.l.b16 %v7432
    %v9993 = vunpack.c.l.b16 %v7433
    %v9994 = vunpack.c.l.b16 %v7434
    %v9995 = vunpack.c.l.b16 %v7435
    %v9996 = vunpack.c.l.b16 %v7436
    %v9997 = vunpack.c.l.b16 %v7437
    %v9998 = vunpack.c.l.b16 %v7438
    %v9999 = vunpack.c.l.b16 %v7439
    %v10000 = vunpack.c.l.b16 %v7440
    %v10001 = vunpack.c.l.b16 %v7441
    %v10002 = vunpack.c.l.b16 %v7442
    %v10003 = vunpack.c.l.b16 %v7443
    %v10004 = vunpack.c.l.b16 %v7444
    %v10005 = vunpack.c.l.b16 %v7445
    %v10006 = vunpack.c.l.b16 %v7446
    %v10007 = vunpack.c.l.b16 %v7447
    %v10008 = vunpack.c.l.b16 %v7448
    %v10009 = vunpack.c.l.b16 %v7449
    %v10010 = vunpack.c.l.b16 %v7450
    %v10011 = vunpack.c.l.b16 %v7451
    %v10012 = vunpack.c.l.b16 %v7452
    %v10013 = vunpack.c.l.b16 %v7453
    %v10014 = vunpack.c.l.b16 %v7454
    %v10015 = vunpack.c.l.b16 %v7455
    %v10016 = vunpack.c.l.b16 %v7456
    %v10017 = vunpack.c.l.b16 %v7457
    %v10018 = vunpack.c.l.b16 %v7458
    %v10019 = vunpack.c.l.b16 %v7459
    %v10020 = vunpack.c.l.b16 %v7460
    %v10021 = vunpack.c.l.b16 %v7461
    %v10022 = vunpack.c.l.b16 %v7462
    %v10023 = vunpack.c.l.b16 %v7463
    %v10024 = vunpack.c.l.b16 %v7464
    %v10025 = vunpack.c.l.b16 %v7465
    %v10026 = vunpack.c.l.b16 %v7466
    %v10027 = vunpack.c.l.b16 %v7467
    %v10028 = vunpack.c.l.b16 %v7468
    %v10029 = vunpack.c.l.b16 %v7469
    %v10030 = vunpack.c.l.b16 %v7470
    %v10031 = vunpack.c.l.b16 %v7471
    %v10032 = vunpack.c.l.b16 %v7472
    %v10033 = vunpack.c.l.b16 %v7473
    %v10034 = vunpack.c.l.b16 %v7474
    %v10035 = vunpack.c.l.b16 %v7475
    %v10036 = vunpack.c.l.b16 %v7476
    %v10037 = vunpack.c.l.b16 %v7477
    %v10038 = vunpack.c.l.b16 %v7478
    %v10039 = vunpack.c.l.b16 %v7479
    %v10040 = vunpack.c.l.b16 %v7480
    %v10041 = vunpack.c.l.b16 %v7481
    %v10042 = vunpack.c.l.b16 %v7482
    %v10043 = vunpack.c.l.b16 %v7483
    %v10044 = vunpack.c.l.b16 %v7484
    %v10045 = vunpack.c.l.b16 %v7485
    %v10046 = vunpack.c.l.b16 %v7486
    %v10047 = vunpack.c.l.b16 %v7487
    %v10048 = vunpack.c.l.b16 %v7488
    %v10049 = vunpack.c.l.b16 %v7489
    %v10050 = vunpack.c.l.b16 %v7490
    %v10051 = vunpack.c.l.b16 %v7491
    %v10052 = vunpack.c.l.b16 %v7492
    %v10053 = vunpack.c.l.b16 %v7493
    %v10054 = vunpack.c.l.b16 %v7494
    %v10055 = vunpack.c.l.b16 %v7495
    %v10056 = vunpack.c.l.b16 %v7496
    %v10057 = vunpack.c.l.b16 %v7497
    %v10058 = vunpack.c.l.b16 %v7498
    %v10059 = vunpack.c.l.b16 %v7499
    %v10060 = vunpack.c.l.b16 %v7500
    %v10061 = vunpack.c.l.b16 %v7501
    %v10062 = vunpack.c.l.b16 %v7502
    %v10063 = vunpack.c.l.b16 %v7503
    %v10064 = vunpack.c.l.b16 %v7504
    %v10065 = vunpack.c.l.b16 %v7505
    %v10066 = vunpack.c.l.b16 %v7506
    %v10067 = vunpack.c.l.b16 %v7507
    %v10068 = vunpack.c.l.b16 %v7508
    %v10069 = vunpack.c.l.b16 %v7509
    %v10070 = vunpack.c.l.b16 %v7510
    %v10071 = vunpack.c.l.b16 %v7511
    %v10072 = vunpack.c.l.b16 %v7512
    %v10073 = vunpack.c.l.b16 %v7513
    %v10074 = vunpack.c.l.b16 %v7514
    %v10075 = vunpack.c.l.b16 %v7515
    %v10076 = vunpack.c.l.b16 %v7516
    %v10077 = vunpack.c.l.b16 %v7517
    %v10078 = vunpack.c.l.b16 %v7518
    %v10079 = vunpack.c.l.b16 %v7519
    %v10080 = vunpack.c.l.b16 %v7520
    %v10081 = vunpack.c.l.b16 %v7521
    %v10082 = vunpack.c.l.b16 %v7522
    %v10083 = vunpack.c.l.b16 %v7523
    %v10084 = vunpack.c.l.b16 %v7524
    %v10085 = vunpack.c.l.b16 %v7525
    %v10086 = vunpack.c.l.b16 %v7526
    %v10087 = vunpack.c.l.b16 %v7527
    %v10088 = vunpack.c.l.b16 %v7528
    %v10089 = vunpack.c.l.b16 %v7529
    %v10090 = vunpack.c.l.b16 %v7530
    %v10091 = vunpack.c.l.b16 %v7531
    %v10092 = vunpack.c.l.b16 %v7532
    %v10093 = vunpack.c.l.b16 %v7533
    %v10094 = vunpack.c.l.b16 %v7534
    %v10095 = vunpack.c.l.b16 %v7535
    %v10096 = vunpack.c.l.b16 %v7536
    %v10097 = vunpack.c.l.b16 %v7537
    %v10098 = vunpack.c.l.b16 %v7538
    %v10099 = vunpack.c.l.b16 %v7539
    %v10100 = vunpack.c.l.b16 %v7540
    %v10101 = vunpack.c.l.b16 %v7541
    %v10102 = vunpack.c.l.b16 %v7542
    %v10103 = vunpack.c.l.b16 %v7543
    %v10104 = vunpack.c.l.b16 %v7544
    %v10105 = vunpack.c.l.b16 %v7545
    %v10106 = vunpack.c.l.b16 %v7546
    %v10107 = vunpack.c.l.b16 %v7547
    %v10108 = vunpack.c.l.b16 %v7548
    %v10109 = vunpack.c.l.b16 %v7549
    %v10110 = vunpack.c.l.b16 %v7550
    %v10111 = vunpack.c.l.b16 %v7551
    %v10112 = vunpack.c.l.b16 %v7552
    %v10113 = vunpack.c.l.b16 %v7553
    %v10114 = vunpack.c.l.b16 %v7554
    %v10115 = vunpack.c.l.b16 %v7555
    %v10116 = vunpack.c.l.b16 %v7556
    %v10117 = vunpack.c.l.b16 %v7557
    %v10118 = vunpack.c.l.b16 %v7558
    %v10119 = vunpack.c.l.b16 %v7559
    %v10120 = vunpack.c.l.b16 %v7560
    %v10121 = vunpack.c.l.b16 %v7561
    %v10122 = vunpack.c.l.b16 %v7562
    %v10123 = vpack.c.b16 %v8844, %v8843
    %v10124 = vpack.c.b16 %v8846, %v8845
    %v10125 = vpack.c.b16 %v8848, %v8847
    %v10126 = vpack.c.b16 %v8850, %v8849
    %v10127 = vpack.c.b16 %v8852, %v8851
    %v10128 = vpack.c.b16 %v8854, %v8853
    %v10129 = vpack.c.b16 %v8856, %v8855
    %v10130 = vpack.c.b16 %v8858, %v8857
    %v10131 = vpack.c.b16 %v8860, %v8859
    %v10132 = vpack.c.b16 %v8862, %v8861
    %v10133 = vpack.c.b16 %v8864, %v8863
    %v10134 = vpack.c.b16 %v8866, %v8865
    %v10135 = vpack.c.b16 %v8868, %v8867
    %v10136 = vpack.c.b16 %v8870, %v8869
    %v10137 = vpack.c.b16 %v8872, %v8871
    %v10138 = vpack.c.b16 %v8874, %v8873
    %v10139 = vpack.c.b16 %v8876, %v8875
    %v10140 = vpack.c.b16 %v8878, %v8877
    %v10141 = vpack.c.b16 %v8880, %v8879
    %v10142 = vpack.c.b16 %v8882, %v8881
    %v10143 = vpack.c.b16 %v8884, %v8883
    %v10144 = vpack.c.b16 %v8886, %v8885
    %v10145 = vpack.c.b16 %v8888, %v8887
    %v10146 = vpack.c.b16 %v8890, %v8889
    %v10147 = vpack.c.b16 %v8892, %v8891
    %v10148 = vpack.c.b16 %v8894, %v8893
    %v10149 = vpack.c.b16 %v8896, %v8895
    %v10150 = vpack.c.b16 %v8898, %v8897
    %v10151 = vpack.c.b16 %v8900, %v8899
    %v10152 = vpack.c.b16 %v8902, %v8901
    %v10153 = vpack.c.b16 %v8904, %v8903
    %v10154 = vpack.c.b16 %v8906, %v8905
    %v10155 = vpack.c.b16 %v8908, %v8907
    %v10156 = vpack.c.b16 %v8910, %v8909
    %v10157 = vpack.c.b16 %v8912, %v8911
    %v10158 = vpack.c.b16 %v8914, %v8913
    %v10159 = vpack.c.b16 %v8916, %v8915
    %v10160 = vpack.c.b16 %v8918, %v8917
    %v10161 = vpack.c.b16 %v8920, %v8919
    %v10162 = vpack.c.b16 %v8922, %v8921
    %v10163 = vpack.c.b16 %v8924, %v8923
    %v10164 = vpack.c.b16 %v8926, %v8925
    %v10165 = vpack.c.b16 %v8928, %v8927
    %v10166 = vpack.c.b16 %v8930, %v8929
    %v10167 = vpack.c.b16 %v8932, %v8931
    %v10168 = vpack.c.b16 %v8934, %v8933
    %v10169 = vpack.c.b16 %v8936, %v8935
    %v10170 = vpack.c.b16 %v8938, %v8937
    %v10171 = vpack.c.b16 %v8940, %v8939
    %v10172 = vpack.c.b16 %v8942, %v8941
    %v10173 = vpack.c.b16 %v8944, %v8943
    %v10174 = vpack.c.b16 %v8946, %v8945
    %v10175 = vpack.c.b16 %v8948, %v8947
    %v10176 = vpack.c.b16 %v8950, %v8949
    %v10177 = vpack.c.b16 %v8952, %v8951
    %v10178 = vpack.c.b16 %v8954, %v8953
    %v10179 = vpack.c.b16 %v8956, %v8955
    %v10180 = vpack.c.b16 %v8958, %v8957
    %v10181 = vpack.c.b16 %v8960, %v8959
    %v10182 = vpack.c.b16 %v8962, %v8961
    %v10183 = vpack.c.b16 %v8964, %v8963
    %v10184 = vpack.c.b16 %v8966, %v8965
    %v10185 = vpack.c.b16 %v8968, %v8967
    %v10186 = vpack.c.b16 %v8970, %v8969
    %v10187 = vpack.c.b16 %v8972, %v8971
    %v10188 = vpack.c.b16 %v8974, %v8973
    %v10189 = vpack.c.b16 %v8976, %v8975
    %v10190 = vpack.c.b16 %v8978, %v8977
    %v10191 = vpack.c.b16 %v8980, %v8979
    %v10192 = vpack.c.b16 %v8982, %v8981
    %v10193 = vpack.c.b16 %v8984, %v8983
    %v10194 = vpack.c.b16 %v8986, %v8985
    %v10195 = vpack.c.b16 %v8988, %v8987
    %v10196 = vpack.c.b16 %v8990, %v8989
    %v10197 = vpack.c.b16 %v8992, %v8991
    %v10198 = vpack.c.b16 %v8994, %v8993
    %v10199 = vpack.c.b16 %v8996, %v8995
    %v10200 = vpack.c.b16 %v8998, %v8997
    %v10201 = vpack.c.b16 %v9000, %v8999
    %v10202 = vpack.c.b16 %v9002, %v9001
    %v10203 = vpack.c.b16 %v9004, %v9003
    %v10204 = vpack.c.b16 %v9006, %v9005
    %v10205 = vpack.c.b16 %v9008, %v9007
    %v10206 = vpack.c.b16 %v9010, %v9009
    %v10207 = vpack.c.b16 %v9012, %v9011
    %v10208 = vpack.c.b16 %v9014, %v9013
    %v10209 = vpack.c.b16 %v9016, %v9015
    %v10210 = vpack.c.b16 %v9018, %v9017
    %v10211 = vpack.c.b16 %v9020, %v9019
    %v10212 = vpack.c.b16 %v9022, %v9021
    %v10213 = vpack.c.b16 %v9024, %v9023
    %v10214 = vpack.c.b16 %v9026, %v9025
    %v10215 = vpack.c.b16 %v9028, %v9027
    %v10216 = vpack.c.b16 %v9030, %v9029
    %v10217 = vpack.c.b16 %v9032, %v9031
    %v10218 = vpack.c.b16 %v9034, %v9033
    %v10219 = vpack.c.b16 %v9036, %v9035
    %v10220 = vpack.c.b16 %v9038, %v9037
    %v10221 = vpack.c.b16 %v9040, %v9039
    %v10222 = vpack.c.b16 %v9042, %v9041
    %v10223 = vpack.c.b16 %v9044, %v9043
    %v10224 = vpack.c.b16 %v9046, %v9045
    %v10225 = vpack.c.b16 %v9048, %v9047
    %v10226 = vpack.c.b16 %v9050, %v9049
    %v10227 = vpack.c.b16 %v9052, %v9051
    %v10228 = vpack.c.b16 %v9054, %v9053
    %v10229 = vpack.c.b16 %v9056, %v9055
    %v10230 = vpack.c.b16 %v9058, %v9057
    %v10231 = vpack.c.b16 %v9060, %v9059
    %v10232 = vpack.c.b16 %v9062, %v9061
    %v10233 = vpack.c.b16 %v9064, %v9063
    %v10234 = vpack.c.b16 %v9066, %v9065
    %v10235 = vpack.c.b16 %v9068, %v9067
    %v10236 = vpack.c.b16 %v9070, %v9069
    %v10237 = vpack.c.b16 %v9072, %v9071
    %v10238 = vpack.c.b16 %v9074, %v9073
    %v10239 = vpack.c.b16 %v9076, %v9075
    %v10240 = vpack.c.b16 %v9078, %v9077
    %v10241 = vpack.c.b16 %v9080, %v9079
    %v10242 = vpack.c.b16 %v9082, %v9081
    %v10243 = vpack.c.b16 %v9084, %v9083
    %v10244 = vpack.c.b16 %v9086, %v9085
    %v10245 = vpack.c.b16 %v9088, %v9087
    %v10246 = vpack.c.b16 %v9090, %v9089
    %v10247 = vpack.c.b16 %v9092, %v9091
    %v10248 = vpack.c.b16 %v9094, %v9093
    %v10249 = vpack.c.b16 %v9096, %v9095
    %v10250 = vpack.c.b16 %v9098, %v9097
    %v10251 = vpack.c.b16 %v9100, %v9099
    %v10252 = vpack.c.b16 %v9102, %v9101
    %v10253 = vpack.c.b16 %v9104, %v9103
    %v10254 = vpack.c.b16 %v9106, %v9105
    %v10255 = vpack.c.b16 %v9108, %v9107
    %v10256 = vpack.c.b16 %v9110, %v9109
    %v10257 = vpack.c.b16 %v9112, %v9111
    %v10258 = vpack.c.b16 %v9114, %v9113
    %v10259 = vpack.c.b16 %v9116, %v9115
    %v10260 = vpack.c.b16 %v9118, %v9117
    %v10261 = vpack.c.b16 %v9120, %v9119
    %v10262 = vpack.c.b16 %v9122, %v9121
    %v10263 = vpack.c.b16 %v9124, %v9123
    %v10264 = vpack.c.b16 %v9126, %v9125
    %v10265 = vpack.c.b16 %v9128, %v9127
    %v10266 = vpack.c.b16 %v9130, %v9129
    %v10267 = vpack.c.b16 %v9132, %v9131
    %v10268 = vpack.c.b16 %v9134, %v9133
    %v10269 = vpack.c.b16 %v9136, %v9135
    %v10270 = vpack.c.b16 %v9138, %v9137
    %v10271 = vpack.c.b16 %v9140, %v9139
    %v10272 = vpack.c.b16 %v9142, %v9141
    %v10273 = vpack.c.b16 %v9144, %v9143
    %v10274 = vpack.c.b16 %v9146, %v9145
    %v10275 = vpack.c.b16 %v9148, %v9147
    %v10276 = vpack.c.b16 %v9150, %v9149
    %v10277 = vpack.c.b16 %v9152, %v9151
    %v10278 = vpack.c.b16 %v9154, %v9153
    %v10279 = vpack.c.b16 %v9156, %v9155
    %v10280 = vpack.c.b16 %v9158, %v9157
    %v10281 = vpack.c.b16 %v9160, %v9159
    %v10282 = vpack.c.b16 %v9162, %v9161
    %v10283 = vpack.c.b16 %v9164, %v9163
    %v10284 = vpack.c.b16 %v9166, %v9165
    %v10285 = vpack.c.b16 %v9168, %v9167
    %v10286 = vpack.c.b16 %v9170, %v9169
    %v10287 = vpack.c.b16 %v9172, %v9171
    %v10288 = vpack.c.b16 %v9174, %v9173
    %v10289 = vpack.c.b16 %v9176, %v9175
    %v10290 = vpack.c.b16 %v9178, %v9177
    %v10291 = vpack.c.b16 %v9180, %v9179
    %v10292 = vpack.c.b16 %v9182, %v9181
    %v10293 = vpack.c.b16 %v9184, %v9183
    %v10294 = vpack.c.b16 %v9186, %v9185
    %v10295 = vpack.c.b16 %v9188, %v9187
    %v10296 = vpack.c.b16 %v9190, %v9189
    %v10297 = vpack.c.b16 %v9192, %v9191
    %v10298 = vpack.c.b16 %v9194, %v9193
    %v10299 = vpack.c.b16 %v9196, %v9195
    %v10300 = vpack.c.b16 %v9198, %v9197
    %v10301 = vpack.c.b16 %v9200, %v9199
    %v10302 = vpack.c.b16 %v9202, %v9201
    %v10303 = vpack.c.b16 %v9204, %v9203
    %v10304 = vpack.c.b16 %v9206, %v9205
    %v10305 = vpack.c.b16 %v9208, %v9207
    %v10306 = vpack.c.b16 %v9210, %v9209
    %v10307 = vpack.c.b16 %v9212, %v9211
    %v10308 = vpack.c.b16 %v9214, %v9213
    %v10309 = vpack.c.b16 %v9216, %v9215
    %v10310 = vpack.c.b16 %v9218, %v9217
    %v10311 = vpack.c.b16 %v9220, %v9219
    %v10312 = vpack.c.b16 %v9222, %v9221
    %v10313 = vpack.c.b16 %v9224, %v9223
    %v10314 = vpack.c.b16 %v9226, %v9225
    %v10315 = vpack.c.b16 %v9228, %v9227
    %v10316 = vpack.c.b16 %v9230, %v9229
    %v10317 = vpack.c.b16 %v9232, %v9231
    %v10318 = vpack.c.b16 %v9234, %v9233
    %v10319 = vpack.c.b16 %v9236, %v9235
    %v10320 = vpack.c.b16 %v9238, %v9237
    %v10321 = vpack.c.b16 %v9240, %v9239
    %v10322 = vpack.c.b16 %v9242, %v9241
    %v10323 = vpack.c.b16 %v9244, %v9243
    %v10324 = vpack.c.b16 %v9246, %v9245
    %v10325 = vpack.c.b16 %v9248, %v9247
    %v10326 = vpack.c.b16 %v9250, %v9249
    %v10327 = vpack.c.b16 %v9252, %v9251
    %v10328 = vpack.c.b16 %v9254, %v9253
    %v10329 = vpack.c.b16 %v9256, %v9255
    %v10330 = vpack.c.b16 %v9258, %v9257
    %v10331 = vpack.c.b16 %v9260, %v9259
    %v10332 = vpack.c.b16 %v9262, %v9261
    %v10333 = vpack.c.b16 %v9264, %v9263
    %v10334 = vpack.c.b16 %v9266, %v9265
    %v10335 = vpack.c.b16 %v9268, %v9267
    %v10336 = vpack.c.b16 %v9270, %v9269
    %v10337 = vpack.c.b16 %v9272, %v9271
    %v10338 = vpack.c.b16 %v9274, %v9273
    %v10339 = vpack.c.b16 %v9276, %v9275
    %v10340 = vpack.c.b16 %v9278, %v9277
    %v10341 = vpack.c.b16 %v9280, %v9279
    %v10342 = vpack.c.b16 %v9282, %v9281
    %v10343 = vpack.c.b16 %v9284, %v9283
    %v10344 = vpack.c.b16 %v9286, %v9285
    %v10345 = vpack.c.b16 %v9288, %v9287
    %v10346 = vpack.c.b16 %v9290, %v9289
    %v10347 = vpack.c.b16 %v9292, %v9291
    %v10348 = vpack.c.b16 %v9294, %v9293
    %v10349 = vpack.c.b16 %v9296, %v9295
    %v10350 = vpack.c.b16 %v9298, %v9297
    %v10351 = vpack.c.b16 %v9300, %v9299
    %v10352 = vpack.c.b16 %v9302, %v9301
    %v10353 = vpack.c.b16 %v9304, %v9303
    %v10354 = vpack.c.b16 %v9306, %v9305
    %v10355 = vpack.c.b16 %v9308, %v9307
    %v10356 = vpack.c.b16 %v9310, %v9309
    %v10357 = vpack.c.b16 %v9312, %v9311
    %v10358 = vpack.c.b16 %v9314, %v9313
    %v10359 = vpack.c.b16 %v9316, %v9315
    %v10360 = vpack.c.b16 %v9318, %v9317
    %v10361 = vpack.c.b16 %v9320, %v9319
    %v10362 = vpack.c.b16 %v9322, %v9321
    %v10363 = vpack.c.b16 %v9324, %v9323
    %v10364 = vpack.c.b16 %v9326, %v9325
    %v10365 = vpack.c.b16 %v9328, %v9327
    %v10366 = vpack.c.b16 %v9330, %v9329
    %v10367 = vpack.c.b16 %v9332, %v9331
    %v10368 = vpack.c.b16 %v9334, %v9333
    %v10369 = vpack.c.b16 %v9336, %v9335
    %v10370 = vpack.c.b16 %v9338, %v9337
    %v10371 = vpack.c.b16 %v9340, %v9339
    %v10372 = vpack.c.b16 %v9342, %v9341
    %v10373 = vpack.c.b16 %v9344, %v9343
    %v10374 = vpack.c.b16 %v9346, %v9345
    %v10375 = vpack.c.b16 %v9348, %v9347
    %v10376 = vpack.c.b16 %v9350, %v9349
    %v10377 = vpack.c.b16 %v9352, %v9351
    %v10378 = vpack.c.b16 %v9354, %v9353
    %v10379 = vpack.c.b16 %v9356, %v9355
    %v10380 = vpack.c.b16 %v9358, %v9357
    %v10381 = vpack.c.b16 %v9360, %v9359
    %v10382 = vpack.c.b16 %v9362, %v9361
    %v10383 = vpack.c.b16 %v9364, %v9363
    %v10384 = vpack.c.b16 %v9366, %v9365
    %v10385 = vpack.c.b16 %v9368, %v9367
    %v10386 = vpack.c.b16 %v9370, %v9369
    %v10387 = vpack.c.b16 %v9372, %v9371
    %v10388 = vpack.c.b16 %v9374, %v9373
    %v10389 = vpack.c.b16 %v9376, %v9375
    %v10390 = vpack.c.b16 %v9378, %v9377
    %v10391 = vpack.c.b16 %v9380, %v9379
    %v10392 = vpack.c.b16 %v9382, %v9381
    %v10393 = vpack.c.b16 %v9384, %v9383
    %v10394 = vpack.c.b16 %v9386, %v9385
    %v10395 = vpack.c.b16 %v9388, %v9387
    %v10396 = vpack.c.b16 %v9390, %v9389
    %v10397 = vpack.c.b16 %v9392, %v9391
    %v10398 = vpack.c.b16 %v9394, %v9393
    %v10399 = vpack.c.b16 %v9396, %v9395
    %v10400 = vpack.c.b16 %v9398, %v9397
    %v10401 = vpack.c.b16 %v9400, %v9399
    %v10402 = vpack.c.b16 %v9402, %v9401
    %v10403 = vpack.c.b16 %v9404, %v9403
    %v10404 = vpack.c.b16 %v9406, %v9405
    %v10405 = vpack.c.b16 %v9408, %v9407
    %v10406 = vpack.c.b16 %v9410, %v9409
    %v10407 = vpack.c.b16 %v9412, %v9411
    %v10408 = vpack.c.b16 %v9414, %v9413
    %v10409 = vpack.c.b16 %v9416, %v9415
    %v10410 = vpack.c.b16 %v9418, %v9417
    %v10411 = vpack.c.b16 %v9420, %v9419
    %v10412 = vpack.c.b16 %v9422, %v9421
    %v10413 = vpack.c.b16 %v9424, %v9423
    %v10414 = vpack.c.b16 %v9426, %v9425
    %v10415 = vpack.c.b16 %v9428, %v9427
    %v10416 = vpack.c.b16 %v9430, %v9429
    %v10417 = vpack.c.b16 %v9432, %v9431
    %v10418 = vpack.c.b16 %v9434, %v9433
    %v10419 = vpack.c.b16 %v9436, %v9435
    %v10420 = vpack.c.b16 %v9438, %v9437
    %v10421 = vpack.c.b16 %v9440, %v9439
    %v10422 = vpack.c.b16 %v9442, %v9441
    %v10423 = vpack.c.b16 %v9444, %v9443
    %v10424 = vpack.c.b16 %v9446, %v9445
    %v10425 = vpack.c.b16 %v9448, %v9447
    %v10426 = vpack.c.b16 %v9450, %v9449
    %v10427 = vpack.c.b16 %v9452, %v9451
    %v10428 = vpack.c.b16 %v9454, %v9453
    %v10429 = vpack.c.b16 %v9456, %v9455
    %v10430 = vpack.c.b16 %v9458, %v9457
    %v10431 = vpack.c.b16 %v9460, %v9459
    %v10432 = vpack.c.b16 %v9462, %v9461
    %v10433 = vpack.c.b16 %v9464, %v9463
    %v10434 = vpack.c.b16 %v9466, %v9465
    %v10435 = vpack.c.b16 %v9468, %v9467
    %v10436 = vpack.c.b16 %v9470, %v9469
    %v10437 = vpack.c.b16 %v9472, %v9471
    %v10438 = vpack.c.b16 %v9474, %v9473
    %v10439 = vpack.c.b16 %v9476, %v9475
    %v10440 = vpack.c.b16 %v9478, %v9477
    %v10441 = vpack.c.b16 %v9480, %v9479
    %v10442 = vpack.c.b16 %v9482, %v9481
    %v10443 = vpack.c.b16 %v9484, %v9483
    %v10444 = vpack.c.b16 %v9486, %v9485
    %v10445 = vpack.c.b16 %v9488, %v9487
    %v10446 = vpack.c.b16 %v9490, %v9489
    %v10447 = vpack.c.b16 %v9492, %v9491
    %v10448 = vpack.c.b16 %v9494, %v9493
    %v10449 = vpack.c.b16 %v9496, %v9495
    %v10450 = vpack.c.b16 %v9498, %v9497
    %v10451 = vpack.c.b16 %v9500, %v9499
    %v10452 = vpack.c.b16 %v9502, %v9501
    %v10453 = vpack.c.b16 %v9504, %v9503
    %v10454 = vpack.c.b16 %v9506, %v9505
    %v10455 = vpack.c.b16 %v9508, %v9507
    %v10456 = vpack.c.b16 %v9510, %v9509
    %v10457 = vpack.c.b16 %v9512, %v9511
    %v10458 = vpack.c.b16 %v9514, %v9513
    %v10459 = vpack.c.b16 %v9516, %v9515
    %v10460 = vpack.c.b16 %v9518, %v9517
    %v10461 = vpack.c.b16 %v9520, %v9519
    %v10462 = vpack.c.b16 %v9522, %v9521
    %v10463 = vpack.c.b16 %v9524, %v9523
    %v10464 = vpack.c.b16 %v9526, %v9525
    %v10465 = vpack.c.b16 %v9528, %v9527
    %v10466 = vpack.c.b16 %v9530, %v9529
    %v10467 = vpack.c.b16 %v9532, %v9531
    %v10468 = vpack.c.b16 %v9534, %v9533
    %v10469 = vpack.c.b16 %v9536, %v9535
    %v10470 = vpack.c.b16 %v9538, %v9537
    %v10471 = vpack.c.b16 %v9540, %v9539
    %v10472 = vpack.c.b16 %v9542, %v9541
    %v10473 = vpack.c.b16 %v9544, %v9543
    %v10474 = vpack.c.b16 %v9546, %v9545
    %v10475 = vpack.c.b16 %v9548, %v9547
    %v10476 = vpack.c.b16 %v9550, %v9549
    %v10477 = vpack.c.b16 %v9552, %v9551
    %v10478 = vpack.c.b16 %v9554, %v9553
    %v10479 = vpack.c.b16 %v9556, %v9555
    %v10480 = vpack.c.b16 %v9558, %v9557
    %v10481 = vpack.c.b16 %v9560, %v9559
    %v10482 = vpack.c.b16 %v9562, %v9561
    %v10483 = vpack.c.b16 %v9564, %v9563
    %v10484 = vpack.c.b16 %v9566, %v9565
    %v10485 = vpack.c.b16 %v9568, %v9567
    %v10486 = vpack.c.b16 %v9570, %v9569
    %v10487 = vpack.c.b16 %v9572, %v9571
    %v10488 = vpack.c.b16 %v9574, %v9573
    %v10489 = vpack.c.b16 %v9576, %v9575
    %v10490 = vpack.c.b16 %v9578, %v9577
    %v10491 = vpack.c.b16 %v9580, %v9579
    %v10492 = vpack.c.b16 %v9582, %v9581
    %v10493 = vpack.c.b16 %v9584, %v9583
    %v10494 = vpack.c.b16 %v9586, %v9585
    %v10495 = vpack.c.b16 %v9588, %v9587
    %v10496 = vpack.c.b16 %v9590, %v9589
    %v10497 = vpack.c.b16 %v9592, %v9591
    %v10498 = vpack.c.b16 %v9594, %v9593
    %v10499 = vpack.c.b16 %v9596, %v9595
    %v10500 = vpack.c.b16 %v9598, %v9597
    %v10501 = vpack.c.b16 %v9600, %v9599
    %v10502 = vpack.c.b16 %v9602, %v9601
    %v10503 = vpack.c.b16 %v9604, %v9603
    %v10504 = vpack.c.b16 %v9606, %v9605
    %v10505 = vpack.c.b16 %v9608, %v9607
    %v10506 = vpack.c.b16 %v9610, %v9609
    %v10507 = vpack.c.b16 %v9612, %v9611
    %v10508 = vpack.c.b16 %v9614, %v9613
    %v10509 = vpack.c.b16 %v9616, %v9615
    %v10510 = vpack.c.b16 %v9618, %v9617
    %v10511 = vpack.c.b16 %v9620, %v9619
    %v10512 = vpack.c.b16 %v9622, %v9621
    %v10513 = vpack.c.b16 %v9624, %v9623
    %v10514 = vpack.c.b16 %v9626, %v9625
    %v10515 = vpack.c.b16 %v9628, %v9627
    %v10516 = vpack.c.b16 %v9630, %v9629
    %v10517 = vpack.c.b16 %v9632, %v9631
    %v10518 = vpack.c.b16 %v9634, %v9633
    %v10519 = vpack.c.b16 %v9636, %v9635
    %v10520 = vpack.c.b16 %v9638, %v9637
    %v10521 = vpack.c.b16 %v9640, %v9639
    %v10522 = vpack.c.b16 %v9642, %v9641
    %v10523 = vpack.c.b16 %v9644, %v9643
    %v10524 = vpack.c.b16 %v9646, %v9645
    %v10525 = vpack.c.b16 %v9648, %v9647
    %v10526 = vpack.c.b16 %v9650, %v9649
    %v10527 = vpack.c.b16 %v9652, %v9651
    %v10528 = vpack.c.b16 %v9654, %v9653
    %v10529 = vpack.c.b16 %v9656, %v9655
    %v10530 = vpack.c.b16 %v9658, %v9657
    %v10531 = vpack.c.b16 %v9660, %v9659
    %v10532 = vpack.c.b16 %v9662, %v9661
    %v10533 = vpack.c.b16 %v9664, %v9663
    %v10534 = vpack.c.b16 %v9666, %v9665
    %v10535 = vpack.c.b16 %v9668, %v9667
    %v10536 = vpack.c.b16 %v9670, %v9669
    %v10537 = vpack.c.b16 %v9672, %v9671
    %v10538 = vpack.c.b16 %v9674, %v9673
    %v10539 = vpack.c.b16 %v9676, %v9675
    %v10540 = vpack.c.b16 %v9678, %v9677
    %v10541 = vpack.c.b16 %v9680, %v9679
    %v10542 = vpack.c.b16 %v9682, %v9681
    %v10543 = vpack.c.b16 %v9684, %v9683
    %v10544 = vpack.c.b16 %v9686, %v9685
    %v10545 = vpack.c.b16 %v9688, %v9687
    %v10546 = vpack.c.b16 %v9690, %v9689
    %v10547 = vpack.c.b16 %v9692, %v9691
    %v10548 = vpack.c.b16 %v9694, %v9693
    %v10549 = vpack.c.b16 %v9696, %v9695
    %v10550 = vpack.c.b16 %v9698, %v9697
    %v10551 = vpack.c.b16 %v9700, %v9699
    %v10552 = vpack.c.b16 %v9702, %v9701
    %v10553 = vpack.c.b16 %v9704, %v9703
    %v10554 = vpack.c.b16 %v9706, %v9705
    %v10555 = vpack.c.b16 %v9708, %v9707
    %v10556 = vpack.c.b16 %v9710, %v9709
    %v10557 = vpack.c.b16 %v9712, %v9711
    %v10558 = vpack.c.b16 %v9714, %v9713
    %v10559 = vpack.c.b16 %v9716, %v9715
    %v10560 = vpack.c.b16 %v9718, %v9717
    %v10561 = vpack.c.b16 %v9720, %v9719
    %v10562 = vpack.c.b16 %v9722, %v9721
    %v10563 = vpack.c.b16 %v9724, %v9723
    %v10564 = vpack.c.b16 %v9726, %v9725
    %v10565 = vpack.c.b16 %v9728, %v9727
    %v10566 = vpack.c.b16 %v9730, %v9729
    %v10567 = vpack.c.b16 %v9732, %v9731
    %v10568 = vpack.c.b16 %v9734, %v9733
    %v10569 = vpack.c.b16 %v9736, %v9735
    %v10570 = vpack.c.b16 %v9738, %v9737
    %v10571 = vpack.c.b16 %v9740, %v9739
    %v10572 = vpack.c.b16 %v9742, %v9741
    %v10573 = vpack.c.b16 %v9744, %v9743
    %v10574 = vpack.c.b16 %v9746, %v9745
    %v10575 = vpack.c.b16 %v9748, %v9747
    %v10576 = vpack.c.b16 %v9750, %v9749
    %v10577 = vpack.c.b16 %v9752, %v9751
    %v10578 = vpack.c.b16 %v9754, %v9753
    %v10579 = vpack.c.b16 %v9756, %v9755
    %v10580 = vpack.c.b16 %v9758, %v9757
    %v10581 = vpack.c.b16 %v9760, %v9759
    %v10582 = vpack.c.b16 %v9762, %v9761
    %v10583 = vpack.c.b16 %v9764, %v9763
    %v10584 = vpack.c.b16 %v9766, %v9765
    %v10585 = vpack.c.b16 %v9768, %v9767
    %v10586 = vpack.c.b16 %v9770, %v9769
    %v10587 = vpack.c.b16 %v9772, %v9771
    %v10588 = vpack.c.b16 %v9774, %v9773
    %v10589 = vpack.c.b16 %v9776, %v9775
    %v10590 = vpack.c.b16 %v9778, %v9777
    %v10591 = vpack.c.b16 %v9780, %v9779
    %v10592 = vpack.c.b16 %v9782, %v9781
    %v10593 = vpack.c.b16 %v9784, %v9783
    %v10594 = vpack.c.b16 %v9786, %v9785
    %v10595 = vpack.c.b16 %v9788, %v9787
    %v10596 = vpack.c.b16 %v9790, %v9789
    %v10597 = vpack.c.b16 %v9792, %v9791
    %v10598 = vpack.c.b16 %v9794, %v9793
    %v10599 = vpack.c.b16 %v9796, %v9795
    %v10600 = vpack.c.b16 %v9798, %v9797
    %v10601 = vpack.c.b16 %v9800, %v9799
    %v10602 = vpack.c.b16 %v9802, %v9801
    %v10603 = vpack.c.b16 %v9804, %v9803
    %v10604 = vpack.c.b16 %v9806, %v9805
    %v10605 = vpack.c.b16 %v9808, %v9807
    %v10606 = vpack.c.b16 %v9810, %v9809
    %v10607 = vpack.c.b16 %v9812, %v9811
    %v10608 = vpack.c.b16 %v9814, %v9813
    %v10609 = vpack.c.b16 %v9816, %v9815
    %v10610 = vpack.c.b16 %v9818, %v9817
    %v10611 = vpack.c.b16 %v9820, %v9819
    %v10612 = vpack.c.b16 %v9822, %v9821
    %v10613 = vpack.c.b16 %v9824, %v9823
    %v10614 = vpack.c.b16 %v9826, %v9825
    %v10615 = vpack.c.b16 %v9828, %v9827
    %v10616 = vpack.c.b16 %v9830, %v9829
    %v10617 = vpack.c.b16 %v9832, %v9831
    %v10618 = vpack.c.b16 %v9834, %v9833
    %v10619 = vpack.c.b16 %v9836, %v9835
    %v10620 = vpack.c.b16 %v9838, %v9837
    %v10621 = vpack.c.b16 %v9840, %v9839
    %v10622 = vpack.c.b16 %v9842, %v9841
    %v10623 = vpack.c.b16 %v9844, %v9843
    %v10624 = vpack.c.b16 %v9846, %v9845
    %v10625 = vpack.c.b16 %v9848, %v9847
    %v10626 = vpack.c.b16 %v9850, %v9849
    %v10627 = vpack.c.b16 %v9852, %v9851
    %v10628 = vpack.c.b16 %v9854, %v9853
    %v10629 = vpack.c.b16 %v9856, %v9855
    %v10630 = vpack.c.b16 %v9858, %v9857
    %v10631 = vpack.c.b16 %v9860, %v9859
    %v10632 = vpack.c.b16 %v9862, %v9861
    %v10633 = vpack.c.b16 %v9864, %v9863
    %v10634 = vpack.c.b16 %v9866, %v9865
    %v10635 = vpack.c.b16 %v9868, %v9867
    %v10636 = vpack.c.b16 %v9870, %v9869
    %v10637 = vpack.c.b16 %v9872, %v9871
    %v10638 = vpack.c.b16 %v9874, %v9873
    %v10639 = vpack.c.b16 %v9876, %v9875
    %v10640 = vpack.c.b16 %v9878, %v9877
    %v10641 = vpack.c.b16 %v9880, %v9879
    %v10642 = vpack.c.b16 %v9882, %v9881
    %v10643 = vpack.c.b16 %v9884, %v9883
    %v10644 = vpack.c.b16 %v9886, %v9885
    %v10645 = vpack.c.b16 %v9888, %v9887
    %v10646 = vpack.c.b16 %v9890, %v9889
    %v10647 = vpack.c.b16 %v9892, %v9891
    %v10648 = vpack.c.b16 %v9894, %v9893
    %v10649 = vpack.c.b16 %v9896, %v9895
    %v10650 = vpack.c.b16 %v9898, %v9897
    %v10651 = vpack.c.b16 %v9900, %v9899
    %v10652 = vpack.c.b16 %v9902, %v9901
    %v10653 = vpack.c.b16 %v9904, %v9903
    %v10654 = vpack.c.b16 %v9906, %v9905
    %v10655 = vpack.c.b16 %v9908, %v9907
    %v10656 = vpack.c.b16 %v9910, %v9909
    %v10657 = vpack.c.b16 %v9912, %v9911
    %v10658 = vpack.c.b16 %v9914, %v9913
    %v10659 = vpack.c.b16 %v9916, %v9915
    %v10660 = vpack.c.b16 %v9918, %v9917
    %v10661 = vpack.c.b16 %v9920, %v9919
    %v10662 = vpack.c.b16 %v9922, %v9921
    %v10663 = vpack.c.b16 %v9924, %v9923
    %v10664 = vpack.c.b16 %v9926, %v9925
    %v10665 = vpack.c.b16 %v9928, %v9927
    %v10666 = vpack.c.b16 %v9930, %v9929
    %v10667 = vpack.c.b16 %v9932, %v9931
    %v10668 = vpack.c.b16 %v9934, %v9933
    %v10669 = vpack.c.b16 %v9936, %v9935
    %v10670 = vpack.c.b16 %v9938, %v9937
    %v10671 = vpack.c.b16 %v9940, %v9939
    %v10672 = vpack.c.b16 %v9942, %v9941
    %v10673 = vpack.c.b16 %v9944, %v9943
    %v10674 = vpack.c.b16 %v9946, %v9945
    %v10675 = vpack.c.b16 %v9948, %v9947
    %v10676 = vpack.c.b16 %v9950, %v9949
    %v10677 = vpack.c.b16 %v9952, %v9951
    %v10678 = vpack.c.b16 %v9954, %v9953
    %v10679 = vpack.c.b16 %v9956, %v9955
    %v10680 = vpack.c.b16 %v9958, %v9957
    %v10681 = vpack.c.b16 %v9960, %v9959
    %v10682 = vpack.c.b16 %v9962, %v9961
    %v10683 = vpack.c.b16 %v9964, %v9963
    %v10684 = vpack.c.b16 %v9966, %v9965
    %v10685 = vpack.c.b16 %v9968, %v9967
    %v10686 = vpack.c.b16 %v9970, %v9969
    %v10687 = vpack.c.b16 %v9972, %v9971
    %v10688 = vpack.c.b16 %v9974, %v9973
    %v10689 = vpack.c.b16 %v9976, %v9975
    %v10690 = vpack.c.b16 %v9978, %v9977
    %v10691 = vpack.c.b16 %v9980, %v9979
    %v10692 = vpack.c.b16 %v9982, %v9981
    %v10693 = vpack.c.b16 %v9984, %v9983
    %v10694 = vpack.c.b16 %v9986, %v9985
    %v10695 = vpack.c.b16 %v9988, %v9987
    %v10696 = vpack.c.b16 %v9990, %v9989
    %v10697 = vpack.c.b16 %v9992, %v9991
    %v10698 = vpack.c.b16 %v9994, %v9993
    %v10699 = vpack.c.b16 %v9996, %v9995
    %v10700 = vpack.c.b16 %v9998, %v9997
    %v10701 = vpack.c.b16 %v10000, %v9999
    %v10702 = vpack.c.b16 %v10002, %v10001
    %v10703 = vpack.c.b16 %v10004, %v10003
    %v10704 = vpack.c.b16 %v10006, %v10005
    %v10705 = vpack.c.b16 %v10008, %v10007
    %v10706 = vpack.c.b16 %v10010, %v10009
    %v10707 = vpack.c.b16 %v10012, %v10011
    %v10708 = vpack.c.b16 %v10014, %v10013
    %v10709 = vpack.c.b16 %v10016, %v10015
    %v10710 = vpack.c.b16 %v10018, %v10017
    %v10711 = vpack.c.b16 %v10020, %v10019
    %v10712 = vpack.c.b16 %v10022, %v10021
    %v10713 = vpack.c.b16 %v10024, %v10023
    %v10714 = vpack.c.b16 %v10026, %v10025
    %v10715 = vpack.c.b16 %v10028, %v10027
    %v10716 = vpack.c.b16 %v10030, %v10029
    %v10717 = vpack.c.b16 %v10032, %v10031
    %v10718 = vpack.c.b16 %v10034, %v10033
    %v10719 = vpack.c.b16 %v10036, %v10035
    %v10720 = vpack.c.b16 %v10038, %v10037
    %v10721 = vpack.c.b16 %v10040, %v10039
    %v10722 = vpack.c.b16 %v10042, %v10041
    %v10723 = vpack.c.b16 %v10044, %v10043
    %v10724 = vpack.c.b16 %v10046, %v10045
    %v10725 = vpack.c.b16 %v10048, %v10047
    %v10726 = vpack.c.b16 %v10050, %v10049
    %v10727 = vpack.c.b16 %v10052, %v10051
    %v10728 = vpack.c.b16 %v10054, %v10053
    %v10729 = vpack.c.b16 %v10056, %v10055
    %v10730 = vpack.c.b16 %v10058, %v10057
    %v10731 = vpack.c.b16 %v10060, %v10059
    %v10732 = vpack.c.b16 %v10062, %v10061
    %v10733 = vpack.c.b16 %v10064, %v10063
    %v10734 = vpack.c.b16 %v10066, %v10065
    %v10735 = vpack.c.b16 %v10068, %v10067
    %v10736 = vpack.c.b16 %v10070, %v10069
    %v10737 = vpack.c.b16 %v10072, %v10071
    %v10738 = vpack.c.b16 %v10074, %v10073
    %v10739 = vpack.c.b16 %v10076, %v10075
    %v10740 = vpack.c.b16 %v10078, %v10077
    %v10741 = vpack.c.b16 %v10080, %v10079
    %v10742 = vpack.c.b16 %v10082, %v10081
    %v10743 = vpack.c.b16 %v10084, %v10083
    %v10744 = vpack.c.b16 %v10086, %v10085
    %v10745 = vpack.c.b16 %v10088, %v10087
    %v10746 = vpack.c.b16 %v10090, %v10089
    %v10747 = vpack.c.b16 %v10092, %v10091
    %v10748 = vpack.c.b16 %v10094, %v10093
    %v10749 = vpack.c.b16 %v10096, %v10095
    %v10750 = vpack.c.b16 %v10098, %v10097
    %v10751 = vpack.c.b16 %v10100, %v10099
    %v10752 = vpack.c.b16 %v10102, %v10101
    %v10753 = vpack.c.b16 %v10104, %v10103
    %v10754 = vpack.c.b16 %v10106, %v10105
    %v10755 = vpack.c.b16 %v10108, %v10107
    %v10756 = vpack.c.b16 %v10110, %v10109
    %v10757 = vpack.c.b16 %v10112, %v10111
    %v10758 = vpack.c.b16 %v10114, %v10113
    %v10759 = vpack.c.b16 %v10116, %v10115
    %v10760 = vpack.c.b16 %v10118, %v10117
    %v10761 = vpack.c.b16 %v10120, %v10119
    %v10762 = vpack.c.b16 %v10122, %v10121
    %11403 = vmatprep.subr.bf16.mxu0 0
    %11404 = vmatpush1.bf16.msra.mxu0 %v10123
    %11405 = vmatprep.subr.bf16.mxu0 0
    %11406 = vmatpush1.bf16.msra.mxu0 %v10124
    %11407 = vmatprep.subr.bf16.mxu0 0
    %11408 = vmatpush1.bf16.msra.mxu0 %v10125
    %11409 = vmatprep.subr.bf16.mxu0 0
    %11410 = vmatpush1.bf16.msra.mxu0 %v10126
    %11411 = vmatprep.subr.bf16.mxu0 0
    %11412 = vmatpush1.bf16.msra.mxu0 %v10127
    %11413 = vmatprep.subr.bf16.mxu0 0
    %11414 = vmatpush1.bf16.msra.mxu0 %v10128
    %11415 = vmatprep.subr.bf16.mxu0 0
    %11416 = vmatpush1.bf16.msra.mxu0 %v10129
    %11417 = vmatprep.subr.bf16.mxu0 0
    %11418 = vmatpush1.bf16.msra.mxu0 %v10130
    %11419 = vmatprep.subr.bf16.mxu0 0
    %11420 = vmatpush1.bf16.msra.mxu0 %v10131
    %11421 = vmatprep.subr.bf16.mxu0 0
    %11422 = vmatpush1.bf16.msra.mxu0 %v10132
    %11423 = vmatprep.subr.bf16.mxu0 0
    %11424 = vmatpush1.bf16.msra.mxu0 %v10133
    %11425 = vmatprep.subr.bf16.mxu0 0
    %11426 = vmatpush1.bf16.msra.mxu0 %v10134
    %11427 = vmatprep.subr.bf16.mxu0 0
    %11428 = vmatpush1.bf16.msra.mxu0 %v10135
    %11429 = vmatprep.subr.bf16.mxu0 0
    %11430 = vmatpush1.bf16.msra.mxu0 %v10136
    %11431 = vmatprep.subr.bf16.mxu0 0
    %11432 = vmatpush1.bf16.msra.mxu0 %v10137
    %11433 = vmatprep.subr.bf16.mxu0 0
    %11434 = vmatpush1.bf16.msra.mxu0 %v10138
    %11435 = vmatprep.mubr.bf16.mxu0 %v6204
    %11436 = vmatmul.mubr.bf16.gmra.mrb[0].mxu0 %v6203
    %v11437 = vpop.f32.mrb[0].mxu0
    %v11438 = vadd.f32 0.0, %v11437
    %v11439 = vpop.f32.mrb[0].mxu0
    %v11440 = vpop.f32.mrb[0].mxu0
    %v11441 = vpop.f32.mrb[0].mxu0
    %11442 = vdwg.mxu0
    %11443 = vmatprep.subr.bf16.mxu0 0
    %11444 = vmatpush1.bf16.msra.mxu0 %v10139
    %11445 = vmatprep.subr.bf16.mxu0 0
    %11446 = vmatpush1.bf16.msra.mxu0 %v10140
    %11447 = vmatprep.subr.bf16.mxu0 0
    %11448 = vmatpush1.bf16.msra.mxu0 %v10141
    %11449 = vmatprep.subr.bf16.mxu0 0
    %11450 = vmatpush1.bf16.msra.mxu0 %v10142
    %11451 = vmatprep.subr.bf16.mxu0 0
    %11452 = vmatpush1.bf16.msra.mxu0 %v10143
    %11453 = vmatprep.subr.bf16.mxu0 0
    %11454 = vmatpush1.bf16.msra.mxu0 %v10144
    %11455 = vmatprep.subr.bf16.mxu0 0
    %11456 = vmatpush1.bf16.msra.mxu0 %v10145
    %11457 = vmatprep.subr.bf16.mxu0 0
    %11458 = vmatpush1.bf16.msra.mxu0 %v10146
    %11459 = vmatprep.subr.bf16.mxu0 0
    %11460 = vmatpush1.bf16.msra.mxu0 %v10147
    %11461 = vmatprep.subr.bf16.mxu0 0
    %11462 = vmatpush1.bf16.msra.mxu0 %v10148
    %11463 = vmatprep.subr.bf16.mxu0 0
    %11464 = vmatpush1.bf16.msra.mxu0 %v10149
    %11465 = vmatprep.subr.bf16.mxu0 0
    %11466 = vmatpush1.bf16.msra.mxu0 %v10150
    %11467 = vmatprep.subr.bf16.mxu0 0
    %11468 = vmatpush1.bf16.msra.mxu0 %v10151
    %11469 = vmatprep.subr.bf16.mxu0 0
    %11470 = vmatpush1.bf16.msra.mxu0 %v10152
    %11471 = vmatprep.subr.bf16.mxu0 0
    %11472 = vmatpush1.bf16.msra.mxu0 %v10153
    %11473 = vmatprep.subr.bf16.mxu0 0
    %11474 = vmatpush1.bf16.msra.mxu0 %v10154
    %11475 = vmatprep.mubr.bf16.mxu0 %v6206
    %11476 = vmatmul.mubr.bf16.gmra.mrb[0].mxu0 %v6205
    %v11477 = vpop.f32.mrb[0].mxu0
    %v11478 = vadd.f32 %v11438, %v11477
    %v11479 = vpop.f32.mrb[0].mxu0
    %v11480 = vpop.f32.mrb[0].mxu0
    %v11481 = vpop.f32.mrb[0].mxu0
    %11482 = vdwg.mxu0
    %11483 = vmatprep.subr.bf16.mxu0 0
    %11484 = vmatpush1.bf16.msra.mxu0 %v10155
    %11485 = vmatprep.subr.bf16.mxu0 0
    %11486 = vmatpush1.bf16.msra.mxu0 %v10156
    %11487 = vmatprep.subr.bf16.mxu0 0
    %11488 = vmatpush1.bf16.msra.mxu0 %v10157
    %11489 = vmatprep.subr.bf16.mxu0 0
    %11490 = vmatpush1.bf16.msra.mxu0 %v10158
    %11491 = vmatprep.subr.bf16.mxu0 0
    %11492 = vmatpush1.bf16.msra.mxu0 %v10159
    %11493 = vmatprep.subr.bf16.mxu0 0
    %11494 = vmatpush1.bf16.msra.mxu0 %v10160
    %11495 = vmatprep.subr.bf16.mxu0 0
    %11496 = vmatpush1.bf16.msra.mxu0 %v10161
    %11497 = vmatprep.subr.bf16.mxu0 0
    %11498 = vmatpush1.bf16.msra.mxu0 %v10162
    %11499 = vmatprep.subr.bf16.mxu0 0
    %11500 = vmatpush1.bf16.msra.mxu0 %v10163
    %11501 = vmatprep.subr.bf16.mxu0 0
    %11502 = vmatpush1.bf16.msra.mxu0 %v10164
    %11503 = vmatprep.subr.bf16.mxu0 0
    %11504 = vmatpush1.bf16.msra.mxu0 %v10165
    %11505 = vmatprep.subr.bf16.mxu0 0
    %11506 = vmatpush1.bf16.msra.mxu0 %v10166
    %11507 = vmatprep.subr.bf16.mxu0 0
    %11508 = vmatpush1.bf16.msra.mxu0 %v10167
    %11509 = vmatprep.subr.bf16.mxu0 0
    %11510 = vmatpush1.bf16.msra.mxu0 %v10168
    %11511 = vmatprep.subr.bf16.mxu0 0
    %11512 = vmatpush1.bf16.msra.mxu0 %v10169
    %11513 = vmatprep.subr.bf16.mxu0 0
    %11514 = vmatpush1.bf16.msra.mxu0 %v10170
    %11515 = vmatprep.mubr.bf16.mxu0 %v6208
    %11516 = vmatmul.mubr.bf16.gmra.mrb[0].mxu0 %v6207
    %v11517 = vpop.f32.mrb[0].mxu0
    %v11518 = vadd.f32 %v11478, %v11517
    %v11519 = vpop.f32.mrb[0].mxu0
    %v11520 = vpop.f32.mrb[0].mxu0
    %v11521 = vpop.f32.mrb[0].mxu0
    %11522 = vdwg.mxu0
    %11523 = vmatprep.subr.bf16.mxu0 0
    %11524 = vmatpush1.bf16.msra.mxu0 %v10171
    %11525 = vmatprep.subr.bf16.mxu0 0
    %11526 = vmatpush1.bf16.msra.mxu0 %v10172
    %11527 = vmatprep.subr.bf16.mxu0 0
    %11528 = vmatpush1.bf16.msra.mxu0 %v10173
    %11529 = vmatprep.subr.bf16.mxu0 0
    %11530 = vmatpush1.bf16.msra.mxu0 %v10174
    %11531 = vmatprep.subr.bf16.mxu0 0
    %11532 = vmatpush1.bf16.msra.mxu0 %v10175
    %11533 = vmatprep.subr.bf16.mxu0 0
    %11534 = vmatpush1.bf16.msra.mxu0 %v10176
    %11535 = vmatprep.subr.bf16.mxu0 0
    %11536 = vmatpush1.bf16.msra.mxu0 %v10177
    %11537 = vmatprep.subr.bf16.mxu0 0
    %11538 = vmatpush1.bf16.msra.mxu0 %v10178
    %11539 = vmatprep.subr.bf16.mxu0 0
    %11540 = vmatpush1.bf16.msra.mxu0 %v10179
    %11541 = vmatprep.subr.bf16.mxu0 0
    %11542 = vmatpush1.bf16.msra.mxu0 %v10180
    %11543 = vmatprep.subr.bf16.mxu0 0
    %11544 = vmatpush1.bf16.msra.mxu0 %v10181
    %11545 = vmatprep.subr.bf16.mxu0 0
    %11546 = vmatpush1.bf16.msra.mxu0 %v10182
    %11547 = vmatprep.subr.bf16.mxu0 0
    %11548 = vmatpush1.bf16.msra.mxu0 %v10183
    %11549 = vmatprep.subr.bf16.mxu0 0
    %11550 = vmatpush1.bf16.msra.mxu0 %v10184
    %11551 = vmatprep.subr.bf16.mxu0 0
    %11552 = vmatpush1.bf16.msra.mxu0 %v10185
    %11553 = vmatprep.subr.bf16.mxu0 0
    %11554 = vmatpush1.bf16.msra.mxu0 %v10186
    %11555 = vmatprep.mubr.bf16.mxu0 %v6210
    %11556 = vmatmul.mubr.bf16.gmra.mrb[0].mxu0 %v6209
    %v11557 = vpop.f32.mrb[0].mxu0
    %v11558 = vadd.f32 %v11518, %v11557
    %v11559 = vpop.f32.mrb[0].mxu0
    %v11560 = vpop.f32.mrb[0].mxu0
    %v11561 = vpop.f32.mrb[0].mxu0
    %11562 = vdwg.mxu0
    %11563 = vmatprep.subr.bf16.mxu0 0
    %11564 = vmatpush1.bf16.msra.mxu0 %v10187
    %11565 = vmatprep.subr.bf16.mxu0 0
    %11566 = vmatpush1.bf16.msra.mxu0 %v10188
    %11567 = vmatprep.subr.bf16.mxu0 0
    %11568 = vmatpush1.bf16.msra.mxu0 %v10189
    %11569 = vmatprep.subr.bf16.mxu0 0
    %11570 = vmatpush1.bf16.msra.mxu0 %v10190
    %11571 = vmatprep.subr.bf16.mxu0 0
    %11572 = vmatpush1.bf16.msra.mxu0 %v10191
    %11573 = vmatprep.subr.bf16.mxu0 0
    %11574 = vmatpush1.bf16.msra.mxu0 %v10192
    %11575 = vmatprep.subr.bf16.mxu0 0
    %11576 = vmatpush1.bf16.msra.mxu0 %v10193
    %11577 = vmatprep.subr.bf16.mxu0 0
    %11578 = vmatpush1.bf16.msra.mxu0 %v10194
    %11579 = vmatprep.subr.bf16.mxu0 0
    %11580 = vmatpush1.bf16.msra.mxu0 %v10195
    %11581 = vmatprep.subr.bf16.mxu0 0
    %11582 = vmatpush1.bf16.msra.mxu0 %v10196
    %11583 = vmatprep.subr.bf16.mxu0 0
    %11584 = vmatpush1.bf16.msra.mxu0 %v10197
    %11585 = vmatprep.subr.bf16.mxu0 0
    %11586 = vmatpush1.bf16.msra.mxu0 %v10198
    %11587 = vmatprep.subr.bf16.mxu0 0
    %11588 = vmatpush1.bf16.msra.mxu0 %v10199
    %11589 = vmatprep.subr.bf16.mxu0 0
    %11590 = vmatpush1.bf16.msra.mxu0 %v10200
    %11591 = vmatprep.subr.bf16.mxu0 0
    %11592 = vmatpush1.bf16.msra.mxu0 %v10201
    %11593 = vmatprep.subr.bf16.mxu0 0
    %11594 = vmatpush1.bf16.msra.mxu0 %v10202
    %11595 = vmatprep.mubr.bf16.mxu0 %v6212
    %11596 = vmatmul.mubr.bf16.gmra.mrb[0].mxu0 %v6211
    %v11597 = vpop.f32.mrb[0].mxu0
    %v11598 = vadd.f32 %v11558, %v11597
    %v11599 = vpop.f32.mrb[0].mxu0
    %v11600 = vpop.f32.mrb[0].mxu0
    %v11601 = vpop.f32.mrb[0].mxu0
    %11602 = vdwg.mxu0
    %11603 = vmatprep.subr.bf16.mxu0 0
    %11604 = vmatpush1.bf16.msra.mxu0 %v10203
    %11605 = vmatprep.subr.bf16.mxu0 0
    %11606 = vmatpush1.bf16.msra.mxu0 %v10204
    %11607 = vmatprep.subr.bf16.mxu0 0
    %11608 = vmatpush1.bf16.msra.mxu0 %v10205
    %11609 = vmatprep.subr.bf16.mxu0 0
    %11610 = vmatpush1.bf16.msra.mxu0 %v10206
    %11611 = vmatprep.subr.bf16.mxu0 0
    %11612 = vmatpush1.bf16.msra.mxu0 %v10207
    %11613 = vmatprep.subr.bf16.mxu0 0
    %11614 = vmatpush1.bf16.msra.mxu0 %v10208
    %11615 = vmatprep.subr.bf16.mxu0 0
    %11616 = vmatpush1.bf16.msra.mxu0 %v10209
    %11617 = vmatprep.subr.bf16.mxu0 0
    %11618 = vmatpush1.bf16.msra.mxu0 %v10210
    %11619 = vmatprep.subr.bf16.mxu0 0
    %11620 = vmatpush1.bf16.msra.mxu0 %v10211
    %11621 = vmatprep.subr.bf16.mxu0 0
    %11622 = vmatpush1.bf16.msra.mxu0 %v10212
    %11623 = vmatprep.subr.bf16.mxu0 0
    %11624 = vmatpush1.bf16.msra.mxu0 %v10213
    %11625 = vmatprep.subr.bf16.mxu0 0
    %11626 = vmatpush1.bf16.msra.mxu0 %v10214
    %11627 = vmatprep.subr.bf16.mxu0 0
    %11628 = vmatpush1.bf16.msra.mxu0 %v10215
    %11629 = vmatprep.subr.bf16.mxu0 0
    %11630 = vmatpush1.bf16.msra.mxu0 %v10216
    %11631 = vmatprep.subr.bf16.mxu0 0
    %11632 = vmatpush1.bf16.msra.mxu0 %v10217
    %11633 = vmatprep.subr.bf16.mxu0 0
    %11634 = vmatpush1.bf16.msra.mxu0 %v10218
    %11635 = vmatprep.mubr.bf16.mxu0 %v6214
    %11636 = vmatmul.mubr.bf16.gmra.mrb[0].mxu0 %v6213
    %v11637 = vpop.f32.mrb[0].mxu0
    %v11638 = vadd.f32 %v11598, %v11637
    %v11639 = vpop.f32.mrb[0].mxu0
    %v11640 = vpop.f32.mrb[0].mxu0
    %v11641 = vpop.f32.mrb[0].mxu0
    %11642 = vdwg.mxu0
    %11643 = vmatprep.subr.bf16.mxu0 0
    %11644 = vmatpush1.bf16.msra.mxu0 %v10219
    %11645 = vmatprep.subr.bf16.mxu0 0
    %11646 = vmatpush1.bf16.msra.mxu0 %v10220
    %11647 = vmatprep.subr.bf16.mxu0 0
    %11648 = vmatpush1.bf16.msra.mxu0 %v10221
    %11649 = vmatprep.subr.bf16.mxu0 0
    %11650 = vmatpush1.bf16.msra.mxu0 %v10222
    %11651 = vmatprep.subr.bf16.mxu0 0
    %11652 = vmatpush1.bf16.msra.mxu0 %v10223
    %11653 = vmatprep.subr.bf16.mxu0 0
    %11654 = vmatpush1.bf16.msra.mxu0 %v10224
    %11655 = vmatprep.subr.bf16.mxu0 0
    %11656 = vmatpush1.bf16.msra.mxu0 %v10225
    %11657 = vmatprep.subr.bf16.mxu0 0
    %11658 = vmatpush1.bf16.msra.mxu0 %v10226
    %11659 = vmatprep.subr.bf16.mxu0 0
    %11660 = vmatpush1.bf16.msra.mxu0 %v10227
    %11661 = vmatprep.subr.bf16.mxu0 0
    %11662 = vmatpush1.bf16.msra.mxu0 %v10228
    %11663 = vmatprep.subr.bf16.mxu0 0
    %11664 = vmatpush1.bf16.msra.mxu0 %v10229
    %11665 = vmatprep.subr.bf16.mxu0 0
    %11666 = vmatpush1.bf16.msra.mxu0 %v10230
    %11667 = vmatprep.subr.bf16.mxu0 0
    %11668 = vmatpush1.bf16.msra.mxu0 %v10231
    %11669 = vmatprep.subr.bf16.mxu0 0
    %11670 = vmatpush1.bf16.msra.mxu0 %v10232
    %11671 = vmatprep.subr.bf16.mxu0 0
    %11672 = vmatpush1.bf16.msra.mxu0 %v10233
    %11673 = vmatprep.subr.bf16.mxu0 0
    %11674 = vmatpush1.bf16.msra.mxu0 %v10234
    %11675 = vmatprep.mubr.bf16.mxu0 %v6216
    %11676 = vmatmul.mubr.bf16.gmra.mrb[0].mxu0 %v6215
    %v11677 = vpop.f32.mrb[0].mxu0
    %v11678 = vadd.f32 %v11638, %v11677
    %v11679 = vpop.f32.mrb[0].mxu0
    %v11680 = vpop.f32.mrb[0].mxu0
    %v11681 = vpop.f32.mrb[0].mxu0
    %11682 = vdwg.mxu0
    %11683 = vmatprep.subr.bf16.mxu0 0
    %11684 = vmatpush1.bf16.msra.mxu0 %v10235
    %11685 = vmatprep.subr.bf16.mxu0 0
    %11686 = vmatpush1.bf16.msra.mxu0 %v10236
    %11687 = vmatprep.subr.bf16.mxu0 0
    %11688 = vmatpush1.bf16.msra.mxu0 %v10237
    %11689 = vmatprep.subr.bf16.mxu0 0
    %11690 = vmatpush1.bf16.msra.mxu0 %v10238
    %11691 = vmatprep.subr.bf16.mxu0 0
    %11692 = vmatpush1.bf16.msra.mxu0 %v10239
    %11693 = vmatprep.subr.bf16.mxu0 0
    %11694 = vmatpush1.bf16.msra.mxu0 %v10240
    %11695 = vmatprep.subr.bf16.mxu0 0
    %11696 = vmatpush1.bf16.msra.mxu0 %v10241
    %11697 = vmatprep.subr.bf16.mxu0 0
    %11698 = vmatpush1.bf16.msra.mxu0 %v10242
    %11699 = vmatprep.subr.bf16.mxu0 0
    %11700 = vmatpush1.bf16.msra.mxu0 %v10243
    %11701 = vmatprep.subr.bf16.mxu0 0
    %11702 = vmatpush1.bf16.msra.mxu0 %v10244
    %11703 = vmatprep.subr.bf16.mxu0 0
    %11704 = vmatpush1.bf16.msra.mxu0 %v10245
    %11705 = vmatprep.subr.bf16.mxu0 0
    %11706 = vmatpush1.bf16.msra.mxu0 %v10246
    %11707 = vmatprep.subr.bf16.mxu0 0
    %11708 = vmatpush1.bf16.msra.mxu0 %v10247
    %11709 = vmatprep.subr.bf16.mxu0 0
    %11710 = vmatpush1.bf16.msra.mxu0 %v10248
    %11711 = vmatprep.subr.bf16.mxu0 0
    %11712 = vmatpush1.bf16.msra.mxu0 %v10249
    %11713 = vmatprep.subr.bf16.mxu0 0
    %11714 = vmatpush1.bf16.msra.mxu0 %v10250
    %11715 = vmatprep.mubr.bf16.mxu0 %v6218
    %11716 = vmatmul.mubr.bf16.gmra.mrb[0].mxu0 %v6217
    %v11717 = vpop.f32.mrb[0].mxu0
    %v11718 = vadd.f32 %v11678, %v11717
    %v11719 = vpop.f32.mrb[0].mxu0
    %v11720 = vpop.f32.mrb[0].mxu0
    %v11721 = vpop.f32.mrb[0].mxu0
    %11722 = vdwg.mxu0
    %11723 = vmatprep.subr.bf16.mxu0 0
    %11724 = vmatpush1.bf16.msra.mxu0 %v10251
    %11725 = vmatprep.subr.bf16.mxu0 0
    %11726 = vmatpush1.bf16.msra.mxu0 %v10252
    %11727 = vmatprep.subr.bf16.mxu0 0
    %11728 = vmatpush1.bf16.msra.mxu0 %v10253
    %11729 = vmatprep.subr.bf16.mxu0 0
    %11730 = vmatpush1.bf16.msra.mxu0 %v10254
    %11731 = vmatprep.subr.bf16.mxu0 0
    %11732 = vmatpush1.bf16.msra.mxu0 %v10255
    %11733 = vmatprep.subr.bf16.mxu0 0
    %11734 = vmatpush1.bf16.msra.mxu0 %v10256
    %11735 = vmatprep.subr.bf16.mxu0 0
    %11736 = vmatpush1.bf16.msra.mxu0 %v10257
    %11737 = vmatprep.subr.bf16.mxu0 0
    %11738 = vmatpush1.bf16.msra.mxu0 %v10258
    %11739 = vmatprep.subr.bf16.mxu0 0
    %11740 = vmatpush1.bf16.msra.mxu0 %v10259
    %11741 = vmatprep.subr.bf16.mxu0 0
    %11742 = vmatpush1.bf16.msra.mxu0 %v10260
    %11743 = vmatprep.subr.bf16.mxu0 0
    %11744 = vmatpush1.bf16.msra.mxu0 %v10261
    %11745 = vmatprep.subr.bf16.mxu0 0
    %11746 = vmatpush1.bf16.msra.mxu0 %v10262
    %11747 = vmatprep.subr.bf16.mxu0 0
    %11748 = vmatpush1.bf16.msra.mxu0 %v10263
    %11749 = vmatprep.subr.bf16.mxu0 0
    %11750 = vmatpush1.bf16.msra.mxu0 %v10264
    %11751 = vmatprep.subr.bf16.mxu0 0
    %11752 = vmatpush1.bf16.msra.mxu0 %v10265
    %11753 = vmatprep.subr.bf16.mxu0 0
    %11754 = vmatpush1.bf16.msra.mxu0 %v10266
    %11755 = vmatprep.mubr.bf16.mxu0 %v6220
    %11756 = vmatmul.mubr.bf16.gmra.mrb[0].mxu0 %v6219
    %v11757 = vpop.f32.mrb[0].mxu0
    %v11758 = vadd.f32 %v11718, %v11757
    %v11759 = vpop.f32.mrb[0].mxu0
    %v11760 = vpop.f32.mrb[0].mxu0
    %v11761 = vpop.f32.mrb[0].mxu0
    %11762 = vdwg.mxu0
    %11763 = vmatprep.subr.bf16.mxu0 0
    %11764 = vmatpush1.bf16.msra.mxu0 %v10267
    %11765 = vmatprep.subr.bf16.mxu0 0
    %11766 = vmatpush1.bf16.msra.mxu0 %v10268
    %11767 = vmatprep.subr.bf16.mxu0 0
    %11768 = vmatpush1.bf16.msra.mxu0 %v10269
    %11769 = vmatprep.subr.bf16.mxu0 0
    %11770 = vmatpush1.bf16.msra.mxu0 %v10270
    %11771 = vmatprep.subr.bf16.mxu0 0
    %11772 = vmatpush1.bf16.msra.mxu0 %v10271
    %11773 = vmatprep.subr.bf16.mxu0 0
    %11774 = vmatpush1.bf16.msra.mxu0 %v10272
    %11775 = vmatprep.subr.bf16.mxu0 0
    %11776 = vmatpush1.bf16.msra.mxu0 %v10273
    %11777 = vmatprep.subr.bf16.mxu0 0
    %11778 = vmatpush1.bf16.msra.mxu0 %v10274
    %11779 = vmatprep.subr.bf16.mxu0 0
    %11780 = vmatpush1.bf16.msra.mxu0 %v10275
    %11781 = vmatprep.subr.bf16.mxu0 0
    %11782 = vmatpush1.bf16.msra.mxu0 %v10276
    %11783 = vmatprep.subr.bf16.mxu0 0
    %11784 = vmatpush1.bf16.msra.mxu0 %v10277
    %11785 = vmatprep.subr.bf16.mxu0 0
    %11786 = vmatpush1.bf16.msra.mxu0 %v10278
    %11787 = vmatprep.subr.bf16.mxu0 0
    %11788 = vmatpush1.bf16.msra.mxu0 %v10279
    %11789 = vmatprep.subr.bf16.mxu0 0
    %11790 = vmatpush1.bf16.msra.mxu0 %v10280
    %11791 = vmatprep.subr.bf16.mxu0 0
    %11792 = vmatpush1.bf16.msra.mxu0 %v10281
    %11793 = vmatprep.subr.bf16.mxu0 0
    %11794 = vmatpush1.bf16.msra.mxu0 %v10282
    %11795 = vmatprep.mubr.bf16.mxu0 %v6222
    %11796 = vmatmul.mubr.bf16.gmra.mrb[0].mxu0 %v6221
    %v11797 = vpop.f32.mrb[0].mxu0
    %v11798 = vadd.f32 %v11758, %v11797
    %v11799 = vpop.f32.mrb[0].mxu0
    %v11800 = vpop.f32.mrb[0].mxu0
    %v11801 = vpop.f32.mrb[0].mxu0
    %11802 = vdwg.mxu0
    %11803 = vmatprep.subr.bf16.mxu0 0
    %11804 = vmatpush1.bf16.msra.mxu0 %v10283
    %11805 = vmatprep.subr.bf16.mxu0 0
    %11806 = vmatpush1.bf16.msra.mxu0 %v10284
    %11807 = vmatprep.subr.bf16.mxu0 0
    %11808 = vmatpush1.bf16.msra.mxu0 %v10285
    %11809 = vmatprep.subr.bf16.mxu0 0
    %11810 = vmatpush1.bf16.msra.mxu0 %v10286
    %11811 = vmatprep.subr.bf16.mxu0 0
    %11812 = vmatpush1.bf16.msra.mxu0 %v10287
    %11813 = vmatprep.subr.bf16.mxu0 0
    %11814 = vmatpush1.bf16.msra.mxu0 %v10288
    %11815 = vmatprep.subr.bf16.mxu0 0
    %11816 = vmatpush1.bf16.msra.mxu0 %v10289
    %11817 = vmatprep.subr.bf16.mxu0 0
    %11818 = vmatpush1.bf16.msra.mxu0 %v10290
    %11819 = vmatprep.subr.bf16.mxu0 0
    %11820 = vmatpush1.bf16.msra.mxu0 %v10291
    %11821 = vmatprep.subr.bf16.mxu0 0
    %11822 = vmatpush1.bf16.msra.mxu0 %v10292
    %11823 = vmatprep.subr.bf16.mxu0 0
    %11824 = vmatpush1.bf16.msra.mxu0 %v10293
    %11825 = vmatprep.subr.bf16.mxu0 0
    %11826 = vmatpush1.bf16.msra.mxu0 %v10294
    %11827 = vmatprep.subr.bf16.mxu0 0
    %11828 = vmatpush1.bf16.msra.mxu0 %v10295
    %11829 = vmatprep.subr.bf16.mxu0 0
    %11830 = vmatpush1.bf16.msra.mxu0 %v10296
    %11831 = vmatprep.subr.bf16.mxu0 0
    %11832 = vmatpush1.bf16.msra.mxu0 %v10297
    %11833 = vmatprep.subr.bf16.mxu0 0
    %11834 = vmatpush1.bf16.msra.mxu0 %v10298
    %11835 = vmatprep.mubr.bf16.mxu0 %v6224
    %11836 = vmatmul.mubr.bf16.gmra.mrb[0].mxu0 %v6223
    %v11837 = vpop.f32.mrb[0].mxu0
    %v11838 = vadd.f32 %v11798, %v11837
    %v11839 = vpop.f32.mrb[0].mxu0
    %v11840 = vpop.f32.mrb[0].mxu0
    %v11841 = vpop.f32.mrb[0].mxu0
    %11842 = vdwg.mxu0
    %11843 = vmatprep.subr.bf16.mxu0 0
    %11844 = vmatpush1.bf16.msra.mxu0 %v10299
    %11845 = vmatprep.subr.bf16.mxu0 0
    %11846 = vmatpush1.bf16.msra.mxu0 %v10300
    %11847 = vmatprep.subr.bf16.mxu0 0
    %11848 = vmatpush1.bf16.msra.mxu0 %v10301
    %11849 = vmatprep.subr.bf16.mxu0 0
    %11850 = vmatpush1.bf16.msra.mxu0 %v10302
    %11851 = vmatprep.subr.bf16.mxu0 0
    %11852 = vmatpush1.bf16.msra.mxu0 %v10303
    %11853 = vmatprep.subr.bf16.mxu0 0
    %11854 = vmatpush1.bf16.msra.mxu0 %v10304
    %11855 = vmatprep.subr.bf16.mxu0 0
    %11856 = vmatpush1.bf16.msra.mxu0 %v10305
    %11857 = vmatprep.subr.bf16.mxu0 0
    %11858 = vmatpush1.bf16.msra.mxu0 %v10306
    %11859 = vmatprep.subr.bf16.mxu0 0
    %11860 = vmatpush1.bf16.msra.mxu0 %v10307
    %11861 = vmatprep.subr.bf16.mxu0 0
    %11862 = vmatpush1.bf16.msra.mxu0 %v10308
    %11863 = vmatprep.subr.bf16.mxu0 0
    %11864 = vmatpush1.bf16.msra.mxu0 %v10309
    %11865 = vmatprep.subr.bf16.mxu0 0
    %11866 = vmatpush1.bf16.msra.mxu0 %v10310
    %11867 = vmatprep.subr.bf16.mxu0 0
    %11868 = vmatpush1.bf16.msra.mxu0 %v10311
    %11869 = vmatprep.subr.bf16.mxu0 0
    %11870 = vmatpush1.bf16.msra.mxu0 %v10312
    %11871 = vmatprep.subr.bf16.mxu0 0
    %11872 = vmatpush1.bf16.msra.mxu0 %v10313
    %11873 = vmatprep.subr.bf16.mxu0 0
    %11874 = vmatpush1.bf16.msra.mxu0 %v10314
    %11875 = vmatprep.mubr.bf16.mxu0 %v6226
    %11876 = vmatmul.mubr.bf16.gmra.mrb[0].mxu0 %v6225
    %v11877 = vpop.f32.mrb[0].mxu0
    %v11878 = vadd.f32 %v11838, %v11877
    %v11879 = vpop.f32.mrb[0].mxu0
    %v11880 = vpop.f32.mrb[0].mxu0
    %v11881 = vpop.f32.mrb[0].mxu0
    %11882 = vdwg.mxu0
    %11883 = vmatprep.subr.bf16.mxu0 0
    %11884 = vmatpush1.bf16.msra.mxu0 %v10315
    %11885 = vmatprep.subr.bf16.mxu0 0
    %11886 = vmatpush1.bf16.msra.mxu0 %v10316
    %11887 = vmatprep.subr.bf16.mxu0 0
    %11888 = vmatpush1.bf16.msra.mxu0 %v10317
    %11889 = vmatprep.subr.bf16.mxu0 0
    %11890 = vmatpush1.bf16.msra.mxu0 %v10318
    %11891 = vmatprep.subr.bf16.mxu0 0
    %11892 = vmatpush1.bf16.msra.mxu0 %v10319
    %11893 = vmatprep.subr.bf16.mxu0 0
    %11894 = vmatpush1.bf16.msra.mxu0 %v10320
    %11895 = vmatprep.subr.bf16.mxu0 0
    %11896 = vmatpush1.bf16.msra.mxu0 %v10321
    %11897 = vmatprep.subr.bf16.mxu0 0
    %11898 = vmatpush1.bf16.msra.mxu0 %v10322
    %11899 = vmatprep.subr.bf16.mxu0 0
    %11900 = vmatpush1.bf16.msra.mxu0 %v10323
    %11901 = vmatprep.subr.bf16.mxu0 0
    %11902 = vmatpush1.bf16.msra.mxu0 %v10324
    %11903 = vmatprep.subr.bf16.mxu0 0
    %11904 = vmatpush1.bf16.msra.mxu0 %v10325
    %11905 = vmatprep.subr.bf16.mxu0 0
    %11906 = vmatpush1.bf16.msra.mxu0 %v10326
    %11907 = vmatprep.subr.bf16.mxu0 0
    %11908 = vmatpush1.bf16.msra.mxu0 %v10327
    %11909 = vmatprep.subr.bf16.mxu0 0
    %11910 = vmatpush1.bf16.msra.mxu0 %v10328
    %11911 = vmatprep.subr.bf16.mxu0 0
    %11912 = vmatpush1.bf16.msra.mxu0 %v10329
    %11913 = vmatprep.subr.bf16.mxu0 0
    %11914 = vmatpush1.bf16.msra.mxu0 %v10330
    %11915 = vmatprep.mubr.bf16.mxu0 %v6228
    %11916 = vmatmul.mubr.bf16.gmra.mrb[0].mxu0 %v6227
    %v11917 = vpop.f32.mrb[0].mxu0
    %v11918 = vadd.f32 %v11878, %v11917
    %v11919 = vpop.f32.mrb[0].mxu0
    %v11920 = vpop.f32.mrb[0].mxu0
    %v11921 = vpop.f32.mrb[0].mxu0
    %11922 = vdwg.mxu0
    %11923 = vmatprep.subr.bf16.mxu0 0
    %11924 = vmatpush1.bf16.msra.mxu0 %v10331
    %11925 = vmatprep.subr.bf16.mxu0 0
    %11926 = vmatpush1.bf16.msra.mxu0 %v10332
    %11927 = vmatprep.subr.bf16.mxu0 0
    %11928 = vmatpush1.bf16.msra.mxu0 %v10333
    %11929 = vmatprep.subr.bf16.mxu0 0
    %11930 = vmatpush1.bf16.msra.mxu0 %v10334
    %11931 = vmatprep.subr.bf16.mxu0 0
    %11932 = vmatpush1.bf16.msra.mxu0 %v10335
    %11933 = vmatprep.subr.bf16.mxu0 0
    %11934 = vmatpush1.bf16.msra.mxu0 %v10336
    %11935 = vmatprep.subr.bf16.mxu0 0
    %11936 = vmatpush1.bf16.msra.mxu0 %v10337
    %11937 = vmatprep.subr.bf16.mxu0 0
    %11938 = vmatpush1.bf16.msra.mxu0 %v10338
    %11939 = vmatprep.subr.bf16.mxu0 0
    %11940 = vmatpush1.bf16.msra.mxu0 %v10339
    %11941 = vmatprep.subr.bf16.mxu0 0
    %11942 = vmatpush1.bf16.msra.mxu0 %v10340
    %11943 = vmatprep.subr.bf16.mxu0 0
    %11944 = vmatpush1.bf16.msra.mxu0 %v10341
    %11945 = vmatprep.subr.bf16.mxu0 0
    %11946 = vmatpush1.bf16.msra.mxu0 %v10342
    %11947 = vmatprep.subr.bf16.mxu0 0
    %11948 = vmatpush1.bf16.msra.mxu0 %v10343
    %11949 = vmatprep.subr.bf16.mxu0 0
    %11950 = vmatpush1.bf16.msra.mxu0 %v10344
    %11951 = vmatprep.subr.bf16.mxu0 0
    %11952 = vmatpush1.bf16.msra.mxu0 %v10345
    %11953 = vmatprep.subr.bf16.mxu0 0
    %11954 = vmatpush1.bf16.msra.mxu0 %v10346
    %11955 = vmatprep.mubr.bf16.mxu0 %v6230
    %11956 = vmatmul.mubr.bf16.gmra.mrb[0].mxu0 %v6229
    %v11957 = vpop.f32.mrb[0].mxu0
    %v11958 = vadd.f32 %v11918, %v11957
    %v11959 = vpop.f32.mrb[0].mxu0
    %v11960 = vpop.f32.mrb[0].mxu0
    %v11961 = vpop.f32.mrb[0].mxu0
    %11962 = vdwg.mxu0
    %11963 = vmatprep.subr.bf16.mxu0 0
    %11964 = vmatpush1.bf16.msra.mxu0 %v10347
    %11965 = vmatprep.subr.bf16.mxu0 0
    %11966 = vmatpush1.bf16.msra.mxu0 %v10348
    %11967 = vmatprep.subr.bf16.mxu0 0
    %11968 = vmatpush1.bf16.msra.mxu0 %v10349
    %11969 = vmatprep.subr.bf16.mxu0 0
    %11970 = vmatpush1.bf16.msra.mxu0 %v10350
    %11971 = vmatprep.subr.bf16.mxu0 0
    %11972 = vmatpush1.bf16.msra.mxu0 %v10351
    %11973 = vmatprep.subr.bf16.mxu0 0
    %11974 = vmatpush1.bf16.msra.mxu0 %v10352
    %11975 = vmatprep.subr.bf16.mxu0 0
    %11976 = vmatpush1.bf16.msra.mxu0 %v10353
    %11977 = vmatprep.subr.bf16.mxu0 0
    %11978 = vmatpush1.bf16.msra.mxu0 %v10354
    %11979 = vmatprep.subr.bf16.mxu0 0
    %11980 = vmatpush1.bf16.msra.mxu0 %v10355
    %11981 = vmatprep.subr.bf16.mxu0 0
    %11982 = vmatpush1.bf16.msra.mxu0 %v10356
    %11983 = vmatprep.subr.bf16.mxu0 0
    %11984 = vmatpush1.bf16.msra.mxu0 %v10357
    %11985 = vmatprep.subr.bf16.mxu0 0
    %11986 = vmatpush1.bf16.msra.mxu0 %v10358
    %11987 = vmatprep.subr.bf16.mxu0 0
    %11988 = vmatpush1.bf16.msra.mxu0 %v10359
    %11989 = vmatprep.subr.bf16.mxu0 0
    %11990 = vmatpush1.bf16.msra.mxu0 %v10360
    %11991 = vmatprep.subr.bf16.mxu0 0
    %11992 = vmatpush1.bf16.msra.mxu0 %v10361
    %11993 = vmatprep.subr.bf16.mxu0 0
    %11994 = vmatpush1.bf16.msra.mxu0 %v10362
    %11995 = vmatprep.mubr.bf16.mxu0 %v6232
    %11996 = vmatmul.mubr.bf16.gmra.mrb[0].mxu0 %v6231
    %v11997 = vpop.f32.mrb[0].mxu0
    %v11998 = vadd.f32 %v11958, %v11997
    %v11999 = vpop.f32.mrb[0].mxu0
    %v12000 = vpop.f32.mrb[0].mxu0
    %v12001 = vpop.f32.mrb[0].mxu0
    %12002 = vdwg.mxu0
    %12003 = vmatprep.subr.bf16.mxu0 0
    %12004 = vmatpush1.bf16.msra.mxu0 %v10363
    %12005 = vmatprep.subr.bf16.mxu0 0
    %12006 = vmatpush1.bf16.msra.mxu0 %v10364
    %12007 = vmatprep.subr.bf16.mxu0 0
    %12008 = vmatpush1.bf16.msra.mxu0 %v10365
    %12009 = vmatprep.subr.bf16.mxu0 0
    %12010 = vmatpush1.bf16.msra.mxu0 %v10366
    %12011 = vmatprep.subr.bf16.mxu0 0
    %12012 = vmatpush1.bf16.msra.mxu0 %v10367
    %12013 = vmatprep.subr.bf16.mxu0 0
    %12014 = vmatpush1.bf16.msra.mxu0 %v10368
    %12015 = vmatprep.subr.bf16.mxu0 0
    %12016 = vmatpush1.bf16.msra.mxu0 %v10369
    %12017 = vmatprep.subr.bf16.mxu0 0
    %12018 = vmatpush1.bf16.msra.mxu0 %v10370
    %12019 = vmatprep.subr.bf16.mxu0 0
    %12020 = vmatpush1.bf16.msra.mxu0 %v10371
    %12021 = vmatprep.subr.bf16.mxu0 0
    %12022 = vmatpush1.bf16.msra.mxu0 %v10372
    %12023 = vmatprep.subr.bf16.mxu0 0
    %12024 = vmatpush1.bf16.msra.mxu0 %v10373
    %12025 = vmatprep.subr.bf16.mxu0 0
    %12026 = vmatpush1.bf16.msra.mxu0 %v10374
    %12027 = vmatprep.subr.bf16.mxu0 0
    %12028 = vmatpush1.bf16.msra.mxu0 %v10375
    %12029 = vmatprep.subr.bf16.mxu0 0
    %12030 = vmatpush1.bf16.msra.mxu0 %v10376
    %12031 = vmatprep.subr.bf16.mxu0 0
    %12032 = vmatpush1.bf16.msra.mxu0 %v10377
    %12033 = vmatprep.subr.bf16.mxu0 0
    %12034 = vmatpush1.bf16.msra.mxu0 %v10378
    %12035 = vmatprep.mubr.bf16.mxu0 %v6234
    %12036 = vmatmul.mubr.bf16.gmra.mrb[0].mxu0 %v6233
    %v12037 = vpop.f32.mrb[0].mxu0
    %v12038 = vadd.f32 %v11998, %v12037
    %v12039 = vpop.f32.mrb[0].mxu0
    %v12040 = vpop.f32.mrb[0].mxu0
    %v12041 = vpop.f32.mrb[0].mxu0
    %12042 = vdwg.mxu0
    %12043 = vmatprep.subr.bf16.mxu0 0
    %12044 = vmatpush1.bf16.msra.mxu0 %v10379
    %12045 = vmatprep.subr.bf16.mxu0 0
    %12046 = vmatpush1.bf16.msra.mxu0 %v10380
    %12047 = vmatprep.subr.bf16.mxu0 0
    %12048 = vmatpush1.bf16.msra.mxu0 %v10381
    %12049 = vmatprep.subr.bf16.mxu0 0
    %12050 = vmatpush1.bf16.msra.mxu0 %v10382
    %12051 = vmatprep.subr.bf16.mxu0 0
    %12052 = vmatpush1.bf16.msra.mxu0 %v10383
    %12053 = vmatprep.subr.bf16.mxu0 0
    %12054 = vmatpush1.bf16.msra.mxu0 %v10384
    %12055 = vmatprep.subr.bf16.mxu0 0
    %12056 = vmatpush1.bf16.msra.mxu0 %v10385
    %12057 = vmatprep.subr.bf16.mxu0 0
    %12058 = vmatpush1.bf16.msra.mxu0 %v10386
    %12059 = vmatprep.subr.bf16.mxu0 0
    %12060 = vmatpush1.bf16.msra.mxu0 %v10387
    %12061 = vmatprep.subr.bf16.mxu0 0
    %12062 = vmatpush1.bf16.msra.mxu0 %v10388
    %12063 = vmatprep.subr.bf16.mxu0 0
    %12064 = vmatpush1.bf16.msra.mxu0 %v10389
    %12065 = vmatprep.subr.bf16.mxu0 0
    %12066 = vmatpush1.bf16.msra.mxu0 %v10390
    %12067 = vmatprep.subr.bf16.mxu0 0
    %12068 = vmatpush1.bf16.msra.mxu0 %v10391
    %12069 = vmatprep.subr.bf16.mxu0 0
    %12070 = vmatpush1.bf16.msra.mxu0 %v10392
    %12071 = vmatprep.subr.bf16.mxu0 0
    %12072 = vmatpush1.bf16.msra.mxu0 %v10393
    %12073 = vmatprep.subr.bf16.mxu0 0
    %12074 = vmatpush1.bf16.msra.mxu0 %v10394
    %12075 = vmatprep.mubr.bf16.mxu0 %v6236
    %12076 = vmatmul.mubr.bf16.gmra.mrb[0].mxu0 %v6235
    %v12077 = vpop.f32.mrb[0].mxu0
    %v12078 = vadd.f32 %v12038, %v12077
    %v12079 = vpop.f32.mrb[0].mxu0
    %v12080 = vpop.f32.mrb[0].mxu0
    %v12081 = vpop.f32.mrb[0].mxu0
    %12082 = vdwg.mxu0
    %12083 = vmatprep.subr.bf16.mxu0 0
    %12084 = vmatpush1.bf16.msra.mxu0 %v10395
    %12085 = vmatprep.subr.bf16.mxu0 0
    %12086 = vmatpush1.bf16.msra.mxu0 %v10396
    %12087 = vmatprep.subr.bf16.mxu0 0
    %12088 = vmatpush1.bf16.msra.mxu0 %v10397
    %12089 = vmatprep.subr.bf16.mxu0 0
    %12090 = vmatpush1.bf16.msra.mxu0 %v10398
    %12091 = vmatprep.subr.bf16.mxu0 0
    %12092 = vmatpush1.bf16.msra.mxu0 %v10399
    %12093 = vmatprep.subr.bf16.mxu0 0
    %12094 = vmatpush1.bf16.msra.mxu0 %v10400
    %12095 = vmatprep.subr.bf16.mxu0 0
    %12096 = vmatpush1.bf16.msra.mxu0 %v10401
    %12097 = vmatprep.subr.bf16.mxu0 0
    %12098 = vmatpush1.bf16.msra.mxu0 %v10402
    %12099 = vmatprep.subr.bf16.mxu0 0
    %12100 = vmatpush1.bf16.msra.mxu0 %v10403
    %12101 = vmatprep.subr.bf16.mxu0 0
    %12102 = vmatpush1.bf16.msra.mxu0 %v10404
    %12103 = vmatprep.subr.bf16.mxu0 0
    %12104 = vmatpush1.bf16.msra.mxu0 %v10405
    %12105 = vmatprep.subr.bf16.mxu0 0
    %12106 = vmatpush1.bf16.msra.mxu0 %v10406
    %12107 = vmatprep.subr.bf16.mxu0 0
    %12108 = vmatpush1.bf16.msra.mxu0 %v10407
    %12109 = vmatprep.subr.bf16.mxu0 0
    %12110 = vmatpush1.bf16.msra.mxu0 %v10408
    %12111 = vmatprep.subr.bf16.mxu0 0
    %12112 = vmatpush1.bf16.msra.mxu0 %v10409
    %12113 = vmatprep.subr.bf16.mxu0 0
    %12114 = vmatpush1.bf16.msra.mxu0 %v10410
    %12115 = vmatprep.mubr.bf16.mxu0 %v6238
    %12116 = vmatmul.mubr.bf16.gmra.mrb[0].mxu0 %v6237
    %v12117 = vpop.f32.mrb[0].mxu0
    %v12118 = vadd.f32 %v12078, %v12117
    %v12119 = vpop.f32.mrb[0].mxu0
    %v12120 = vpop.f32.mrb[0].mxu0
    %v12121 = vpop.f32.mrb[0].mxu0
    %12122 = vdwg.mxu0
    %12123 = vmatprep.subr.bf16.mxu0 0
    %12124 = vmatpush1.bf16.msra.mxu0 %v10411
    %12125 = vmatprep.subr.bf16.mxu0 0
    %12126 = vmatpush1.bf16.msra.mxu0 %v10412
    %12127 = vmatprep.subr.bf16.mxu0 0
    %12128 = vmatpush1.bf16.msra.mxu0 %v10413
    %12129 = vmatprep.subr.bf16.mxu0 0
    %12130 = vmatpush1.bf16.msra.mxu0 %v10414
    %12131 = vmatprep.subr.bf16.mxu0 0
    %12132 = vmatpush1.bf16.msra.mxu0 %v10415
    %12133 = vmatprep.subr.bf16.mxu0 0
    %12134 = vmatpush1.bf16.msra.mxu0 %v10416
    %12135 = vmatprep.subr.bf16.mxu0 0
    %12136 = vmatpush1.bf16.msra.mxu0 %v10417
    %12137 = vmatprep.subr.bf16.mxu0 0
    %12138 = vmatpush1.bf16.msra.mxu0 %v10418
    %12139 = vmatprep.subr.bf16.mxu0 0
    %12140 = vmatpush1.bf16.msra.mxu0 %v10419
    %12141 = vmatprep.subr.bf16.mxu0 0
    %12142 = vmatpush1.bf16.msra.mxu0 %v10420
    %12143 = vmatprep.subr.bf16.mxu0 0
    %12144 = vmatpush1.bf16.msra.mxu0 %v10421
    %12145 = vmatprep.subr.bf16.mxu0 0
    %12146 = vmatpush1.bf16.msra.mxu0 %v10422
    %12147 = vmatprep.subr.bf16.mxu0 0
    %12148 = vmatpush1.bf16.msra.mxu0 %v10423
    %12149 = vmatprep.subr.bf16.mxu0 0
    %12150 = vmatpush1.bf16.msra.mxu0 %v10424
    %12151 = vmatprep.subr.bf16.mxu0 0
    %12152 = vmatpush1.bf16.msra.mxu0 %v10425
    %12153 = vmatprep.subr.bf16.mxu0 0
    %12154 = vmatpush1.bf16.msra.mxu0 %v10426
    %12155 = vmatprep.mubr.bf16.mxu0 %v6240
    %12156 = vmatmul.mubr.bf16.gmra.mrb[0].mxu0 %v6239
    %v12157 = vpop.f32.mrb[0].mxu0
    %v12158 = vadd.f32 %v12118, %v12157
    %v12159 = vpop.f32.mrb[0].mxu0
    %v12160 = vpop.f32.mrb[0].mxu0
    %v12161 = vpop.f32.mrb[0].mxu0
    %12162 = vdwg.mxu0
    %12163 = vmatprep.subr.bf16.mxu0 0
    %12164 = vmatpush1.bf16.msra.mxu0 %v10427
    %12165 = vmatprep.subr.bf16.mxu0 0
    %12166 = vmatpush1.bf16.msra.mxu0 %v10428
    %12167 = vmatprep.subr.bf16.mxu0 0
    %12168 = vmatpush1.bf16.msra.mxu0 %v10429
    %12169 = vmatprep.subr.bf16.mxu0 0
    %12170 = vmatpush1.bf16.msra.mxu0 %v10430
    %12171 = vmatprep.subr.bf16.mxu0 0
    %12172 = vmatpush1.bf16.msra.mxu0 %v10431
    %12173 = vmatprep.subr.bf16.mxu0 0
    %12174 = vmatpush1.bf16.msra.mxu0 %v10432
    %12175 = vmatprep.subr.bf16.mxu0 0
    %12176 = vmatpush1.bf16.msra.mxu0 %v10433
    %12177 = vmatprep.subr.bf16.mxu0 0
    %12178 = vmatpush1.bf16.msra.mxu0 %v10434
    %12179 = vmatprep.subr.bf16.mxu0 0
    %12180 = vmatpush1.bf16.msra.mxu0 %v10435
    %12181 = vmatprep.subr.bf16.mxu0 0
    %12182 = vmatpush1.bf16.msra.mxu0 %v10436
    %12183 = vmatprep.subr.bf16.mxu0 0
    %12184 = vmatpush1.bf16.msra.mxu0 %v10437
    %12185 = vmatprep.subr.bf16.mxu0 0
    %12186 = vmatpush1.bf16.msra.mxu0 %v10438
    %12187 = vmatprep.subr.bf16.mxu0 0
    %12188 = vmatpush1.bf16.msra.mxu0 %v10439
    %12189 = vmatprep.subr.bf16.mxu0 0
    %12190 = vmatpush1.bf16.msra.mxu0 %v10440
    %12191 = vmatprep.subr.bf16.mxu0 0
    %12192 = vmatpush1.bf16.msra.mxu0 %v10441
    %12193 = vmatprep.subr.bf16.mxu0 0
    %12194 = vmatpush1.bf16.msra.mxu0 %v10442
    %12195 = vmatprep.mubr.bf16.mxu0 %v6242
    %12196 = vmatmul.mubr.bf16.gmra.mrb[0].mxu0 %v6241
    %v12197 = vpop.f32.mrb[0].mxu0
    %v12198 = vadd.f32 %v12158, %v12197
    %v12199 = vpop.f32.mrb[0].mxu0
    %v12200 = vpop.f32.mrb[0].mxu0
    %v12201 = vpop.f32.mrb[0].mxu0
    %12202 = vdwg.mxu0
    %12203 = vmatprep.subr.bf16.mxu0 0
    %12204 = vmatpush1.bf16.msra.mxu0 %v10443
    %12205 = vmatprep.subr.bf16.mxu0 0
    %12206 = vmatpush1.bf16.msra.mxu0 %v10444
    %12207 = vmatprep.subr.bf16.mxu0 0
    %12208 = vmatpush1.bf16.msra.mxu0 %v10445
    %12209 = vmatprep.subr.bf16.mxu0 0
    %12210 = vmatpush1.bf16.msra.mxu0 %v10446
    %12211 = vmatprep.subr.bf16.mxu0 0
    %12212 = vmatpush1.bf16.msra.mxu0 %v10447
    %12213 = vmatprep.subr.bf16.mxu0 0
    %12214 = vmatpush1.bf16.msra.mxu0 %v10448
    %12215 = vmatprep.subr.bf16.mxu0 0
    %12216 = vmatpush1.bf16.msra.mxu0 %v10449
    %12217 = vmatprep.subr.bf16.mxu0 0
    %12218 = vmatpush1.bf16.msra.mxu0 %v10450
    %12219 = vmatprep.subr.bf16.mxu0 0
    %12220 = vmatpush1.bf16.msra.mxu0 %v10451
    %12221 = vmatprep.subr.bf16.mxu0 0
    %12222 = vmatpush1.bf16.msra.mxu0 %v10452
    %12223 = vmatprep.subr.bf16.mxu0 0
    %12224 = vmatpush1.bf16.msra.mxu0 %v10453
    %12225 = vmatprep.subr.bf16.mxu0 0
    %12226 = vmatpush1.bf16.msra.mxu0 %v10454
    %12227 = vmatprep.subr.bf16.mxu0 0
    %12228 = vmatpush1.bf16.msra.mxu0 %v10455
    %12229 = vmatprep.subr.bf16.mxu0 0
    %12230 = vmatpush1.bf16.msra.mxu0 %v10456
    %12231 = vmatprep.subr.bf16.mxu0 0
    %12232 = vmatpush1.bf16.msra.mxu0 %v10457
    %12233 = vmatprep.subr.bf16.mxu0 0
    %12234 = vmatpush1.bf16.msra.mxu0 %v10458
    %12235 = vmatprep.mubr.bf16.mxu0 %v6244
    %12236 = vmatmul.mubr.bf16.gmra.mrb[0].mxu0 %v6243
    %v12237 = vpop.f32.mrb[0].mxu0
    %v12238 = vadd.f32 %v12198, %v12237
    %v12239 = vpop.f32.mrb[0].mxu0
    %v12240 = vpop.f32.mrb[0].mxu0
    %v12241 = vpop.f32.mrb[0].mxu0
    %12242 = vdwg.mxu0
    %12243 = vmatprep.subr.bf16.mxu0 0
    %12244 = vmatpush1.bf16.msra.mxu0 %v10459
    %12245 = vmatprep.subr.bf16.mxu0 0
    %12246 = vmatpush1.bf16.msra.mxu0 %v10460
    %12247 = vmatprep.subr.bf16.mxu0 0
    %12248 = vmatpush1.bf16.msra.mxu0 %v10461
    %12249 = vmatprep.subr.bf16.mxu0 0
    %12250 = vmatpush1.bf16.msra.mxu0 %v10462
    %12251 = vmatprep.subr.bf16.mxu0 0
    %12252 = vmatpush1.bf16.msra.mxu0 %v10463
    %12253 = vmatprep.subr.bf16.mxu0 0
    %12254 = vmatpush1.bf16.msra.mxu0 %v10464
    %12255 = vmatprep.subr.bf16.mxu0 0
    %12256 = vmatpush1.bf16.msra.mxu0 %v10465
    %12257 = vmatprep.subr.bf16.mxu0 0
    %12258 = vmatpush1.bf16.msra.mxu0 %v10466
    %12259 = vmatprep.subr.bf16.mxu0 0
    %12260 = vmatpush1.bf16.msra.mxu0 %v10467
    %12261 = vmatprep.subr.bf16.mxu0 0
    %12262 = vmatpush1.bf16.msra.mxu0 %v10468
    %12263 = vmatprep.subr.bf16.mxu0 0
    %12264 = vmatpush1.bf16.msra.mxu0 %v10469
    %12265 = vmatprep.subr.bf16.mxu0 0
    %12266 = vmatpush1.bf16.msra.mxu0 %v10470
    %12267 = vmatprep.subr.bf16.mxu0 0
    %12268 = vmatpush1.bf16.msra.mxu0 %v10471
    %12269 = vmatprep.subr.bf16.mxu0 0
    %12270 = vmatpush1.bf16.msra.mxu0 %v10472
    %12271 = vmatprep.subr.bf16.mxu0 0
    %12272 = vmatpush1.bf16.msra.mxu0 %v10473
    %12273 = vmatprep.subr.bf16.mxu0 0
    %12274 = vmatpush1.bf16.msra.mxu0 %v10474
    %12275 = vmatprep.mubr.bf16.mxu0 %v6246
    %12276 = vmatmul.mubr.bf16.gmra.mrb[0].mxu0 %v6245
    %v12277 = vpop.f32.mrb[0].mxu0
    %v12278 = vadd.f32 %v12238, %v12277
    %v12279 = vpop.f32.mrb[0].mxu0
    %v12280 = vpop.f32.mrb[0].mxu0
    %v12281 = vpop.f32.mrb[0].mxu0
    %12282 = vdwg.mxu0
    %12283 = vmatprep.subr.bf16.mxu0 0
    %12284 = vmatpush1.bf16.msra.mxu0 %v10475
    %12285 = vmatprep.subr.bf16.mxu0 0
    %12286 = vmatpush1.bf16.msra.mxu0 %v10476
    %12287 = vmatprep.subr.bf16.mxu0 0
    %12288 = vmatpush1.bf16.msra.mxu0 %v10477
    %12289 = vmatprep.subr.bf16.mxu0 0
    %12290 = vmatpush1.bf16.msra.mxu0 %v10478
    %12291 = vmatprep.subr.bf16.mxu0 0
    %12292 = vmatpush1.bf16.msra.mxu0 %v10479
    %12293 = vmatprep.subr.bf16.mxu0 0
    %12294 = vmatpush1.bf16.msra.mxu0 %v10480
    %12295 = vmatprep.subr.bf16.mxu0 0
    %12296 = vmatpush1.bf16.msra.mxu0 %v10481
    %12297 = vmatprep.subr.bf16.mxu0 0
    %12298 = vmatpush1.bf16.msra.mxu0 %v10482
    %12299 = vmatprep.subr.bf16.mxu0 0
    %12300 = vmatpush1.bf16.msra.mxu0 %v10483
    %12301 = vmatprep.subr.bf16.mxu0 0
    %12302 = vmatpush1.bf16.msra.mxu0 %v10484
    %12303 = vmatprep.subr.bf16.mxu0 0
    %12304 = vmatpush1.bf16.msra.mxu0 %v10485
    %12305 = vmatprep.subr.bf16.mxu0 0
    %12306 = vmatpush1.bf16.msra.mxu0 %v10486
    %12307 = vmatprep.subr.bf16.mxu0 0
    %12308 = vmatpush1.bf16.msra.mxu0 %v10487
    %12309 = vmatprep.subr.bf16.mxu0 0
    %12310 = vmatpush1.bf16.msra.mxu0 %v10488
    %12311 = vmatprep.subr.bf16.mxu0 0
    %12312 = vmatpush1.bf16.msra.mxu0 %v10489
    %12313 = vmatprep.subr.bf16.mxu0 0
    %12314 = vmatpush1.bf16.msra.mxu0 %v10490
    %12315 = vmatprep.mubr.bf16.mxu0 %v6248
    %12316 = vmatmul.mubr.bf16.gmra.mrb[0].mxu0 %v6247
    %v12317 = vpop.f32.mrb[0].mxu0
    %v12318 = vadd.f32 %v12278, %v12317
    %v12319 = vpop.f32.mrb[0].mxu0
    %v12320 = vpop.f32.mrb[0].mxu0
    %v12321 = vpop.f32.mrb[0].mxu0
    %12322 = vdwg.mxu0
    %12323 = vmatprep.subr.bf16.mxu0 0
    %12324 = vmatpush1.bf16.msra.mxu0 %v10491
    %12325 = vmatprep.subr.bf16.mxu0 0
    %12326 = vmatpush1.bf16.msra.mxu0 %v10492
    %12327 = vmatprep.subr.bf16.mxu0 0
    %12328 = vmatpush1.bf16.msra.mxu0 %v10493
    %12329 = vmatprep.subr.bf16.mxu0 0
    %12330 = vmatpush1.bf16.msra.mxu0 %v10494
    %12331 = vmatprep.subr.bf16.mxu0 0
    %12332 = vmatpush1.bf16.msra.mxu0 %v10495
    %12333 = vmatprep.subr.bf16.mxu0 0
    %12334 = vmatpush1.bf16.msra.mxu0 %v10496
    %12335 = vmatprep.subr.bf16.mxu0 0
    %12336 = vmatpush1.bf16.msra.mxu0 %v10497
    %12337 = vmatprep.subr.bf16.mxu0 0
    %12338 = vmatpush1.bf16.msra.mxu0 %v10498
    %12339 = vmatprep.subr.bf16.mxu0 0
    %12340 = vmatpush1.bf16.msra.mxu0 %v10499
    %12341 = vmatprep.subr.bf16.mxu0 0
    %12342 = vmatpush1.bf16.msra.mxu0 %v10500
    %12343 = vmatprep.subr.bf16.mxu0 0
    %12344 = vmatpush1.bf16.msra.mxu0 %v10501
    %12345 = vmatprep.subr.bf16.mxu0 0
    %12346 = vmatpush1.bf16.msra.mxu0 %v10502
    %12347 = vmatprep.subr.bf16.mxu0 0
    %12348 = vmatpush1.bf16.msra.mxu0 %v10503
    %12349 = vmatprep.subr.bf16.mxu0 0
    %12350 = vmatpush1.bf16.msra.mxu0 %v10504
    %12351 = vmatprep.subr.bf16.mxu0 0
    %12352 = vmatpush1.bf16.msra.mxu0 %v10505
    %12353 = vmatprep.subr.bf16.mxu0 0
    %12354 = vmatpush1.bf16.msra.mxu0 %v10506
    %12355 = vmatprep.mubr.bf16.mxu0 %v6250
    %12356 = vmatmul.mubr.bf16.gmra.mrb[0].mxu0 %v6249
    %v12357 = vpop.f32.mrb[0].mxu0
    %v12358 = vadd.f32 %v12318, %v12357
    %v12359 = vpop.f32.mrb[0].mxu0
    %v12360 = vpop.f32.mrb[0].mxu0
    %v12361 = vpop.f32.mrb[0].mxu0
    %12362 = vdwg.mxu0
    %12363 = vmatprep.subr.bf16.mxu0 0
    %12364 = vmatpush1.bf16.msra.mxu0 %v10507
    %12365 = vmatprep.subr.bf16.mxu0 0
    %12366 = vmatpush1.bf16.msra.mxu0 %v10508
    %12367 = vmatprep.subr.bf16.mxu0 0
    %12368 = vmatpush1.bf16.msra.mxu0 %v10509
    %12369 = vmatprep.subr.bf16.mxu0 0
    %12370 = vmatpush1.bf16.msra.mxu0 %v10510
    %12371 = vmatprep.subr.bf16.mxu0 0
    %12372 = vmatpush1.bf16.msra.mxu0 %v10511
    %12373 = vmatprep.subr.bf16.mxu0 0
    %12374 = vmatpush1.bf16.msra.mxu0 %v10512
    %12375 = vmatprep.subr.bf16.mxu0 0
    %12376 = vmatpush1.bf16.msra.mxu0 %v10513
    %12377 = vmatprep.subr.bf16.mxu0 0
    %12378 = vmatpush1.bf16.msra.mxu0 %v10514
    %12379 = vmatprep.subr.bf16.mxu0 0
    %12380 = vmatpush1.bf16.msra.mxu0 %v10515
    %12381 = vmatprep.subr.bf16.mxu0 0
    %12382 = vmatpush1.bf16.msra.mxu0 %v10516
    %12383 = vmatprep.subr.bf16.mxu0 0
    %12384 = vmatpush1.bf16.msra.mxu0 %v10517
    %12385 = vmatprep.subr.bf16.mxu0 0
    %12386 = vmatpush1.bf16.msra.mxu0 %v10518
    %12387 = vmatprep.subr.bf16.mxu0 0
    %12388 = vmatpush1.bf16.msra.mxu0 %v10519
    %12389 = vmatprep.subr.bf16.mxu0 0
    %12390 = vmatpush1.bf16.msra.mxu0 %v10520
    %12391 = vmatprep.subr.bf16.mxu0 0
    %12392 = vmatpush1.bf16.msra.mxu0 %v10521
    %12393 = vmatprep.subr.bf16.mxu0 0
    %12394 = vmatpush1.bf16.msra.mxu0 %v10522
    %12395 = vmatprep.mubr.bf16.mxu0 %v6252
    %12396 = vmatmul.mubr.bf16.gmra.mrb[0].mxu0 %v6251
    %v12397 = vpop.f32.mrb[0].mxu0
    %v12398 = vadd.f32 %v12358, %v12397
    %v12399 = vpop.f32.mrb[0].mxu0
    %v12400 = vpop.f32.mrb[0].mxu0
    %v12401 = vpop.f32.mrb[0].mxu0
    %12402 = vdwg.mxu0
    %12403 = vmatprep.subr.bf16.mxu0 0
    %12404 = vmatpush1.bf16.msra.mxu0 %v10523
    %12405 = vmatprep.subr.bf16.mxu0 0
    %12406 = vmatpush1.bf16.msra.mxu0 %v10524
    %12407 = vmatprep.subr.bf16.mxu0 0
    %12408 = vmatpush1.bf16.msra.mxu0 %v10525
    %12409 = vmatprep.subr.bf16.mxu0 0
    %12410 = vmatpush1.bf16.msra.mxu0 %v10526
    %12411 = vmatprep.subr.bf16.mxu0 0
    %12412 = vmatpush1.bf16.msra.mxu0 %v10527
    %12413 = vmatprep.subr.bf16.mxu0 0
    %12414 = vmatpush1.bf16.msra.mxu0 %v10528
    %12415 = vmatprep.subr.bf16.mxu0 0
    %12416 = vmatpush1.bf16.msra.mxu0 %v10529
    %12417 = vmatprep.subr.bf16.mxu0 0
    %12418 = vmatpush1.bf16.msra.mxu0 %v10530
    %12419 = vmatprep.subr.bf16.mxu0 0
    %12420 = vmatpush1.bf16.msra.mxu0 %v10531
    %12421 = vmatprep.subr.bf16.mxu0 0
    %12422 = vmatpush1.bf16.msra.mxu0 %v10532
    %12423 = vmatprep.subr.bf16.mxu0 0
    %12424 = vmatpush1.bf16.msra.mxu0 %v10533
    %12425 = vmatprep.subr.bf16.mxu0 0
    %12426 = vmatpush1.bf16.msra.mxu0 %v10534
    %12427 = vmatprep.subr.bf16.mxu0 0
    %12428 = vmatpush1.bf16.msra.mxu0 %v10535
    %12429 = vmatprep.subr.bf16.mxu0 0
    %12430 = vmatpush1.bf16.msra.mxu0 %v10536
    %12431 = vmatprep.subr.bf16.mxu0 0
    %12432 = vmatpush1.bf16.msra.mxu0 %v10537
    %12433 = vmatprep.subr.bf16.mxu0 0
    %12434 = vmatpush1.bf16.msra.mxu0 %v10538
    %12435 = vmatprep.mubr.bf16.mxu0 %v6254
    %12436 = vmatmul.mubr.bf16.gmra.mrb[0].mxu0 %v6253
    %v12437 = vpop.f32.mrb[0].mxu0
    %v12438 = vadd.f32 %v12398, %v12437
    %v12439 = vpop.f32.mrb[0].mxu0
    %v12440 = vpop.f32.mrb[0].mxu0
    %v12441 = vpop.f32.mrb[0].mxu0
    %12442 = vdwg.mxu0
    %12443 = vmatprep.subr.bf16.mxu0 0
    %12444 = vmatpush1.bf16.msra.mxu0 %v10539
    %12445 = vmatprep.subr.bf16.mxu0 0
    %12446 = vmatpush1.bf16.msra.mxu0 %v10540
    %12447 = vmatprep.subr.bf16.mxu0 0
    %12448 = vmatpush1.bf16.msra.mxu0 %v10541
    %12449 = vmatprep.subr.bf16.mxu0 0
    %12450 = vmatpush1.bf16.msra.mxu0 %v10542
    %12451 = vmatprep.subr.bf16.mxu0 0
    %12452 = vmatpush1.bf16.msra.mxu0 %v10543
    %12453 = vmatprep.subr.bf16.mxu0 0
    %12454 = vmatpush1.bf16.msra.mxu0 %v10544
    %12455 = vmatprep.subr.bf16.mxu0 0
    %12456 = vmatpush1.bf16.msra.mxu0 %v10545
    %12457 = vmatprep.subr.bf16.mxu0 0
    %12458 = vmatpush1.bf16.msra.mxu0 %v10546
    %12459 = vmatprep.subr.bf16.mxu0 0
    %12460 = vmatpush1.bf16.msra.mxu0 %v10547
    %12461 = vmatprep.subr.bf16.mxu0 0
    %12462 = vmatpush1.bf16.msra.mxu0 %v10548
    %12463 = vmatprep.subr.bf16.mxu0 0
    %12464 = vmatpush1.bf16.msra.mxu0 %v10549
    %12465 = vmatprep.subr.bf16.mxu0 0
    %12466 = vmatpush1.bf16.msra.mxu0 %v10550
    %12467 = vmatprep.subr.bf16.mxu0 0
    %12468 = vmatpush1.bf16.msra.mxu0 %v10551
    %12469 = vmatprep.subr.bf16.mxu0 0
    %12470 = vmatpush1.bf16.msra.mxu0 %v10552
    %12471 = vmatprep.subr.bf16.mxu0 0
    %12472 = vmatpush1.bf16.msra.mxu0 %v10553
    %12473 = vmatprep.subr.bf16.mxu0 0
    %12474 = vmatpush1.bf16.msra.mxu0 %v10554
    %12475 = vmatprep.mubr.bf16.mxu0 %v6256
    %12476 = vmatmul.mubr.bf16.gmra.mrb[0].mxu0 %v6255
    %v12477 = vpop.f32.mrb[0].mxu0
    %v12478 = vadd.f32 %v12438, %v12477
    %v12479 = vpop.f32.mrb[0].mxu0
    %v12480 = vpop.f32.mrb[0].mxu0
    %v12481 = vpop.f32.mrb[0].mxu0
    %12482 = vdwg.mxu0
    %12483 = vmatprep.subr.bf16.mxu0 0
    %12484 = vmatpush1.bf16.msra.mxu0 %v10555
    %12485 = vmatprep.subr.bf16.mxu0 0
    %12486 = vmatpush1.bf16.msra.mxu0 %v10556
    %12487 = vmatprep.subr.bf16.mxu0 0
    %12488 = vmatpush1.bf16.msra.mxu0 %v10557
    %12489 = vmatprep.subr.bf16.mxu0 0
    %12490 = vmatpush1.bf16.msra.mxu0 %v10558
    %12491 = vmatprep.subr.bf16.mxu0 0
    %12492 = vmatpush1.bf16.msra.mxu0 %v10559
    %12493 = vmatprep.subr.bf16.mxu0 0
    %12494 = vmatpush1.bf16.msra.mxu0 %v10560
    %12495 = vmatprep.subr.bf16.mxu0 0
    %12496 = vmatpush1.bf16.msra.mxu0 %v10561
    %12497 = vmatprep.subr.bf16.mxu0 0
    %12498 = vmatpush1.bf16.msra.mxu0 %v10562
    %12499 = vmatprep.subr.bf16.mxu0 0
    %12500 = vmatpush1.bf16.msra.mxu0 %v10563
    %12501 = vmatprep.subr.bf16.mxu0 0
    %12502 = vmatpush1.bf16.msra.mxu0 %v10564
    %12503 = vmatprep.subr.bf16.mxu0 0
    %12504 = vmatpush1.bf16.msra.mxu0 %v10565
    %12505 = vmatprep.subr.bf16.mxu0 0
    %12506 = vmatpush1.bf16.msra.mxu0 %v10566
    %12507 = vmatprep.subr.bf16.mxu0 0
    %12508 = vmatpush1.bf16.msra.mxu0 %v10567
    %12509 = vmatprep.subr.bf16.mxu0 0
    %12510 = vmatpush1.bf16.msra.mxu0 %v10568
    %12511 = vmatprep.subr.bf16.mxu0 0
    %12512 = vmatpush1.bf16.msra.mxu0 %v10569
    %12513 = vmatprep.subr.bf16.mxu0 0
    %12514 = vmatpush1.bf16.msra.mxu0 %v10570
    %12515 = vmatprep.mubr.bf16.mxu0 %v6258
    %12516 = vmatmul.mubr.bf16.gmra.mrb[0].mxu0 %v6257
    %v12517 = vpop.f32.mrb[0].mxu0
    %v12518 = vadd.f32 %v12478, %v12517
    %v12519 = vpop.f32.mrb[0].mxu0
    %v12520 = vpop.f32.mrb[0].mxu0
    %v12521 = vpop.f32.mrb[0].mxu0
    %12522 = vdwg.mxu0
    %12523 = vmatprep.subr.bf16.mxu0 0
    %12524 = vmatpush1.bf16.msra.mxu0 %v10571
    %12525 = vmatprep.subr.bf16.mxu0 0
    %12526 = vmatpush1.bf16.msra.mxu0 %v10572
    %12527 = vmatprep.subr.bf16.mxu0 0
    %12528 = vmatpush1.bf16.msra.mxu0 %v10573
    %12529 = vmatprep.subr.bf16.mxu0 0
    %12530 = vmatpush1.bf16.msra.mxu0 %v10574
    %12531 = vmatprep.subr.bf16.mxu0 0
    %12532 = vmatpush1.bf16.msra.mxu0 %v10575
    %12533 = vmatprep.subr.bf16.mxu0 0
    %12534 = vmatpush1.bf16.msra.mxu0 %v10576
    %12535 = vmatprep.subr.bf16.mxu0 0
    %12536 = vmatpush1.bf16.msra.mxu0 %v10577
    %12537 = vmatprep.subr.bf16.mxu0 0
    %12538 = vmatpush1.bf16.msra.mxu0 %v10578
    %12539 = vmatprep.subr.bf16.mxu0 0
    %12540 = vmatpush1.bf16.msra.mxu0 %v10579
    %12541 = vmatprep.subr.bf16.mxu0 0
    %12542 = vmatpush1.bf16.msra.mxu0 %v10580
    %12543 = vmatprep.subr.bf16.mxu0 0
    %12544 = vmatpush1.bf16.msra.mxu0 %v10581
    %12545 = vmatprep.subr.bf16.mxu0 0
    %12546 = vmatpush1.bf16.msra.mxu0 %v10582
    %12547 = vmatprep.subr.bf16.mxu0 0
    %12548 = vmatpush1.bf16.msra.mxu0 %v10583
    %12549 = vmatprep.subr.bf16.mxu0 0
    %12550 = vmatpush1.bf16.msra.mxu0 %v10584
    %12551 = vmatprep.subr.bf16.mxu0 0
    %12552 = vmatpush1.bf16.msra.mxu0 %v10585
    %12553 = vmatprep.subr.bf16.mxu0 0
    %12554 = vmatpush1.bf16.msra.mxu0 %v10586
    %12555 = vmatprep.mubr.bf16.mxu0 %v6260
    %12556 = vmatmul.mubr.bf16.gmra.mrb[0].mxu0 %v6259
    %v12557 = vpop.f32.mrb[0].mxu0
    %v12558 = vadd.f32 %v12518, %v12557
    %v12559 = vpop.f32.mrb[0].mxu0
    %v12560 = vpop.f32.mrb[0].mxu0
    %v12561 = vpop.f32.mrb[0].mxu0
    %12562 = vdwg.mxu0
    %12563 = vmatprep.subr.bf16.mxu0 0
    %12564 = vmatpush1.bf16.msra.mxu0 %v10587
    %12565 = vmatprep.subr.bf16.mxu0 0
    %12566 = vmatpush1.bf16.msra.mxu0 %v10588
    %12567 = vmatprep.subr.bf16.mxu0 0
    %12568 = vmatpush1.bf16.msra.mxu0 %v10589
    %12569 = vmatprep.subr.bf16.mxu0 0
    %12570 = vmatpush1.bf16.msra.mxu0 %v10590
    %12571 = vmatprep.subr.bf16.mxu0 0
    %12572 = vmatpush1.bf16.msra.mxu0 %v10591
    %12573 = vmatprep.subr.bf16.mxu0 0
    %12574 = vmatpush1.bf16.msra.mxu0 %v10592
    %12575 = vmatprep.subr.bf16.mxu0 0
    %12576 = vmatpush1.bf16.msra.mxu0 %v10593
    %12577 = vmatprep.subr.bf16.mxu0 0
    %12578 = vmatpush1.bf16.msra.mxu0 %v10594
    %12579 = vmatprep.subr.bf16.mxu0 0
    %12580 = vmatpush1.bf16.msra.mxu0 %v10595
    %12581 = vmatprep.subr.bf16.mxu0 0
    %12582 = vmatpush1.bf16.msra.mxu0 %v10596
    %12583 = vmatprep.subr.bf16.mxu0 0
    %12584 = vmatpush1.bf16.msra.mxu0 %v10597
    %12585 = vmatprep.subr.bf16.mxu0 0
    %12586 = vmatpush1.bf16.msra.mxu0 %v10598
    %12587 = vmatprep.subr.bf16.mxu0 0
    %12588 = vmatpush1.bf16.msra.mxu0 %v10599
    %12589 = vmatprep.subr.bf16.mxu0 0
    %12590 = vmatpush1.bf16.msra.mxu0 %v10600
    %12591 = vmatprep.subr.bf16.mxu0 0
    %12592 = vmatpush1.bf16.msra.mxu0 %v10601
    %12593 = vmatprep.subr.bf16.mxu0 0
    %12594 = vmatpush1.bf16.msra.mxu0 %v10602
    %12595 = vmatprep.mubr.bf16.mxu0 %v6262
    %12596 = vmatmul.mubr.bf16.gmra.mrb[0].mxu0 %v6261
    %v12597 = vpop.f32.mrb[0].mxu0
    %v12598 = vadd.f32 %v12558, %v12597
    %v12599 = vpop.f32.mrb[0].mxu0
    %v12600 = vpop.f32.mrb[0].mxu0
    %v12601 = vpop.f32.mrb[0].mxu0
    %12602 = vdwg.mxu0
    %12603 = vmatprep.subr.bf16.mxu0 0
    %12604 = vmatpush1.bf16.msra.mxu0 %v10603
    %12605 = vmatprep.subr.bf16.mxu0 0
    %12606 = vmatpush1.bf16.msra.mxu0 %v10604
    %12607 = vmatprep.subr.bf16.mxu0 0
    %12608 = vmatpush1.bf16.msra.mxu0 %v10605
    %12609 = vmatprep.subr.bf16.mxu0 0
    %12610 = vmatpush1.bf16.msra.mxu0 %v10606
    %12611 = vmatprep.subr.bf16.mxu0 0
    %12612 = vmatpush1.bf16.msra.mxu0 %v10607
    %12613 = vmatprep.subr.bf16.mxu0 0
    %12614 = vmatpush1.bf16.msra.mxu0 %v10608
    %12615 = vmatprep.subr.bf16.mxu0 0
    %12616 = vmatpush1.bf16.msra.mxu0 %v10609
    %12617 = vmatprep.subr.bf16.mxu0 0
    %12618 = vmatpush1.bf16.msra.mxu0 %v10610
    %12619 = vmatprep.subr.bf16.mxu0 0
    %12620 = vmatpush1.bf16.msra.mxu0 %v10611
    %12621 = vmatprep.subr.bf16.mxu0 0
    %12622 = vmatpush1.bf16.msra.mxu0 %v10612
    %12623 = vmatprep.subr.bf16.mxu0 0
    %12624 = vmatpush1.bf16.msra.mxu0 %v10613
    %12625 = vmatprep.subr.bf16.mxu0 0
    %12626 = vmatpush1.bf16.msra.mxu0 %v10614
    %12627 = vmatprep.subr.bf16.mxu0 0
    %12628 = vmatpush1.bf16.msra.mxu0 %v10615
    %12629 = vmatprep.subr.bf16.mxu0 0
    %12630 = vmatpush1.bf16.msra.mxu0 %v10616
    %12631 = vmatprep.subr.bf16.mxu0 0
    %12632 = vmatpush1.bf16.msra.mxu0 %v10617
    %12633 = vmatprep.subr.bf16.mxu0 0
    %12634 = vmatpush1.bf16.msra.mxu0 %v10618
    %12635 = vmatprep.mubr.bf16.mxu0 %v6264
    %12636 = vmatmul.mubr.bf16.gmra.mrb[0].mxu0 %v6263
    %v12637 = vpop.f32.mrb[0].mxu0
    %v12638 = vadd.f32 %v12598, %v12637
    %v12639 = vpop.f32.mrb[0].mxu0
    %v12640 = vpop.f32.mrb[0].mxu0
    %v12641 = vpop.f32.mrb[0].mxu0
    %12642 = vdwg.mxu0
    %12643 = vmatprep.subr.bf16.mxu0 0
    %12644 = vmatpush1.bf16.msra.mxu0 %v10619
    %12645 = vmatprep.subr.bf16.mxu0 0
    %12646 = vmatpush1.bf16.msra.mxu0 %v10620
    %12647 = vmatprep.subr.bf16.mxu0 0
    %12648 = vmatpush1.bf16.msra.mxu0 %v10621
    %12649 = vmatprep.subr.bf16.mxu0 0
    %12650 = vmatpush1.bf16.msra.mxu0 %v10622
    %12651 = vmatprep.subr.bf16.mxu0 0
    %12652 = vmatpush1.bf16.msra.mxu0 %v10623
    %12653 = vmatprep.subr.bf16.mxu0 0
    %12654 = vmatpush1.bf16.msra.mxu0 %v10624
    %12655 = vmatprep.subr.bf16.mxu0 0
    %12656 = vmatpush1.bf16.msra.mxu0 %v10625
    %12657 = vmatprep.subr.bf16.mxu0 0
    %12658 = vmatpush1.bf16.msra.mxu0 %v10626
    %12659 = vmatprep.subr.bf16.mxu0 0
    %12660 = vmatpush1.bf16.msra.mxu0 %v10627
    %12661 = vmatprep.subr.bf16.mxu0 0
    %12662 = vmatpush1.bf16.msra.mxu0 %v10628
    %12663 = vmatprep.subr.bf16.mxu0 0
    %12664 = vmatpush1.bf16.msra.mxu0 %v10629
    %12665 = vmatprep.subr.bf16.mxu0 0
    %12666 = vmatpush1.bf16.msra.mxu0 %v10630
    %12667 = vmatprep.subr.bf16.mxu0 0
    %12668 = vmatpush1.bf16.msra.mxu0 %v10631
    %12669 = vmatprep.subr.bf16.mxu0 0
    %12670 = vmatpush1.bf16.msra.mxu0 %v10632
    %12671 = vmatprep.subr.bf16.mxu0 0
    %12672 = vmatpush1.bf16.msra.mxu0 %v10633
    %12673 = vmatprep.subr.bf16.mxu0 0
    %12674 = vmatpush1.bf16.msra.mxu0 %v10634
    %12675 = vmatprep.mubr.bf16.mxu0 %v6266
    %12676 = vmatmul.mubr.bf16.gmra.mrb[0].mxu0 %v6265
    %v12677 = vpop.f32.mrb[0].mxu0
    %v12678 = vadd.f32 %v12638, %v12677
    %v12679 = vpop.f32.mrb[0].mxu0
    %v12680 = vpop.f32.mrb[0].mxu0
    %v12681 = vpop.f32.mrb[0].mxu0
    %12682 = vdwg.mxu0
    %12683 = vmatprep.subr.bf16.mxu0 0
    %12684 = vmatpush1.bf16.msra.mxu0 %v10635
    %12685 = vmatprep.subr.bf16.mxu0 0
    %12686 = vmatpush1.bf16.msra.mxu0 %v10636
    %12687 = vmatprep.subr.bf16.mxu0 0
    %12688 = vmatpush1.bf16.msra.mxu0 %v10637
    %12689 = vmatprep.subr.bf16.mxu0 0
    %12690 = vmatpush1.bf16.msra.mxu0 %v10638
    %12691 = vmatprep.subr.bf16.mxu0 0
    %12692 = vmatpush1.bf16.msra.mxu0 %v10639
    %12693 = vmatprep.subr.bf16.mxu0 0
    %12694 = vmatpush1.bf16.msra.mxu0 %v10640
    %12695 = vmatprep.subr.bf16.mxu0 0
    %12696 = vmatpush1.bf16.msra.mxu0 %v10641
    %12697 = vmatprep.subr.bf16.mxu0 0
    %12698 = vmatpush1.bf16.msra.mxu0 %v10642
    %12699 = vmatprep.subr.bf16.mxu0 0
    %12700 = vmatpush1.bf16.msra.mxu0 %v10643
    %12701 = vmatprep.subr.bf16.mxu0 0
    %12702 = vmatpush1.bf16.msra.mxu0 %v10644
    %12703 = vmatprep.subr.bf16.mxu0 0
    %12704 = vmatpush1.bf16.msra.mxu0 %v10645
    %12705 = vmatprep.subr.bf16.mxu0 0
    %12706 = vmatpush1.bf16.msra.mxu0 %v10646
    %12707 = vmatprep.subr.bf16.mxu0 0
    %12708 = vmatpush1.bf16.msra.mxu0 %v10647
    %12709 = vmatprep.subr.bf16.mxu0 0
    %12710 = vmatpush1.bf16.msra.mxu0 %v10648
    %12711 = vmatprep.subr.bf16.mxu0 0
    %12712 = vmatpush1.bf16.msra.mxu0 %v10649
    %12713 = vmatprep.subr.bf16.mxu0 0
    %12714 = vmatpush1.bf16.msra.mxu0 %v10650
    %12715 = vmatprep.mubr.bf16.mxu0 %v6268
    %12716 = vmatmul.mubr.bf16.gmra.mrb[0].mxu0 %v6267
    %v12717 = vpop.f32.mrb[0].mxu0
    %v12718 = vadd.f32 %v12678, %v12717
    %v12719 = vpop.f32.mrb[0].mxu0
    %v12720 = vpop.f32.mrb[0].mxu0
    %v12721 = vpop.f32.mrb[0].mxu0
    %12722 = vdwg.mxu0
    %12723 = vmatprep.subr.bf16.mxu0 0
    %12724 = vmatpush1.bf16.msra.mxu0 %v10651
    %12725 = vmatprep.subr.bf16.mxu0 0
    %12726 = vmatpush1.bf16.msra.mxu0 %v10652
    %12727 = vmatprep.subr.bf16.mxu0 0
    %12728 = vmatpush1.bf16.msra.mxu0 %v10653
    %12729 = vmatprep.subr.bf16.mxu0 0
    %12730 = vmatpush1.bf16.msra.mxu0 %v10654
    %12731 = vmatprep.subr.bf16.mxu0 0
    %12732 = vmatpush1.bf16.msra.mxu0 %v10655
    %12733 = vmatprep.subr.bf16.mxu0 0
    %12734 = vmatpush1.bf16.msra.mxu0 %v10656
    %12735 = vmatprep.subr.bf16.mxu0 0
    %12736 = vmatpush1.bf16.msra.mxu0 %v10657
    %12737 = vmatprep.subr.bf16.mxu0 0
    %12738 = vmatpush1.bf16.msra.mxu0 %v10658
    %12739 = vmatprep.subr.bf16.mxu0 0
    %12740 = vmatpush1.bf16.msra.mxu0 %v10659
    %12741 = vmatprep.subr.bf16.mxu0 0
    %12742 = vmatpush1.bf16.msra.mxu0 %v10660
    %12743 = vmatprep.subr.bf16.mxu0 0
    %12744 = vmatpush1.bf16.msra.mxu0 %v10661
    %12745 = vmatprep.subr.bf16.mxu0 0
    %12746 = vmatpush1.bf16.msra.mxu0 %v10662
    %12747 = vmatprep.subr.bf16.mxu0 0
    %12748 = vmatpush1.bf16.msra.mxu0 %v10663
    %12749 = vmatprep.subr.bf16.mxu0 0
    %12750 = vmatpush1.bf16.msra.mxu0 %v10664
    %12751 = vmatprep.subr.bf16.mxu0 0
    %12752 = vmatpush1.bf16.msra.mxu0 %v10665
    %12753 = vmatprep.subr.bf16.mxu0 0
    %12754 = vmatpush1.bf16.msra.mxu0 %v10666
    %12755 = vmatprep.mubr.bf16.mxu0 %v6270
    %12756 = vmatmul.mubr.bf16.gmra.mrb[0].mxu0 %v6269
    %v12757 = vpop.f32.mrb[0].mxu0
    %v12758 = vadd.f32 %v12718, %v12757
    %v12759 = vpop.f32.mrb[0].mxu0
    %v12760 = vpop.f32.mrb[0].mxu0
    %v12761 = vpop.f32.mrb[0].mxu0
    %12762 = vdwg.mxu0
    %12763 = vmatprep.subr.bf16.mxu0 0
    %12764 = vmatpush1.bf16.msra.mxu0 %v10667
    %12765 = vmatprep.subr.bf16.mxu0 0
    %12766 = vmatpush1.bf16.msra.mxu0 %v10668
    %12767 = vmatprep.subr.bf16.mxu0 0
    %12768 = vmatpush1.bf16.msra.mxu0 %v10669
    %12769 = vmatprep.subr.bf16.mxu0 0
    %12770 = vmatpush1.bf16.msra.mxu0 %v10670
    %12771 = vmatprep.subr.bf16.mxu0 0
    %12772 = vmatpush1.bf16.msra.mxu0 %v10671
    %12773 = vmatprep.subr.bf16.mxu0 0
    %12774 = vmatpush1.bf16.msra.mxu0 %v10672
    %12775 = vmatprep.subr.bf16.mxu0 0
    %12776 = vmatpush1.bf16.msra.mxu0 %v10673
    %12777 = vmatprep.subr.bf16.mxu0 0
    %12778 = vmatpush1.bf16.msra.mxu0 %v10674
    %12779 = vmatprep.subr.bf16.mxu0 0
    %12780 = vmatpush1.bf16.msra.mxu0 %v10675
    %12781 = vmatprep.subr.bf16.mxu0 0
    %12782 = vmatpush1.bf16.msra.mxu0 %v10676
    %12783 = vmatprep.subr.bf16.mxu0 0
    %12784 = vmatpush1.bf16.msra.mxu0 %v10677
    %12785 = vmatprep.subr.bf16.mxu0 0
    %12786 = vmatpush1.bf16.msra.mxu0 %v10678
    %12787 = vmatprep.subr.bf16.mxu0 0
    %12788 = vmatpush1.bf16.msra.mxu0 %v10679
    %12789 = vmatprep.subr.bf16.mxu0 0
    %12790 = vmatpush1.bf16.msra.mxu0 %v10680
    %12791 = vmatprep.subr.bf16.mxu0 0
    %12792 = vmatpush1.bf16.msra.mxu0 %v10681
    %12793 = vmatprep.subr.bf16.mxu0 0
    %12794 = vmatpush1.bf16.msra.mxu0 %v10682
    %12795 = vmatprep.mubr.bf16.mxu0 %v6272
    %12796 = vmatmul.mubr.bf16.gmra.mrb[0].mxu0 %v6271
    %v12797 = vpop.f32.mrb[0].mxu0
    %v12798 = vadd.f32 %v12758, %v12797
    %v12799 = vpop.f32.mrb[0].mxu0
    %v12800 = vpop.f32.mrb[0].mxu0
    %v12801 = vpop.f32.mrb[0].mxu0
    %12802 = vdwg.mxu0
    %12803 = vmatprep.subr.bf16.mxu0 0
    %12804 = vmatpush1.bf16.msra.mxu0 %v10683
    %12805 = vmatprep.subr.bf16.mxu0 0
    %12806 = vmatpush1.bf16.msra.mxu0 %v10684
    %12807 = vmatprep.subr.bf16.mxu0 0
    %12808 = vmatpush1.bf16.msra.mxu0 %v10685
    %12809 = vmatprep.subr.bf16.mxu0 0
    %12810 = vmatpush1.bf16.msra.mxu0 %v10686
    %12811 = vmatprep.subr.bf16.mxu0 0
    %12812 = vmatpush1.bf16.msra.mxu0 %v10687
    %12813 = vmatprep.subr.bf16.mxu0 0
    %12814 = vmatpush1.bf16.msra.mxu0 %v10688
    %12815 = vmatprep.subr.bf16.mxu0 0
    %12816 = vmatpush1.bf16.msra.mxu0 %v10689
    %12817 = vmatprep.subr.bf16.mxu0 0
    %12818 = vmatpush1.bf16.msra.mxu0 %v10690
    %12819 = vmatprep.subr.bf16.mxu0 0
    %12820 = vmatpush1.bf16.msra.mxu0 %v10691
    %12821 = vmatprep.subr.bf16.mxu0 0
    %12822 = vmatpush1.bf16.msra.mxu0 %v10692
    %12823 = vmatprep.subr.bf16.mxu0 0
    %12824 = vmatpush1.bf16.msra.mxu0 %v10693
    %12825 = vmatprep.subr.bf16.mxu0 0
    %12826 = vmatpush1.bf16.msra.mxu0 %v10694
    %12827 = vmatprep.subr.bf16.mxu0 0
    %12828 = vmatpush1.bf16.msra.mxu0 %v10695
    %12829 = vmatprep.subr.bf16.mxu0 0
    %12830 = vmatpush1.bf16.msra.mxu0 %v10696
    %12831 = vmatprep.subr.bf16.mxu0 0
    %12832 = vmatpush1.bf16.msra.mxu0 %v10697
    %12833 = vmatprep.subr.bf16.mxu0 0
    %12834 = vmatpush1.bf16.msra.mxu0 %v10698
    %12835 = vmatprep.mubr.bf16.mxu0 %v6274
    %12836 = vmatmul.mubr.bf16.gmra.mrb[0].mxu0 %v6273
    %v12837 = vpop.f32.mrb[0].mxu0
    %v12838 = vadd.f32 %v12798, %v12837
    %v12839 = vpop.f32.mrb[0].mxu0
    %v12840 = vpop.f32.mrb[0].mxu0
    %v12841 = vpop.f32.mrb[0].mxu0
    %12842 = vdwg.mxu0
    %12843 = vmatprep.subr.bf16.mxu0 0
    %12844 = vmatpush1.bf16.msra.mxu0 %v10699
    %12845 = vmatprep.subr.bf16.mxu0 0
    %12846 = vmatpush1.bf16.msra.mxu0 %v10700
    %12847 = vmatprep.subr.bf16.mxu0 0
    %12848 = vmatpush1.bf16.msra.mxu0 %v10701
    %12849 = vmatprep.subr.bf16.mxu0 0
    %12850 = vmatpush1.bf16.msra.mxu0 %v10702
    %12851 = vmatprep.subr.bf16.mxu0 0
    %12852 = vmatpush1.bf16.msra.mxu0 %v10703
    %12853 = vmatprep.subr.bf16.mxu0 0
    %12854 = vmatpush1.bf16.msra.mxu0 %v10704
    %12855 = vmatprep.subr.bf16.mxu0 0
    %12856 = vmatpush1.bf16.msra.mxu0 %v10705
    %12857 = vmatprep.subr.bf16.mxu0 0
    %12858 = vmatpush1.bf16.msra.mxu0 %v10706
    %12859 = vmatprep.subr.bf16.mxu0 0
    %12860 = vmatpush1.bf16.msra.mxu0 %v10707
    %12861 = vmatprep.subr.bf16.mxu0 0
    %12862 = vmatpush1.bf16.msra.mxu0 %v10708
    %12863 = vmatprep.subr.bf16.mxu0 0
    %12864 = vmatpush1.bf16.msra.mxu0 %v10709
    %12865 = vmatprep.subr.bf16.mxu0 0
    %12866 = vmatpush1.bf16.msra.mxu0 %v10710
    %12867 = vmatprep.subr.bf16.mxu0 0
    %12868 = vmatpush1.bf16.msra.mxu0 %v10711
    %12869 = vmatprep.subr.bf16.mxu0 0
    %12870 = vmatpush1.bf16.msra.mxu0 %v10712
    %12871 = vmatprep.subr.bf16.mxu0 0
    %12872 = vmatpush1.bf16.msra.mxu0 %v10713
    %12873 = vmatprep.subr.bf16.mxu0 0
    %12874 = vmatpush1.bf16.msra.mxu0 %v10714
    %12875 = vmatprep.mubr.bf16.mxu0 %v6276
    %12876 = vmatmul.mubr.bf16.gmra.mrb[0].mxu0 %v6275
    %v12877 = vpop.f32.mrb[0].mxu0
    %v12878 = vadd.f32 %v12838, %v12877
    %v12879 = vpop.f32.mrb[0].mxu0
    %v12880 = vpop.f32.mrb[0].mxu0
    %v12881 = vpop.f32.mrb[0].mxu0
    %12882 = vdwg.mxu0
    %12883 = vmatprep.subr.bf16.mxu0 0
    %12884 = vmatpush1.bf16.msra.mxu0 %v10715
    %12885 = vmatprep.subr.bf16.mxu0 0
    %12886 = vmatpush1.bf16.msra.mxu0 %v10716
    %12887 = vmatprep.subr.bf16.mxu0 0
    %12888 = vmatpush1.bf16.msra.mxu0 %v10717
    %12889 = vmatprep.subr.bf16.mxu0 0
    %12890 = vmatpush1.bf16.msra.mxu0 %v10718
    %12891 = vmatprep.subr.bf16.mxu0 0
    %12892 = vmatpush1.bf16.msra.mxu0 %v10719
    %12893 = vmatprep.subr.bf16.mxu0 0
    %12894 = vmatpush1.bf16.msra.mxu0 %v10720
    %12895 = vmatprep.subr.bf16.mxu0 0
    %12896 = vmatpush1.bf16.msra.mxu0 %v10721
    %12897 = vmatprep.subr.bf16.mxu0 0
    %12898 = vmatpush1.bf16.msra.mxu0 %v10722
    %12899 = vmatprep.subr.bf16.mxu0 0
    %12900 = vmatpush1.bf16.msra.mxu0 %v10723
    %12901 = vmatprep.subr.bf16.mxu0 0
    %12902 = vmatpush1.bf16.msra.mxu0 %v10724
    %12903 = vmatprep.subr.bf16.mxu0 0
    %12904 = vmatpush1.bf16.msra.mxu0 %v10725
    %12905 = vmatprep.subr.bf16.mxu0 0
    %12906 = vmatpush1.bf16.msra.mxu0 %v10726
    %12907 = vmatprep.subr.bf16.mxu0 0
    %12908 = vmatpush1.bf16.msra.mxu0 %v10727
    %12909 = vmatprep.subr.bf16.mxu0 0
    %12910 = vmatpush1.bf16.msra.mxu0 %v10728
    %12911 = vmatprep.subr.bf16.mxu0 0
    %12912 = vmatpush1.bf16.msra.mxu0 %v10729
    %12913 = vmatprep.subr.bf16.mxu0 0
    %12914 = vmatpush1.bf16.msra.mxu0 %v10730
    %12915 = vmatprep.mubr.bf16.mxu0 %v6278
    %12916 = vmatmul.mubr.bf16.gmra.mrb[0].mxu0 %v6277
    %v12917 = vpop.f32.mrb[0].mxu0
    %v12918 = vadd.f32 %v12878, %v12917
    %v12919 = vpop.f32.mrb[0].mxu0
    %v12920 = vpop.f32.mrb[0].mxu0
    %v12921 = vpop.f32.mrb[0].mxu0
    %12922 = vdwg.mxu0
    %12923 = vmatprep.subr.bf16.mxu0 0
    %12924 = vmatpush1.bf16.msra.mxu0 %v10731
    %12925 = vmatprep.subr.bf16.mxu0 0
    %12926 = vmatpush1.bf16.msra.mxu0 %v10732
    %12927 = vmatprep.subr.bf16.mxu0 0
    %12928 = vmatpush1.bf16.msra.mxu0 %v10733
    %12929 = vmatprep.subr.bf16.mxu0 0
    %12930 = vmatpush1.bf16.msra.mxu0 %v10734
    %12931 = vmatprep.subr.bf16.mxu0 0
    %12932 = vmatpush1.bf16.msra.mxu0 %v10735
    %12933 = vmatprep.subr.bf16.mxu0 0
    %12934 = vmatpush1.bf16.msra.mxu0 %v10736
    %12935 = vmatprep.subr.bf16.mxu0 0
    %12936 = vmatpush1.bf16.msra.mxu0 %v10737
    %12937 = vmatprep.subr.bf16.mxu0 0
    %12938 = vmatpush1.bf16.msra.mxu0 %v10738
    %12939 = vmatprep.subr.bf16.mxu0 0
    %12940 = vmatpush1.bf16.msra.mxu0 %v10739
    %12941 = vmatprep.subr.bf16.mxu0 0
    %12942 = vmatpush1.bf16.msra.mxu0 %v10740
    %12943 = vmatprep.subr.bf16.mxu0 0
    %12944 = vmatpush1.bf16.msra.mxu0 %v10741
    %12945 = vmatprep.subr.bf16.mxu0 0
    %12946 = vmatpush1.bf16.msra.mxu0 %v10742
    %12947 = vmatprep.subr.bf16.mxu0 0
    %12948 = vmatpush1.bf16.msra.mxu0 %v10743
    %12949 = vmatprep.subr.bf16.mxu0 0
    %12950 = vmatpush1.bf16.msra.mxu0 %v10744
    %12951 = vmatprep.subr.bf16.mxu0 0
    %12952 = vmatpush1.bf16.msra.mxu0 %v10745
    %12953 = vmatprep.subr.bf16.mxu0 0
    %12954 = vmatpush1.bf16.msra.mxu0 %v10746
    %12955 = vmatprep.mubr.bf16.mxu0 %v6280
    %12956 = vmatmul.mubr.bf16.gmra.mrb[0].mxu0 %v6279
    %v12957 = vpop.f32.mrb[0].mxu0
    %v12958 = vadd.f32 %v12918, %v12957
    %v12959 = vpop.f32.mrb[0].mxu0
    %v12960 = vpop.f32.mrb[0].mxu0
    %v12961 = vpop.f32.mrb[0].mxu0
    %12962 = vdwg.mxu0
    %12963 = vmatprep.subr.bf16.mxu0 0
    %12964 = vmatpush1.bf16.msra.mxu0 %v10747
    %12965 = vmatprep.subr.bf16.mxu0 0
    %12966 = vmatpush1.bf16.msra.mxu0 %v10748
    %12967 = vmatprep.subr.bf16.mxu0 0
    %12968 = vmatpush1.bf16.msra.mxu0 %v10749
    %12969 = vmatprep.subr.bf16.mxu0 0
    %12970 = vmatpush1.bf16.msra.mxu0 %v10750
    %12971 = vmatprep.subr.bf16.mxu0 0
    %12972 = vmatpush1.bf16.msra.mxu0 %v10751
    %12973 = vmatprep.subr.bf16.mxu0 0
    %12974 = vmatpush1.bf16.msra.mxu0 %v10752
    %12975 = vmatprep.subr.bf16.mxu0 0
    %12976 = vmatpush1.bf16.msra.mxu0 %v10753
    %12977 = vmatprep.subr.bf16.mxu0 0
    %12978 = vmatpush1.bf16.msra.mxu0 %v10754
    %12979 = vmatprep.subr.bf16.mxu0 0
    %12980 = vmatpush1.bf16.msra.mxu0 %v10755
    %12981 = vmatprep.subr.bf16.mxu0 0
    %12982 = vmatpush1.bf16.msra.mxu0 %v10756
    %12983 = vmatprep.subr.bf16.mxu0 0
    %12984 = vmatpush1.bf16.msra.mxu0 %v10757
    %12985 = vmatprep.subr.bf16.mxu0 0
    %12986 = vmatpush1.bf16.msra.mxu0 %v10758
    %12987 = vmatprep.subr.bf16.mxu0 0
    %12988 = vmatpush1.bf16.msra.mxu0 %v10759
    %12989 = vmatprep.subr.bf16.mxu0 0
    %12990 = vmatpush1.bf16.msra.mxu0 %v10760
    %12991 = vmatprep.subr.bf16.mxu0 0
    %12992 = vmatpush1.bf16.msra.mxu0 %v10761
    %12993 = vmatprep.subr.bf16.mxu0 0
    %12994 = vmatpush1.bf16.msra.mxu0 %v10762
    %12995 = vmatprep.mubr.bf16.mxu0 %v6282
    %12996 = vmatmul.mubr.bf16.gmra.mrb[0].mxu0 %v6281
    %v12997 = vpop.f32.mrb[0].mxu0
    %v12998 = vadd.f32 %v12958, %v12997
    %v12999 = vpop.f32.mrb[0].mxu0
    %v13000 = vpop.f32.mrb[0].mxu0
    %v13001 = vpop.f32.mrb[0].mxu0
    %13002 = vdwg.mxu0
    %v13003 = vadd.f32 %v6202, %v12998
    %13004 = vst [vmem:[#allocation15] sm:$0xff] %v13003
    // Predicated region
    $region62: #{tpu_custom_call.1} parent=1 // pred_check
      _
    $region63: #{tpu_custom_call.1} parent=1 // pred_check_branch
      %13006 = sbr.rel (0) target = $region65
    $region64: #{tpu_custom_call.1} parent=1 // pred_region
      %s13008 = ssub.s32 128, 128
      %13009 = vsyncadd [#allocation5], %s13008
      %s13011 = sshll.u32 [#allocation15], 4
      %s13012 = int_to_ptr.vmem [resolvable:$true] %s13011
      %13014 = dma.vmem_to_hbm [thread:$0]  %s13012, 128, %s7, [#allocation5]
    $region65: #{tpu_custom_call.1} parent=1 // pred_fallthru
      _
    // Predicated region
    $region66: #{tpu_custom_call.1} parent=1 // pred_check
      _
    $region67: #{tpu_custom_call.1} parent=1 // pred_check_branch
      %13016 = sbr.rel (0) target = $region69
    $region68: #{tpu_custom_call.1} parent=1 // pred_region
      %13017 = dma.done [#allocation5], 128
    $region69: #{tpu_custom_call.1} parent=1 // pred_fallthru
      _
    %13018 = vsyncpa [#allocation4], 1
    %13019 = vsyncpa [#allocation7], 1
    %13020 = vsyncpa [#allocation10], 1
    %13021 = vsyncpa [#allocation13], 1
    %13022 = vsyncpa [#allocation5], 1

</llo_original>
